<compile_context>
chip_gen: v7x
topology: tpu7x:2x2x1
jax: 0.10.0
libtpu: 0.0.40
codegen_flags: <defaults>
</compile_context>

<pallas_src>
import functools
import math

import jax
import jax.numpy as jnp
from jax.experimental import pallas as pl
from jax.experimental.pallas import tpu as pltpu


# ---------------------------------------------------------------------------
# In-kernel math helpers
# ---------------------------------------------------------------------------
def _erf_approx(x):
    # Abramowitz & Stegun 7.1.26 polynomial, |abs err| <= 1.5e-7 (~f32 eps).
    # TODO(synk): torch.erf replaced by this polynomial (uses exp/abs/where only).
    p = 0.3275911
    a1, a2, a3, a4, a5 = (0.254829592, -0.284496736, 1.421413741,
                          -1.453152027, 1.061405429)
    sgn = jnp.where(x >= 0.0, 1.0, -1.0)
    ax = jnp.abs(x)
    t = 1.0 / (1.0 + p * ax)
    poly = ((((a5 * t + a4) * t + a3) * t + a2) * t + a1) * t
    return sgn * (1.0 - poly * jnp.exp(-ax * ax))


def _gelu(x):
    # gelu(x) = x * 0.5 * (1 + erf(x / sqrt(2)))
    return x * 0.5 * (1.0 + _erf_approx(x * (1.0 / math.sqrt(2.0))))


def _layer_norm(y, gamma, beta, eps):
    # Two-pass (PyTorch-parity) TF-style LN: eps inside sqrt, rsqrt on EUP.
    mean = jnp.mean(y, axis=-1, keepdims=True)
    d = y - mean
    var = jnp.mean(d * d, axis=-1, keepdims=True)
    return gamma * (d * jax.lax.rsqrt(var + eps)) + beta


# ---------------------------------------------------------------------------
# Fused BertLayerNoMemory kernel
# ---------------------------------------------------------------------------
def _bert_layer_kernel(x_ref, mask_ref,
                       wq_ref, bq_ref, wk_ref, bk_ref, wv_ref, bv_ref,
                       wo_ref, bo_ref, g1_ref, be1_ref,
                       wi_ref, bi_ref, w2_ref, b2_ref, g2_ref, be2_ref,
                       o_ref, *, num_heads, max_v_len, ln_eps):
    B, L, D = x_ref.shape
    dh = D // num_heads
    scale = 1.0 / math.sqrt(dh)

    x = x_ref[...].astype(jnp.float32)               # (B, L, D)
    x2 = x.reshape(B * L, D)                         # flattened rows for matmuls

    def dense(inp_f32, w_ref, b_ref):
        # bf16 operands -> native MXU rate; f32 accumulation.
        return (jnp.dot(inp_f32.astype(jnp.bfloat16),
                        w_ref[...].astype(jnp.bfloat16),
                        preferred_element_type=jnp.float32)
                + b_ref[...].astype(jnp.float32))

    # --- BertSelfAttention: QKV projections on the (B*L, D) slab ------------
    q = dense(x2, wq_ref, bq_ref) * scale            # fold 1/sqrt(dh) into q
    k = dense(x2, wk_ref, bk_ref)
    v = dense(x2, wv_ref, bv_ref)

    def split_heads(t):                              # (B*L, D) -> (B*nh, L, dh)
        t4 = t.reshape(B, L, num_heads, dh)
        return jnp.swapaxes(t4, 1, 2).reshape(B * num_heads, L, dh).astype(jnp.bfloat16)

    qh = split_heads(q)
    kh = split_heads(k)
    vh = split_heads(v)

    # Additive pad-shifted attention bias rebuilt in-kernel from (B, 1, L) mask.
    row = jax.lax.broadcasted_iota(jnp.int32, (L, L), 0)
    col = jax.lax.broadcasted_iota(jnp.int32, (L, L), 1)
    struct = jnp.where((col < max_v_len) | ((row >= max_v_len) & (col <= row)),
                       1.0, 0.0)                     # (L, L) shifted mask
    msk = mask_ref[...].astype(jnp.float32)          # (B, 1, L) pad mask
    bias = (1.0 - struct[None, :, :] * msk) * -10000.0   # (B, L, L)

    # Head-batched attention: one relayout, no per-head unroll / lane concat.
    s = jnp.einsum('bqd,bkd->bqk', qh, kh,
                   preferred_element_type=jnp.float32)    # (B*nh, L, L)
    s = s.reshape(B, num_heads, L, L) + bias[:, None, :, :]
    m = jnp.max(s, axis=-1, keepdims=True)
    e = jnp.exp(s - m)
    prob = e * pl.reciprocal(jnp.sum(e, axis=-1, keepdims=True), approx=True)
    # TODO(synk): attention_probs dropout omitted (eval-mode identity).
    ctx = jnp.einsum('bqk,bkd->bqd',
                     prob.reshape(B * num_heads, L, L).astype(jnp.bfloat16), vh,
                     preferred_element_type=jnp.float32)  # (B*nh, L, dh)
    ctx = jnp.swapaxes(ctx.reshape(B, num_heads, L, dh), 1, 2).reshape(B * L, D)

    # --- BertSelfOutput: dense + residual + LayerNorm (dropout == identity) --
    attn_out = _layer_norm(dense(ctx, wo_ref, bo_ref) + x2,
                           g1_ref[...], be1_ref[...], ln_eps)

    # --- BertIntermediate: dense + gelu --------------------------------------
    inter = _gelu(dense(attn_out, wi_ref, bi_ref))

    # --- BertOutput: dense + residual + LayerNorm (dropout == identity) ------
    out = _layer_norm(dense(inter, w2_ref, b2_ref) + attn_out,
                      g2_ref[...], be2_ref[...], ln_eps)

    o_ref[...] = out.reshape(B, L, D).astype(o_ref.dtype)


# ---------------------------------------------------------------------------
# Host-side glue
# ---------------------------------------------------------------------------
def make_pad_shifted_mask(input_mask, max_v_len, max_t_len, memory_len=0):
    """input_mask: (N, L) float {0,1} -> (N, L, L) pad-shifted mask (pure JAX)."""
    N, L = input_mask.shape
    assert max_v_len + max_t_len + memory_len == L
    shifted = jnp.zeros((L, L), jnp.float32)
    shifted = shifted.at[:, :memory_len + max_v_len].set(1.0)
    tril = jnp.tril(jnp.ones((max_t_len, max_t_len), jnp.float32))
    shifted = shifted.at[max_v_len:, memory_len + max_v_len:].set(tril)
    shifted = jnp.broadcast_to(shifted[None], (N, L, L))
    return shifted * input_mask[:, None, :].astype(jnp.float32)


def _layer_block_vmem_bytes(b, L, D, Di, nh, io_bytes, param_bytes):
    """Rough upper estimate of VMEM used by one grid step (for block sizing)."""
    rows = b * L
    io_bufs = 2 * 2 * rows * D * io_bytes          # x in + out, double-buffered
    mask_bufs = 2 * b * L * 4
    weights = (4 * D * D + 2 * D * Di) * param_bytes   # single-buffered weights
    vecs = (8 * D + 2 * Di) * 4
    acts = rows * D * 4 * 10                       # x2, q/k/v, head views, ctx, ...
    scores = b * nh * L * L * 4 * 3                # scores, exp, probs(+bf16)
    inter = rows * Di * 4 * 2                      # intermediate (f32 + bf16)
    return io_bufs + mask_bufs + weights + vecs + acts + scores + inter


def _pick_batch_block(N, L, D, Di, nh, io_bytes, param_bytes, vmem_budget):
    """Largest batch block under the VMEM budget; keep >=2 grid steps (v7x)."""
    if N <= 1:
        return 1
    max_b = (N + 1) // 2          # >= 2 grid steps -> both v7x TensorCores busy
    best = 1
    for b in range(1, max_b + 1):
        if _layer_block_vmem_bytes(b, L, D, Di, nh, io_bytes, param_bytes) <= vmem_budget:
            best = b
    return best


def bert_encoder_no_memory(hidden_states, attention_mask, layer_params, config,
                           output_all_encoded_layers=True,
                           param_dtype=jnp.bfloat16, activation_dtype=None):
    """hidden_states: (N, L, D); attention_mask: (N, L) -> list of (N, L, D).

    param_dtype: dtype weights are shipped in (bf16 -> native MXU rate, half VMEM).
    activation_dtype: inter-layer activation dtype (None keeps input dtype; set
        jnp.bfloat16 to halve the per-layer HBM round trip at ~1e-2 parity cost).
    """
    N, L, D = hidden_states.shape
    nh = config['num_attention_heads']
    Di = config['intermediate_size']
    ln_eps = config['layer_norm_eps']
    max_v_len = config['max_vid_len']
    assert D % nh == 0
    assert max_v_len + config['max_t_len'] == L

    out_dtype = activation_dtype or hidden_states.dtype
    io_bytes = jnp.dtype(out_dtype).itemsize
    param_bytes = jnp.dtype(param_dtype).itemsize

    # Per-generation VMEM budget (<= ~48 MiB on v7x's 64 MiB, <= ~96-100 MiB
    # on v5e/v6e's 128 MiB physical VMEM).
    try:
        phys_vmem = int(pltpu.get_tpu_info().vmem_capacity_bytes)
    except Exception:
        phys_vmem = 64 * 1024 * 1024
    vmem_budget = min(int(phys_vmem * 0.75), 100 * 1024 * 1024)

    b_blk = _pick_batch_block(N, L, D, Di, nh, io_bytes, param_bytes, vmem_budget)
    n_blocks = -(-N // b_blk)
    N_pad = n_blocks * b_blk

    # Pad the batch so awkward / prime N never collapses to 1-sample blocks;
    # padded rows are computed on garbage and sliced off.
    hs_pad = hidden_states.astype(out_dtype)
    am_pad = attention_mask.astype(jnp.float32)
    if N_pad != N:
        hs_pad = jnp.pad(hs_pad, ((0, N_pad - N), (0, 0), (0, 0)))
        am_pad = jnp.pad(am_pad, ((0, N_pad - N), (0, 0)))
    mask3 = am_pad.reshape(N_pad, 1, L)     # (N_pad, 1, L): lane-dim = L

    def build_layer_fn(single_buffer_weights):
        def pspec(shape):
            idx = lambda i: (0,) * len(shape)
            if single_buffer_weights:
                try:
                    # Grid-invariant weights: no need for double buffering.
                    return pl.BlockSpec(shape, idx, pipeline_mode=pl.Buffered(1))
                except Exception:
                    pass
            return pl.BlockSpec(shape, idx)

        in_specs = [
            pl.BlockSpec((b_blk, L, D), lambda i: (i, 0, 0)),   # hidden states
            pl.BlockSpec((b_blk, 1, L), lambda i: (i, 0, 0)),   # pad mask
            pspec((D, D)), pspec((1, D)),      # Wq, bq
            pspec((D, D)), pspec((1, D)),      # Wk, bk
            pspec((D, D)), pspec((1, D)),      # Wv, bv
            pspec((D, D)), pspec((1, D)),      # Wo, bo
            pspec((1, D)), pspec((1, D)),      # LN1 g, b
            pspec((D, Di)), pspec((1, Di)),    # Wi, bi
            pspec((Di, D)), pspec((1, D)),     # W2, b2
            pspec((1, D)), pspec((1, D)),      # LN2 g, b
        ]
        return pl.pallas_call(
            functools.partial(_bert_layer_kernel, num_heads=nh,
                              max_v_len=max_v_len, ln_eps=ln_eps),
            out_shape=jax.ShapeDtypeStruct((N_pad, L, D), out_dtype),
            grid_spec=pltpu.PrefetchScalarGridSpec(
                num_scalar_prefetch=0,
                grid=(N_pad // b_blk,),
                in_specs=in_specs,
                out_specs=pl.BlockSpec((b_blk, L, D), lambda i: (i, 0, 0)),
            ),
            compiler_params=pltpu.CompilerParams(
                dimension_semantics=("parallel",),
                vmem_limit_bytes=int(vmem_budget)),
        )

    def layer_args(p):
        f32 = jnp.float32
        return (p['wq'].astype(param_dtype), p['bq'].astype(f32),
                p['wk'].astype(param_dtype), p['bk'].astype(f32),
                p['wv'].astype(param_dtype), p['bv'].astype(f32),
                p['wo'].astype(param_dtype), p['bo'].astype(f32),
                p['ln1_g'].astype(f32), p['ln1_b'].astype(f32),
                p['wi'].astype(param_dtype), p['bi'].astype(f32),
                p['w2'].astype(param_dtype), p['b2'].astype(f32),
                p['ln2_g'].astype(f32), p['ln2_b'].astype(f32))

    layer_fn = build_layer_fn(single_buffer_weights=True)

    all_layers = []
    hs = hs_pad
    for li, p in enumerate(layer_params):
        args = (hs, mask3) + layer_args(p)
        if li == 0:
            try:
                new_hs = layer_fn(*args)
                jax.block_until_ready(new_hs)
            except Exception:
                # pl.Buffered(1) not supported on this jax/libtpu: fall back to
                # default double-buffered weight specs (still bf16).
                layer_fn = build_layer_fn(single_buffer_weights=False)
                new_hs = layer_fn(*args)
        else:
            new_hs = layer_fn(*args)
        hs = new_hs
        if output_all_encoded_layers:
            all_layers.append(hs[:N])
    if not output_all_encoded_layers:
        all_layers.append(hs[:N])
    return all_layers


# ---------------------------------------------------------------------------
# Parameter init (PyTorch nn.Linear defaults) and pure-JAX reference
# ---------------------------------------------------------------------------
def _linear_init(key, fan_in, fan_out):
    kw, kb = jax.random.split(key)
    bound = 1.0 / math.sqrt(fan_in)
    w = jax.random.uniform(kw, (fan_in, fan_out), jnp.float32, -bound, bound)
    b = jax.random.uniform(kb, (1, fan_out), jnp.float32, -bound, bound)
    return w, b


def init_layer_params(key, hidden_size, intermediate_size):
    keys = jax.random.split(key, 6)
    wq, bq = _linear_init(keys[0], hidden_size, hidden_size)
    wk, bk = _linear_init(keys[1], hidden_size, hidden_size)
    wv, bv = _linear_init(keys[2], hidden_size, hidden_size)
    wo, bo = _linear_init(keys[3], hidden_size, hidden_size)
    wi, bi = _linear_init(keys[4], hidden_size, intermediate_size)
    w2, b2 = _linear_init(keys[5], intermediate_size, hidden_size)
    return dict(
        wq=wq, bq=bq, wk=wk, bk=bk, wv=wv, bv=bv, wo=wo, bo=bo,
        ln1_g=jnp.ones((1, hidden_size), jnp.float32),
        ln1_b=jnp.zeros((1, hidden_size), jnp.float32),
        wi=wi, bi=bi, w2=w2, b2=b2,
        ln2_g=jnp.ones((1, hidden_size), jnp.float32),
        ln2_b=jnp.zeros((1, hidden_size), jnp.float32),
    )


def _reference_encoder(hidden_states, attention_mask, layer_params, config):
    """Pure-JAX f32 reference of BertEncoderNoMemory (eval mode)."""
    from jax.scipy.special import erf
    N, L, D = hidden_states.shape
    nh = config['num_attention_heads']
    dh = D // nh
    eps = config['layer_norm_eps']
    mask = make_pad_shifted_mask(attention_mask, config['max_vid_len'],
                                 config['max_t_len'])
    bias = (1.0 - mask)[:, None] * -10000.0

    def ln(x, g, b):
        u = jnp.mean(x, -1, keepdims=True)
        s = jnp.mean((x - u) ** 2, -1, keepdims=True)
        return g * ((x - u) / jnp.sqrt(s + eps)) + b

    def gelu_exact(x):
        return x * 0.5 * (1.0 + erf(x / math.sqrt(2.0)))

    def heads(t):
        return t.reshape(N, L, nh, dh).transpose(0, 2, 1, 3)

    outs = []
    hs = hidden_states
    for p in layer_params:
        q = hs @ p['wq'] + p['bq']
        k = hs @ p['wk'] + p['bk']
        v = hs @ p['wv'] + p['bv']
        s = jnp.einsum('bhqd,bhkd->bhqk', heads(q), heads(k)) / math.sqrt(dh) + bias
        pr = jax.nn.softmax(s, axis=-1)
        ctx = jnp.einsum('bhqk,bhkd->bhqd', pr, heads(v))
        ctx = ctx.transpose(0, 2, 1, 3).reshape(N, L, D)
        attn = ln(ctx @ p['wo'] + p['bo'] + hs, p['ln1_g'], p['ln1_b'])
        inter = gelu_exact(attn @ p['wi'] + p['bi'])
        hs = ln(inter @ p['w2'] + p['b2'] + attn, p['ln2_g'], p['ln2_b'])
        outs.append(hs)
    return outs


if __name__ == "__main__":
    config = dict(
        hidden_size=128,                  # lane-dense (multiple of 128)
        num_attention_heads=4,
        intermediate_size=256,
        num_hidden_layers=2,
        max_vid_len=8,
        max_t_len=8,
        hidden_dropout_prob=0.1,          # identity (eval mode)
        attention_probs_dropout_prob=0.1, # identity (eval mode)
        layer_norm_eps=1e-12,
    )
    N = 3                                 # odd on purpose: exercises batch padding
    L = config['max_vid_len'] + config['max_t_len']
    D = config['hidden_size']

    key = jax.random.PRNGKey(0)
    k_x, k_p = jax.random.split(key)
    hidden_states = jax.random.normal(k_x, (N, L, D), jnp.float32)
    attention_mask = jnp.array(
        [[1.0] * L,
         [1.0] * (L - 3) + [0.0] * 3,
         [1.0] * (L - 6) + [0.0] * 6], jnp.float32)

    layer_keys = jax.random.split(k_p, config['num_hidden_layers'])
    layer_params = [init_layer_params(k, D, config['intermediate_size'])
                    for k in layer_keys]

    outs = bert_encoder_no_memory(hidden_states, attention_mask,
                                  layer_params, config,
                                  output_all_encoded_layers=True)
    jax.block_until_ready(outs)
    assert len(outs) == config['num_hidden_layers']
    assert all(o.shape == (N, L, D) for o in outs)

    # Loose sanity check vs a pure-JAX f32 reference (bf16 matmuls + approx
    # reciprocal introduce small numeric drift; structural bugs would be O(1)).
    refs = _reference_encoder(hidden_states, attention_mask, layer_params, config)
    for o, r in zip(outs, refs):
        err = float(jnp.max(jnp.abs(o.astype(jnp.float32) - r)))
        assert err < 0.2, f"kernel/reference mismatch: max abs err {err}"

    print("KERNEL_OK")
</pallas_src>

<mosaic_0001>
module attributes {stable_mosaic.version = 11 : i64} {
  func.func @_bert_layer_kernel(%arg0: i32, %arg1: memref<2x16x128xf32, #tpu.memory_space<vmem>>, %arg2: memref<2x1x16xf32, #tpu.memory_space<vmem>>, %arg3: memref<128x128xbf16, #tpu.memory_space<vmem>>, %arg4: memref<1x128xf32, #tpu.memory_space<vmem>>, %arg5: memref<128x128xbf16, #tpu.memory_space<vmem>>, %arg6: memref<1x128xf32, #tpu.memory_space<vmem>>, %arg7: memref<128x128xbf16, #tpu.memory_space<vmem>>, %arg8: memref<1x128xf32, #tpu.memory_space<vmem>>, %arg9: memref<128x128xbf16, #tpu.memory_space<vmem>>, %arg10: memref<1x128xf32, #tpu.memory_space<vmem>>, %arg11: memref<1x128xf32, #tpu.memory_space<vmem>>, %arg12: memref<1x128xf32, #tpu.memory_space<vmem>>, %arg13: memref<128x256xbf16, #tpu.memory_space<vmem>>, %arg14: memref<1x256xf32, #tpu.memory_space<vmem>>, %arg15: memref<256x128xbf16, #tpu.memory_space<vmem>>, %arg16: memref<1x128xf32, #tpu.memory_space<vmem>>, %arg17: memref<1x128xf32, #tpu.memory_space<vmem>>, %arg18: memref<1x128xf32, #tpu.memory_space<vmem>>, %arg19: memref<2x16x128xf32, #tpu.memory_space<vmem>>) attributes {dimension_semantics = [#tpu.dimension_semantics<parallel>], iteration_bounds = array<i64: 2>, scalar_prefetch = 0 : i64, scratch_operands = 0 : i64, tpu.core_type = #tpu.core_type<tc>, window_params = [{transform_indices = @transform_0, window_bounds = array<i64: 2, 16, 128>}, {transform_indices = @transform_1, window_bounds = array<i64: 2, 1, 16>}, {pipeline_mode = #tpu.pipeline_mode<synchronous>, transform_indices = @transform_2, window_bounds = array<i64: 128, 128>}, {pipeline_mode = #tpu.pipeline_mode<synchronous>, transform_indices = @transform_3, window_bounds = array<i64: 1, 128>}, {pipeline_mode = #tpu.pipeline_mode<synchronous>, transform_indices = @transform_4, window_bounds = array<i64: 128, 128>}, {pipeline_mode = #tpu.pipeline_mode<synchronous>, transform_indices = @transform_5, window_bounds = array<i64: 1, 128>}, {pipeline_mode = #tpu.pipeline_mode<synchronous>, transform_indices = @transform_6, window_bounds = array<i64: 128, 128>}, {pipeline_mode = #tpu.pipeline_mode<synchronous>, transform_indices = @transform_7, window_bounds = array<i64: 1, 128>}, {pipeline_mode = #tpu.pipeline_mode<synchronous>, transform_indices = @transform_8, window_bounds = array<i64: 128, 128>}, {pipeline_mode = #tpu.pipeline_mode<synchronous>, transform_indices = @transform_9, window_bounds = array<i64: 1, 128>}, {pipeline_mode = #tpu.pipeline_mode<synchronous>, transform_indices = @transform_10, window_bounds = array<i64: 1, 128>}, {pipeline_mode = #tpu.pipeline_mode<synchronous>, transform_indices = @transform_11, window_bounds = array<i64: 1, 128>}, {pipeline_mode = #tpu.pipeline_mode<synchronous>, transform_indices = @transform_12, window_bounds = array<i64: 128, 256>}, {pipeline_mode = #tpu.pipeline_mode<synchronous>, transform_indices = @transform_13, window_bounds = array<i64: 1, 256>}, {pipeline_mode = #tpu.pipeline_mode<synchronous>, transform_indices = @transform_14, window_bounds = array<i64: 256, 128>}, {pipeline_mode = #tpu.pipeline_mode<synchronous>, transform_indices = @transform_15, window_bounds = array<i64: 1, 128>}, {pipeline_mode = #tpu.pipeline_mode<synchronous>, transform_indices = @transform_16, window_bounds = array<i64: 1, 128>}, {pipeline_mode = #tpu.pipeline_mode<synchronous>, transform_indices = @transform_17, window_bounds = array<i64: 1, 128>}, {transform_indices = @transform_18, window_bounds = array<i64: 2, 16, 128>}]} {
    %c0 = arith.constant 0 : index
    %c0_0 = arith.constant 0 : index
    %c0_1 = arith.constant 0 : index
    %0 = vector.load %arg1[%c0, %c0_0, %c0_1] : memref<2x16x128xf32, #tpu.memory_space<vmem>>, vector<2x16x128xf32>
    %1 = vector.shape_cast %0 : vector<2x16x128xf32> to vector<32x128xf32>
    %2 = arith.truncf %1 : vector<32x128xf32> to vector<32x128xbf16>
    %c0_2 = arith.constant 0 : index
    %c0_3 = arith.constant 0 : index
    %3 = vector.load %arg3[%c0_2, %c0_3] : memref<128x128xbf16, #tpu.memory_space<vmem>>, vector<128x128xbf16>
    %cst = arith.constant dense<0.000000e+00> : vector<32x128xf32>
    %4 = tpu.matmul %2, %3, %cst {dimension_numbers = #tpu.dot_dimension_numbers<[1], [0], [0], [1], [0, 0, 1, 1], [], []>} : vector<32x128xbf16>, vector<128x128xbf16>, vector<32x128xf32> -> vector<32x128xf32>
    %c0_4 = arith.constant 0 : index
    %c0_5 = arith.constant 0 : index
    %5 = vector.load %arg4[%c0_4, %c0_5] : memref<1x128xf32, #tpu.memory_space<vmem>>, vector<1x128xf32>
    %6 = vector.broadcast %5 : vector<1x128xf32> to vector<32x128xf32>
    %7 = arith.addf %4, %6 : vector<32x128xf32>
    %cst_6 = arith.constant 0.176776692 : f32
    %8 = vector.broadcast %cst_6 : f32 to vector<32x128xf32>
    %9 = arith.mulf %7, %8 : vector<32x128xf32>
    %10 = arith.truncf %1 : vector<32x128xf32> to vector<32x128xbf16>
    %c0_7 = arith.constant 0 : index
    %c0_8 = arith.constant 0 : index
    %11 = vector.load %arg5[%c0_7, %c0_8] : memref<128x128xbf16, #tpu.memory_space<vmem>>, vector<128x128xbf16>
    %cst_9 = arith.constant dense<0.000000e+00> : vector<32x128xf32>
    %12 = tpu.matmul %10, %11, %cst_9 {dimension_numbers = #tpu.dot_dimension_numbers<[1], [0], [0], [1], [0, 0, 1, 1], [], []>} : vector<32x128xbf16>, vector<128x128xbf16>, vector<32x128xf32> -> vector<32x128xf32>
    %c0_10 = arith.constant 0 : index
    %c0_11 = arith.constant 0 : index
    %13 = vector.load %arg6[%c0_10, %c0_11] : memref<1x128xf32, #tpu.memory_space<vmem>>, vector<1x128xf32>
    %14 = vector.broadcast %13 : vector<1x128xf32> to vector<32x128xf32>
    %15 = arith.addf %12, %14 : vector<32x128xf32>
    %16 = arith.truncf %1 : vector<32x128xf32> to vector<32x128xbf16>
    %c0_12 = arith.constant 0 : index
    %c0_13 = arith.constant 0 : index
    %17 = vector.load %arg7[%c0_12, %c0_13] : memref<128x128xbf16, #tpu.memory_space<vmem>>, vector<128x128xbf16>
    %cst_14 = arith.constant dense<0.000000e+00> : vector<32x128xf32>
    %18 = tpu.matmul %16, %17, %cst_14 {dimension_numbers = #tpu.dot_dimension_numbers<[1], [0], [0], [1], [0, 0, 1, 1], [], []>} : vector<32x128xbf16>, vector<128x128xbf16>, vector<32x128xf32> -> vector<32x128xf32>
    %c0_15 = arith.constant 0 : index
    %c0_16 = arith.constant 0 : index
    %19 = vector.load %arg8[%c0_15, %c0_16] : memref<1x128xf32, #tpu.memory_space<vmem>>, vector<1x128xf32>
    %20 = vector.broadcast %19 : vector<1x128xf32> to vector<32x128xf32>
    %21 = arith.addf %18, %20 : vector<32x128xf32>
    %22 = vector.shape_cast %9 : vector<32x128xf32> to vector<2x16x4x32xf32>
    %23 = tpu.transpose %22, [0, 2, 1, 3] : vector<2x16x4x32xf32> -> vector<2x4x16x32xf32>
    %24 = vector.shape_cast %23 : vector<2x4x16x32xf32> to vector<8x16x32xf32>
    %25 = arith.truncf %24 : vector<8x16x32xf32> to vector<8x16x32xbf16>
    %26 = vector.shape_cast %15 : vector<32x128xf32> to vector<2x16x4x32xf32>
    %27 = tpu.transpose %26, [0, 2, 1, 3] : vector<2x16x4x32xf32> -> vector<2x4x16x32xf32>
    %28 = vector.shape_cast %27 : vector<2x4x16x32xf32> to vector<8x16x32xf32>
    %29 = arith.truncf %28 : vector<8x16x32xf32> to vector<8x16x32xbf16>
    %30 = vector.shape_cast %21 : vector<32x128xf32> to vector<2x16x4x32xf32>
    %31 = tpu.transpose %30, [0, 2, 1, 3] : vector<2x16x4x32xf32> -> vector<2x4x16x32xf32>
    %32 = vector.shape_cast %31 : vector<2x4x16x32xf32> to vector<8x16x32xf32>
    %33 = arith.truncf %32 : vector<8x16x32xf32> to vector<8x16x32xbf16>
    %34 = tpu.iota {dimensions = array<i32: 0>} : vector<16x16xi32>
    %35 = tpu.iota {dimensions = array<i32: 1>} : vector<16x16xi32>
    %c8_i32 = arith.constant 8 : i32
    %36 = vector.broadcast %c8_i32 : i32 to vector<16x16xi32>
    %37 = arith.cmpi slt, %35, %36 : vector<16x16xi32>
    %c8_i32_17 = arith.constant 8 : i32
    %38 = vector.broadcast %c8_i32_17 : i32 to vector<16x16xi32>
    %39 = arith.cmpi sge, %34, %38 : vector<16x16xi32>
    %40 = arith.cmpi sle, %35, %34 : vector<16x16xi32>
    %41 = arith.andi %39, %40 : vector<16x16xi1>
    %42 = arith.ori %37, %41 : vector<16x16xi1>
    %cst_18 = arith.constant 1.000000e+00 : f32
    %cst_19 = arith.constant 0.000000e+00 : f32
    %43 = vector.broadcast %cst_18 : f32 to vector<16x16xf32>
    %44 = vector.broadcast %cst_19 : f32 to vector<16x16xf32>
    %45 = arith.select %42, %43, %44 : vector<16x16xi1>, vector<16x16xf32>
    %c0_20 = arith.constant 0 : index
    %c0_21 = arith.constant 0 : index
    %c0_22 = arith.constant 0 : index
    %46 = vector.load %arg2[%c0_20, %c0_21, %c0_22] : memref<2x1x16xf32, #tpu.memory_space<vmem>>, vector<2x1x16xf32>
    %47 = vector.shape_cast %45 : vector<16x16xf32> to vector<1x16x16xf32>
    %48 = vector.broadcast %47 : vector<1x16x16xf32> to vector<2x16x16xf32>
    %49 = vector.broadcast %46 : vector<2x1x16xf32> to vector<2x16x16xf32>
    %50 = arith.mulf %48, %49 : vector<2x16x16xf32>
    %cst_23 = arith.constant 1.000000e+00 : f32
    %51 = vector.broadcast %cst_23 : f32 to vector<2x16x16xf32>
    %52 = arith.subf %51, %50 : vector<2x16x16xf32>
    %cst_24 = arith.constant -1.000000e+04 : f32
    %53 = vector.broadcast %cst_24 : f32 to vector<2x16x16xf32>
    %54 = arith.mulf %52, %53 : vector<2x16x16xf32>
    "tpu.trace_start"() <{level = 10 : i32, message = "bqd,bkd->bqk"}> : () -> ()
    %cst_25 = arith.constant dense<0.000000e+00> : vector<8x16x16xf32>
    %55 = tpu.matmul %25, %29, %cst_25 {dimension_numbers = #tpu.dot_dimension_numbers<[2], [2], [1], [1], [0, 0, 0, 1, 1, 1], [0], [0]>} : vector<8x16x32xbf16>, vector<8x16x32xbf16>, vector<8x16x16xf32> -> vector<8x16x16xf32>
    "tpu.trace_stop"() : () -> ()
    %56 = vector.shape_cast %55 : vector<8x16x16xf32> to vector<2x4x16x16xf32>
    %57 = vector.shape_cast %54 : vector<2x16x16xf32> to vector<2x1x16x16xf32>
    %58 = vector.broadcast %57 : vector<2x1x16x16xf32> to vector<2x4x16x16xf32>
    %59 = arith.addf %56, %58 : vector<2x4x16x16xf32>
    %cst_26 = arith.constant dense<0xFF800000> : vector<2x4x16xf32>
    %60 = vector.multi_reduction <maximumf>, %59, %cst_26 [3] : vector<2x4x16x16xf32> to vector<2x4x16xf32>
    %61 = vector.shape_cast %60 : vector<2x4x16xf32> to vector<2x4x16x1xf32>
    %62 = vector.broadcast %61 : vector<2x4x16x1xf32> to vector<2x4x16x16xf32>
    %63 = arith.subf %59, %62 : vector<2x4x16x16xf32>
    %64 = math.exp %63 : vector<2x4x16x16xf32>
    %cst_27 = arith.constant dense<0.000000e+00> : vector<2x4x16xf32>
    %65 = vector.multi_reduction <add>, %64, %cst_27 [3] : vector<2x4x16x16xf32> to vector<2x4x16xf32>
    %66 = vector.shape_cast %65 : vector<2x4x16xf32> to vector<2x4x16x1xf32>
    %67 = tpu.reciprocal %66 {approx = true} : vector<2x4x16x1xf32> -> vector<2x4x16x1xf32>
    %68 = vector.broadcast %67 : vector<2x4x16x1xf32> to vector<2x4x16x16xf32>
    %69 = arith.mulf %64, %68 : vector<2x4x16x16xf32>
    %70 = vector.shape_cast %69 : vector<2x4x16x16xf32> to vector<8x16x16xf32>
    %71 = arith.truncf %70 : vector<8x16x16xf32> to vector<8x16x16xbf16>
    "tpu.trace_start"() <{level = 10 : i32, message = "bqk,bkd->bqd"}> : () -> ()
    %cst_28 = arith.constant dense<0.000000e+00> : vector<8x16x32xf32>
    %72 = tpu.matmul %71, %33, %cst_28 {dimension_numbers = #tpu.dot_dimension_numbers<[2], [1], [1], [2], [0, 0, 0, 1, 1, 2], [0], [0]>} : vector<8x16x16xbf16>, vector<8x16x32xbf16>, vector<8x16x32xf32> -> vector<8x16x32xf32>
    "tpu.trace_stop"() : () -> ()
    %73 = vector.shape_cast %72 : vector<8x16x32xf32> to vector<2x4x16x32xf32>
    %74 = tpu.transpose %73, [0, 2, 1, 3] : vector<2x4x16x32xf32> -> vector<2x16x4x32xf32>
    %75 = vector.shape_cast %74 : vector<2x16x4x32xf32> to vector<32x128xf32>
    %76 = arith.truncf %75 : vector<32x128xf32> to vector<32x128xbf16>
    %c0_29 = arith.constant 0 : index
    %c0_30 = arith.constant 0 : index
    %77 = vector.load %arg9[%c0_29, %c0_30] : memref<128x128xbf16, #tpu.memory_space<vmem>>, vector<128x128xbf16>
    %cst_31 = arith.constant dense<0.000000e+00> : vector<32x128xf32>
    %78 = tpu.matmul %76, %77, %cst_31 {dimension_numbers = #tpu.dot_dimension_numbers<[1], [0], [0], [1], [0, 0, 1, 1], [], []>} : vector<32x128xbf16>, vector<128x128xbf16>, vector<32x128xf32> -> vector<32x128xf32>
    %c0_32 = arith.constant 0 : index
    %c0_33 = arith.constant 0 : index
    %79 = vector.load %arg10[%c0_32, %c0_33] : memref<1x128xf32, #tpu.memory_space<vmem>>, vector<1x128xf32>
    %80 = vector.broadcast %79 : vector<1x128xf32> to vector<32x128xf32>
    %81 = arith.addf %78, %80 : vector<32x128xf32>
    %82 = arith.addf %81, %1 : vector<32x128xf32>
    %c0_34 = arith.constant 0 : index
    %c0_35 = arith.constant 0 : index
    %83 = vector.load %arg11[%c0_34, %c0_35] : memref<1x128xf32, #tpu.memory_space<vmem>>, vector<1x128xf32>
    %c0_36 = arith.constant 0 : index
    %c0_37 = arith.constant 0 : index
    %84 = vector.load %arg12[%c0_36, %c0_37] : memref<1x128xf32, #tpu.memory_space<vmem>>, vector<1x128xf32>
    %cst_38 = arith.constant dense<0.000000e+00> : vector<32xf32>
    %85 = vector.multi_reduction <add>, %82, %cst_38 [1] : vector<32x128xf32> to vector<32xf32>
    %86 = vector.shape_cast %85 : vector<32xf32> to vector<32x1xf32>
    %cst_39 = arith.constant 1.280000e+02 : f32
    %87 = vector.broadcast %cst_39 : f32 to vector<32x1xf32>
    %88 = arith.divf %86, %87 : vector<32x1xf32>
    %89 = vector.broadcast %88 : vector<32x1xf32> to vector<32x128xf32>
    %90 = arith.subf %82, %89 : vector<32x128xf32>
    %91 = arith.mulf %90, %90 : vector<32x128xf32>
    %cst_40 = arith.constant dense<0.000000e+00> : vector<32xf32>
    %92 = vector.multi_reduction <add>, %91, %cst_40 [1] : vector<32x128xf32> to vector<32xf32>
    %93 = vector.shape_cast %92 : vector<32xf32> to vector<32x1xf32>
    %cst_41 = arith.constant 1.280000e+02 : f32
    %94 = vector.broadcast %cst_41 : f32 to vector<32x1xf32>
    %95 = arith.divf %93, %94 : vector<32x1xf32>
    %cst_42 = arith.constant 9.99999996E-13 : f32
    %96 = vector.broadcast %cst_42 : f32 to vector<32x1xf32>
    %97 = arith.addf %95, %96 : vector<32x1xf32>
    %98 = math.rsqrt %97 : vector<32x1xf32>
    %99 = vector.broadcast %98 : vector<32x1xf32> to vector<32x128xf32>
    %100 = arith.mulf %90, %99 : vector<32x128xf32>
    %101 = vector.broadcast %83 : vector<1x128xf32> to vector<32x128xf32>
    %102 = arith.mulf %101, %100 : vector<32x128xf32>
    %103 = vector.broadcast %84 : vector<1x128xf32> to vector<32x128xf32>
    %104 = arith.addf %102, %103 : vector<32x128xf32>
    %105 = arith.truncf %104 : vector<32x128xf32> to vector<32x128xbf16>
    %c0_43 = arith.constant 0 : index
    %c0_44 = arith.constant 0 : index
    %106 = vector.load %arg13[%c0_43, %c0_44] : memref<128x256xbf16, #tpu.memory_space<vmem>>, vector<128x256xbf16>
    %cst_45 = arith.constant dense<0.000000e+00> : vector<32x256xf32>
    %107 = tpu.matmul %105, %106, %cst_45 {dimension_numbers = #tpu.dot_dimension_numbers<[1], [0], [0], [1], [0, 0, 1, 1], [], []>} : vector<32x128xbf16>, vector<128x256xbf16>, vector<32x256xf32> -> vector<32x256xf32>
    %c0_46 = arith.constant 0 : index
    %c0_47 = arith.constant 0 : index
    %108 = vector.load %arg14[%c0_46, %c0_47] : memref<1x256xf32, #tpu.memory_space<vmem>>, vector<1x256xf32>
    %109 = vector.broadcast %108 : vector<1x256xf32> to vector<32x256xf32>
    %110 = arith.addf %107, %109 : vector<32x256xf32>
    %cst_48 = arith.constant 5.000000e-01 : f32
    %111 = vector.broadcast %cst_48 : f32 to vector<32x256xf32>
    %112 = arith.mulf %110, %111 : vector<32x256xf32>
    %cst_49 = arith.constant 0.707106769 : f32
    %113 = vector.broadcast %cst_49 : f32 to vector<32x256xf32>
    %114 = arith.mulf %110, %113 : vector<32x256xf32>
    %cst_50 = arith.constant 0.000000e+00 : f32
    %115 = vector.broadcast %cst_50 : f32 to vector<32x256xf32>
    %116 = arith.cmpf oge, %114, %115 : vector<32x256xf32>
    %cst_51 = arith.constant 1.000000e+00 : f32
    %cst_52 = arith.constant -1.000000e+00 : f32
    %117 = vector.broadcast %cst_51 : f32 to vector<32x256xf32>
    %118 = vector.broadcast %cst_52 : f32 to vector<32x256xf32>
    %119 = arith.select %116, %117, %118 : vector<32x256xi1>, vector<32x256xf32>
    %120 = math.absf %114 : vector<32x256xf32>
    %cst_53 = arith.constant 0.327591091 : f32
    %121 = vector.broadcast %cst_53 : f32 to vector<32x256xf32>
    %122 = arith.mulf %121, %120 : vector<32x256xf32>
    %cst_54 = arith.constant 1.000000e+00 : f32
    %123 = vector.broadcast %cst_54 : f32 to vector<32x256xf32>
    %124 = arith.addf %123, %122 : vector<32x256xf32>
    %cst_55 = arith.constant 1.000000e+00 : f32
    %125 = vector.broadcast %cst_55 : f32 to vector<32x256xf32>
    %126 = arith.divf %125, %124 : vector<32x256xf32>
    %cst_56 = arith.constant 1.06140542 : f32
    %127 = vector.broadcast %cst_56 : f32 to vector<32x256xf32>
    %128 = arith.mulf %127, %126 : vector<32x256xf32>
    %cst_57 = arith.constant -1.45315206 : f32
    %129 = vector.broadcast %cst_57 : f32 to vector<32x256xf32>
    %130 = arith.addf %128, %129 : vector<32x256xf32>
    %131 = arith.mulf %130, %126 : vector<32x256xf32>
    %cst_58 = arith.constant 1.42141378 : f32
    %132 = vector.broadcast %cst_58 : f32 to vector<32x256xf32>
    %133 = arith.addf %131, %132 : vector<32x256xf32>
    %134 = arith.mulf %133, %126 : vector<32x256xf32>
    %cst_59 = arith.constant -0.284496725 : f32
    %135 = vector.broadcast %cst_59 : f32 to vector<32x256xf32>
    %136 = arith.addf %134, %135 : vector<32x256xf32>
    %137 = arith.mulf %136, %126 : vector<32x256xf32>
    %cst_60 = arith.constant 0.254829586 : f32
    %138 = vector.broadcast %cst_60 : f32 to vector<32x256xf32>
    %139 = arith.addf %137, %138 : vector<32x256xf32>
    %140 = arith.mulf %139, %126 : vector<32x256xf32>
    %cst_61 = arith.constant 0.000000e+00 : f32
    %141 = vector.broadcast %cst_61 : f32 to vector<32x256xf32>
    %142 = arith.subf %141, %120 : vector<32x256xf32>
    %143 = arith.mulf %142, %120 : vector<32x256xf32>
    %144 = math.exp %143 : vector<32x256xf32>
    %145 = arith.mulf %140, %144 : vector<32x256xf32>
    %cst_62 = arith.constant 1.000000e+00 : f32
    %146 = vector.broadcast %cst_62 : f32 to vector<32x256xf32>
    %147 = arith.subf %146, %145 : vector<32x256xf32>
    %148 = arith.mulf %119, %147 : vector<32x256xf32>
    %cst_63 = arith.constant 1.000000e+00 : f32
    %149 = vector.broadcast %cst_63 : f32 to vector<32x256xf32>
    %150 = arith.addf %149, %148 : vector<32x256xf32>
    %151 = arith.mulf %112, %150 : vector<32x256xf32>
    %152 = arith.truncf %151 : vector<32x256xf32> to vector<32x256xbf16>
    %c0_64 = arith.constant 0 : index
    %c0_65 = arith.constant 0 : index
    %153 = vector.load %arg15[%c0_64, %c0_65] : memref<256x128xbf16, #tpu.memory_space<vmem>>, vector<256x128xbf16>
    %cst_66 = arith.constant dense<0.000000e+00> : vector<32x128xf32>
    %154 = tpu.matmul %152, %153, %cst_66 {dimension_numbers = #tpu.dot_dimension_numbers<[1], [0], [0], [1], [0, 0, 1, 1], [], []>} : vector<32x256xbf16>, vector<256x128xbf16>, vector<32x128xf32> -> vector<32x128xf32>
    %c0_67 = arith.constant 0 : index
    %c0_68 = arith.constant 0 : index
    %155 = vector.load %arg16[%c0_67, %c0_68] : memref<1x128xf32, #tpu.memory_space<vmem>>, vector<1x128xf32>
    %156 = vector.broadcast %155 : vector<1x128xf32> to vector<32x128xf32>
    %157 = arith.addf %154, %156 : vector<32x128xf32>
    %158 = arith.addf %157, %104 : vector<32x128xf32>
    %c0_69 = arith.constant 0 : index
    %c0_70 = arith.constant 0 : index
    %159 = vector.load %arg17[%c0_69, %c0_70] : memref<1x128xf32, #tpu.memory_space<vmem>>, vector<1x128xf32>
    %c0_71 = arith.constant 0 : index
    %c0_72 = arith.constant 0 : index
    %160 = vector.load %arg18[%c0_71, %c0_72] : memref<1x128xf32, #tpu.memory_space<vmem>>, vector<1x128xf32>
    %cst_73 = arith.constant dense<0.000000e+00> : vector<32xf32>
    %161 = vector.multi_reduction <add>, %158, %cst_73 [1] : vector<32x128xf32> to vector<32xf32>
    %162 = vector.shape_cast %161 : vector<32xf32> to vector<32x1xf32>
    %cst_74 = arith.constant 1.280000e+02 : f32
    %163 = vector.broadcast %cst_74 : f32 to vector<32x1xf32>
    %164 = arith.divf %162, %163 : vector<32x1xf32>
    %165 = vector.broadcast %164 : vector<32x1xf32> to vector<32x128xf32>
    %166 = arith.subf %158, %165 : vector<32x128xf32>
    %167 = arith.mulf %166, %166 : vector<32x128xf32>
    %cst_75 = arith.constant dense<0.000000e+00> : vector<32xf32>
    %168 = vector.multi_reduction <add>, %167, %cst_75 [1] : vector<32x128xf32> to vector<32xf32>
    %169 = vector.shape_cast %168 : vector<32xf32> to vector<32x1xf32>
    %cst_76 = arith.constant 1.280000e+02 : f32
    %170 = vector.broadcast %cst_76 : f32 to vector<32x1xf32>
    %171 = arith.divf %169, %170 : vector<32x1xf32>
    %cst_77 = arith.constant 9.99999996E-13 : f32
    %172 = vector.broadcast %cst_77 : f32 to vector<32x1xf32>
    %173 = arith.addf %171, %172 : vector<32x1xf32>
    %174 = math.rsqrt %173 : vector<32x1xf32>
    %175 = vector.broadcast %174 : vector<32x1xf32> to vector<32x128xf32>
    %176 = arith.mulf %166, %175 : vector<32x128xf32>
    %177 = vector.broadcast %159 : vector<1x128xf32> to vector<32x128xf32>
    %178 = arith.mulf %177, %176 : vector<32x128xf32>
    %179 = vector.broadcast %160 : vector<1x128xf32> to vector<32x128xf32>
    %180 = arith.addf %178, %179 : vector<32x128xf32>
    %181 = vector.shape_cast %180 : vector<32x128xf32> to vector<2x16x128xf32>
    %c0_78 = arith.constant 0 : index
    %c0_79 = arith.constant 0 : index
    %c0_80 = arith.constant 0 : index
    %182 = vector.load %arg19[%c0_78, %c0_79, %c0_80] : memref<2x16x128xf32, #tpu.memory_space<vmem>>, vector<2x16x128xf32>
    tpu.vector_store %arg19[%c0_78, %c0_79, %c0_80], %181 {strides = array<i32>} : memref<2x16x128xf32, #tpu.memory_space<vmem>>, vector<2x16x128xf32>,
    return
  }
  func.func @transform_0(%arg0: i32) -> (i32, i32, i32) {
    %c0_i32 = arith.constant 0 : i32
    %c0_i32_0 = arith.constant 0 : i32
    %c0_i32_1 = arith.constant 0 : i32
    return %arg0, %c0_i32, %c0_i32_0 : i32, i32, i32
  }
  func.func @transform_1(%arg0: i32) -> (i32, i32, i32) {
    %c0_i32 = arith.constant 0 : i32
    %c0_i32_0 = arith.constant 0 : i32
    %c0_i32_1 = arith.constant 0 : i32
    return %arg0, %c0_i32, %c0_i32_0 : i32, i32, i32
  }
  func.func @transform_2(%arg0: i32) -> (i32, i32) {
    %c0_i32 = arith.constant 0 : i32
    %c0_i32_0 = arith.constant 0 : i32
    %c0_i32_1 = arith.constant 0 : i32
    return %c0_i32, %c0_i32_0 : i32, i32
  }
  func.func @transform_3(%arg0: i32) -> (i32, i32) {
    %c0_i32 = arith.constant 0 : i32
    %c0_i32_0 = arith.constant 0 : i32
    %c0_i32_1 = arith.constant 0 : i32
    return %c0_i32, %c0_i32_0 : i32, i32
  }
  func.func @transform_4(%arg0: i32) -> (i32, i32) {
    %c0_i32 = arith.constant 0 : i32
    %c0_i32_0 = arith.constant 0 : i32
    %c0_i32_1 = arith.constant 0 : i32
    return %c0_i32, %c0_i32_0 : i32, i32
  }
  func.func @transform_5(%arg0: i32) -> (i32, i32) {
    %c0_i32 = arith.constant 0 : i32
    %c0_i32_0 = arith.constant 0 : i32
    %c0_i32_1 = arith.constant 0 : i32
    return %c0_i32, %c0_i32_0 : i32, i32
  }
  func.func @transform_6(%arg0: i32) -> (i32, i32) {
    %c0_i32 = arith.constant 0 : i32
    %c0_i32_0 = arith.constant 0 : i32
    %c0_i32_1 = arith.constant 0 : i32
    return %c0_i32, %c0_i32_0 : i32, i32
  }
  func.func @transform_7(%arg0: i32) -> (i32, i32) {
    %c0_i32 = arith.constant 0 : i32
    %c0_i32_0 = arith.constant 0 : i32
    %c0_i32_1 = arith.constant 0 : i32
    return %c0_i32, %c0_i32_0 : i32, i32
  }
  func.func @transform_8(%arg0: i32) -> (i32, i32) {
    %c0_i32 = arith.constant 0 : i32
    %c0_i32_0 = arith.constant 0 : i32
    %c0_i32_1 = arith.constant 0 : i32
    return %c0_i32, %c0_i32_0 : i32, i32
  }
  func.func @transform_9(%arg0: i32) -> (i32, i32) {
    %c0_i32 = arith.constant 0 : i32
    %c0_i32_0 = arith.constant 0 : i32
    %c0_i32_1 = arith.constant 0 : i32
    return %c0_i32, %c0_i32_0 : i32, i32
  }
  func.func @transform_10(%arg0: i32) -> (i32, i32) {
    %c0_i32 = arith.constant 0 : i32
    %c0_i32_0 = arith.constant 0 : i32
    %c0_i32_1 = arith.constant 0 : i32
    return %c0_i32, %c0_i32_0 : i32, i32
  }
  func.func @transform_11(%arg0: i32) -> (i32, i32) {
    %c0_i32 = arith.constant 0 : i32
    %c0_i32_0 = arith.constant 0 : i32
    %c0_i32_1 = arith.constant 0 : i32
    return %c0_i32, %c0_i32_0 : i32, i32
  }
  func.func @transform_12(%arg0: i32) -> (i32, i32) {
    %c0_i32 = arith.constant 0 : i32
    %c0_i32_0 = arith.constant 0 : i32
    %c0_i32_1 = arith.constant 0 : i32
    return %c0_i32, %c0_i32_0 : i32, i32
  }
  func.func @transform_13(%arg0: i32) -> (i32, i32) {
    %c0_i32 = arith.constant 0 : i32
    %c0_i32_0 = arith.constant 0 : i32
    %c0_i32_1 = arith.constant 0 : i32
    return %c0_i32, %c0_i32_0 : i32, i32
  }
  func.func @transform_14(%arg0: i32) -> (i32, i32) {
    %c0_i32 = arith.constant 0 : i32
    %c0_i32_0 = arith.constant 0 : i32
    %c0_i32_1 = arith.constant 0 : i32
    return %c0_i32, %c0_i32_0 : i32, i32
  }
  func.func @transform_15(%arg0: i32) -> (i32, i32) {
    %c0_i32 = arith.constant 0 : i32
    %c0_i32_0 = arith.constant 0 : i32
    %c0_i32_1 = arith.constant 0 : i32
    return %c0_i32, %c0_i32_0 : i32, i32
  }
  func.func @transform_16(%arg0: i32) -> (i32, i32) {
    %c0_i32 = arith.constant 0 : i32
    %c0_i32_0 = arith.constant 0 : i32
    %c0_i32_1 = arith.constant 0 : i32
    return %c0_i32, %c0_i32_0 : i32, i32
  }
  func.func @transform_17(%arg0: i32) -> (i32, i32) {
    %c0_i32 = arith.constant 0 : i32
    %c0_i32_0 = arith.constant 0 : i32
    %c0_i32_1 = arith.constant 0 : i32
    return %c0_i32, %c0_i32_0 : i32, i32
  }
  func.func @transform_18(%arg0: i32) -> (i32, i32, i32) {
    %c0_i32 = arith.constant 0 : i32
    %c0_i32_0 = arith.constant 0 : i32
    %c0_i32_1 = arith.constant 0 : i32
    return %arg0, %c0_i32, %c0_i32_0 : i32, i32, i32
  }
}

module attributes {stable_mosaic.version = 11 : i64} {
  func.func @_bert_layer_kernel(%arg0: i32, %arg1: memref<2x16x128xf32, #tpu.memory_space<vmem>>, %arg2: memref<2x1x16xf32, #tpu.memory_space<vmem>>, %arg3: memref<128x128xbf16, #tpu.memory_space<vmem>>, %arg4: memref<1x128xf32, #tpu.memory_space<vmem>>, %arg5: memref<128x128xbf16, #tpu.memory_space<vmem>>, %arg6: memref<1x128xf32, #tpu.memory_space<vmem>>, %arg7: memref<128x128xbf16, #tpu.memory_space<vmem>>, %arg8: memref<1x128xf32, #tpu.memory_space<vmem>>, %arg9: memref<128x128xbf16, #tpu.memory_space<vmem>>, %arg10: memref<1x128xf32, #tpu.memory_space<vmem>>, %arg11: memref<1x128xf32, #tpu.memory_space<vmem>>, %arg12: memref<1x128xf32, #tpu.memory_space<vmem>>, %arg13: memref<128x256xbf16, #tpu.memory_space<vmem>>, %arg14: memref<1x256xf32, #tpu.memory_space<vmem>>, %arg15: memref<256x128xbf16, #tpu.memory_space<vmem>>, %arg16: memref<1x128xf32, #tpu.memory_space<vmem>>, %arg17: memref<1x128xf32, #tpu.memory_space<vmem>>, %arg18: memref<1x128xf32, #tpu.memory_space<vmem>>, %arg19: memref<2x16x128xf32, #tpu.memory_space<vmem>>) attributes {dimension_semantics = [#tpu.dimension_semantics<parallel>], iteration_bounds = array<i64: 2>, scalar_prefetch = 0 : i64, scratch_operands = 0 : i64, tpu.core_type = #tpu.core_type<tc>, window_params = [{transform_indices = @transform_0, window_bounds = array<i64: 2, 16, 128>}, {transform_indices = @transform_1, window_bounds = array<i64: 2, 1, 16>}, {pipeline_mode = #tpu.pipeline_mode<synchronous>, transform_indices = @transform_2, window_bounds = array<i64: 128, 128>}, {pipeline_mode = #tpu.pipeline_mode<synchronous>, transform_indices = @transform_3, window_bounds = array<i64: 1, 128>}, {pipeline_mode = #tpu.pipeline_mode<synchronous>, transform_indices = @transform_4, window_bounds = array<i64: 128, 128>}, {pipeline_mode = #tpu.pipeline_mode<synchronous>, transform_indices = @transform_5, window_bounds = array<i64: 1, 128>}, {pipeline_mode = #tpu.pipeline_mode<synchronous>, transform_indices = @transform_6, window_bounds = array<i64: 128, 128>}, {pipeline_mode = #tpu.pipeline_mode<synchronous>, transform_indices = @transform_7, window_bounds = array<i64: 1, 128>}, {pipeline_mode = #tpu.pipeline_mode<synchronous>, transform_indices = @transform_8, window_bounds = array<i64: 128, 128>}, {pipeline_mode = #tpu.pipeline_mode<synchronous>, transform_indices = @transform_9, window_bounds = array<i64: 1, 128>}, {pipeline_mode = #tpu.pipeline_mode<synchronous>, transform_indices = @transform_10, window_bounds = array<i64: 1, 128>}, {pipeline_mode = #tpu.pipeline_mode<synchronous>, transform_indices = @transform_11, window_bounds = array<i64: 1, 128>}, {pipeline_mode = #tpu.pipeline_mode<synchronous>, transform_indices = @transform_12, window_bounds = array<i64: 128, 256>}, {pipeline_mode = #tpu.pipeline_mode<synchronous>, transform_indices = @transform_13, window_bounds = array<i64: 1, 256>}, {pipeline_mode = #tpu.pipeline_mode<synchronous>, transform_indices = @transform_14, window_bounds = array<i64: 256, 128>}, {pipeline_mode = #tpu.pipeline_mode<synchronous>, transform_indices = @transform_15, window_bounds = array<i64: 1, 128>}, {pipeline_mode = #tpu.pipeline_mode<synchronous>, transform_indices = @transform_16, window_bounds = array<i64: 1, 128>}, {pipeline_mode = #tpu.pipeline_mode<synchronous>, transform_indices = @transform_17, window_bounds = array<i64: 1, 128>}, {transform_indices = @transform_18, window_bounds = array<i64: 2, 16, 128>}]} {
    %c0 = arith.constant 0 : index
    %c0_0 = arith.constant 0 : index
    %c0_1 = arith.constant 0 : index
    %0 = vector.load %arg1[%c0, %c0_0, %c0_1] : memref<2x16x128xf32, #tpu.memory_space<vmem>>, vector<2x16x128xf32>
    %1 = vector.shape_cast %0 : vector<2x16x128xf32> to vector<32x128xf32>
    %2 = arith.truncf %1 : vector<32x128xf32> to vector<32x128xbf16>
    %c0_2 = arith.constant 0 : index
    %c0_3 = arith.constant 0 : index
    %3 = vector.load %arg3[%c0_2, %c0_3] : memref<128x128xbf16, #tpu.memory_space<vmem>>, vector<128x128xbf16>
    %cst = arith.constant dense<0.000000e+00> : vector<32x128xf32>
    %4 = tpu.matmul %2, %3, %cst {dimension_numbers = #tpu.dot_dimension_numbers<[1], [0], [0], [1], [0, 0, 1, 1], [], []>} : vector<32x128xbf16>, vector<128x128xbf16>, vector<32x128xf32> -> vector<32x128xf32>
    %c0_4 = arith.constant 0 : index
    %c0_5 = arith.constant 0 : index
    %5 = vector.load %arg4[%c0_4, %c0_5] : memref<1x128xf32, #tpu.memory_space<vmem>>, vector<1x128xf32>
    %6 = vector.broadcast %5 : vector<1x128xf32> to vector<32x128xf32>
    %7 = arith.addf %4, %6 : vector<32x128xf32>
    %cst_6 = arith.constant 0.176776692 : f32
    %8 = vector.broadcast %cst_6 : f32 to vector<32x128xf32>
    %9 = arith.mulf %7, %8 : vector<32x128xf32>
    %10 = arith.truncf %1 : vector<32x128xf32> to vector<32x128xbf16>
    %c0_7 = arith.constant 0 : index
    %c0_8 = arith.constant 0 : index
    %11 = vector.load %arg5[%c0_7, %c0_8] : memref<128x128xbf16, #tpu.memory_space<vmem>>, vector<128x128xbf16>
    %cst_9 = arith.constant dense<0.000000e+00> : vector<32x128xf32>
    %12 = tpu.matmul %10, %11, %cst_9 {dimension_numbers = #tpu.dot_dimension_numbers<[1], [0], [0], [1], [0, 0, 1, 1], [], []>} : vector<32x128xbf16>, vector<128x128xbf16>, vector<32x128xf32> -> vector<32x128xf32>
    %c0_10 = arith.constant 0 : index
    %c0_11 = arith.constant 0 : index
    %13 = vector.load %arg6[%c0_10, %c0_11] : memref<1x128xf32, #tpu.memory_space<vmem>>, vector<1x128xf32>
    %14 = vector.broadcast %13 : vector<1x128xf32> to vector<32x128xf32>
    %15 = arith.addf %12, %14 : vector<32x128xf32>
    %16 = arith.truncf %1 : vector<32x128xf32> to vector<32x128xbf16>
    %c0_12 = arith.constant 0 : index
    %c0_13 = arith.constant 0 : index
    %17 = vector.load %arg7[%c0_12, %c0_13] : memref<128x128xbf16, #tpu.memory_space<vmem>>, vector<128x128xbf16>
    %cst_14 = arith.constant dense<0.000000e+00> : vector<32x128xf32>
    %18 = tpu.matmul %16, %17, %cst_14 {dimension_numbers = #tpu.dot_dimension_numbers<[1], [0], [0], [1], [0, 0, 1, 1], [], []>} : vector<32x128xbf16>, vector<128x128xbf16>, vector<32x128xf32> -> vector<32x128xf32>
    %c0_15 = arith.constant 0 : index
    %c0_16 = arith.constant 0 : index
    %19 = vector.load %arg8[%c0_15, %c0_16] : memref<1x128xf32, #tpu.memory_space<vmem>>, vector<1x128xf32>
    %20 = vector.broadcast %19 : vector<1x128xf32> to vector<32x128xf32>
    %21 = arith.addf %18, %20 : vector<32x128xf32>
    %22 = vector.shape_cast %9 : vector<32x128xf32> to vector<2x16x4x32xf32>
    %23 = tpu.transpose %22, [0, 2, 1, 3] : vector<2x16x4x32xf32> -> vector<2x4x16x32xf32>
    %24 = vector.shape_cast %23 : vector<2x4x16x32xf32> to vector<8x16x32xf32>
    %25 = arith.truncf %24 : vector<8x16x32xf32> to vector<8x16x32xbf16>
    %26 = vector.shape_cast %15 : vector<32x128xf32> to vector<2x16x4x32xf32>
    %27 = tpu.transpose %26, [0, 2, 1, 3] : vector<2x16x4x32xf32> -> vector<2x4x16x32xf32>
    %28 = vector.shape_cast %27 : vector<2x4x16x32xf32> to vector<8x16x32xf32>
    %29 = arith.truncf %28 : vector<8x16x32xf32> to vector<8x16x32xbf16>
    %30 = vector.shape_cast %21 : vector<32x128xf32> to vector<2x16x4x32xf32>
    %31 = tpu.transpose %30, [0, 2, 1, 3] : vector<2x16x4x32xf32> -> vector<2x4x16x32xf32>
    %32 = vector.shape_cast %31 : vector<2x4x16x32xf32> to vector<8x16x32xf32>
    %33 = arith.truncf %32 : vector<8x16x32xf32> to vector<8x16x32xbf16>
    %34 = tpu.iota {dimensions = array<i32: 0>} : vector<16x16xi32>
    %35 = tpu.iota {dimensions = array<i32: 1>} : vector<16x16xi32>
    %c8_i32 = arith.constant 8 : i32
    %36 = vector.broadcast %c8_i32 : i32 to vector<16x16xi32>
    %37 = arith.cmpi slt, %35, %36 : vector<16x16xi32>
    %c8_i32_17 = arith.constant 8 : i32
    %38 = vector.broadcast %c8_i32_17 : i32 to vector<16x16xi32>
    %39 = arith.cmpi sge, %34, %38 : vector<16x16xi32>
    %40 = arith.cmpi sle, %35, %34 : vector<16x16xi32>
    %41 = arith.andi %39, %40 : vector<16x16xi1>
    %42 = arith.ori %37, %41 : vector<16x16xi1>
    %cst_18 = arith.constant 1.000000e+00 : f32
    %cst_19 = arith.constant 0.000000e+00 : f32
    %43 = vector.broadcast %cst_18 : f32 to vector<16x16xf32>
    %44 = vector.broadcast %cst_19 : f32 to vector<16x16xf32>
    %45 = arith.select %42, %43, %44 : vector<16x16xi1>, vector<16x16xf32>
    %c0_20 = arith.constant 0 : index
    %c0_21 = arith.constant 0 : index
    %c0_22 = arith.constant 0 : index
    %46 = vector.load %arg2[%c0_20, %c0_21, %c0_22] : memref<2x1x16xf32, #tpu.memory_space<vmem>>, vector<2x1x16xf32>
    %47 = vector.shape_cast %45 : vector<16x16xf32> to vector<1x16x16xf32>
    %48 = vector.broadcast %47 : vector<1x16x16xf32> to vector<2x16x16xf32>
    %49 = vector.broadcast %46 : vector<2x1x16xf32> to vector<2x16x16xf32>
    %50 = arith.mulf %48, %49 : vector<2x16x16xf32>
    %cst_23 = arith.constant 1.000000e+00 : f32
    %51 = vector.broadcast %cst_23 : f32 to vector<2x16x16xf32>
    %52 = arith.subf %51, %50 : vector<2x16x16xf32>
    %cst_24 = arith.constant -1.000000e+04 : f32
    %53 = vector.broadcast %cst_24 : f32 to vector<2x16x16xf32>
    %54 = arith.mulf %52, %53 : vector<2x16x16xf32>
    "tpu.trace_start"() <{level = 10 : i32, message = "bqd,bkd->bqk"}> : () -> ()
    %cst_25 = arith.constant dense<0.000000e+00> : vector<8x16x16xf32>
    %55 = tpu.matmul %25, %29, %cst_25 {dimension_numbers = #tpu.dot_dimension_numbers<[2], [2], [1], [1], [0, 0, 0, 1, 1, 1], [0], [0]>} : vector<8x16x32xbf16>, vector<8x16x32xbf16>, vector<8x16x16xf32> -> vector<8x16x16xf32>
    "tpu.trace_stop"() : () -> ()
    %56 = vector.shape_cast %55 : vector<8x16x16xf32> to vector<2x4x16x16xf32>
    %57 = vector.shape_cast %54 : vector<2x16x16xf32> to vector<2x1x16x16xf32>
    %58 = vector.broadcast %57 : vector<2x1x16x16xf32> to vector<2x4x16x16xf32>
    %59 = arith.addf %56, %58 : vector<2x4x16x16xf32>
    %cst_26 = arith.constant dense<0xFF800000> : vector<2x4x16xf32>
    %60 = vector.multi_reduction <maximumf>, %59, %cst_26 [3] : vector<2x4x16x16xf32> to vector<2x4x16xf32>
    %61 = vector.shape_cast %60 : vector<2x4x16xf32> to vector<2x4x16x1xf32>
    %62 = vector.broadcast %61 : vector<2x4x16x1xf32> to vector<2x4x16x16xf32>
    %63 = arith.subf %59, %62 : vector<2x4x16x16xf32>
    %64 = math.exp %63 : vector<2x4x16x16xf32>
    %cst_27 = arith.constant dense<0.000000e+00> : vector<2x4x16xf32>
    %65 = vector.multi_reduction <add>, %64, %cst_27 [3] : vector<2x4x16x16xf32> to vector<2x4x16xf32>
    %66 = vector.shape_cast %65 : vector<2x4x16xf32> to vector<2x4x16x1xf32>
    %67 = tpu.reciprocal %66 {approx = true} : vector<2x4x16x1xf32> -> vector<2x4x16x1xf32>
    %68 = vector.broadcast %67 : vector<2x4x16x1xf32> to vector<2x4x16x16xf32>
    %69 = arith.mulf %64, %68 : vector<2x4x16x16xf32>
    %70 = vector.shape_cast %69 : vector<2x4x16x16xf32> to vector<8x16x16xf32>
    %71 = arith.truncf %70 : vector<8x16x16xf32> to vector<8x16x16xbf16>
    "tpu.trace_start"() <{level = 10 : i32, message = "bqk,bkd->bqd"}> : () -> ()
    %cst_28 = arith.constant dense<0.000000e+00> : vector<8x16x32xf32>
    %72 = tpu.matmul %71, %33, %cst_28 {dimension_numbers = #tpu.dot_dimension_numbers<[2], [1], [1], [2], [0, 0, 0, 1, 1, 2], [0], [0]>} : vector<8x16x16xbf16>, vector<8x16x32xbf16>, vector<8x16x32xf32> -> vector<8x16x32xf32>
    "tpu.trace_stop"() : () -> ()
    %73 = vector.shape_cast %72 : vector<8x16x32xf32> to vector<2x4x16x32xf32>
    %74 = tpu.transpose %73, [0, 2, 1, 3] : vector<2x4x16x32xf32> -> vector<2x16x4x32xf32>
    %75 = vector.shape_cast %74 : vector<2x16x4x32xf32> to vector<32x128xf32>
    %76 = arith.truncf %75 : vector<32x128xf32> to vector<32x128xbf16>
    %c0_29 = arith.constant 0 : index
    %c0_30 = arith.constant 0 : index
    %77 = vector.load %arg9[%c0_29, %c0_30] : memref<128x128xbf16, #tpu.memory_space<vmem>>, vector<128x128xbf16>
    %cst_31 = arith.constant dense<0.000000e+00> : vector<32x128xf32>
    %78 = tpu.matmul %76, %77, %cst_31 {dimension_numbers = #tpu.dot_dimension_numbers<[1], [0], [0], [1], [0, 0, 1, 1], [], []>} : vector<32x128xbf16>, vector<128x128xbf16>, vector<32x128xf32> -> vector<32x128xf32>
    %c0_32 = arith.constant 0 : index
    %c0_33 = arith.constant 0 : index
    %79 = vector.load %arg10[%c0_32, %c0_33] : memref<1x128xf32, #tpu.memory_space<vmem>>, vector<1x128xf32>
    %80 = vector.broadcast %79 : vector<1x128xf32> to vector<32x128xf32>
    %81 = arith.addf %78, %80 : vector<32x128xf32>
    %82 = arith.addf %81, %1 : vector<32x128xf32>
    %c0_34 = arith.constant 0 : index
    %c0_35 = arith.constant 0 : index
    %83 = vector.load %arg11[%c0_34, %c0_35] : memref<1x128xf32, #tpu.memory_space<vmem>>, vector<1x128xf32>
    %c0_36 = arith.constant 0 : index
    %c0_37 = arith.constant 0 : index
    %84 = vector.load %arg12[%c0_36, %c0_37] : memref<1x128xf32, #tpu.memory_space<vmem>>, vector<1x128xf32>
    %cst_38 = arith.constant dense<0.000000e+00> : vector<32xf32>
    %85 = vector.multi_reduction <add>, %82, %cst_38 [1] : vector<32x128xf32> to vector<32xf32>
    %86 = vector.shape_cast %85 : vector<32xf32> to vector<32x1xf32>
    %cst_39 = arith.constant 1.280000e+02 : f32
    %87 = vector.broadcast %cst_39 : f32 to vector<32x1xf32>
    %88 = arith.divf %86, %87 : vector<32x1xf32>
    %89 = vector.broadcast %88 : vector<32x1xf32> to vector<32x128xf32>
    %90 = arith.subf %82, %89 : vector<32x128xf32>
    %91 = arith.mulf %90, %90 : vector<32x128xf32>
    %cst_40 = arith.constant dense<0.000000e+00> : vector<32xf32>
    %92 = vector.multi_reduction <add>, %91, %cst_40 [1] : vector<32x128xf32> to vector<32xf32>
    %93 = vector.shape_cast %92 : vector<32xf32> to vector<32x1xf32>
    %cst_41 = arith.constant 1.280000e+02 : f32
    %94 = vector.broadcast %cst_41 : f32 to vector<32x1xf32>
    %95 = arith.divf %93, %94 : vector<32x1xf32>
    %cst_42 = arith.constant 9.99999996E-13 : f32
    %96 = vector.broadcast %cst_42 : f32 to vector<32x1xf32>
    %97 = arith.addf %95, %96 : vector<32x1xf32>
    %98 = math.rsqrt %97 : vector<32x1xf32>
    %99 = vector.broadcast %98 : vector<32x1xf32> to vector<32x128xf32>
    %100 = arith.mulf %90, %99 : vector<32x128xf32>
    %101 = vector.broadcast %83 : vector<1x128xf32> to vector<32x128xf32>
    %102 = arith.mulf %101, %100 : vector<32x128xf32>
    %103 = vector.broadcast %84 : vector<1x128xf32> to vector<32x128xf32>
    %104 = arith.addf %102, %103 : vector<32x128xf32>
    %105 = arith.truncf %104 : vector<32x128xf32> to vector<32x128xbf16>
    %c0_43 = arith.constant 0 : index
    %c0_44 = arith.constant 0 : index
    %106 = vector.load %arg13[%c0_43, %c0_44] : memref<128x256xbf16, #tpu.memory_space<vmem>>, vector<128x256xbf16>
    %cst_45 = arith.constant dense<0.000000e+00> : vector<32x256xf32>
    %107 = tpu.matmul %105, %106, %cst_45 {dimension_numbers = #tpu.dot_dimension_numbers<[1], [0], [0], [1], [0, 0, 1, 1], [], []>} : vector<32x128xbf16>, vector<128x256xbf16>, vector<32x256xf32> -> vector<32x256xf32>
    %c0_46 = arith.constant 0 : index
    %c0_47 = arith.constant 0 : index
    %108 = vector.load %arg14[%c0_46, %c0_47] : memref<1x256xf32, #tpu.memory_space<vmem>>, vector<1x256xf32>
    %109 = vector.broadcast %108 : vector<1x256xf32> to vector<32x256xf32>
    %110 = arith.addf %107, %109 : vector<32x256xf32>
    %cst_48 = arith.constant 5.000000e-01 : f32
    %111 = vector.broadcast %cst_48 : f32 to vector<32x256xf32>
    %112 = arith.mulf %110, %111 : vector<32x256xf32>
    %cst_49 = arith.constant 0.707106769 : f32
    %113 = vector.broadcast %cst_49 : f32 to vector<32x256xf32>
    %114 = arith.mulf %110, %113 : vector<32x256xf32>
    %cst_50 = arith.constant 0.000000e+00 : f32
    %115 = vector.broadcast %cst_50 : f32 to vector<32x256xf32>
    %116 = arith.cmpf oge, %114, %115 : vector<32x256xf32>
    %cst_51 = arith.constant 1.000000e+00 : f32
    %cst_52 = arith.constant -1.000000e+00 : f32
    %117 = vector.broadcast %cst_51 : f32 to vector<32x256xf32>
    %118 = vector.broadcast %cst_52 : f32 to vector<32x256xf32>
    %119 = arith.select %116, %117, %118 : vector<32x256xi1>, vector<32x256xf32>
    %120 = math.absf %114 : vector<32x256xf32>
    %cst_53 = arith.constant 0.327591091 : f32
    %121 = vector.broadcast %cst_53 : f32 to vector<32x256xf32>
    %122 = arith.mulf %121, %120 : vector<32x256xf32>
    %cst_54 = arith.constant 1.000000e+00 : f32
    %123 = vector.broadcast %cst_54 : f32 to vector<32x256xf32>
    %124 = arith.addf %123, %122 : vector<32x256xf32>
    %cst_55 = arith.constant 1.000000e+00 : f32
    %125 = vector.broadcast %cst_55 : f32 to vector<32x256xf32>
    %126 = arith.divf %125, %124 : vector<32x256xf32>
    %cst_56 = arith.constant 1.06140542 : f32
    %127 = vector.broadcast %cst_56 : f32 to vector<32x256xf32>
    %128 = arith.mulf %127, %126 : vector<32x256xf32>
    %cst_57 = arith.constant -1.45315206 : f32
    %129 = vector.broadcast %cst_57 : f32 to vector<32x256xf32>
    %130 = arith.addf %128, %129 : vector<32x256xf32>
    %131 = arith.mulf %130, %126 : vector<32x256xf32>
    %cst_58 = arith.constant 1.42141378 : f32
    %132 = vector.broadcast %cst_58 : f32 to vector<32x256xf32>
    %133 = arith.addf %131, %132 : vector<32x256xf32>
    %134 = arith.mulf %133, %126 : vector<32x256xf32>
    %cst_59 = arith.constant -0.284496725 : f32
    %135 = vector.broadcast %cst_59 : f32 to vector<32x256xf32>
    %136 = arith.addf %134, %135 : vector<32x256xf32>
    %137 = arith.mulf %136, %126 : vector<32x256xf32>
    %cst_60 = arith.constant 0.254829586 : f32
    %138 = vector.broadcast %cst_60 : f32 to vector<32x256xf32>
    %139 = arith.addf %137, %138 : vector<32x256xf32>
    %140 = arith.mulf %139, %126 : vector<32x256xf32>
    %cst_61 = arith.constant 0.000000e+00 : f32
    %141 = vector.broadcast %cst_61 : f32 to vector<32x256xf32>
    %142 = arith.subf %141, %120 : vector<32x256xf32>
    %143 = arith.mulf %142, %120 : vector<32x256xf32>
    %144 = math.exp %143 : vector<32x256xf32>
    %145 = arith.mulf %140, %144 : vector<32x256xf32>
    %cst_62 = arith.constant 1.000000e+00 : f32
    %146 = vector.broadcast %cst_62 : f32 to vector<32x256xf32>
    %147 = arith.subf %146, %145 : vector<32x256xf32>
    %148 = arith.mulf %119, %147 : vector<32x256xf32>
    %cst_63 = arith.constant 1.000000e+00 : f32
    %149 = vector.broadcast %cst_63 : f32 to vector<32x256xf32>
    %150 = arith.addf %149, %148 : vector<32x256xf32>
    %151 = arith.mulf %112, %150 : vector<32x256xf32>
    %152 = arith.truncf %151 : vector<32x256xf32> to vector<32x256xbf16>
    %c0_64 = arith.constant 0 : index
    %c0_65 = arith.constant 0 : index
    %153 = vector.load %arg15[%c0_64, %c0_65] : memref<256x128xbf16, #tpu.memory_space<vmem>>, vector<256x128xbf16>
    %cst_66 = arith.constant dense<0.000000e+00> : vector<32x128xf32>
    %154 = tpu.matmul %152, %153, %cst_66 {dimension_numbers = #tpu.dot_dimension_numbers<[1], [0], [0], [1], [0, 0, 1, 1], [], []>} : vector<32x256xbf16>, vector<256x128xbf16>, vector<32x128xf32> -> vector<32x128xf32>
    %c0_67 = arith.constant 0 : index
    %c0_68 = arith.constant 0 : index
    %155 = vector.load %arg16[%c0_67, %c0_68] : memref<1x128xf32, #tpu.memory_space<vmem>>, vector<1x128xf32>
    %156 = vector.broadcast %155 : vector<1x128xf32> to vector<32x128xf32>
    %157 = arith.addf %154, %156 : vector<32x128xf32>
    %158 = arith.addf %157, %104 : vector<32x128xf32>
    %c0_69 = arith.constant 0 : index
    %c0_70 = arith.constant 0 : index
    %159 = vector.load %arg17[%c0_69, %c0_70] : memref<1x128xf32, #tpu.memory_space<vmem>>, vector<1x128xf32>
    %c0_71 = arith.constant 0 : index
    %c0_72 = arith.constant 0 : index
    %160 = vector.load %arg18[%c0_71, %c0_72] : memref<1x128xf32, #tpu.memory_space<vmem>>, vector<1x128xf32>
    %cst_73 = arith.constant dense<0.000000e+00> : vector<32xf32>
    %161 = vector.multi_reduction <add>, %158, %cst_73 [1] : vector<32x128xf32> to vector<32xf32>
    %162 = vector.shape_cast %161 : vector<32xf32> to vector<32x1xf32>
    %cst_74 = arith.constant 1.280000e+02 : f32
    %163 = vector.broadcast %cst_74 : f32 to vector<32x1xf32>
    %164 = arith.divf %162, %163 : vector<32x1xf32>
    %165 = vector.broadcast %164 : vector<32x1xf32> to vector<32x128xf32>
    %166 = arith.subf %158, %165 : vector<32x128xf32>
    %167 = arith.mulf %166, %166 : vector<32x128xf32>
    %cst_75 = arith.constant dense<0.000000e+00> : vector<32xf32>
    %168 = vector.multi_reduction <add>, %167, %cst_75 [1] : vector<32x128xf32> to vector<32xf32>
    %169 = vector.shape_cast %168 : vector<32xf32> to vector<32x1xf32>
    %cst_76 = arith.constant 1.280000e+02 : f32
    %170 = vector.broadcast %cst_76 : f32 to vector<32x1xf32>
    %171 = arith.divf %169, %170 : vector<32x1xf32>
    %cst_77 = arith.constant 9.99999996E-13 : f32
    %172 = vector.broadcast %cst_77 : f32 to vector<32x1xf32>
    %173 = arith.addf %171, %172 : vector<32x1xf32>
    %174 = math.rsqrt %173 : vector<32x1xf32>
    %175 = vector.broadcast %174 : vector<32x1xf32> to vector<32x128xf32>
    %176 = arith.mulf %166, %175 : vector<32x128xf32>
    %177 = vector.broadcast %159 : vector<1x128xf32> to vector<32x128xf32>
    %178 = arith.mulf %177, %176 : vector<32x128xf32>
    %179 = vector.broadcast %160 : vector<1x128xf32> to vector<32x128xf32>
    %180 = arith.addf %178, %179 : vector<32x128xf32>
    %181 = vector.shape_cast %180 : vector<32x128xf32> to vector<2x16x128xf32>
    %c0_78 = arith.constant 0 : index
    %c0_79 = arith.constant 0 : index
    %c0_80 = arith.constant 0 : index
    %182 = vector.load %arg19[%c0_78, %c0_79, %c0_80] : memref<2x16x128xf32, #tpu.memory_space<vmem>>, vector<2x16x128xf32>
    tpu.vector_store %arg19[%c0_78, %c0_79, %c0_80], %181 {strides = array<i32>} : memref<2x16x128xf32, #tpu.memory_space<vmem>>, vector<2x16x128xf32>,
    return
  }
  func.func @transform_0(%arg0: i32) -> (i32, i32, i32) {
    %c0_i32 = arith.constant 0 : i32
    %c0_i32_0 = arith.constant 0 : i32
    %c0_i32_1 = arith.constant 0 : i32
    return %arg0, %c0_i32, %c0_i32_0 : i32, i32, i32
  }
  func.func @transform_1(%arg0: i32) -> (i32, i32, i32) {
    %c0_i32 = arith.constant 0 : i32
    %c0_i32_0 = arith.constant 0 : i32
    %c0_i32_1 = arith.constant 0 : i32
    return %arg0, %c0_i32, %c0_i32_0 : i32, i32, i32
  }
  func.func @transform_2(%arg0: i32) -> (i32, i32) {
    %c0_i32 = arith.constant 0 : i32
    %c0_i32_0 = arith.constant 0 : i32
    %c0_i32_1 = arith.constant 0 : i32
    return %c0_i32, %c0_i32_0 : i32, i32
  }
  func.func @transform_3(%arg0: i32) -> (i32, i32) {
    %c0_i32 = arith.constant 0 : i32
    %c0_i32_0 = arith.constant 0 : i32
    %c0_i32_1 = arith.constant 0 : i32
    return %c0_i32, %c0_i32_0 : i32, i32
  }
  func.func @transform_4(%arg0: i32) -> (i32, i32) {
    %c0_i32 = arith.constant 0 : i32
    %c0_i32_0 = arith.constant 0 : i32
    %c0_i32_1 = arith.constant 0 : i32
    return %c0_i32, %c0_i32_0 : i32, i32
  }
  func.func @transform_5(%arg0: i32) -> (i32, i32) {
    %c0_i32 = arith.constant 0 : i32
    %c0_i32_0 = arith.constant 0 : i32
    %c0_i32_1 = arith.constant 0 : i32
    return %c0_i32, %c0_i32_0 : i32, i32
  }
  func.func @transform_6(%arg0: i32) -> (i32, i32) {
    %c0_i32 = arith.constant 0 : i32
    %c0_i32_0 = arith.constant 0 : i32
    %c0_i32_1 = arith.constant 0 : i32
    return %c0_i32, %c0_i32_0 : i32, i32
  }
  func.func @transform_7(%arg0: i32) -> (i32, i32) {
    %c0_i32 = arith.constant 0 : i32
    %c0_i32_0 = arith.constant 0 : i32
    %c0_i32_1 = arith.constant 0 : i32
    return %c0_i32, %c0_i32_0 : i32, i32
  }
  func.func @transform_8(%arg0: i32) -> (i32, i32) {
    %c0_i32 = arith.constant 0 : i32
    %c0_i32_0 = arith.constant 0 : i32
    %c0_i32_1 = arith.constant 0 : i32
    return %c0_i32, %c0_i32_0 : i32, i32
  }
  func.func @transform_9(%arg0: i32) -> (i32, i32) {
    %c0_i32 = arith.constant 0 : i32
    %c0_i32_0 = arith.constant 0 : i32
    %c0_i32_1 = arith.constant 0 : i32
    return %c0_i32, %c0_i32_0 : i32, i32
  }
  func.func @transform_10(%arg0: i32) -> (i32, i32) {
    %c0_i32 = arith.constant 0 : i32
    %c0_i32_0 = arith.constant 0 : i32
    %c0_i32_1 = arith.constant 0 : i32
    return %c0_i32, %c0_i32_0 : i32, i32
  }
  func.func @transform_11(%arg0: i32) -> (i32, i32) {
    %c0_i32 = arith.constant 0 : i32
    %c0_i32_0 = arith.constant 0 : i32
    %c0_i32_1 = arith.constant 0 : i32
    return %c0_i32, %c0_i32_0 : i32, i32
  }
  func.func @transform_12(%arg0: i32) -> (i32, i32) {
    %c0_i32 = arith.constant 0 : i32
    %c0_i32_0 = arith.constant 0 : i32
    %c0_i32_1 = arith.constant 0 : i32
    return %c0_i32, %c0_i32_0 : i32, i32
  }
  func.func @transform_13(%arg0: i32) -> (i32, i32) {
    %c0_i32 = arith.constant 0 : i32
    %c0_i32_0 = arith.constant 0 : i32
    %c0_i32_1 = arith.constant 0 : i32
    return %c0_i32, %c0_i32_0 : i32, i32
  }
  func.func @transform_14(%arg0: i32) -> (i32, i32) {
    %c0_i32 = arith.constant 0 : i32
    %c0_i32_0 = arith.constant 0 : i32
    %c0_i32_1 = arith.constant 0 : i32
    return %c0_i32, %c0_i32_0 : i32, i32
  }
  func.func @transform_15(%arg0: i32) -> (i32, i32) {
    %c0_i32 = arith.constant 0 : i32
    %c0_i32_0 = arith.constant 0 : i32
    %c0_i32_1 = arith.constant 0 : i32
    return %c0_i32, %c0_i32_0 : i32, i32
  }
  func.func @transform_16(%arg0: i32) -> (i32, i32) {
    %c0_i32 = arith.constant 0 : i32
    %c0_i32_0 = arith.constant 0 : i32
    %c0_i32_1 = arith.constant 0 : i32
    return %c0_i32, %c0_i32_0 : i32, i32
  }
  func.func @transform_17(%arg0: i32) -> (i32, i32) {
    %c0_i32 = arith.constant 0 : i32
    %c0_i32_0 = arith.constant 0 : i32
    %c0_i32_1 = arith.constant 0 : i32
    return %c0_i32, %c0_i32_0 : i32, i32
  }
  func.func @transform_18(%arg0: i32) -> (i32, i32, i32) {
    %c0_i32 = arith.constant 0 : i32
    %c0_i32_0 = arith.constant 0 : i32
    %c0_i32_1 = arith.constant 0 : i32
    return %arg0, %c0_i32, %c0_i32_0 : i32, i32, i32
  }
}

</mosaic_0001>

<llo_original>
// kernel: tpu_custom_call.1
$region0: #{tpu_custom_call.1}
  #allocation0 [shape = 'u32[]', space=smem, size = 0x4, offset = 0x4, fixed_abs, tag = 'smem constant byte address 0x4 - core index']
  #allocation1 [shape = 'u32[144,128]{1,0:T(1,128)}', space=vmem, size = 0x12000, scoped, tag = 'internal scratch']
  %s0 = inlined_call_operand.hbm [shape: f32[4,16,128], index: 0, kind: input, shape index: {}]
  %s1 = inlined_call_operand.hbm [shape: f32[4,1,16], index: 1, kind: input, shape index: {}]
  %s2 = inlined_call_operand.hbm [shape: bf16[128,128], index: 2, kind: input, shape index: {}]
  %s3 = inlined_call_operand.vmem [shape: f32[1,128], index: 3, kind: input, shape index: {}]
  %s4 = inlined_call_operand.hbm [shape: bf16[128,128], index: 4, kind: input, shape index: {}]
  %s5 = inlined_call_operand.vmem [shape: f32[1,128], index: 5, kind: input, shape index: {}]
  %s6 = inlined_call_operand.hbm [shape: bf16[128,128], index: 6, kind: input, shape index: {}]
  %s7 = inlined_call_operand.vmem [shape: f32[1,128], index: 7, kind: input, shape index: {}]
  %s8 = inlined_call_operand.hbm [shape: bf16[128,128], index: 8, kind: input, shape index: {}]
  %s9 = inlined_call_operand.vmem [shape: f32[1,128], index: 9, kind: input, shape index: {}]
  %s10 = inlined_call_operand.vmem [shape: f32[1,128], index: 10, kind: input, shape index: {}]
  %s11 = inlined_call_operand.vmem [shape: f32[1,128], index: 11, kind: input, shape index: {}]
  %s12 = inlined_call_operand.hbm [shape: bf16[128,256], index: 12, kind: input, shape index: {}]
  %s13 = inlined_call_operand.vmem [shape: f32[1,256], index: 13, kind: input, shape index: {}]
  %s14 = inlined_call_operand.hbm [shape: bf16[256,128], index: 14, kind: input, shape index: {}]
  %s15 = inlined_call_operand.vmem [shape: f32[1,128], index: 15, kind: input, shape index: {}]
  %s16 = inlined_call_operand.vmem [shape: f32[1,128], index: 16, kind: input, shape index: {}]
  %s17 = inlined_call_operand.vmem [shape: f32[1,128], index: 17, kind: input, shape index: {}]
  %s18 = inlined_call_operand.hbm [shape: f32[4,16,128], index: 18, kind: output, shape index: {}]
  %s19 = sld [smem:[#allocation0]]
  $region137: #{tpu_custom_call.1} parent=0
    _
  %s21 = ssub.s32 1, %s19
  %s22 = scalar_select 0, %s21, %s19
  $region1: #{tpu_custom_call.1} parent=0
    #allocation2 [shape = 'u8[32768]{0}', space=vmem, size = 0x8000, scoped, tag = 'input window, operand 0']
    #allocation3 [shape = 's32[2]{0}', space=sflag, size = 0x8, scoped, tag = 'scoped memory for tpu_custom_call.1']
    #allocation4 [shape = 's32[2]{0}', space=sflag, size = 0x8, scoped, tag = 'scoped memory for tpu_custom_call.1']
    #allocation5 [shape = 'u8[2048]{0}', space=vmem, size = 0x800, scoped, tag = 'input window, operand 1']
    #allocation6 [shape = 's32[2]{0}', space=sflag, size = 0x8, scoped, tag = 'scoped memory for tpu_custom_call.1']
    #allocation7 [shape = 'u8[32768]{0}', space=vmem, size = 0x8000, scoped, tag = 'input window, operand 2, single buffered']
    #allocation8 [shape = 'u8[32768]{0}', space=vmem, size = 0x8000, scoped, tag = 'input window, operand 4, single buffered']
    #allocation9 [shape = 's32[1]{0}', space=sflag, size = 0x4, scoped, tag = 'scoped memory for tpu_custom_call.1']
    #allocation10 [shape = 'u8[32768]{0}', space=vmem, size = 0x8000, scoped, tag = 'input window, operand 6, single buffered']
    #allocation11 [shape = 'u8[32768]{0}', space=vmem, size = 0x8000, scoped, tag = 'input window, operand 8, single buffered']
    #allocation12 [shape = 's32[1]{0}', space=sflag, size = 0x4, scoped, tag = 'scoped memory for tpu_custom_call.1']
    #allocation13 [shape = 'u8[65536]{0}', space=vmem, size = 0x10000, scoped, tag = 'input window, operand 12, single buffered']
    #allocation14 [shape = 'u8[65536]{0}', space=vmem, size = 0x10000, scoped, tag = 'input window, operand 14, single buffered']
    #allocation15 [shape = 's32[1]{0}', space=sflag, size = 0x4, scoped, tag = 'scoped memory for tpu_custom_call.1']
    #allocation16 [shape = 'u8[32768]{0}', space=vmem, size = 0x8000, scoped, tag = 'output window, operand 0']
    %23 = vsyncpa [#allocation3], 0
    %s24 = scalar_lea.sflag [#allocation3], 1
    %25 = vsyncpa %s24, 0
    %26 = vsyncpa [#allocation6], 0
    %s27 = scalar_lea.sflag [#allocation6], 1
    %28 = vsyncpa %s27, 0
    %29 = vsyncpa [#allocation9], 0
    %30 = vsyncpa [#allocation12], 0
    %31 = vsyncpa [#allocation15], 0
    %32 = vsyncpa [#allocation4], 0
    %s33 = scalar_lea.sflag [#allocation4], 1
    %34 = vsyncpa %s33, 0
    loop: start=0, step=1, limit=4
    $region2: #{tpu_custom_call.1} parent=1 // loop_pre_header
      _
    $region3: #{tpu_custom_call.1} parent=1 // loop_header
      %s36 = sphi 0, %s40
      %p37 = scmp.ge.s32.totalorder %s36, 4
      %s46 = sphi 0, %s48
      %s49 = sphi 0, %s46
      %s50 = sphi 0, %s49
      %s66 = sphi 0, %s50
      %s72 = sphi 0, %s74
      %s75 = sphi 0, %s72
      %s76 = sphi 0, %s75
      %s92 = sphi 0, %s76
      %s96 = sphi 0, %s96
      %s98 = sphi 0, %s96
      %s99 = sphi 0, %s98
      %s113 = sphi 0, %s99
      %s117 = sphi 0, %s117
      %s119 = sphi 0, %s117
      %s120 = sphi 0, %s119
      %s134 = sphi 0, %s120
      %s138 = sphi 0, %s138
      %s140 = sphi 0, %s138
      %s141 = sphi 0, %s140
      %s155 = sphi 0, %s141
      %s159 = sphi 0, %s159
      %s161 = sphi 0, %s159
      %s162 = sphi 0, %s161
      %s176 = sphi 0, %s162
      %s180 = sphi 0, %s180
      %s182 = sphi 0, %s180
      %s183 = sphi 0, %s182
      %s197 = sphi 0, %s183
      %s201 = sphi 0, %s201
      %s203 = sphi 0, %s201
      %s204 = sphi 0, %s203
      %s218 = sphi 0, %s204
      %s222 = sphi 0, %s222
      %s224 = sphi 0, %s222
      %s225 = sphi 0, %s224
      %s239 = sphi 0, %s225
      %s243 = sphi 0, %s243
      %s245 = sphi 0, %s243
      %s246 = sphi 0, %s245
      %s260 = sphi 0, %s246
      %s264 = sphi 0, %s264
      %s266 = sphi 0, %s264
      %s267 = sphi 0, %s266
      %s281 = sphi 0, %s267
      %s285 = sphi 0, %s285
      %s287 = sphi 0, %s285
      %s288 = sphi 0, %s287
      %s302 = sphi 0, %s288
      %s306 = sphi 0, %s306
      %s308 = sphi 0, %s306
      %s309 = sphi 0, %s308
      %s323 = sphi 0, %s309
      %s327 = sphi 0, %s327
      %s329 = sphi 0, %s327
      %s330 = sphi 0, %s329
      %s344 = sphi 0, %s330
      %s348 = sphi 0, %s348
      %s350 = sphi 0, %s348
      %s351 = sphi 0, %s350
      %s365 = sphi 0, %s351
      %s369 = sphi 0, %s369
      %s371 = sphi 0, %s369
      %s372 = sphi 0, %s371
      %s386 = sphi 0, %s372
      %s390 = sphi 0, %s390
      %s392 = sphi 0, %s390
      %s393 = sphi 0, %s392
      %s407 = sphi 0, %s393
      %s411 = sphi 0, %s411
      %s413 = sphi 0, %s411
      %s414 = sphi 0, %s413
      %s428 = sphi 0, %s414
      %s434 = sphi 0, %s436
      %s437 = sphi 0, %s434
      %s438 = sphi 0, %s437
      %s454 = sphi 0, %s438
    $region4: #{tpu_custom_call.1} parent=1 // loop_header_branch
      %39 = sbr.rel (%p37) target = $region8
    $region5: #{tpu_custom_call.1} parent=1 // loop_body
      %s41 = ssub.s32 %s36, 1
      %s42 = ssub.s32 %s36, 2
      %s43 = sadd.s32 %s36, 1
      %s44 = ssub.s32 %s36, %s43
      %p45 = scmp.eq.s32.totalorder %s44, 0
      %s47 = sadd.s32 %s46, 1
      %s48 = scalar_select %p45, %s46, %s47
      %p51 = pneg %p45
      %p52 = scmp.eq.s32.totalorder %s36, 1
      %p53 = por %p51, %p52
      %p54 = scmp.ne.s32.totalorder %s46, %s49
      %p55 = scmp.eq.s32.totalorder %s36, 0
      %p56 = por %p54, %p55
      %p57 = scmp.ne.s32.totalorder %s46, %s49
      %p58 = scmp.eq.s32.totalorder %s41, 1
      %p59 = por %p57, %p58
      %p60 = scmp.ne.s32.totalorder %s49, %s50
      %p61 = scmp.eq.s32.totalorder %s41, 0
      %p62 = por %p60, %p61
      %p63 = scmp.ne.s32.totalorder %s49, %s50
      %p64 = scmp.eq.s32.totalorder %s42, 1
      %p65 = por %p63, %p64
      %p67 = scmp.ne.s32.totalorder %s50, %s66
      %p68 = scmp.eq.s32.totalorder %s42, 0
      %p69 = por %p67, %p68
      %s70 = ssub.s32 %s36, %s43
      %p71 = scmp.eq.s32.totalorder %s70, 0
      %s73 = sadd.s32 %s72, 1
      %s74 = scalar_select %p71, %s72, %s73
      %p77 = pneg %p71
      %p78 = scmp.eq.s32.totalorder %s36, 1
      %p79 = por %p77, %p78
      %p80 = scmp.ne.s32.totalorder %s72, %s75
      %p81 = scmp.eq.s32.totalorder %s36, 0
      %p82 = por %p80, %p81
      %p83 = scmp.ne.s32.totalorder %s72, %s75
      %p84 = scmp.eq.s32.totalorder %s41, 1
      %p85 = por %p83, %p84
      %p86 = scmp.ne.s32.totalorder %s75, %s76
      %p87 = scmp.eq.s32.totalorder %s41, 0
      %p88 = por %p86, %p87
      %p89 = scmp.ne.s32.totalorder %s75, %s76
      %p90 = scmp.eq.s32.totalorder %s42, 1
      %p91 = por %p89, %p90
      %p93 = scmp.ne.s32.totalorder %s76, %s92
      %p94 = scmp.eq.s32.totalorder %s42, 0
      %p95 = por %p93, %p94
      %s97 = sadd.s32 %s96, 1
      %p100 = scmp.eq.s32.totalorder %s36, 1
      %p101 = scmp.ne.s32.totalorder %s96, %s98
      %p102 = scmp.eq.s32.totalorder %s36, 0
      %p103 = por %p101, %p102
      %p104 = scmp.ne.s32.totalorder %s96, %s98
      %p105 = scmp.eq.s32.totalorder %s41, 1
      %p106 = por %p104, %p105
      %p107 = scmp.ne.s32.totalorder %s98, %s99
      %p108 = scmp.eq.s32.totalorder %s41, 0
      %p109 = por %p107, %p108
      %p110 = scmp.ne.s32.totalorder %s98, %s99
      %p111 = scmp.eq.s32.totalorder %s42, 1
      %p112 = por %p110, %p111
      %p114 = scmp.ne.s32.totalorder %s99, %s113
      %p115 = scmp.eq.s32.totalorder %s42, 0
      %p116 = por %p114, %p115
      %s118 = sadd.s32 %s117, 1
      %p121 = scmp.eq.s32.totalorder %s36, 1
      %p122 = scmp.ne.s32.totalorder %s117, %s119
      %p123 = scmp.eq.s32.totalorder %s36, 0
      %p124 = por %p122, %p123
      %p125 = scmp.ne.s32.totalorder %s117, %s119
      %p126 = scmp.eq.s32.totalorder %s41, 1
      %p127 = por %p125, %p126
      %p128 = scmp.ne.s32.totalorder %s119, %s120
      %p129 = scmp.eq.s32.totalorder %s41, 0
      %p130 = por %p128, %p129
      %p131 = scmp.ne.s32.totalorder %s119, %s120
      %p132 = scmp.eq.s32.totalorder %s42, 1
      %p133 = por %p131, %p132
      %p135 = scmp.ne.s32.totalorder %s120, %s134
      %p136 = scmp.eq.s32.totalorder %s42, 0
      %p137 = por %p135, %p136
      %s139 = sadd.s32 %s138, 1
      %p142 = scmp.eq.s32.totalorder %s36, 1
      %p143 = scmp.ne.s32.totalorder %s138, %s140
      %p144 = scmp.eq.s32.totalorder %s36, 0
      %p145 = por %p143, %p144
      %p146 = scmp.ne.s32.totalorder %s138, %s140
      %p147 = scmp.eq.s32.totalorder %s41, 1
      %p148 = por %p146, %p147
      %p149 = scmp.ne.s32.totalorder %s140, %s141
      %p150 = scmp.eq.s32.totalorder %s41, 0
      %p151 = por %p149, %p150
      %p152 = scmp.ne.s32.totalorder %s140, %s141
      %p153 = scmp.eq.s32.totalorder %s42, 1
      %p154 = por %p152, %p153
      %p156 = scmp.ne.s32.totalorder %s141, %s155
      %p157 = scmp.eq.s32.totalorder %s42, 0
      %p158 = por %p156, %p157
      %s160 = sadd.s32 %s159, 1
      %p163 = scmp.eq.s32.totalorder %s36, 1
      %p164 = scmp.ne.s32.totalorder %s159, %s161
      %p165 = scmp.eq.s32.totalorder %s36, 0
      %p166 = por %p164, %p165
      %p167 = scmp.ne.s32.totalorder %s159, %s161
      %p168 = scmp.eq.s32.totalorder %s41, 1
      %p169 = por %p167, %p168
      %p170 = scmp.ne.s32.totalorder %s161, %s162
      %p171 = scmp.eq.s32.totalorder %s41, 0
      %p172 = por %p170, %p171
      %p173 = scmp.ne.s32.totalorder %s161, %s162
      %p174 = scmp.eq.s32.totalorder %s42, 1
      %p175 = por %p173, %p174
      %p177 = scmp.ne.s32.totalorder %s162, %s176
      %p178 = scmp.eq.s32.totalorder %s42, 0
      %p179 = por %p177, %p178
      %s181 = sadd.s32 %s180, 1
      %p184 = scmp.eq.s32.totalorder %s36, 1
      %p185 = scmp.ne.s32.totalorder %s180, %s182
      %p186 = scmp.eq.s32.totalorder %s36, 0
      %p187 = por %p185, %p186
      %p188 = scmp.ne.s32.totalorder %s180, %s182
      %p189 = scmp.eq.s32.totalorder %s41, 1
      %p190 = por %p188, %p189
      %p191 = scmp.ne.s32.totalorder %s182, %s183
      %p192 = scmp.eq.s32.totalorder %s41, 0
      %p193 = por %p191, %p192
      %p194 = scmp.ne.s32.totalorder %s182, %s183
      %p195 = scmp.eq.s32.totalorder %s42, 1
      %p196 = por %p194, %p195
      %p198 = scmp.ne.s32.totalorder %s183, %s197
      %p199 = scmp.eq.s32.totalorder %s42, 0
      %p200 = por %p198, %p199
      %s202 = sadd.s32 %s201, 1
      %p205 = scmp.eq.s32.totalorder %s36, 1
      %p206 = scmp.ne.s32.totalorder %s201, %s203
      %p207 = scmp.eq.s32.totalorder %s36, 0
      %p208 = por %p206, %p207
      %p209 = scmp.ne.s32.totalorder %s201, %s203
      %p210 = scmp.eq.s32.totalorder %s41, 1
      %p211 = por %p209, %p210
      %p212 = scmp.ne.s32.totalorder %s203, %s204
      %p213 = scmp.eq.s32.totalorder %s41, 0
      %p214 = por %p212, %p213
      %p215 = scmp.ne.s32.totalorder %s203, %s204
      %p216 = scmp.eq.s32.totalorder %s42, 1
      %p217 = por %p215, %p216
      %p219 = scmp.ne.s32.totalorder %s204, %s218
      %p220 = scmp.eq.s32.totalorder %s42, 0
      %p221 = por %p219, %p220
      %s223 = sadd.s32 %s222, 1
      %p226 = scmp.eq.s32.totalorder %s36, 1
      %p227 = scmp.ne.s32.totalorder %s222, %s224
      %p228 = scmp.eq.s32.totalorder %s36, 0
      %p229 = por %p227, %p228
      %p230 = scmp.ne.s32.totalorder %s222, %s224
      %p231 = scmp.eq.s32.totalorder %s41, 1
      %p232 = por %p230, %p231
      %p233 = scmp.ne.s32.totalorder %s224, %s225
      %p234 = scmp.eq.s32.totalorder %s41, 0
      %p235 = por %p233, %p234
      %p236 = scmp.ne.s32.totalorder %s224, %s225
      %p237 = scmp.eq.s32.totalorder %s42, 1
      %p238 = por %p236, %p237
      %p240 = scmp.ne.s32.totalorder %s225, %s239
      %p241 = scmp.eq.s32.totalorder %s42, 0
      %p242 = por %p240, %p241
      %s244 = sadd.s32 %s243, 1
      %p247 = scmp.eq.s32.totalorder %s36, 1
      %p248 = scmp.ne.s32.totalorder %s243, %s245
      %p249 = scmp.eq.s32.totalorder %s36, 0
      %p250 = por %p248, %p249
      %p251 = scmp.ne.s32.totalorder %s243, %s245
      %p252 = scmp.eq.s32.totalorder %s41, 1
      %p253 = por %p251, %p252
      %p254 = scmp.ne.s32.totalorder %s245, %s246
      %p255 = scmp.eq.s32.totalorder %s41, 0
      %p256 = por %p254, %p255
      %p257 = scmp.ne.s32.totalorder %s245, %s246
      %p258 = scmp.eq.s32.totalorder %s42, 1
      %p259 = por %p257, %p258
      %p261 = scmp.ne.s32.totalorder %s246, %s260
      %p262 = scmp.eq.s32.totalorder %s42, 0
      %p263 = por %p261, %p262
      %s265 = sadd.s32 %s264, 1
      %p268 = scmp.eq.s32.totalorder %s36, 1
      %p269 = scmp.ne.s32.totalorder %s264, %s266
      %p270 = scmp.eq.s32.totalorder %s36, 0
      %p271 = por %p269, %p270
      %p272 = scmp.ne.s32.totalorder %s264, %s266
      %p273 = scmp.eq.s32.totalorder %s41, 1
      %p274 = por %p272, %p273
      %p275 = scmp.ne.s32.totalorder %s266, %s267
      %p276 = scmp.eq.s32.totalorder %s41, 0
      %p277 = por %p275, %p276
      %p278 = scmp.ne.s32.totalorder %s266, %s267
      %p279 = scmp.eq.s32.totalorder %s42, 1
      %p280 = por %p278, %p279
      %p282 = scmp.ne.s32.totalorder %s267, %s281
      %p283 = scmp.eq.s32.totalorder %s42, 0
      %p284 = por %p282, %p283
      %s286 = sadd.s32 %s285, 1
      %p289 = scmp.eq.s32.totalorder %s36, 1
      %p290 = scmp.ne.s32.totalorder %s285, %s287
      %p291 = scmp.eq.s32.totalorder %s36, 0
      %p292 = por %p290, %p291
      %p293 = scmp.ne.s32.totalorder %s285, %s287
      %p294 = scmp.eq.s32.totalorder %s41, 1
      %p295 = por %p293, %p294
      %p296 = scmp.ne.s32.totalorder %s287, %s288
      %p297 = scmp.eq.s32.totalorder %s41, 0
      %p298 = por %p296, %p297
      %p299 = scmp.ne.s32.totalorder %s287, %s288
      %p300 = scmp.eq.s32.totalorder %s42, 1
      %p301 = por %p299, %p300
      %p303 = scmp.ne.s32.totalorder %s288, %s302
      %p304 = scmp.eq.s32.totalorder %s42, 0
      %p305 = por %p303, %p304
      %s307 = sadd.s32 %s306, 1
      %p310 = scmp.eq.s32.totalorder %s36, 1
      %p311 = scmp.ne.s32.totalorder %s306, %s308
      %p312 = scmp.eq.s32.totalorder %s36, 0
      %p313 = por %p311, %p312
      %p314 = scmp.ne.s32.totalorder %s306, %s308
      %p315 = scmp.eq.s32.totalorder %s41, 1
      %p316 = por %p314, %p315
      %p317 = scmp.ne.s32.totalorder %s308, %s309
      %p318 = scmp.eq.s32.totalorder %s41, 0
      %p319 = por %p317, %p318
      %p320 = scmp.ne.s32.totalorder %s308, %s309
      %p321 = scmp.eq.s32.totalorder %s42, 1
      %p322 = por %p320, %p321
      %p324 = scmp.ne.s32.totalorder %s309, %s323
      %p325 = scmp.eq.s32.totalorder %s42, 0
      %p326 = por %p324, %p325
      %s328 = sadd.s32 %s327, 1
      %p331 = scmp.eq.s32.totalorder %s36, 1
      %p332 = scmp.ne.s32.totalorder %s327, %s329
      %p333 = scmp.eq.s32.totalorder %s36, 0
      %p334 = por %p332, %p333
      %p335 = scmp.ne.s32.totalorder %s327, %s329
      %p336 = scmp.eq.s32.totalorder %s41, 1
      %p337 = por %p335, %p336
      %p338 = scmp.ne.s32.totalorder %s329, %s330
      %p339 = scmp.eq.s32.totalorder %s41, 0
      %p340 = por %p338, %p339
      %p341 = scmp.ne.s32.totalorder %s329, %s330
      %p342 = scmp.eq.s32.totalorder %s42, 1
      %p343 = por %p341, %p342
      %p345 = scmp.ne.s32.totalorder %s330, %s344
      %p346 = scmp.eq.s32.totalorder %s42, 0
      %p347 = por %p345, %p346
      %s349 = sadd.s32 %s348, 1
      %p352 = scmp.eq.s32.totalorder %s36, 1
      %p353 = scmp.ne.s32.totalorder %s348, %s350
      %p354 = scmp.eq.s32.totalorder %s36, 0
      %p355 = por %p353, %p354
      %p356 = scmp.ne.s32.totalorder %s348, %s350
      %p357 = scmp.eq.s32.totalorder %s41, 1
      %p358 = por %p356, %p357
      %p359 = scmp.ne.s32.totalorder %s350, %s351
      %p360 = scmp.eq.s32.totalorder %s41, 0
      %p361 = por %p359, %p360
      %p362 = scmp.ne.s32.totalorder %s350, %s351
      %p363 = scmp.eq.s32.totalorder %s42, 1
      %p364 = por %p362, %p363
      %p366 = scmp.ne.s32.totalorder %s351, %s365
      %p367 = scmp.eq.s32.totalorder %s42, 0
      %p368 = por %p366, %p367
      %s370 = sadd.s32 %s369, 1
      %p373 = scmp.eq.s32.totalorder %s36, 1
      %p374 = scmp.ne.s32.totalorder %s369, %s371
      %p375 = scmp.eq.s32.totalorder %s36, 0
      %p376 = por %p374, %p375
      %p377 = scmp.ne.s32.totalorder %s369, %s371
      %p378 = scmp.eq.s32.totalorder %s41, 1
      %p379 = por %p377, %p378
      %p380 = scmp.ne.s32.totalorder %s371, %s372
      %p381 = scmp.eq.s32.totalorder %s41, 0
      %p382 = por %p380, %p381
      %p383 = scmp.ne.s32.totalorder %s371, %s372
      %p384 = scmp.eq.s32.totalorder %s42, 1
      %p385 = por %p383, %p384
      %p387 = scmp.ne.s32.totalorder %s372, %s386
      %p388 = scmp.eq.s32.totalorder %s42, 0
      %p389 = por %p387, %p388
      %s391 = sadd.s32 %s390, 1
      %p394 = scmp.eq.s32.totalorder %s36, 1
      %p395 = scmp.ne.s32.totalorder %s390, %s392
      %p396 = scmp.eq.s32.totalorder %s36, 0
      %p397 = por %p395, %p396
      %p398 = scmp.ne.s32.totalorder %s390, %s392
      %p399 = scmp.eq.s32.totalorder %s41, 1
      %p400 = por %p398, %p399
      %p401 = scmp.ne.s32.totalorder %s392, %s393
      %p402 = scmp.eq.s32.totalorder %s41, 0
      %p403 = por %p401, %p402
      %p404 = scmp.ne.s32.totalorder %s392, %s393
      %p405 = scmp.eq.s32.totalorder %s42, 1
      %p406 = por %p404, %p405
      %p408 = scmp.ne.s32.totalorder %s393, %s407
      %p409 = scmp.eq.s32.totalorder %s42, 0
      %p410 = por %p408, %p409
      %s412 = sadd.s32 %s411, 1
      %p415 = scmp.eq.s32.totalorder %s36, 1
      %p416 = scmp.ne.s32.totalorder %s411, %s413
      %p417 = scmp.eq.s32.totalorder %s36, 0
      %p418 = por %p416, %p417
      %p419 = scmp.ne.s32.totalorder %s411, %s413
      %p420 = scmp.eq.s32.totalorder %s41, 1
      %p421 = por %p419, %p420
      %p422 = scmp.ne.s32.totalorder %s413, %s414
      %p423 = scmp.eq.s32.totalorder %s41, 0
      %p424 = por %p422, %p423
      %p425 = scmp.ne.s32.totalorder %s413, %s414
      %p426 = scmp.eq.s32.totalorder %s42, 1
      %p427 = por %p425, %p426
      %p429 = scmp.ne.s32.totalorder %s414, %s428
      %p430 = scmp.eq.s32.totalorder %s42, 0
      %p431 = por %p429, %p430
      %s432 = ssub.s32 %s36, %s43
      %p433 = scmp.eq.s32.totalorder %s432, 0
      %s435 = sadd.s32 %s434, 1
      %s436 = scalar_select %p433, %s434, %s435
      %p439 = pneg %p433
      %p440 = scmp.eq.s32.totalorder %s36, 1
      %p441 = por %p439, %p440
      %p442 = scmp.ne.s32.totalorder %s434, %s437
      %p443 = scmp.eq.s32.totalorder %s36, 0
      %p444 = por %p442, %p443
      %p445 = scmp.ne.s32.totalorder %s434, %s437
      %p446 = scmp.eq.s32.totalorder %s41, 1
      %p447 = por %p445, %p446
      %p448 = scmp.ne.s32.totalorder %s437, %s438
      %p449 = scmp.eq.s32.totalorder %s41, 0
      %p450 = por %p448, %p449
      %p451 = scmp.ne.s32.totalorder %s437, %s438
      %p452 = scmp.eq.s32.totalorder %s42, 1
      %p453 = por %p451, %p452
      %p455 = scmp.ne.s32.totalorder %s438, %s454
      %p456 = scmp.eq.s32.totalorder %s42, 0
      %p457 = por %p455, %p456
      %p458 = scmp.le.s32.totalorder 1, %s36
      %p459 = scmp.lt.s32.totalorder %s36, 3
      %p460 = pnand %p458, %p459
      %p461 = pneg %p460
      // Predicated region
      $region9: #{tpu_custom_call.1} parent=5 // pred_check
        _
      $region10: #{tpu_custom_call.1} parent=5 // pred_check_branch
        %463 = sbr.rel (%p460) target = $region12
      $region11: #{tpu_custom_call.1} parent=5 // pred_region
        %s464 = ssub.s32 %s36, 1
        // Predicated region
        $region13: #{tpu_custom_call.1} parent=11 // pred_check
          %p465 = pneg %p109
        $region14: #{tpu_custom_call.1} parent=11 // pred_check_branch
          %467 = sbr.rel (%p465) target = $region16
        $region15: #{tpu_custom_call.1} parent=11 // pred_region
          %s469 = ssub.s32 1024, 1024
          %470 = vsyncadd [#allocation6], %s469
          %s471 = sshll.u32 [#allocation7], 4
          %s472 = int_to_ptr.vmem [resolvable:$true] %s471
          %477 = dma.hbm_to_vmem [thread:$0]  %s2, 1024, %s472, [#allocation6], 64, 64, 4
        $region16: #{tpu_custom_call.1} parent=11 // pred_fallthru
          _
        // Predicated region
        $region17: #{tpu_custom_call.1} parent=11 // pred_check
          %p478 = pneg %p130
        $region18: #{tpu_custom_call.1} parent=11 // pred_check_branch
          %480 = sbr.rel (%p478) target = $region20
        $region19: #{tpu_custom_call.1} parent=11 // pred_region
          _
        $region20: #{tpu_custom_call.1} parent=11 // pred_fallthru
          _
        // Predicated region
        $region21: #{tpu_custom_call.1} parent=11 // pred_check
          %p481 = pneg %p151
        $region22: #{tpu_custom_call.1} parent=11 // pred_check_branch
          %483 = sbr.rel (%p481) target = $region24
        $region23: #{tpu_custom_call.1} parent=11 // pred_region
          %s485 = ssub.s32 1024, 1024
          %486 = vsyncadd [#allocation9], %s485
          %s487 = sshll.u32 [#allocation8], 4
          %s488 = int_to_ptr.vmem [resolvable:$true] %s487
          %493 = dma.hbm_to_vmem [thread:$0]  %s4, 1024, %s488, [#allocation9], 64, 64, 4
        $region24: #{tpu_custom_call.1} parent=11 // pred_fallthru
          _
        // Predicated region
        $region25: #{tpu_custom_call.1} parent=11 // pred_check
          %p494 = pneg %p172
        $region26: #{tpu_custom_call.1} parent=11 // pred_check_branch
          %496 = sbr.rel (%p494) target = $region28
        $region27: #{tpu_custom_call.1} parent=11 // pred_region
          _
        $region28: #{tpu_custom_call.1} parent=11 // pred_fallthru
          _
        // Predicated region
        $region29: #{tpu_custom_call.1} parent=11 // pred_check
          %p497 = pneg %p193
        $region30: #{tpu_custom_call.1} parent=11 // pred_check_branch
          %499 = sbr.rel (%p497) target = $region32
        $region31: #{tpu_custom_call.1} parent=11 // pred_region
          %s501 = ssub.s32 1024, 1024
          %502 = vsyncadd [#allocation9], %s501
          %s503 = sshll.u32 [#allocation10], 4
          %s504 = int_to_ptr.vmem [resolvable:$true] %s503
          %509 = dma.hbm_to_vmem [thread:$0]  %s6, 1024, %s504, [#allocation9], 64, 64, 4
        $region32: #{tpu_custom_call.1} parent=11 // pred_fallthru
          _
        // Predicated region
        $region33: #{tpu_custom_call.1} parent=11 // pred_check
          %p510 = pneg %p214
        $region34: #{tpu_custom_call.1} parent=11 // pred_check_branch
          %512 = sbr.rel (%p510) target = $region36
        $region35: #{tpu_custom_call.1} parent=11 // pred_region
          _
        $region36: #{tpu_custom_call.1} parent=11 // pred_fallthru
          _
        // Predicated region
        $region37: #{tpu_custom_call.1} parent=11 // pred_check
          %p513 = pneg %p235
        $region38: #{tpu_custom_call.1} parent=11 // pred_check_branch
          %515 = sbr.rel (%p513) target = $region40
        $region39: #{tpu_custom_call.1} parent=11 // pred_region
          %s517 = ssub.s32 1024, 1024
          %518 = vsyncadd [#allocation12], %s517
          %s519 = sshll.u32 [#allocation11], 4
          %s520 = int_to_ptr.vmem [resolvable:$true] %s519
          %525 = dma.hbm_to_vmem [thread:$0]  %s8, 1024, %s520, [#allocation12], 64, 64, 4
        $region40: #{tpu_custom_call.1} parent=11 // pred_fallthru
          _
        // Predicated region
        $region41: #{tpu_custom_call.1} parent=11 // pred_check
          %p526 = pneg %p256
        $region42: #{tpu_custom_call.1} parent=11 // pred_check_branch
          %528 = sbr.rel (%p526) target = $region44
        $region43: #{tpu_custom_call.1} parent=11 // pred_region
          _
        $region44: #{tpu_custom_call.1} parent=11 // pred_fallthru
          _
        // Predicated region
        $region45: #{tpu_custom_call.1} parent=11 // pred_check
          %p529 = pneg %p277
        $region46: #{tpu_custom_call.1} parent=11 // pred_check_branch
          %531 = sbr.rel (%p529) target = $region48
        $region47: #{tpu_custom_call.1} parent=11 // pred_region
          _
        $region48: #{tpu_custom_call.1} parent=11 // pred_fallthru
          _
        // Predicated region
        $region49: #{tpu_custom_call.1} parent=11 // pred_check
          %p532 = pneg %p298
        $region50: #{tpu_custom_call.1} parent=11 // pred_check_branch
          %534 = sbr.rel (%p532) target = $region52
        $region51: #{tpu_custom_call.1} parent=11 // pred_region
          _
        $region52: #{tpu_custom_call.1} parent=11 // pred_fallthru
          _
        // Predicated region
        $region53: #{tpu_custom_call.1} parent=11 // pred_check
          %p535 = pneg %p319
        $region54: #{tpu_custom_call.1} parent=11 // pred_check_branch
          %537 = sbr.rel (%p535) target = $region56
        $region55: #{tpu_custom_call.1} parent=11 // pred_region
          %s539 = ssub.s32 2048, 2048
          %540 = vsyncadd [#allocation12], %s539
          %s541 = sshll.u32 [#allocation13], 4
          %s542 = int_to_ptr.vmem [resolvable:$true] %s541
          %547 = dma.hbm_to_vmem [thread:$0]  %s12, 2048, %s542, [#allocation12], 128, 128, 8
        $region56: #{tpu_custom_call.1} parent=11 // pred_fallthru
          _
        // Predicated region
        $region57: #{tpu_custom_call.1} parent=11 // pred_check
          %p548 = pneg %p340
        $region58: #{tpu_custom_call.1} parent=11 // pred_check_branch
          %550 = sbr.rel (%p548) target = $region60
        $region59: #{tpu_custom_call.1} parent=11 // pred_region
          _
        $region60: #{tpu_custom_call.1} parent=11 // pred_fallthru
          _
        // Predicated region
        $region61: #{tpu_custom_call.1} parent=11 // pred_check
          %p551 = pneg %p361
        $region62: #{tpu_custom_call.1} parent=11 // pred_check_branch
          %553 = sbr.rel (%p551) target = $region64
        $region63: #{tpu_custom_call.1} parent=11 // pred_region
          %s555 = ssub.s32 2048, 2048
          %556 = vsyncadd [#allocation15], %s555
          %s557 = sshll.u32 [#allocation14], 4
          %s558 = int_to_ptr.vmem [resolvable:$true] %s557
          %563 = dma.hbm_to_vmem [thread:$0]  %s14, 2048, %s558, [#allocation15], 64, 64, 4
        $region64: #{tpu_custom_call.1} parent=11 // pred_fallthru
          _
        // Predicated region
        $region65: #{tpu_custom_call.1} parent=11 // pred_check
          %p564 = pneg %p382
        $region66: #{tpu_custom_call.1} parent=11 // pred_check_branch
          %566 = sbr.rel (%p564) target = $region68
        $region67: #{tpu_custom_call.1} parent=11 // pred_region
          _
        $region68: #{tpu_custom_call.1} parent=11 // pred_fallthru
          _
        // Predicated region
        $region69: #{tpu_custom_call.1} parent=11 // pred_check
          %p567 = pneg %p403
        $region70: #{tpu_custom_call.1} parent=11 // pred_check_branch
          %569 = sbr.rel (%p567) target = $region72
        $region71: #{tpu_custom_call.1} parent=11 // pred_region
          _
        $region72: #{tpu_custom_call.1} parent=11 // pred_fallthru
          _
        // Predicated region
        $region73: #{tpu_custom_call.1} parent=11 // pred_check
          %p570 = pneg %p424
        $region74: #{tpu_custom_call.1} parent=11 // pred_check_branch
          %572 = sbr.rel (%p570) target = $region76
        $region75: #{tpu_custom_call.1} parent=11 // pred_region
          _
        $region76: #{tpu_custom_call.1} parent=11 // pred_fallthru
          _
      $region12: #{tpu_custom_call.1} parent=5 // pred_fallthru
        _
      %p573 = scmp.lt.s32.totalorder %s36, 2
      // Predicated region
      $region77: #{tpu_custom_call.1} parent=5 // pred_check
        %p574 = pneg %p573
      $region78: #{tpu_custom_call.1} parent=5 // pred_check_branch
        %576 = sbr.rel (%p574) target = $region80
      $region79: #{tpu_custom_call.1} parent=5 // pred_region
        // Predicated region
        $region81: #{tpu_custom_call.1} parent=79 // pred_check
          %p577 = pneg %p56
        $region82: #{tpu_custom_call.1} parent=79 // pred_check_branch
          %579 = sbr.rel (%p577) target = $region84
        $region83: #{tpu_custom_call.1} parent=79 // pred_region
          %s580 = sand.u32 %s46, 1
          %s581 = scalar_lea.sflag [#allocation3], %s580
          %s582 = sand.u32 %s46, 1
          %s583 = smul.addr %s582, 32
          %s584 = scalar_lea.vmem [#allocation2], %s583
          %s585 = smul.u32 2, %s36
          %s587 = ssub.s32 512, 512
          %588 = vsyncadd %s581, %s587
          %s589 = smul.addr %s585, 2
          %s590 = smul.addr %s589, 128
          %s591 = scalar_lea.hbm %s0, %s590
          %s592 = sshll.u32 %s584, 4
          %s593 = int_to_ptr.vmem [resolvable:$true] %s592
          %598 = dma.hbm_to_vmem [thread:$0]  %s591, 512, %s593, %s581, 128, 128, 8
        $region84: #{tpu_custom_call.1} parent=79 // pred_fallthru
          _
        // Predicated region
        $region85: #{tpu_custom_call.1} parent=79 // pred_check
          %p599 = pneg %p82
        $region86: #{tpu_custom_call.1} parent=79 // pred_check_branch
          %601 = sbr.rel (%p599) target = $region88
        $region87: #{tpu_custom_call.1} parent=79 // pred_region
          %s602 = sand.u32 %s36, 1
          %s603 = scalar_lea.sflag [#allocation6], %s602
          %s604 = sand.u32 %s72, 1
          %s605 = smul.addr %s604, 2
          %s606 = scalar_lea.vmem [#allocation5], %s605
          %s607 = smul.u32 2, %s36
          %s609 = ssub.s32 32, 32
          %610 = vsyncadd %s603, %s609
          %s611 = smul.addr %s607, 16
          %s612 = scalar_lea.hbm %s1, %s611
          %s613 = sshll.u32 %s606, 4
          %s614 = int_to_ptr.vmem [resolvable:$true] %s613
          %619 = dma.hbm_to_vmem [thread:$0]  %s612, 32, %s614, %s603, 16, 16, 1
        $region88: #{tpu_custom_call.1} parent=79 // pred_fallthru
          _
      $region80: #{tpu_custom_call.1} parent=5 // pred_fallthru
        _
      %p620 = scmp.le.s32.totalorder 1, %s36
      %p621 = scmp.lt.s32.totalorder %s36, 3
      %p622 = pnand %p620, %p621
      %p623 = pneg %p622
      // Predicated region
      $region89: #{tpu_custom_call.1} parent=5 // pred_check
        _
      $region90: #{tpu_custom_call.1} parent=5 // pred_check_branch
        %625 = sbr.rel (%p622) target = $region92
      $region91: #{tpu_custom_call.1} parent=5 // pred_region
        %s626 = ssub.s32 %s36, 1
        %s627 = sand.u32 %s49, 1
        %s628 = scalar_lea.sflag [#allocation3], %s627
        %s629 = sand.u32 %s49, 1
        %s630 = smul.addr %s629, 32
        %s631 = scalar_lea.vmem [#allocation2], %s630
        // Predicated region
        $region93: #{tpu_custom_call.1} parent=91 // pred_check
          %p632 = pneg %p62
        $region94: #{tpu_custom_call.1} parent=91 // pred_check_branch
          %634 = sbr.rel (%p632) target = $region96
        $region95: #{tpu_custom_call.1} parent=91 // pred_region
          %635 = dma.done %s628, 512
        $region96: #{tpu_custom_call.1} parent=91 // pred_fallthru
          _
        %s636 = sand.u32 %s41, 1
        %s637 = scalar_lea.sflag [#allocation6], %s636
        %s638 = sand.u32 %s75, 1
        %s639 = smul.addr %s638, 2
        %s640 = scalar_lea.vmem [#allocation5], %s639
        // Predicated region
        $region97: #{tpu_custom_call.1} parent=91 // pred_check
          %p641 = pneg %p88
        $region98: #{tpu_custom_call.1} parent=91 // pred_check_branch
          %643 = sbr.rel (%p641) target = $region100
        $region99: #{tpu_custom_call.1} parent=91 // pred_region
          %644 = dma.done %s637, 32
        $region100: #{tpu_custom_call.1} parent=91 // pred_fallthru
          _
        // Predicated region
        $region101: #{tpu_custom_call.1} parent=91 // pred_check
          %p645 = pneg %p109
        $region102: #{tpu_custom_call.1} parent=91 // pred_check_branch
          %647 = sbr.rel (%p645) target = $region104
        $region103: #{tpu_custom_call.1} parent=91 // pred_region
          %648 = dma.done [#allocation6], 1024
        $region104: #{tpu_custom_call.1} parent=91 // pred_fallthru
          _
        // Predicated region
        $region105: #{tpu_custom_call.1} parent=91 // pred_check
          %p649 = pneg %p151
        $region106: #{tpu_custom_call.1} parent=91 // pred_check_branch
          %651 = sbr.rel (%p649) target = $region108
        $region107: #{tpu_custom_call.1} parent=91 // pred_region
          %652 = dma.done [#allocation9], 1024
        $region108: #{tpu_custom_call.1} parent=91 // pred_fallthru
          _
        // Predicated region
        $region109: #{tpu_custom_call.1} parent=91 // pred_check
          %p653 = pneg %p193
        $region110: #{tpu_custom_call.1} parent=91 // pred_check_branch
          %655 = sbr.rel (%p653) target = $region112
        $region111: #{tpu_custom_call.1} parent=91 // pred_region
          %656 = dma.done [#allocation9], 1024
        $region112: #{tpu_custom_call.1} parent=91 // pred_fallthru
          _
        // Predicated region
        $region113: #{tpu_custom_call.1} parent=91 // pred_check
          %p657 = pneg %p235
        $region114: #{tpu_custom_call.1} parent=91 // pred_check_branch
          %659 = sbr.rel (%p657) target = $region116
        $region115: #{tpu_custom_call.1} parent=91 // pred_region
          %660 = dma.done [#allocation12], 1024
        $region116: #{tpu_custom_call.1} parent=91 // pred_fallthru
          _
        // Predicated region
        $region117: #{tpu_custom_call.1} parent=91 // pred_check
          %p661 = pneg %p319
        $region118: #{tpu_custom_call.1} parent=91 // pred_check_branch
          %663 = sbr.rel (%p661) target = $region120
        $region119: #{tpu_custom_call.1} parent=91 // pred_region
          %664 = dma.done [#allocation12], 2048
        $region120: #{tpu_custom_call.1} parent=91 // pred_fallthru
          _
        // Predicated region
        $region121: #{tpu_custom_call.1} parent=91 // pred_check
          %p665 = pneg %p361
        $region122: #{tpu_custom_call.1} parent=91 // pred_check_branch
          %667 = sbr.rel (%p665) target = $region124
        $region123: #{tpu_custom_call.1} parent=91 // pred_region
          %668 = dma.done [#allocation15], 2048
        $region124: #{tpu_custom_call.1} parent=91 // pred_fallthru
          _
        %s669 = sand.u32 %s49, 1
        %s670 = scalar_lea.sflag [#allocation3], %s669
        %s671 = sand.u32 %s49, 1
        %s672 = smul.addr %s671, 32
        %s673 = scalar_lea.vmem [#allocation2], %s672
        %p674 = pneg %p62
        %p675 = pneg %p59
        %s676 = sand.u32 %s41, 1
        %s677 = scalar_lea.sflag [#allocation6], %s676
        %s678 = sand.u32 %s75, 1
        %s679 = smul.addr %s678, 2
        %s680 = scalar_lea.vmem [#allocation5], %s679
        %p681 = pneg %p88
        %p682 = pneg %p85
        %p683 = pneg %p109
        %p684 = pneg %p106
        %p685 = pneg %p130
        %p686 = pneg %p127
        %p687 = pneg %p151
        %p688 = pneg %p148
        %p689 = pneg %p172
        %p690 = pneg %p169
        %p691 = pneg %p193
        %p692 = pneg %p190
        %p693 = pneg %p214
        %p694 = pneg %p211
        %p695 = pneg %p235
        %p696 = pneg %p232
        %p697 = pneg %p256
        %p698 = pneg %p253
        %p699 = pneg %p277
        %p700 = pneg %p274
        %p701 = pneg %p298
        %p702 = pneg %p295
        %p703 = pneg %p319
        %p704 = pneg %p316
        %p705 = pneg %p340
        %p706 = pneg %p337
        %p707 = pneg %p361
        %p708 = pneg %p358
        %p709 = pneg %p382
        %p710 = pneg %p379
        %p711 = pneg %p403
        %p712 = pneg %p400
        %p713 = pneg %p424
        %p714 = pneg %p421
        %p715 = pneg %p450
        %p716 = pneg %p447
        %s717 = sand.u32 %s437, 1
        %s718 = scalar_lea.sflag [#allocation4], %s717
        %s719 = sand.u32 %s437, 1
        %s720 = smul.addr %s719, 32
        %s721 = scalar_lea.vmem [#allocation16], %s720
        %s722 = smul.u32 2, %s41
        %s723 = smul.u32 2, %s41
        %s724 = smul.u32 2, %s41
        %v726 = vld [vmem:[%s631] sm:$0xff]
        %v727 = vld [vmem:[%s631 + $0x8] sm:$0xff]
        %v728 = vld [vmem:[%s631 + $0x10] sm:$0xff]
        %v729 = vld [vmem:[%s631 + $0x18] sm:$0xff]
        %v730 = vpack.c.bf16 %v727, %v726
        %v731 = vpack.c.bf16 %v729, %v728
        %v732 = vld [vmem:[#allocation7] sm:$0xf]
        %v733 = vld [vmem:[#allocation7 + $0x4] sm:$0xf]
        %v734 = vld [vmem:[#allocation7 + $0x8] sm:$0xf]
        %v735 = vld [vmem:[#allocation7 + $0xc] sm:$0xf]
        %v736 = vld [vmem:[#allocation7 + $0x10] sm:$0xf]
        %v737 = vld [vmem:[#allocation7 + $0x14] sm:$0xf]
        %v738 = vld [vmem:[#allocation7 + $0x18] sm:$0xf]
        %v739 = vld [vmem:[#allocation7 + $0x1c] sm:$0xf]
        %v740 = vld [vmem:[#allocation7 + $0x20] sm:$0xf]
        %v741 = vld [vmem:[#allocation7 + $0x24] sm:$0xf]
        %v742 = vld [vmem:[#allocation7 + $0x28] sm:$0xf]
        %v743 = vld [vmem:[#allocation7 + $0x2c] sm:$0xf]
        %v744 = vld [vmem:[#allocation7 + $0x30] sm:$0xf]
        %v745 = vld [vmem:[#allocation7 + $0x34] sm:$0xf]
        %v746 = vld [vmem:[#allocation7 + $0x38] sm:$0xf]
        %v747 = vld [vmem:[#allocation7 + $0x3c] sm:$0xf]
        %v748 = vld [vmem:[%s3] sm:$0x1]
        %v750 = vlaneseq
        %v751 = vshrl.u32 %v750, 7
        %v752 = vsub.s32 0, %v751
        %v753 = vrot.slane %v748, %v752
        %v771 = vunpack.c.l.b16 %v732
        %v772 = vunpack.c.l.b16 %v733
        %v773 = vunpack.c.l.b16 %v734
        %v774 = vunpack.c.l.b16 %v735
        %v775 = vunpack.c.l.b16 %v736
        %v776 = vunpack.c.l.b16 %v737
        %v777 = vunpack.c.l.b16 %v738
        %v778 = vunpack.c.l.b16 %v739
        %v779 = vunpack.c.l.b16 %v740
        %v780 = vunpack.c.l.b16 %v741
        %v781 = vunpack.c.l.b16 %v742
        %v782 = vunpack.c.l.b16 %v743
        %v783 = vunpack.c.l.b16 %v744
        %v784 = vunpack.c.l.b16 %v745
        %v785 = vunpack.c.l.b16 %v746
        %v786 = vunpack.c.l.b16 %v747
        %v787 = vpack.c.b16 %v772, %v771
        %v788 = vpack.c.b16 %v774, %v773
        %v789 = vpack.c.b16 %v776, %v775
        %v790 = vpack.c.b16 %v778, %v777
        %v791 = vpack.c.b16 %v780, %v779
        %v792 = vpack.c.b16 %v782, %v781
        %v793 = vpack.c.b16 %v784, %v783
        %v794 = vpack.c.b16 %v786, %v785
        %803 = vmatprep.subr.bf16.mxu0 0
        %804 = vmatpush1.bf16.msra.mxu0 %v787
        %805 = vmatprep.subr.bf16.mxu0 0
        %806 = vmatpush1.bf16.msra.mxu0 %v788
        %807 = vmatprep.subr.bf16.mxu0 0
        %808 = vmatpush1.bf16.msra.mxu0 %v789
        %809 = vmatprep.subr.bf16.mxu0 0
        %810 = vmatpush1.bf16.msra.mxu0 %v790
        %811 = vmatprep.subr.bf16.mxu0 0
        %812 = vmatpush1.bf16.msra.mxu0 %v791
        %813 = vmatprep.subr.bf16.mxu0 0
        %814 = vmatpush1.bf16.msra.mxu0 %v792
        %815 = vmatprep.subr.bf16.mxu0 0
        %816 = vmatpush1.bf16.msra.mxu0 %v793
        %817 = vmatprep.subr.bf16.mxu0 0
        %818 = vmatpush1.bf16.msra.mxu0 %v794
        %819 = vmatprep.subr.bf16.mxu0 0
        %820 = vmatpush1.bf16.msra.mxu0 0
        %821 = vmatprep.subr.bf16.mxu0 0
        %822 = vmatpush1.bf16.msra.mxu0 0
        %823 = vmatprep.subr.bf16.mxu0 0
        %824 = vmatpush1.bf16.msra.mxu0 0
        %825 = vmatprep.subr.bf16.mxu0 0
        %826 = vmatpush1.bf16.msra.mxu0 0
        %827 = vmatprep.subr.bf16.mxu0 0
        %828 = vmatpush1.bf16.msra.mxu0 0
        %829 = vmatprep.subr.bf16.mxu0 0
        %830 = vmatpush1.bf16.msra.mxu0 0
        %831 = vmatprep.subr.bf16.mxu0 0
        %832 = vmatpush1.bf16.msra.mxu0 0
        %833 = vmatprep.subr.bf16.mxu0 0
        %834 = vmatpush1.bf16.msra.mxu0 0
        %835 = vmatprep.mubr.bf16.mxu0 0
        %836 = vmatmul.mubr.bf16.gmra.mrb[0].mxu0 %v730
        %v837 = vpop.f32.mrb[0].mxu0
        %v838 = vadd.f32 %v753, %v837
        %v839 = vpop.f32.mrb[0].mxu0
        %v840 = vpop.f32.mrb[0].mxu0
        %v841 = vadd.f32 %v753, %v840
        %v842 = vpop.f32.mrb[0].mxu0
        %843 = vmatprep.mubr.bf16.mxu0 0
        %844 = vmatmul.mubr.bf16.gmra.mrb[0].mxu0 %v731
        %v845 = vpop.f32.mrb[0].mxu0
        %v846 = vadd.f32 %v753, %v845
        %v847 = vpop.f32.mrb[0].mxu0
        %v848 = vpop.f32.mrb[0].mxu0
        %v849 = vadd.f32 %v753, %v848
        %v850 = vpop.f32.mrb[0].mxu0
        %851 = vdwg.mxu0
        %v852 = vmul.f32 %v838, 0.17677669
        %v853 = vmul.f32 %v841, 0.17677669
        %v854 = vmul.f32 %v846, 0.17677669
        %v855 = vmul.f32 %v849, 0.17677669
        %v856 = vld [vmem:[#allocation8] sm:$0xf]
        %v857 = vld [vmem:[#allocation8 + $0x4] sm:$0xf]
        %v858 = vld [vmem:[#allocation8 + $0x8] sm:$0xf]
        %v859 = vld [vmem:[#allocation8 + $0xc] sm:$0xf]
        %v860 = vld [vmem:[#allocation8 + $0x10] sm:$0xf]
        %v861 = vld [vmem:[#allocation8 + $0x14] sm:$0xf]
        %v862 = vld [vmem:[#allocation8 + $0x18] sm:$0xf]
        %v863 = vld [vmem:[#allocation8 + $0x1c] sm:$0xf]
        %v864 = vld [vmem:[#allocation8 + $0x20] sm:$0xf]
        %v865 = vld [vmem:[#allocation8 + $0x24] sm:$0xf]
        %v866 = vld [vmem:[#allocation8 + $0x28] sm:$0xf]
        %v867 = vld [vmem:[#allocation8 + $0x2c] sm:$0xf]
        %v868 = vld [vmem:[#allocation8 + $0x30] sm:$0xf]
        %v869 = vld [vmem:[#allocation8 + $0x34] sm:$0xf]
        %v870 = vld [vmem:[#allocation8 + $0x38] sm:$0xf]
        %v871 = vld [vmem:[#allocation8 + $0x3c] sm:$0xf]
        %v872 = vld [vmem:[%s5] sm:$0x1]
        %v874 = vlaneseq
        %v875 = vshrl.u32 %v874, 7
        %v876 = vsub.s32 0, %v875
        %v877 = vrot.slane %v872, %v876
        %v895 = vunpack.c.l.b16 %v856
        %v896 = vunpack.c.l.b16 %v857
        %v897 = vunpack.c.l.b16 %v858
        %v898 = vunpack.c.l.b16 %v859
        %v899 = vunpack.c.l.b16 %v860
        %v900 = vunpack.c.l.b16 %v861
        %v901 = vunpack.c.l.b16 %v862
        %v902 = vunpack.c.l.b16 %v863
        %v903 = vunpack.c.l.b16 %v864
        %v904 = vunpack.c.l.b16 %v865
        %v905 = vunpack.c.l.b16 %v866
        %v906 = vunpack.c.l.b16 %v867
        %v907 = vunpack.c.l.b16 %v868
        %v908 = vunpack.c.l.b16 %v869
        %v909 = vunpack.c.l.b16 %v870
        %v910 = vunpack.c.l.b16 %v871
        %v911 = vpack.c.b16 %v896, %v895
        %v912 = vpack.c.b16 %v898, %v897
        %v913 = vpack.c.b16 %v900, %v899
        %v914 = vpack.c.b16 %v902, %v901
        %v915 = vpack.c.b16 %v904, %v903
        %v916 = vpack.c.b16 %v906, %v905
        %v917 = vpack.c.b16 %v908, %v907
        %v918 = vpack.c.b16 %v910, %v909
        %927 = vmatprep.subr.bf16.mxu0 0
        %928 = vmatpush1.bf16.msra.mxu0 %v911
        %929 = vmatprep.subr.bf16.mxu0 0
        %930 = vmatpush1.bf16.msra.mxu0 %v912
        %931 = vmatprep.subr.bf16.mxu0 0
        %932 = vmatpush1.bf16.msra.mxu0 %v913
        %933 = vmatprep.subr.bf16.mxu0 0
        %934 = vmatpush1.bf16.msra.mxu0 %v914
        %935 = vmatprep.subr.bf16.mxu0 0
        %936 = vmatpush1.bf16.msra.mxu0 %v915
        %937 = vmatprep.subr.bf16.mxu0 0
        %938 = vmatpush1.bf16.msra.mxu0 %v916
        %939 = vmatprep.subr.bf16.mxu0 0
        %940 = vmatpush1.bf16.msra.mxu0 %v917
        %941 = vmatprep.subr.bf16.mxu0 0
        %942 = vmatpush1.bf16.msra.mxu0 %v918
        %943 = vmatprep.subr.bf16.mxu0 0
        %944 = vmatpush1.bf16.msra.mxu0 0
        %945 = vmatprep.subr.bf16.mxu0 0
        %946 = vmatpush1.bf16.msra.mxu0 0
        %947 = vmatprep.subr.bf16.mxu0 0
        %948 = vmatpush1.bf16.msra.mxu0 0
        %949 = vmatprep.subr.bf16.mxu0 0
        %950 = vmatpush1.bf16.msra.mxu0 0
        %951 = vmatprep.subr.bf16.mxu0 0
        %952 = vmatpush1.bf16.msra.mxu0 0
        %953 = vmatprep.subr.bf16.mxu0 0
        %954 = vmatpush1.bf16.msra.mxu0 0
        %955 = vmatprep.subr.bf16.mxu0 0
        %956 = vmatpush1.bf16.msra.mxu0 0
        %957 = vmatprep.subr.bf16.mxu0 0
        %958 = vmatpush1.bf16.msra.mxu0 0
        %959 = vmatprep.mubr.bf16.mxu0 0
        %960 = vmatmul.mubr.bf16.gmra.mrb[0].mxu0 %v730
        %v961 = vpop.f32.mrb[0].mxu0
        %v962 = vadd.f32 %v877, %v961
        %v963 = vpop.f32.mrb[0].mxu0
        %v964 = vpop.f32.mrb[0].mxu0
        %v965 = vadd.f32 %v877, %v964
        %v966 = vpop.f32.mrb[0].mxu0
        %967 = vmatprep.mubr.bf16.mxu0 0
        %968 = vmatmul.mubr.bf16.gmra.mrb[0].mxu0 %v731
        %v969 = vpop.f32.mrb[0].mxu0
        %v970 = vadd.f32 %v877, %v969
        %v971 = vpop.f32.mrb[0].mxu0
        %v972 = vpop.f32.mrb[0].mxu0
        %v973 = vadd.f32 %v877, %v972
        %v974 = vpop.f32.mrb[0].mxu0
        %975 = vdwg.mxu0
        %v976 = vld [vmem:[#allocation10] sm:$0xf]
        %v977 = vld [vmem:[#allocation10 + $0x4] sm:$0xf]
        %v978 = vld [vmem:[#allocation10 + $0x8] sm:$0xf]
        %v979 = vld [vmem:[#allocation10 + $0xc] sm:$0xf]
        %v980 = vld [vmem:[#allocation10 + $0x10] sm:$0xf]
        %v981 = vld [vmem:[#allocation10 + $0x14] sm:$0xf]
        %v982 = vld [vmem:[#allocation10 + $0x18] sm:$0xf]
        %v983 = vld [vmem:[#allocation10 + $0x1c] sm:$0xf]
        %v984 = vld [vmem:[#allocation10 + $0x20] sm:$0xf]
        %v985 = vld [vmem:[#allocation10 + $0x24] sm:$0xf]
        %v986 = vld [vmem:[#allocation10 + $0x28] sm:$0xf]
        %v987 = vld [vmem:[#allocation10 + $0x2c] sm:$0xf]
        %v988 = vld [vmem:[#allocation10 + $0x30] sm:$0xf]
        %v989 = vld [vmem:[#allocation10 + $0x34] sm:$0xf]
        %v990 = vld [vmem:[#allocation10 + $0x38] sm:$0xf]
        %v991 = vld [vmem:[#allocation10 + $0x3c] sm:$0xf]
        %v992 = vld [vmem:[%s7] sm:$0x1]
        %v994 = vlaneseq
        %v995 = vshrl.u32 %v994, 7
        %v996 = vsub.s32 0, %v995
        %v997 = vrot.slane %v992, %v996
        %v1015 = vunpack.c.l.b16 %v976
        %v1016 = vunpack.c.l.b16 %v977
        %v1017 = vunpack.c.l.b16 %v978
        %v1018 = vunpack.c.l.b16 %v979
        %v1019 = vunpack.c.l.b16 %v980
        %v1020 = vunpack.c.l.b16 %v981
        %v1021 = vunpack.c.l.b16 %v982
        %v1022 = vunpack.c.l.b16 %v983
        %v1023 = vunpack.c.l.b16 %v984
        %v1024 = vunpack.c.l.b16 %v985
        %v1025 = vunpack.c.l.b16 %v986
        %v1026 = vunpack.c.l.b16 %v987
        %v1027 = vunpack.c.l.b16 %v988
        %v1028 = vunpack.c.l.b16 %v989
        %v1029 = vunpack.c.l.b16 %v990
        %v1030 = vunpack.c.l.b16 %v991
        %v1031 = vpack.c.b16 %v1016, %v1015
        %v1032 = vpack.c.b16 %v1018, %v1017
        %v1033 = vpack.c.b16 %v1020, %v1019
        %v1034 = vpack.c.b16 %v1022, %v1021
        %v1035 = vpack.c.b16 %v1024, %v1023
        %v1036 = vpack.c.b16 %v1026, %v1025
        %v1037 = vpack.c.b16 %v1028, %v1027
        %v1038 = vpack.c.b16 %v1030, %v1029
        %1047 = vmatprep.subr.bf16.mxu0 0
        %1048 = vmatpush1.bf16.msra.mxu0 %v1031
        %1049 = vmatprep.subr.bf16.mxu0 0
        %1050 = vmatpush1.bf16.msra.mxu0 %v1032
        %1051 = vmatprep.subr.bf16.mxu0 0
        %1052 = vmatpush1.bf16.msra.mxu0 %v1033
        %1053 = vmatprep.subr.bf16.mxu0 0
        %1054 = vmatpush1.bf16.msra.mxu0 %v1034
        %1055 = vmatprep.subr.bf16.mxu0 0
        %1056 = vmatpush1.bf16.msra.mxu0 %v1035
        %1057 = vmatprep.subr.bf16.mxu0 0
        %1058 = vmatpush1.bf16.msra.mxu0 %v1036
        %1059 = vmatprep.subr.bf16.mxu0 0
        %1060 = vmatpush1.bf16.msra.mxu0 %v1037
        %1061 = vmatprep.subr.bf16.mxu0 0
        %1062 = vmatpush1.bf16.msra.mxu0 %v1038
        %1063 = vmatprep.subr.bf16.mxu0 0
        %1064 = vmatpush1.bf16.msra.mxu0 0
        %1065 = vmatprep.subr.bf16.mxu0 0
        %1066 = vmatpush1.bf16.msra.mxu0 0
        %1067 = vmatprep.subr.bf16.mxu0 0
        %1068 = vmatpush1.bf16.msra.mxu0 0
        %1069 = vmatprep.subr.bf16.mxu0 0
        %1070 = vmatpush1.bf16.msra.mxu0 0
        %1071 = vmatprep.subr.bf16.mxu0 0
        %1072 = vmatpush1.bf16.msra.mxu0 0
        %1073 = vmatprep.subr.bf16.mxu0 0
        %1074 = vmatpush1.bf16.msra.mxu0 0
        %1075 = vmatprep.subr.bf16.mxu0 0
        %1076 = vmatpush1.bf16.msra.mxu0 0
        %1077 = vmatprep.subr.bf16.mxu0 0
        %1078 = vmatpush1.bf16.msra.mxu0 0
        %1079 = vmatprep.mubr.bf16.mxu0 0
        %1080 = vmatmul.mubr.bf16.gmra.mrb[0].mxu0 %v730
        %v1081 = vpop.f32.mrb[0].mxu0
        %v1082 = vadd.f32 %v997, %v1081
        %v1083 = vpop.f32.mrb[0].mxu0
        %v1084 = vpop.f32.mrb[0].mxu0
        %v1085 = vadd.f32 %v997, %v1084
        %v1086 = vpop.f32.mrb[0].mxu0
        %1087 = vmatprep.mubr.bf16.mxu0 0
        %1088 = vmatmul.mubr.bf16.gmra.mrb[0].mxu0 %v731
        %v1089 = vpop.f32.mrb[0].mxu0
        %v1090 = vadd.f32 %v997, %v1089
        %v1091 = vpop.f32.mrb[0].mxu0
        %v1092 = vpop.f32.mrb[0].mxu0
        %v1093 = vadd.f32 %v997, %v1092
        %v1094 = vpop.f32.mrb[0].mxu0
        %1095 = vdwg.mxu0
        %1100 = vrot.lane.b32.xlu0 %v852, 96
        %v1101 = vpop.permute.xlu0 %1100
        %1102 = vrot.lane.b32.xlu0 %v853, 96
        %v1103 = vpop.permute.xlu0 %1102
        %1104 = vrot.lane.b32.xlu0 %v854, 96
        %v1105 = vpop.permute.xlu0 %1104
        %1106 = vrot.lane.b32.xlu0 %v855, 96
        %v1107 = vpop.permute.xlu0 %1106
        %1112 = vrot.lane.b32.xlu0 %v852, 64
        %v1113 = vpop.permute.xlu0 %1112
        %1114 = vrot.lane.b32.xlu0 %v853, 64
        %v1115 = vpop.permute.xlu0 %1114
        %1116 = vrot.lane.b32.xlu0 %v854, 64
        %v1117 = vpop.permute.xlu0 %1116
        %1118 = vrot.lane.b32.xlu0 %v855, 64
        %v1119 = vpop.permute.xlu0 %1118
        %1124 = vrot.lane.b32.xlu0 %v852, 32
        %v1125 = vpop.permute.xlu0 %1124
        %1126 = vrot.lane.b32.xlu0 %v853, 32
        %v1127 = vpop.permute.xlu0 %1126
        %1128 = vrot.lane.b32.xlu0 %v854, 32
        %v1129 = vpop.permute.xlu0 %1128
        %1130 = vrot.lane.b32.xlu0 %v855, 32
        %v1131 = vpop.permute.xlu0 %1130
        %v1136 = vcombine.low %v852, %v1113
        %v1137 = vcombine.high %v852, %v1113
        %v1139 = vunpack.c.l.s4 1983009808
        %v1140 = vunpack.c.0.s8 %v1139
        %v1141 = vlaneseq
        %v1142 = vshrl.u32 %v1141, 7
        %v1143 = vsub.s32 %v1140, %v1142
        %v1144 = vrot.slane %v1136, %v1143
        %v1146 = vunpack.c.l.s4 1983009808
        %v1147 = vunpack.c.0.s8 %v1146
        %v1148 = vlaneseq
        %v1149 = vshrl.u32 %v1148, 7
        %v1150 = vsub.s32 %v1147, %v1149
        %v1151 = vrot.slane %v1137, %v1150
        %v1152 = vcombine.low %v1101, %v1125
        %v1153 = vcombine.high %v1101, %v1125
        %v1155 = vunpack.c.l.s4 1983009808
        %v1156 = vunpack.c.0.s8 %v1155
        %v1157 = vlaneseq
        %v1158 = vshrl.u32 %v1157, 7
        %v1159 = vsub.s32 %v1156, %v1158
        %v1160 = vrot.slane %v1152, %v1159
        %v1162 = vunpack.c.l.s4 1983009808
        %v1163 = vunpack.c.0.s8 %v1162
        %v1164 = vlaneseq
        %v1165 = vshrl.u32 %v1164, 7
        %v1166 = vsub.s32 %v1163, %v1165
        %v1167 = vrot.slane %v1153, %v1166
        %v1168 = vcombine.low %v1144, %v1160
        %v1169 = vcombine.high %v1144, %v1160
        %v1171 = vunpack.c.l.s4 1934713408
        %v1172 = vunpack.c.0.s8 %v1171
        %v1173 = vlaneseq
        %v1174 = vshrl.u32 %v1173, 7
        %v1175 = vsub.s32 %v1172, %v1174
        %v1176 = vrot.slane %v1168, %v1175
        %v1178 = vunpack.c.l.s4 1934713408
        %v1179 = vunpack.c.0.s8 %v1178
        %v1180 = vlaneseq
        %v1181 = vshrl.u32 %v1180, 7
        %v1182 = vsub.s32 %v1179, %v1181
        %v1183 = vrot.slane %v1169, %v1182
        %v1184 = vcombine.low %v1151, %v1167
        %v1185 = vcombine.high %v1151, %v1167
        %v1187 = vunpack.c.l.s4 1934713408
        %v1188 = vunpack.c.0.s8 %v1187
        %v1189 = vlaneseq
        %v1190 = vshrl.u32 %v1189, 7
        %v1191 = vsub.s32 %v1188, %v1190
        %v1192 = vrot.slane %v1184, %v1191
        %v1194 = vunpack.c.l.s4 1934713408
        %v1195 = vunpack.c.0.s8 %v1194
        %v1196 = vlaneseq
        %v1197 = vshrl.u32 %v1196, 7
        %v1198 = vsub.s32 %v1195, %v1197
        %v1199 = vrot.slane %v1185, %v1198
        %v1200 = vcombine.high %v1176, 0.0
        %v1201 = vcombine.high %v1183, 0.0
        %v1202 = vcombine.high %v1192, 0.0
        %v1203 = vcombine.high %v1199, 0.0
        %v1204 = vcombine.low %v853, %v1115
        %v1205 = vcombine.high %v853, %v1115
        %v1207 = vunpack.c.l.s4 1983009808
        %v1208 = vunpack.c.0.s8 %v1207
        %v1209 = vlaneseq
        %v1210 = vshrl.u32 %v1209, 7
        %v1211 = vsub.s32 %v1208, %v1210
        %v1212 = vrot.slane %v1204, %v1211
        %v1214 = vunpack.c.l.s4 1983009808
        %v1215 = vunpack.c.0.s8 %v1214
        %v1216 = vlaneseq
        %v1217 = vshrl.u32 %v1216, 7
        %v1218 = vsub.s32 %v1215, %v1217
        %v1219 = vrot.slane %v1205, %v1218
        %v1220 = vcombine.low %v1103, %v1127
        %v1221 = vcombine.high %v1103, %v1127
        %v1223 = vunpack.c.l.s4 1983009808
        %v1224 = vunpack.c.0.s8 %v1223
        %v1225 = vlaneseq
        %v1226 = vshrl.u32 %v1225, 7
        %v1227 = vsub.s32 %v1224, %v1226
        %v1228 = vrot.slane %v1220, %v1227
        %v1230 = vunpack.c.l.s4 1983009808
        %v1231 = vunpack.c.0.s8 %v1230
        %v1232 = vlaneseq
        %v1233 = vshrl.u32 %v1232, 7
        %v1234 = vsub.s32 %v1231, %v1233
        %v1235 = vrot.slane %v1221, %v1234
        %v1236 = vcombine.low %v1212, %v1228
        %v1237 = vcombine.high %v1212, %v1228
        %v1239 = vunpack.c.l.s4 1934713408
        %v1240 = vunpack.c.0.s8 %v1239
        %v1241 = vlaneseq
        %v1242 = vshrl.u32 %v1241, 7
        %v1243 = vsub.s32 %v1240, %v1242
        %v1244 = vrot.slane %v1236, %v1243
        %v1246 = vunpack.c.l.s4 1934713408
        %v1247 = vunpack.c.0.s8 %v1246
        %v1248 = vlaneseq
        %v1249 = vshrl.u32 %v1248, 7
        %v1250 = vsub.s32 %v1247, %v1249
        %v1251 = vrot.slane %v1237, %v1250
        %v1252 = vcombine.low %v1219, %v1235
        %v1253 = vcombine.high %v1219, %v1235
        %v1255 = vunpack.c.l.s4 1934713408
        %v1256 = vunpack.c.0.s8 %v1255
        %v1257 = vlaneseq
        %v1258 = vshrl.u32 %v1257, 7
        %v1259 = vsub.s32 %v1256, %v1258
        %v1260 = vrot.slane %v1252, %v1259
        %v1262 = vunpack.c.l.s4 1934713408
        %v1263 = vunpack.c.0.s8 %v1262
        %v1264 = vlaneseq
        %v1265 = vshrl.u32 %v1264, 7
        %v1266 = vsub.s32 %v1263, %v1265
        %v1267 = vrot.slane %v1253, %v1266
        %v1268 = vcombine.high %v1244, 0.0
        %v1269 = vcombine.high %v1251, 0.0
        %v1270 = vcombine.high %v1260, 0.0
        %v1271 = vcombine.high %v1267, 0.0
        %v1272 = vcombine.low %v854, %v1117
        %v1273 = vcombine.high %v854, %v1117
        %v1275 = vunpack.c.l.s4 1983009808
        %v1276 = vunpack.c.0.s8 %v1275
        %v1277 = vlaneseq
        %v1278 = vshrl.u32 %v1277, 7
        %v1279 = vsub.s32 %v1276, %v1278
        %v1280 = vrot.slane %v1272, %v1279
        %v1282 = vunpack.c.l.s4 1983009808
        %v1283 = vunpack.c.0.s8 %v1282
        %v1284 = vlaneseq
        %v1285 = vshrl.u32 %v1284, 7
        %v1286 = vsub.s32 %v1283, %v1285
        %v1287 = vrot.slane %v1273, %v1286
        %v1288 = vcombine.low %v1105, %v1129
        %v1289 = vcombine.high %v1105, %v1129
        %v1291 = vunpack.c.l.s4 1983009808
        %v1292 = vunpack.c.0.s8 %v1291
        %v1293 = vlaneseq
        %v1294 = vshrl.u32 %v1293, 7
        %v1295 = vsub.s32 %v1292, %v1294
        %v1296 = vrot.slane %v1288, %v1295
        %v1298 = vunpack.c.l.s4 1983009808
        %v1299 = vunpack.c.0.s8 %v1298
        %v1300 = vlaneseq
        %v1301 = vshrl.u32 %v1300, 7
        %v1302 = vsub.s32 %v1299, %v1301
        %v1303 = vrot.slane %v1289, %v1302
        %v1304 = vcombine.low %v1280, %v1296
        %v1305 = vcombine.high %v1280, %v1296
        %v1307 = vunpack.c.l.s4 1934713408
        %v1308 = vunpack.c.0.s8 %v1307
        %v1309 = vlaneseq
        %v1310 = vshrl.u32 %v1309, 7
        %v1311 = vsub.s32 %v1308, %v1310
        %v1312 = vrot.slane %v1304, %v1311
        %v1314 = vunpack.c.l.s4 1934713408
        %v1315 = vunpack.c.0.s8 %v1314
        %v1316 = vlaneseq
        %v1317 = vshrl.u32 %v1316, 7
        %v1318 = vsub.s32 %v1315, %v1317
        %v1319 = vrot.slane %v1305, %v1318
        %v1320 = vcombine.low %v1287, %v1303
        %v1321 = vcombine.high %v1287, %v1303
        %v1323 = vunpack.c.l.s4 1934713408
        %v1324 = vunpack.c.0.s8 %v1323
        %v1325 = vlaneseq
        %v1326 = vshrl.u32 %v1325, 7
        %v1327 = vsub.s32 %v1324, %v1326
        %v1328 = vrot.slane %v1320, %v1327
        %v1330 = vunpack.c.l.s4 1934713408
        %v1331 = vunpack.c.0.s8 %v1330
        %v1332 = vlaneseq
        %v1333 = vshrl.u32 %v1332, 7
        %v1334 = vsub.s32 %v1331, %v1333
        %v1335 = vrot.slane %v1321, %v1334
        %v1336 = vcombine.high %v1312, 0.0
        %v1337 = vcombine.high %v1319, 0.0
        %v1338 = vcombine.high %v1328, 0.0
        %v1339 = vcombine.high %v1335, 0.0
        %v1340 = vcombine.low %v855, %v1119
        %v1341 = vcombine.high %v855, %v1119
        %v1343 = vunpack.c.l.s4 1983009808
        %v1344 = vunpack.c.0.s8 %v1343
        %v1345 = vlaneseq
        %v1346 = vshrl.u32 %v1345, 7
        %v1347 = vsub.s32 %v1344, %v1346
        %v1348 = vrot.slane %v1340, %v1347
        %v1350 = vunpack.c.l.s4 1983009808
        %v1351 = vunpack.c.0.s8 %v1350
        %v1352 = vlaneseq
        %v1353 = vshrl.u32 %v1352, 7
        %v1354 = vsub.s32 %v1351, %v1353
        %v1355 = vrot.slane %v1341, %v1354
        %v1356 = vcombine.low %v1107, %v1131
        %v1357 = vcombine.high %v1107, %v1131
        %v1359 = vunpack.c.l.s4 1983009808
        %v1360 = vunpack.c.0.s8 %v1359
        %v1361 = vlaneseq
        %v1362 = vshrl.u32 %v1361, 7
        %v1363 = vsub.s32 %v1360, %v1362
        %v1364 = vrot.slane %v1356, %v1363
        %v1366 = vunpack.c.l.s4 1983009808
        %v1367 = vunpack.c.0.s8 %v1366
        %v1368 = vlaneseq
        %v1369 = vshrl.u32 %v1368, 7
        %v1370 = vsub.s32 %v1367, %v1369
        %v1371 = vrot.slane %v1357, %v1370
        %v1372 = vcombine.low %v1348, %v1364
        %v1373 = vcombine.high %v1348, %v1364
        %v1375 = vunpack.c.l.s4 1934713408
        %v1376 = vunpack.c.0.s8 %v1375
        %v1377 = vlaneseq
        %v1378 = vshrl.u32 %v1377, 7
        %v1379 = vsub.s32 %v1376, %v1378
        %v1380 = vrot.slane %v1372, %v1379
        %v1382 = vunpack.c.l.s4 1934713408
        %v1383 = vunpack.c.0.s8 %v1382
        %v1384 = vlaneseq
        %v1385 = vshrl.u32 %v1384, 7
        %v1386 = vsub.s32 %v1383, %v1385
        %v1387 = vrot.slane %v1373, %v1386
        %v1388 = vcombine.low %v1355, %v1371
        %v1389 = vcombine.high %v1355, %v1371
        %v1391 = vunpack.c.l.s4 1934713408
        %v1392 = vunpack.c.0.s8 %v1391
        %v1393 = vlaneseq
        %v1394 = vshrl.u32 %v1393, 7
        %v1395 = vsub.s32 %v1392, %v1394
        %v1396 = vrot.slane %v1388, %v1395
        %v1398 = vunpack.c.l.s4 1934713408
        %v1399 = vunpack.c.0.s8 %v1398
        %v1400 = vlaneseq
        %v1401 = vshrl.u32 %v1400, 7
        %v1402 = vsub.s32 %v1399, %v1401
        %v1403 = vrot.slane %v1389, %v1402
        %v1404 = vcombine.high %v1380, 0.0
        %v1405 = vcombine.high %v1387, 0.0
        %v1406 = vcombine.high %v1396, 0.0
        %v1407 = vcombine.high %v1403, 0.0
        %v1408 = vcombine.low %v1176, %v1183
        %v1410 = vunpack.c.l.s4 1983009808
        %v1411 = vunpack.c.0.s8 %v1410
        %v1412 = vlaneseq
        %v1413 = vshrl.u32 %v1412, 7
        %v1414 = vsub.s32 %v1411, %v1413
        %v1415 = vrot.slane %v1408, %v1414
        %v1416 = vcombine.low %v1200, %v1201
        %v1418 = vunpack.c.l.s4 1983009808
        %v1419 = vunpack.c.0.s8 %v1418
        %v1420 = vlaneseq
        %v1421 = vshrl.u32 %v1420, 7
        %v1422 = vsub.s32 %v1419, %v1421
        %v1423 = vrot.slane %v1416, %v1422
        %v1424 = vcombine.low %v1192, %v1199
        %v1426 = vunpack.c.l.s4 1983009808
        %v1427 = vunpack.c.0.s8 %v1426
        %v1428 = vlaneseq
        %v1429 = vshrl.u32 %v1428, 7
        %v1430 = vsub.s32 %v1427, %v1429
        %v1431 = vrot.slane %v1424, %v1430
        %v1432 = vcombine.low %v1202, %v1203
        %v1434 = vunpack.c.l.s4 1983009808
        %v1435 = vunpack.c.0.s8 %v1434
        %v1436 = vlaneseq
        %v1437 = vshrl.u32 %v1436, 7
        %v1438 = vsub.s32 %v1435, %v1437
        %v1439 = vrot.slane %v1432, %v1438
        %v1440 = vcombine.low %v1415, %v1423
        %v1441 = vcombine.high %v1415, %v1423
        %v1443 = vunpack.c.l.s4 1934713408
        %v1444 = vunpack.c.0.s8 %v1443
        %v1445 = vlaneseq
        %v1446 = vshrl.u32 %v1445, 7
        %v1447 = vsub.s32 %v1444, %v1446
        %v1448 = vrot.slane %v1440, %v1447
        %v1450 = vunpack.c.l.s4 1934713408
        %v1451 = vunpack.c.0.s8 %v1450
        %v1452 = vlaneseq
        %v1453 = vshrl.u32 %v1452, 7
        %v1454 = vsub.s32 %v1451, %v1453
        %v1455 = vrot.slane %v1441, %v1454
        %v1456 = vcombine.low %v1431, %v1439
        %v1457 = vcombine.high %v1431, %v1439
        %v1459 = vunpack.c.l.s4 1934713408
        %v1460 = vunpack.c.0.s8 %v1459
        %v1461 = vlaneseq
        %v1462 = vshrl.u32 %v1461, 7
        %v1463 = vsub.s32 %v1460, %v1462
        %v1464 = vrot.slane %v1456, %v1463
        %v1466 = vunpack.c.l.s4 1934713408
        %v1467 = vunpack.c.0.s8 %v1466
        %v1468 = vlaneseq
        %v1469 = vshrl.u32 %v1468, 7
        %v1470 = vsub.s32 %v1467, %v1469
        %v1471 = vrot.slane %v1457, %v1470
        %v1472 = vcombine.low %v1448, %v1464
        %v1473 = vcombine.high %v1448, %v1464
        %v1474 = vcombine.low %v1455, %v1471
        %v1475 = vcombine.high %v1455, %v1471
        %v1476 = vcombine.low %v1244, %v1251
        %v1478 = vunpack.c.l.s4 1983009808
        %v1479 = vunpack.c.0.s8 %v1478
        %v1480 = vlaneseq
        %v1481 = vshrl.u32 %v1480, 7
        %v1482 = vsub.s32 %v1479, %v1481
        %v1483 = vrot.slane %v1476, %v1482
        %v1484 = vcombine.low %v1268, %v1269
        %v1486 = vunpack.c.l.s4 1983009808
        %v1487 = vunpack.c.0.s8 %v1486
        %v1488 = vlaneseq
        %v1489 = vshrl.u32 %v1488, 7
        %v1490 = vsub.s32 %v1487, %v1489
        %v1491 = vrot.slane %v1484, %v1490
        %v1492 = vcombine.low %v1260, %v1267
        %v1494 = vunpack.c.l.s4 1983009808
        %v1495 = vunpack.c.0.s8 %v1494
        %v1496 = vlaneseq
        %v1497 = vshrl.u32 %v1496, 7
        %v1498 = vsub.s32 %v1495, %v1497
        %v1499 = vrot.slane %v1492, %v1498
        %v1500 = vcombine.low %v1270, %v1271
        %v1502 = vunpack.c.l.s4 1983009808
        %v1503 = vunpack.c.0.s8 %v1502
        %v1504 = vlaneseq
        %v1505 = vshrl.u32 %v1504, 7
        %v1506 = vsub.s32 %v1503, %v1505
        %v1507 = vrot.slane %v1500, %v1506
        %v1508 = vcombine.low %v1483, %v1491
        %v1509 = vcombine.high %v1483, %v1491
        %v1511 = vunpack.c.l.s4 1934713408
        %v1512 = vunpack.c.0.s8 %v1511
        %v1513 = vlaneseq
        %v1514 = vshrl.u32 %v1513, 7
        %v1515 = vsub.s32 %v1512, %v1514
        %v1516 = vrot.slane %v1508, %v1515
        %v1518 = vunpack.c.l.s4 1934713408
        %v1519 = vunpack.c.0.s8 %v1518
        %v1520 = vlaneseq
        %v1521 = vshrl.u32 %v1520, 7
        %v1522 = vsub.s32 %v1519, %v1521
        %v1523 = vrot.slane %v1509, %v1522
        %v1524 = vcombine.low %v1499, %v1507
        %v1525 = vcombine.high %v1499, %v1507
        %v1527 = vunpack.c.l.s4 1934713408
        %v1528 = vunpack.c.0.s8 %v1527
        %v1529 = vlaneseq
        %v1530 = vshrl.u32 %v1529, 7
        %v1531 = vsub.s32 %v1528, %v1530
        %v1532 = vrot.slane %v1524, %v1531
        %v1534 = vunpack.c.l.s4 1934713408
        %v1535 = vunpack.c.0.s8 %v1534
        %v1536 = vlaneseq
        %v1537 = vshrl.u32 %v1536, 7
        %v1538 = vsub.s32 %v1535, %v1537
        %v1539 = vrot.slane %v1525, %v1538
        %v1540 = vcombine.low %v1516, %v1532
        %v1541 = vcombine.high %v1516, %v1532
        %v1542 = vcombine.low %v1523, %v1539
        %v1543 = vcombine.high %v1523, %v1539
        %v1544 = vcombine.low %v1312, %v1319
        %v1546 = vunpack.c.l.s4 1983009808
        %v1547 = vunpack.c.0.s8 %v1546
        %v1548 = vlaneseq
        %v1549 = vshrl.u32 %v1548, 7
        %v1550 = vsub.s32 %v1547, %v1549
        %v1551 = vrot.slane %v1544, %v1550
        %v1552 = vcombine.low %v1336, %v1337
        %v1554 = vunpack.c.l.s4 1983009808
        %v1555 = vunpack.c.0.s8 %v1554
        %v1556 = vlaneseq
        %v1557 = vshrl.u32 %v1556, 7
        %v1558 = vsub.s32 %v1555, %v1557
        %v1559 = vrot.slane %v1552, %v1558
        %v1560 = vcombine.low %v1328, %v1335
        %v1562 = vunpack.c.l.s4 1983009808
        %v1563 = vunpack.c.0.s8 %v1562
        %v1564 = vlaneseq
        %v1565 = vshrl.u32 %v1564, 7
        %v1566 = vsub.s32 %v1563, %v1565
        %v1567 = vrot.slane %v1560, %v1566
        %v1568 = vcombine.low %v1338, %v1339
        %v1570 = vunpack.c.l.s4 1983009808
        %v1571 = vunpack.c.0.s8 %v1570
        %v1572 = vlaneseq
        %v1573 = vshrl.u32 %v1572, 7
        %v1574 = vsub.s32 %v1571, %v1573
        %v1575 = vrot.slane %v1568, %v1574
        %v1576 = vcombine.low %v1551, %v1559
        %v1577 = vcombine.high %v1551, %v1559
        %v1579 = vunpack.c.l.s4 1934713408
        %v1580 = vunpack.c.0.s8 %v1579
        %v1581 = vlaneseq
        %v1582 = vshrl.u32 %v1581, 7
        %v1583 = vsub.s32 %v1580, %v1582
        %v1584 = vrot.slane %v1576, %v1583
        %v1586 = vunpack.c.l.s4 1934713408
        %v1587 = vunpack.c.0.s8 %v1586
        %v1588 = vlaneseq
        %v1589 = vshrl.u32 %v1588, 7
        %v1590 = vsub.s32 %v1587, %v1589
        %v1591 = vrot.slane %v1577, %v1590
        %v1592 = vcombine.low %v1567, %v1575
        %v1593 = vcombine.high %v1567, %v1575
        %v1595 = vunpack.c.l.s4 1934713408
        %v1596 = vunpack.c.0.s8 %v1595
        %v1597 = vlaneseq
        %v1598 = vshrl.u32 %v1597, 7
        %v1599 = vsub.s32 %v1596, %v1598
        %v1600 = vrot.slane %v1592, %v1599
        %v1602 = vunpack.c.l.s4 1934713408
        %v1603 = vunpack.c.0.s8 %v1602
        %v1604 = vlaneseq
        %v1605 = vshrl.u32 %v1604, 7
        %v1606 = vsub.s32 %v1603, %v1605
        %v1607 = vrot.slane %v1593, %v1606
        %v1608 = vcombine.low %v1584, %v1600
        %v1609 = vcombine.high %v1584, %v1600
        %v1610 = vcombine.low %v1591, %v1607
        %v1611 = vcombine.high %v1591, %v1607
        %v1612 = vcombine.low %v1380, %v1387
        %v1614 = vunpack.c.l.s4 1983009808
        %v1615 = vunpack.c.0.s8 %v1614
        %v1616 = vlaneseq
        %v1617 = vshrl.u32 %v1616, 7
        %v1618 = vsub.s32 %v1615, %v1617
        %v1619 = vrot.slane %v1612, %v1618
        %v1620 = vcombine.low %v1404, %v1405
        %v1622 = vunpack.c.l.s4 1983009808
        %v1623 = vunpack.c.0.s8 %v1622
        %v1624 = vlaneseq
        %v1625 = vshrl.u32 %v1624, 7
        %v1626 = vsub.s32 %v1623, %v1625
        %v1627 = vrot.slane %v1620, %v1626
        %v1628 = vcombine.low %v1396, %v1403
        %v1630 = vunpack.c.l.s4 1983009808
        %v1631 = vunpack.c.0.s8 %v1630
        %v1632 = vlaneseq
        %v1633 = vshrl.u32 %v1632, 7
        %v1634 = vsub.s32 %v1631, %v1633
        %v1635 = vrot.slane %v1628, %v1634
        %v1636 = vcombine.low %v1406, %v1407
        %v1638 = vunpack.c.l.s4 1983009808
        %v1639 = vunpack.c.0.s8 %v1638
        %v1640 = vlaneseq
        %v1641 = vshrl.u32 %v1640, 7
        %v1642 = vsub.s32 %v1639, %v1641
        %v1643 = vrot.slane %v1636, %v1642
        %v1644 = vcombine.low %v1619, %v1627
        %v1645 = vcombine.high %v1619, %v1627
        %v1647 = vunpack.c.l.s4 1934713408
        %v1648 = vunpack.c.0.s8 %v1647
        %v1649 = vlaneseq
        %v1650 = vshrl.u32 %v1649, 7
        %v1651 = vsub.s32 %v1648, %v1650
        %v1652 = vrot.slane %v1644, %v1651
        %v1654 = vunpack.c.l.s4 1934713408
        %v1655 = vunpack.c.0.s8 %v1654
        %v1656 = vlaneseq
        %v1657 = vshrl.u32 %v1656, 7
        %v1658 = vsub.s32 %v1655, %v1657
        %v1659 = vrot.slane %v1645, %v1658
        %v1660 = vcombine.low %v1635, %v1643
        %v1661 = vcombine.high %v1635, %v1643
        %v1663 = vunpack.c.l.s4 1934713408
        %v1664 = vunpack.c.0.s8 %v1663
        %v1665 = vlaneseq
        %v1666 = vshrl.u32 %v1665, 7
        %v1667 = vsub.s32 %v1664, %v1666
        %v1668 = vrot.slane %v1660, %v1667
        %v1670 = vunpack.c.l.s4 1934713408
        %v1671 = vunpack.c.0.s8 %v1670
        %v1672 = vlaneseq
        %v1673 = vshrl.u32 %v1672, 7
        %v1674 = vsub.s32 %v1671, %v1673
        %v1675 = vrot.slane %v1661, %v1674
        %v1676 = vcombine.low %v1652, %v1668
        %v1677 = vcombine.high %v1652, %v1668
        %v1678 = vcombine.low %v1659, %v1675
        %v1679 = vcombine.high %v1659, %v1675
        %v1680 = vpack.c.bf16 %v1540, %v1472
        %v1681 = vpack.c.bf16 %v1541, %v1473
        %v1682 = vpack.c.bf16 %v1542, %v1474
        %v1683 = vpack.c.bf16 %v1543, %v1475
        %v1684 = vpack.c.bf16 %v1676, %v1608
        %v1685 = vpack.c.bf16 %v1677, %v1609
        %v1686 = vpack.c.bf16 %v1678, %v1610
        %v1687 = vpack.c.bf16 %v1679, %v1611
        %1692 = vrot.lane.b32.xlu0 %v962, 96
        %v1693 = vpop.permute.xlu0 %1692
        %1694 = vrot.lane.b32.xlu0 %v965, 96
        %v1695 = vpop.permute.xlu0 %1694
        %1696 = vrot.lane.b32.xlu0 %v970, 96
        %v1697 = vpop.permute.xlu0 %1696
        %1698 = vrot.lane.b32.xlu0 %v973, 96
        %v1699 = vpop.permute.xlu0 %1698
        %1704 = vrot.lane.b32.xlu0 %v962, 64
        %v1705 = vpop.permute.xlu0 %1704
        %1706 = vrot.lane.b32.xlu0 %v965, 64
        %v1707 = vpop.permute.xlu0 %1706
        %1708 = vrot.lane.b32.xlu0 %v970, 64
        %v1709 = vpop.permute.xlu0 %1708
        %1710 = vrot.lane.b32.xlu0 %v973, 64
        %v1711 = vpop.permute.xlu0 %1710
        %1716 = vrot.lane.b32.xlu0 %v962, 32
        %v1717 = vpop.permute.xlu0 %1716
        %1718 = vrot.lane.b32.xlu0 %v965, 32
        %v1719 = vpop.permute.xlu0 %1718
        %1720 = vrot.lane.b32.xlu0 %v970, 32
        %v1721 = vpop.permute.xlu0 %1720
        %1722 = vrot.lane.b32.xlu0 %v973, 32
        %v1723 = vpop.permute.xlu0 %1722
        %v1728 = vcombine.low %v962, %v1705
        %v1729 = vcombine.high %v962, %v1705
        %v1731 = vunpack.c.l.s4 1983009808
        %v1732 = vunpack.c.0.s8 %v1731
        %v1733 = vlaneseq
        %v1734 = vshrl.u32 %v1733, 7
        %v1735 = vsub.s32 %v1732, %v1734
        %v1736 = vrot.slane %v1728, %v1735
        %v1738 = vunpack.c.l.s4 1983009808
        %v1739 = vunpack.c.0.s8 %v1738
        %v1740 = vlaneseq
        %v1741 = vshrl.u32 %v1740, 7
        %v1742 = vsub.s32 %v1739, %v1741
        %v1743 = vrot.slane %v1729, %v1742
        %v1744 = vcombine.low %v1693, %v1717
        %v1745 = vcombine.high %v1693, %v1717
        %v1747 = vunpack.c.l.s4 1983009808
        %v1748 = vunpack.c.0.s8 %v1747
        %v1749 = vlaneseq
        %v1750 = vshrl.u32 %v1749, 7
        %v1751 = vsub.s32 %v1748, %v1750
        %v1752 = vrot.slane %v1744, %v1751
        %v1754 = vunpack.c.l.s4 1983009808
        %v1755 = vunpack.c.0.s8 %v1754
        %v1756 = vlaneseq
        %v1757 = vshrl.u32 %v1756, 7
        %v1758 = vsub.s32 %v1755, %v1757
        %v1759 = vrot.slane %v1745, %v1758
        %v1760 = vcombine.low %v1736, %v1752
        %v1761 = vcombine.high %v1736, %v1752
        %v1763 = vunpack.c.l.s4 1934713408
        %v1764 = vunpack.c.0.s8 %v1763
        %v1765 = vlaneseq
        %v1766 = vshrl.u32 %v1765, 7
        %v1767 = vsub.s32 %v1764, %v1766
        %v1768 = vrot.slane %v1760, %v1767
        %v1770 = vunpack.c.l.s4 1934713408
        %v1771 = vunpack.c.0.s8 %v1770
        %v1772 = vlaneseq
        %v1773 = vshrl.u32 %v1772, 7
        %v1774 = vsub.s32 %v1771, %v1773
        %v1775 = vrot.slane %v1761, %v1774
        %v1776 = vcombine.low %v1743, %v1759
        %v1777 = vcombine.high %v1743, %v1759
        %v1779 = vunpack.c.l.s4 1934713408
        %v1780 = vunpack.c.0.s8 %v1779
        %v1781 = vlaneseq
        %v1782 = vshrl.u32 %v1781, 7
        %v1783 = vsub.s32 %v1780, %v1782
        %v1784 = vrot.slane %v1776, %v1783
        %v1786 = vunpack.c.l.s4 1934713408
        %v1787 = vunpack.c.0.s8 %v1786
        %v1788 = vlaneseq
        %v1789 = vshrl.u32 %v1788, 7
        %v1790 = vsub.s32 %v1787, %v1789
        %v1791 = vrot.slane %v1777, %v1790
        %v1792 = vcombine.high %v1768, 0.0
        %v1793 = vcombine.high %v1775, 0.0
        %v1794 = vcombine.high %v1784, 0.0
        %v1795 = vcombine.high %v1791, 0.0
        %v1796 = vcombine.low %v965, %v1707
        %v1797 = vcombine.high %v965, %v1707
        %v1799 = vunpack.c.l.s4 1983009808
        %v1800 = vunpack.c.0.s8 %v1799
        %v1801 = vlaneseq
        %v1802 = vshrl.u32 %v1801, 7
        %v1803 = vsub.s32 %v1800, %v1802
        %v1804 = vrot.slane %v1796, %v1803
        %v1806 = vunpack.c.l.s4 1983009808
        %v1807 = vunpack.c.0.s8 %v1806
        %v1808 = vlaneseq
        %v1809 = vshrl.u32 %v1808, 7
        %v1810 = vsub.s32 %v1807, %v1809
        %v1811 = vrot.slane %v1797, %v1810
        %v1812 = vcombine.low %v1695, %v1719
        %v1813 = vcombine.high %v1695, %v1719
        %v1815 = vunpack.c.l.s4 1983009808
        %v1816 = vunpack.c.0.s8 %v1815
        %v1817 = vlaneseq
        %v1818 = vshrl.u32 %v1817, 7
        %v1819 = vsub.s32 %v1816, %v1818
        %v1820 = vrot.slane %v1812, %v1819
        %v1822 = vunpack.c.l.s4 1983009808
        %v1823 = vunpack.c.0.s8 %v1822
        %v1824 = vlaneseq
        %v1825 = vshrl.u32 %v1824, 7
        %v1826 = vsub.s32 %v1823, %v1825
        %v1827 = vrot.slane %v1813, %v1826
        %v1828 = vcombine.low %v1804, %v1820
        %v1829 = vcombine.high %v1804, %v1820
        %v1831 = vunpack.c.l.s4 1934713408
        %v1832 = vunpack.c.0.s8 %v1831
        %v1833 = vlaneseq
        %v1834 = vshrl.u32 %v1833, 7
        %v1835 = vsub.s32 %v1832, %v1834
        %v1836 = vrot.slane %v1828, %v1835
        %v1838 = vunpack.c.l.s4 1934713408
        %v1839 = vunpack.c.0.s8 %v1838
        %v1840 = vlaneseq
        %v1841 = vshrl.u32 %v1840, 7
        %v1842 = vsub.s32 %v1839, %v1841
        %v1843 = vrot.slane %v1829, %v1842
        %v1844 = vcombine.low %v1811, %v1827
        %v1845 = vcombine.high %v1811, %v1827
        %v1847 = vunpack.c.l.s4 1934713408
        %v1848 = vunpack.c.0.s8 %v1847
        %v1849 = vlaneseq
        %v1850 = vshrl.u32 %v1849, 7
        %v1851 = vsub.s32 %v1848, %v1850
        %v1852 = vrot.slane %v1844, %v1851
        %v1854 = vunpack.c.l.s4 1934713408
        %v1855 = vunpack.c.0.s8 %v1854
        %v1856 = vlaneseq
        %v1857 = vshrl.u32 %v1856, 7
        %v1858 = vsub.s32 %v1855, %v1857
        %v1859 = vrot.slane %v1845, %v1858
        %v1860 = vcombine.high %v1836, 0.0
        %v1861 = vcombine.high %v1843, 0.0
        %v1862 = vcombine.high %v1852, 0.0
        %v1863 = vcombine.high %v1859, 0.0
        %v1864 = vcombine.low %v970, %v1709
        %v1865 = vcombine.high %v970, %v1709
        %v1867 = vunpack.c.l.s4 1983009808
        %v1868 = vunpack.c.0.s8 %v1867
        %v1869 = vlaneseq
        %v1870 = vshrl.u32 %v1869, 7
        %v1871 = vsub.s32 %v1868, %v1870
        %v1872 = vrot.slane %v1864, %v1871
        %v1874 = vunpack.c.l.s4 1983009808
        %v1875 = vunpack.c.0.s8 %v1874
        %v1876 = vlaneseq
        %v1877 = vshrl.u32 %v1876, 7
        %v1878 = vsub.s32 %v1875, %v1877
        %v1879 = vrot.slane %v1865, %v1878
        %v1880 = vcombine.low %v1697, %v1721
        %v1881 = vcombine.high %v1697, %v1721
        %v1883 = vunpack.c.l.s4 1983009808
        %v1884 = vunpack.c.0.s8 %v1883
        %v1885 = vlaneseq
        %v1886 = vshrl.u32 %v1885, 7
        %v1887 = vsub.s32 %v1884, %v1886
        %v1888 = vrot.slane %v1880, %v1887
        %v1890 = vunpack.c.l.s4 1983009808
        %v1891 = vunpack.c.0.s8 %v1890
        %v1892 = vlaneseq
        %v1893 = vshrl.u32 %v1892, 7
        %v1894 = vsub.s32 %v1891, %v1893
        %v1895 = vrot.slane %v1881, %v1894
        %v1896 = vcombine.low %v1872, %v1888
        %v1897 = vcombine.high %v1872, %v1888
        %v1899 = vunpack.c.l.s4 1934713408
        %v1900 = vunpack.c.0.s8 %v1899
        %v1901 = vlaneseq
        %v1902 = vshrl.u32 %v1901, 7
        %v1903 = vsub.s32 %v1900, %v1902
        %v1904 = vrot.slane %v1896, %v1903
        %v1906 = vunpack.c.l.s4 1934713408
        %v1907 = vunpack.c.0.s8 %v1906
        %v1908 = vlaneseq
        %v1909 = vshrl.u32 %v1908, 7
        %v1910 = vsub.s32 %v1907, %v1909
        %v1911 = vrot.slane %v1897, %v1910
        %v1912 = vcombine.low %v1879, %v1895
        %v1913 = vcombine.high %v1879, %v1895
        %v1915 = vunpack.c.l.s4 1934713408
        %v1916 = vunpack.c.0.s8 %v1915
        %v1917 = vlaneseq
        %v1918 = vshrl.u32 %v1917, 7
        %v1919 = vsub.s32 %v1916, %v1918
        %v1920 = vrot.slane %v1912, %v1919
        %v1922 = vunpack.c.l.s4 1934713408
        %v1923 = vunpack.c.0.s8 %v1922
        %v1924 = vlaneseq
        %v1925 = vshrl.u32 %v1924, 7
        %v1926 = vsub.s32 %v1923, %v1925
        %v1927 = vrot.slane %v1913, %v1926
        %v1928 = vcombine.high %v1904, 0.0
        %v1929 = vcombine.high %v1911, 0.0
        %v1930 = vcombine.high %v1920, 0.0
        %v1931 = vcombine.high %v1927, 0.0
        %v1932 = vcombine.low %v973, %v1711
        %v1933 = vcombine.high %v973, %v1711
        %v1935 = vunpack.c.l.s4 1983009808
        %v1936 = vunpack.c.0.s8 %v1935
        %v1937 = vlaneseq
        %v1938 = vshrl.u32 %v1937, 7
        %v1939 = vsub.s32 %v1936, %v1938
        %v1940 = vrot.slane %v1932, %v1939
        %v1942 = vunpack.c.l.s4 1983009808
        %v1943 = vunpack.c.0.s8 %v1942
        %v1944 = vlaneseq
        %v1945 = vshrl.u32 %v1944, 7
        %v1946 = vsub.s32 %v1943, %v1945
        %v1947 = vrot.slane %v1933, %v1946
        %v1948 = vcombine.low %v1699, %v1723
        %v1949 = vcombine.high %v1699, %v1723
        %v1951 = vunpack.c.l.s4 1983009808
        %v1952 = vunpack.c.0.s8 %v1951
        %v1953 = vlaneseq
        %v1954 = vshrl.u32 %v1953, 7
        %v1955 = vsub.s32 %v1952, %v1954
        %v1956 = vrot.slane %v1948, %v1955
        %v1958 = vunpack.c.l.s4 1983009808
        %v1959 = vunpack.c.0.s8 %v1958
        %v1960 = vlaneseq
        %v1961 = vshrl.u32 %v1960, 7
        %v1962 = vsub.s32 %v1959, %v1961
        %v1963 = vrot.slane %v1949, %v1962
        %v1964 = vcombine.low %v1940, %v1956
        %v1965 = vcombine.high %v1940, %v1956
        %v1967 = vunpack.c.l.s4 1934713408
        %v1968 = vunpack.c.0.s8 %v1967
        %v1969 = vlaneseq
        %v1970 = vshrl.u32 %v1969, 7
        %v1971 = vsub.s32 %v1968, %v1970
        %v1972 = vrot.slane %v1964, %v1971
        %v1974 = vunpack.c.l.s4 1934713408
        %v1975 = vunpack.c.0.s8 %v1974
        %v1976 = vlaneseq
        %v1977 = vshrl.u32 %v1976, 7
        %v1978 = vsub.s32 %v1975, %v1977
        %v1979 = vrot.slane %v1965, %v1978
        %v1980 = vcombine.low %v1947, %v1963
        %v1981 = vcombine.high %v1947, %v1963
        %v1983 = vunpack.c.l.s4 1934713408
        %v1984 = vunpack.c.0.s8 %v1983
        %v1985 = vlaneseq
        %v1986 = vshrl.u32 %v1985, 7
        %v1987 = vsub.s32 %v1984, %v1986
        %v1988 = vrot.slane %v1980, %v1987
        %v1990 = vunpack.c.l.s4 1934713408
        %v1991 = vunpack.c.0.s8 %v1990
        %v1992 = vlaneseq
        %v1993 = vshrl.u32 %v1992, 7
        %v1994 = vsub.s32 %v1991, %v1993
        %v1995 = vrot.slane %v1981, %v1994
        %v1996 = vcombine.high %v1972, 0.0
        %v1997 = vcombine.high %v1979, 0.0
        %v1998 = vcombine.high %v1988, 0.0
        %v1999 = vcombine.high %v1995, 0.0
        %v2000 = vcombine.low %v1768, %v1775
        %v2002 = vunpack.c.l.s4 1983009808
        %v2003 = vunpack.c.0.s8 %v2002
        %v2004 = vlaneseq
        %v2005 = vshrl.u32 %v2004, 7
        %v2006 = vsub.s32 %v2003, %v2005
        %v2007 = vrot.slane %v2000, %v2006
        %v2008 = vcombine.low %v1792, %v1793
        %v2010 = vunpack.c.l.s4 1983009808
        %v2011 = vunpack.c.0.s8 %v2010
        %v2012 = vlaneseq
        %v2013 = vshrl.u32 %v2012, 7
        %v2014 = vsub.s32 %v2011, %v2013
        %v2015 = vrot.slane %v2008, %v2014
        %v2016 = vcombine.low %v1784, %v1791
        %v2018 = vunpack.c.l.s4 1983009808
        %v2019 = vunpack.c.0.s8 %v2018
        %v2020 = vlaneseq
        %v2021 = vshrl.u32 %v2020, 7
        %v2022 = vsub.s32 %v2019, %v2021
        %v2023 = vrot.slane %v2016, %v2022
        %v2024 = vcombine.low %v1794, %v1795
        %v2026 = vunpack.c.l.s4 1983009808
        %v2027 = vunpack.c.0.s8 %v2026
        %v2028 = vlaneseq
        %v2029 = vshrl.u32 %v2028, 7
        %v2030 = vsub.s32 %v2027, %v2029
        %v2031 = vrot.slane %v2024, %v2030
        %v2032 = vcombine.low %v2007, %v2015
        %v2033 = vcombine.high %v2007, %v2015
        %v2035 = vunpack.c.l.s4 1934713408
        %v2036 = vunpack.c.0.s8 %v2035
        %v2037 = vlaneseq
        %v2038 = vshrl.u32 %v2037, 7
        %v2039 = vsub.s32 %v2036, %v2038
        %v2040 = vrot.slane %v2032, %v2039
        %v2042 = vunpack.c.l.s4 1934713408
        %v2043 = vunpack.c.0.s8 %v2042
        %v2044 = vlaneseq
        %v2045 = vshrl.u32 %v2044, 7
        %v2046 = vsub.s32 %v2043, %v2045
        %v2047 = vrot.slane %v2033, %v2046
        %v2048 = vcombine.low %v2023, %v2031
        %v2049 = vcombine.high %v2023, %v2031
        %v2051 = vunpack.c.l.s4 1934713408
        %v2052 = vunpack.c.0.s8 %v2051
        %v2053 = vlaneseq
        %v2054 = vshrl.u32 %v2053, 7
        %v2055 = vsub.s32 %v2052, %v2054
        %v2056 = vrot.slane %v2048, %v2055
        %v2058 = vunpack.c.l.s4 1934713408
        %v2059 = vunpack.c.0.s8 %v2058
        %v2060 = vlaneseq
        %v2061 = vshrl.u32 %v2060, 7
        %v2062 = vsub.s32 %v2059, %v2061
        %v2063 = vrot.slane %v2049, %v2062
        %v2064 = vcombine.low %v2040, %v2056
        %v2065 = vcombine.high %v2040, %v2056
        %v2066 = vcombine.low %v2047, %v2063
        %v2067 = vcombine.high %v2047, %v2063
        %v2068 = vcombine.low %v1836, %v1843
        %v2070 = vunpack.c.l.s4 1983009808
        %v2071 = vunpack.c.0.s8 %v2070
        %v2072 = vlaneseq
        %v2073 = vshrl.u32 %v2072, 7
        %v2074 = vsub.s32 %v2071, %v2073
        %v2075 = vrot.slane %v2068, %v2074
        %v2076 = vcombine.low %v1860, %v1861
        %v2078 = vunpack.c.l.s4 1983009808
        %v2079 = vunpack.c.0.s8 %v2078
        %v2080 = vlaneseq
        %v2081 = vshrl.u32 %v2080, 7
        %v2082 = vsub.s32 %v2079, %v2081
        %v2083 = vrot.slane %v2076, %v2082
        %v2084 = vcombine.low %v1852, %v1859
        %v2086 = vunpack.c.l.s4 1983009808
        %v2087 = vunpack.c.0.s8 %v2086
        %v2088 = vlaneseq
        %v2089 = vshrl.u32 %v2088, 7
        %v2090 = vsub.s32 %v2087, %v2089
        %v2091 = vrot.slane %v2084, %v2090
        %v2092 = vcombine.low %v1862, %v1863
        %v2094 = vunpack.c.l.s4 1983009808
        %v2095 = vunpack.c.0.s8 %v2094
        %v2096 = vlaneseq
        %v2097 = vshrl.u32 %v2096, 7
        %v2098 = vsub.s32 %v2095, %v2097
        %v2099 = vrot.slane %v2092, %v2098
        %v2100 = vcombine.low %v2075, %v2083
        %v2101 = vcombine.high %v2075, %v2083
        %v2103 = vunpack.c.l.s4 1934713408
        %v2104 = vunpack.c.0.s8 %v2103
        %v2105 = vlaneseq
        %v2106 = vshrl.u32 %v2105, 7
        %v2107 = vsub.s32 %v2104, %v2106
        %v2108 = vrot.slane %v2100, %v2107
        %v2110 = vunpack.c.l.s4 1934713408
        %v2111 = vunpack.c.0.s8 %v2110
        %v2112 = vlaneseq
        %v2113 = vshrl.u32 %v2112, 7
        %v2114 = vsub.s32 %v2111, %v2113
        %v2115 = vrot.slane %v2101, %v2114
        %v2116 = vcombine.low %v2091, %v2099
        %v2117 = vcombine.high %v2091, %v2099
        %v2119 = vunpack.c.l.s4 1934713408
        %v2120 = vunpack.c.0.s8 %v2119
        %v2121 = vlaneseq
        %v2122 = vshrl.u32 %v2121, 7
        %v2123 = vsub.s32 %v2120, %v2122
        %v2124 = vrot.slane %v2116, %v2123
        %v2126 = vunpack.c.l.s4 1934713408
        %v2127 = vunpack.c.0.s8 %v2126
        %v2128 = vlaneseq
        %v2129 = vshrl.u32 %v2128, 7
        %v2130 = vsub.s32 %v2127, %v2129
        %v2131 = vrot.slane %v2117, %v2130
        %v2132 = vcombine.low %v2108, %v2124
        %v2133 = vcombine.high %v2108, %v2124
        %v2134 = vcombine.low %v2115, %v2131
        %v2135 = vcombine.high %v2115, %v2131
        %v2136 = vcombine.low %v1904, %v1911
        %v2138 = vunpack.c.l.s4 1983009808
        %v2139 = vunpack.c.0.s8 %v2138
        %v2140 = vlaneseq
        %v2141 = vshrl.u32 %v2140, 7
        %v2142 = vsub.s32 %v2139, %v2141
        %v2143 = vrot.slane %v2136, %v2142
        %v2144 = vcombine.low %v1928, %v1929
        %v2146 = vunpack.c.l.s4 1983009808
        %v2147 = vunpack.c.0.s8 %v2146
        %v2148 = vlaneseq
        %v2149 = vshrl.u32 %v2148, 7
        %v2150 = vsub.s32 %v2147, %v2149
        %v2151 = vrot.slane %v2144, %v2150
        %v2152 = vcombine.low %v1920, %v1927
        %v2154 = vunpack.c.l.s4 1983009808
        %v2155 = vunpack.c.0.s8 %v2154
        %v2156 = vlaneseq
        %v2157 = vshrl.u32 %v2156, 7
        %v2158 = vsub.s32 %v2155, %v2157
        %v2159 = vrot.slane %v2152, %v2158
        %v2160 = vcombine.low %v1930, %v1931
        %v2162 = vunpack.c.l.s4 1983009808
        %v2163 = vunpack.c.0.s8 %v2162
        %v2164 = vlaneseq
        %v2165 = vshrl.u32 %v2164, 7
        %v2166 = vsub.s32 %v2163, %v2165
        %v2167 = vrot.slane %v2160, %v2166
        %v2168 = vcombine.low %v2143, %v2151
        %v2169 = vcombine.high %v2143, %v2151
        %v2171 = vunpack.c.l.s4 1934713408
        %v2172 = vunpack.c.0.s8 %v2171
        %v2173 = vlaneseq
        %v2174 = vshrl.u32 %v2173, 7
        %v2175 = vsub.s32 %v2172, %v2174
        %v2176 = vrot.slane %v2168, %v2175
        %v2178 = vunpack.c.l.s4 1934713408
        %v2179 = vunpack.c.0.s8 %v2178
        %v2180 = vlaneseq
        %v2181 = vshrl.u32 %v2180, 7
        %v2182 = vsub.s32 %v2179, %v2181
        %v2183 = vrot.slane %v2169, %v2182
        %v2184 = vcombine.low %v2159, %v2167
        %v2185 = vcombine.high %v2159, %v2167
        %v2187 = vunpack.c.l.s4 1934713408
        %v2188 = vunpack.c.0.s8 %v2187
        %v2189 = vlaneseq
        %v2190 = vshrl.u32 %v2189, 7
        %v2191 = vsub.s32 %v2188, %v2190
        %v2192 = vrot.slane %v2184, %v2191
        %v2194 = vunpack.c.l.s4 1934713408
        %v2195 = vunpack.c.0.s8 %v2194
        %v2196 = vlaneseq
        %v2197 = vshrl.u32 %v2196, 7
        %v2198 = vsub.s32 %v2195, %v2197
        %v2199 = vrot.slane %v2185, %v2198
        %v2200 = vcombine.low %v2176, %v2192
        %v2201 = vcombine.high %v2176, %v2192
        %v2202 = vcombine.low %v2183, %v2199
        %v2203 = vcombine.high %v2183, %v2199
        %v2204 = vcombine.low %v1972, %v1979
        %v2206 = vunpack.c.l.s4 1983009808
        %v2207 = vunpack.c.0.s8 %v2206
        %v2208 = vlaneseq
        %v2209 = vshrl.u32 %v2208, 7
        %v2210 = vsub.s32 %v2207, %v2209
        %v2211 = vrot.slane %v2204, %v2210
        %v2212 = vcombine.low %v1996, %v1997
        %v2214 = vunpack.c.l.s4 1983009808
        %v2215 = vunpack.c.0.s8 %v2214
        %v2216 = vlaneseq
        %v2217 = vshrl.u32 %v2216, 7
        %v2218 = vsub.s32 %v2215, %v2217
        %v2219 = vrot.slane %v2212, %v2218
        %v2220 = vcombine.low %v1988, %v1995
        %v2222 = vunpack.c.l.s4 1983009808
        %v2223 = vunpack.c.0.s8 %v2222
        %v2224 = vlaneseq
        %v2225 = vshrl.u32 %v2224, 7
        %v2226 = vsub.s32 %v2223, %v2225
        %v2227 = vrot.slane %v2220, %v2226
        %v2228 = vcombine.low %v1998, %v1999
        %v2230 = vunpack.c.l.s4 1983009808
        %v2231 = vunpack.c.0.s8 %v2230
        %v2232 = vlaneseq
        %v2233 = vshrl.u32 %v2232, 7
        %v2234 = vsub.s32 %v2231, %v2233
        %v2235 = vrot.slane %v2228, %v2234
        %v2236 = vcombine.low %v2211, %v2219
        %v2237 = vcombine.high %v2211, %v2219
        %v2239 = vunpack.c.l.s4 1934713408
        %v2240 = vunpack.c.0.s8 %v2239
        %v2241 = vlaneseq
        %v2242 = vshrl.u32 %v2241, 7
        %v2243 = vsub.s32 %v2240, %v2242
        %v2244 = vrot.slane %v2236, %v2243
        %v2246 = vunpack.c.l.s4 1934713408
        %v2247 = vunpack.c.0.s8 %v2246
        %v2248 = vlaneseq
        %v2249 = vshrl.u32 %v2248, 7
        %v2250 = vsub.s32 %v2247, %v2249
        %v2251 = vrot.slane %v2237, %v2250
        %v2252 = vcombine.low %v2227, %v2235
        %v2253 = vcombine.high %v2227, %v2235
        %v2255 = vunpack.c.l.s4 1934713408
        %v2256 = vunpack.c.0.s8 %v2255
        %v2257 = vlaneseq
        %v2258 = vshrl.u32 %v2257, 7
        %v2259 = vsub.s32 %v2256, %v2258
        %v2260 = vrot.slane %v2252, %v2259
        %v2262 = vunpack.c.l.s4 1934713408
        %v2263 = vunpack.c.0.s8 %v2262
        %v2264 = vlaneseq
        %v2265 = vshrl.u32 %v2264, 7
        %v2266 = vsub.s32 %v2263, %v2265
        %v2267 = vrot.slane %v2253, %v2266
        %v2268 = vcombine.low %v2244, %v2260
        %v2269 = vcombine.high %v2244, %v2260
        %v2270 = vcombine.low %v2251, %v2267
        %v2271 = vcombine.high %v2251, %v2267
        %v2272 = vpack.c.bf16 %v2132, %v2064
        %v2273 = vpack.c.bf16 %v2133, %v2065
        %v2274 = vpack.c.bf16 %v2134, %v2066
        %v2275 = vpack.c.bf16 %v2135, %v2067
        %v2276 = vpack.c.bf16 %v2268, %v2200
        %v2277 = vpack.c.bf16 %v2269, %v2201
        %v2278 = vpack.c.bf16 %v2270, %v2202
        %v2279 = vpack.c.bf16 %v2271, %v2203
        %2284 = vrot.lane.b32.xlu0 %v1082, 96
        %v2285 = vpop.permute.xlu0 %2284
        %2286 = vrot.lane.b32.xlu0 %v1085, 96
        %v2287 = vpop.permute.xlu0 %2286
        %2288 = vrot.lane.b32.xlu0 %v1090, 96
        %v2289 = vpop.permute.xlu0 %2288
        %2290 = vrot.lane.b32.xlu0 %v1093, 96
        %v2291 = vpop.permute.xlu0 %2290
        %2296 = vrot.lane.b32.xlu0 %v1082, 64
        %v2297 = vpop.permute.xlu0 %2296
        %2298 = vrot.lane.b32.xlu0 %v1085, 64
        %v2299 = vpop.permute.xlu0 %2298
        %2300 = vrot.lane.b32.xlu0 %v1090, 64
        %v2301 = vpop.permute.xlu0 %2300
        %2302 = vrot.lane.b32.xlu0 %v1093, 64
        %v2303 = vpop.permute.xlu0 %2302
        %2308 = vrot.lane.b32.xlu0 %v1082, 32
        %v2309 = vpop.permute.xlu0 %2308
        %2310 = vrot.lane.b32.xlu0 %v1085, 32
        %v2311 = vpop.permute.xlu0 %2310
        %2312 = vrot.lane.b32.xlu0 %v1090, 32
        %v2313 = vpop.permute.xlu0 %2312
        %2314 = vrot.lane.b32.xlu0 %v1093, 32
        %v2315 = vpop.permute.xlu0 %2314
        %v2320 = vcombine.low %v1082, %v2297
        %v2321 = vcombine.high %v1082, %v2297
        %v2323 = vunpack.c.l.s4 1983009808
        %v2324 = vunpack.c.0.s8 %v2323
        %v2325 = vlaneseq
        %v2326 = vshrl.u32 %v2325, 7
        %v2327 = vsub.s32 %v2324, %v2326
        %v2328 = vrot.slane %v2320, %v2327
        %v2330 = vunpack.c.l.s4 1983009808
        %v2331 = vunpack.c.0.s8 %v2330
        %v2332 = vlaneseq
        %v2333 = vshrl.u32 %v2332, 7
        %v2334 = vsub.s32 %v2331, %v2333
        %v2335 = vrot.slane %v2321, %v2334
        %v2336 = vcombine.low %v2285, %v2309
        %v2337 = vcombine.high %v2285, %v2309
        %v2339 = vunpack.c.l.s4 1983009808
        %v2340 = vunpack.c.0.s8 %v2339
        %v2341 = vlaneseq
        %v2342 = vshrl.u32 %v2341, 7
        %v2343 = vsub.s32 %v2340, %v2342
        %v2344 = vrot.slane %v2336, %v2343
        %v2346 = vunpack.c.l.s4 1983009808
        %v2347 = vunpack.c.0.s8 %v2346
        %v2348 = vlaneseq
        %v2349 = vshrl.u32 %v2348, 7
        %v2350 = vsub.s32 %v2347, %v2349
        %v2351 = vrot.slane %v2337, %v2350
        %v2352 = vcombine.low %v2328, %v2344
        %v2353 = vcombine.high %v2328, %v2344
        %v2355 = vunpack.c.l.s4 1934713408
        %v2356 = vunpack.c.0.s8 %v2355
        %v2357 = vlaneseq
        %v2358 = vshrl.u32 %v2357, 7
        %v2359 = vsub.s32 %v2356, %v2358
        %v2360 = vrot.slane %v2352, %v2359
        %v2362 = vunpack.c.l.s4 1934713408
        %v2363 = vunpack.c.0.s8 %v2362
        %v2364 = vlaneseq
        %v2365 = vshrl.u32 %v2364, 7
        %v2366 = vsub.s32 %v2363, %v2365
        %v2367 = vrot.slane %v2353, %v2366
        %v2368 = vcombine.low %v2335, %v2351
        %v2369 = vcombine.high %v2335, %v2351
        %v2371 = vunpack.c.l.s4 1934713408
        %v2372 = vunpack.c.0.s8 %v2371
        %v2373 = vlaneseq
        %v2374 = vshrl.u32 %v2373, 7
        %v2375 = vsub.s32 %v2372, %v2374
        %v2376 = vrot.slane %v2368, %v2375
        %v2378 = vunpack.c.l.s4 1934713408
        %v2379 = vunpack.c.0.s8 %v2378
        %v2380 = vlaneseq
        %v2381 = vshrl.u32 %v2380, 7
        %v2382 = vsub.s32 %v2379, %v2381
        %v2383 = vrot.slane %v2369, %v2382
        %v2384 = vcombine.high %v2360, 0.0
        %v2385 = vcombine.high %v2367, 0.0
        %v2386 = vcombine.high %v2376, 0.0
        %v2387 = vcombine.high %v2383, 0.0
        %v2388 = vcombine.low %v1085, %v2299
        %v2389 = vcombine.high %v1085, %v2299
        %v2391 = vunpack.c.l.s4 1983009808
        %v2392 = vunpack.c.0.s8 %v2391
        %v2393 = vlaneseq
        %v2394 = vshrl.u32 %v2393, 7
        %v2395 = vsub.s32 %v2392, %v2394
        %v2396 = vrot.slane %v2388, %v2395
        %v2398 = vunpack.c.l.s4 1983009808
        %v2399 = vunpack.c.0.s8 %v2398
        %v2400 = vlaneseq
        %v2401 = vshrl.u32 %v2400, 7
        %v2402 = vsub.s32 %v2399, %v2401
        %v2403 = vrot.slane %v2389, %v2402
        %v2404 = vcombine.low %v2287, %v2311
        %v2405 = vcombine.high %v2287, %v2311
        %v2407 = vunpack.c.l.s4 1983009808
        %v2408 = vunpack.c.0.s8 %v2407
        %v2409 = vlaneseq
        %v2410 = vshrl.u32 %v2409, 7
        %v2411 = vsub.s32 %v2408, %v2410
        %v2412 = vrot.slane %v2404, %v2411
        %v2414 = vunpack.c.l.s4 1983009808
        %v2415 = vunpack.c.0.s8 %v2414
        %v2416 = vlaneseq
        %v2417 = vshrl.u32 %v2416, 7
        %v2418 = vsub.s32 %v2415, %v2417
        %v2419 = vrot.slane %v2405, %v2418
        %v2420 = vcombine.low %v2396, %v2412
        %v2421 = vcombine.high %v2396, %v2412
        %v2423 = vunpack.c.l.s4 1934713408
        %v2424 = vunpack.c.0.s8 %v2423
        %v2425 = vlaneseq
        %v2426 = vshrl.u32 %v2425, 7
        %v2427 = vsub.s32 %v2424, %v2426
        %v2428 = vrot.slane %v2420, %v2427
        %v2430 = vunpack.c.l.s4 1934713408
        %v2431 = vunpack.c.0.s8 %v2430
        %v2432 = vlaneseq
        %v2433 = vshrl.u32 %v2432, 7
        %v2434 = vsub.s32 %v2431, %v2433
        %v2435 = vrot.slane %v2421, %v2434
        %v2436 = vcombine.low %v2403, %v2419
        %v2437 = vcombine.high %v2403, %v2419
        %v2439 = vunpack.c.l.s4 1934713408
        %v2440 = vunpack.c.0.s8 %v2439
        %v2441 = vlaneseq
        %v2442 = vshrl.u32 %v2441, 7
        %v2443 = vsub.s32 %v2440, %v2442
        %v2444 = vrot.slane %v2436, %v2443
        %v2446 = vunpack.c.l.s4 1934713408
        %v2447 = vunpack.c.0.s8 %v2446
        %v2448 = vlaneseq
        %v2449 = vshrl.u32 %v2448, 7
        %v2450 = vsub.s32 %v2447, %v2449
        %v2451 = vrot.slane %v2437, %v2450
        %v2452 = vcombine.high %v2428, 0.0
        %v2453 = vcombine.high %v2435, 0.0
        %v2454 = vcombine.high %v2444, 0.0
        %v2455 = vcombine.high %v2451, 0.0
        %v2456 = vcombine.low %v1090, %v2301
        %v2457 = vcombine.high %v1090, %v2301
        %v2459 = vunpack.c.l.s4 1983009808
        %v2460 = vunpack.c.0.s8 %v2459
        %v2461 = vlaneseq
        %v2462 = vshrl.u32 %v2461, 7
        %v2463 = vsub.s32 %v2460, %v2462
        %v2464 = vrot.slane %v2456, %v2463
        %v2466 = vunpack.c.l.s4 1983009808
        %v2467 = vunpack.c.0.s8 %v2466
        %v2468 = vlaneseq
        %v2469 = vshrl.u32 %v2468, 7
        %v2470 = vsub.s32 %v2467, %v2469
        %v2471 = vrot.slane %v2457, %v2470
        %v2472 = vcombine.low %v2289, %v2313
        %v2473 = vcombine.high %v2289, %v2313
        %v2475 = vunpack.c.l.s4 1983009808
        %v2476 = vunpack.c.0.s8 %v2475
        %v2477 = vlaneseq
        %v2478 = vshrl.u32 %v2477, 7
        %v2479 = vsub.s32 %v2476, %v2478
        %v2480 = vrot.slane %v2472, %v2479
        %v2482 = vunpack.c.l.s4 1983009808
        %v2483 = vunpack.c.0.s8 %v2482
        %v2484 = vlaneseq
        %v2485 = vshrl.u32 %v2484, 7
        %v2486 = vsub.s32 %v2483, %v2485
        %v2487 = vrot.slane %v2473, %v2486
        %v2488 = vcombine.low %v2464, %v2480
        %v2489 = vcombine.high %v2464, %v2480
        %v2491 = vunpack.c.l.s4 1934713408
        %v2492 = vunpack.c.0.s8 %v2491
        %v2493 = vlaneseq
        %v2494 = vshrl.u32 %v2493, 7
        %v2495 = vsub.s32 %v2492, %v2494
        %v2496 = vrot.slane %v2488, %v2495
        %v2498 = vunpack.c.l.s4 1934713408
        %v2499 = vunpack.c.0.s8 %v2498
        %v2500 = vlaneseq
        %v2501 = vshrl.u32 %v2500, 7
        %v2502 = vsub.s32 %v2499, %v2501
        %v2503 = vrot.slane %v2489, %v2502
        %v2504 = vcombine.low %v2471, %v2487
        %v2505 = vcombine.high %v2471, %v2487
        %v2507 = vunpack.c.l.s4 1934713408
        %v2508 = vunpack.c.0.s8 %v2507
        %v2509 = vlaneseq
        %v2510 = vshrl.u32 %v2509, 7
        %v2511 = vsub.s32 %v2508, %v2510
        %v2512 = vrot.slane %v2504, %v2511
        %v2514 = vunpack.c.l.s4 1934713408
        %v2515 = vunpack.c.0.s8 %v2514
        %v2516 = vlaneseq
        %v2517 = vshrl.u32 %v2516, 7
        %v2518 = vsub.s32 %v2515, %v2517
        %v2519 = vrot.slane %v2505, %v2518
        %v2520 = vcombine.high %v2496, 0.0
        %v2521 = vcombine.high %v2503, 0.0
        %v2522 = vcombine.high %v2512, 0.0
        %v2523 = vcombine.high %v2519, 0.0
        %v2524 = vcombine.low %v1093, %v2303
        %v2525 = vcombine.high %v1093, %v2303
        %v2527 = vunpack.c.l.s4 1983009808
        %v2528 = vunpack.c.0.s8 %v2527
        %v2529 = vlaneseq
        %v2530 = vshrl.u32 %v2529, 7
        %v2531 = vsub.s32 %v2528, %v2530
        %v2532 = vrot.slane %v2524, %v2531
        %v2534 = vunpack.c.l.s4 1983009808
        %v2535 = vunpack.c.0.s8 %v2534
        %v2536 = vlaneseq
        %v2537 = vshrl.u32 %v2536, 7
        %v2538 = vsub.s32 %v2535, %v2537
        %v2539 = vrot.slane %v2525, %v2538
        %v2540 = vcombine.low %v2291, %v2315
        %v2541 = vcombine.high %v2291, %v2315
        %v2543 = vunpack.c.l.s4 1983009808
        %v2544 = vunpack.c.0.s8 %v2543
        %v2545 = vlaneseq
        %v2546 = vshrl.u32 %v2545, 7
        %v2547 = vsub.s32 %v2544, %v2546
        %v2548 = vrot.slane %v2540, %v2547
        %v2550 = vunpack.c.l.s4 1983009808
        %v2551 = vunpack.c.0.s8 %v2550
        %v2552 = vlaneseq
        %v2553 = vshrl.u32 %v2552, 7
        %v2554 = vsub.s32 %v2551, %v2553
        %v2555 = vrot.slane %v2541, %v2554
        %v2556 = vcombine.low %v2532, %v2548
        %v2557 = vcombine.high %v2532, %v2548
        %v2559 = vunpack.c.l.s4 1934713408
        %v2560 = vunpack.c.0.s8 %v2559
        %v2561 = vlaneseq
        %v2562 = vshrl.u32 %v2561, 7
        %v2563 = vsub.s32 %v2560, %v2562
        %v2564 = vrot.slane %v2556, %v2563
        %v2566 = vunpack.c.l.s4 1934713408
        %v2567 = vunpack.c.0.s8 %v2566
        %v2568 = vlaneseq
        %v2569 = vshrl.u32 %v2568, 7
        %v2570 = vsub.s32 %v2567, %v2569
        %v2571 = vrot.slane %v2557, %v2570
        %v2572 = vcombine.low %v2539, %v2555
        %v2573 = vcombine.high %v2539, %v2555
        %v2575 = vunpack.c.l.s4 1934713408
        %v2576 = vunpack.c.0.s8 %v2575
        %v2577 = vlaneseq
        %v2578 = vshrl.u32 %v2577, 7
        %v2579 = vsub.s32 %v2576, %v2578
        %v2580 = vrot.slane %v2572, %v2579
        %v2582 = vunpack.c.l.s4 1934713408
        %v2583 = vunpack.c.0.s8 %v2582
        %v2584 = vlaneseq
        %v2585 = vshrl.u32 %v2584, 7
        %v2586 = vsub.s32 %v2583, %v2585
        %v2587 = vrot.slane %v2573, %v2586
        %v2588 = vcombine.high %v2564, 0.0
        %v2589 = vcombine.high %v2571, 0.0
        %v2590 = vcombine.high %v2580, 0.0
        %v2591 = vcombine.high %v2587, 0.0
        %v2592 = vcombine.low %v2360, %v2367
        %v2594 = vunpack.c.l.s4 1983009808
        %v2595 = vunpack.c.0.s8 %v2594
        %v2596 = vlaneseq
        %v2597 = vshrl.u32 %v2596, 7
        %v2598 = vsub.s32 %v2595, %v2597
        %v2599 = vrot.slane %v2592, %v2598
        %v2600 = vcombine.low %v2384, %v2385
        %v2602 = vunpack.c.l.s4 1983009808
        %v2603 = vunpack.c.0.s8 %v2602
        %v2604 = vlaneseq
        %v2605 = vshrl.u32 %v2604, 7
        %v2606 = vsub.s32 %v2603, %v2605
        %v2607 = vrot.slane %v2600, %v2606
        %v2608 = vcombine.low %v2376, %v2383
        %v2610 = vunpack.c.l.s4 1983009808
        %v2611 = vunpack.c.0.s8 %v2610
        %v2612 = vlaneseq
        %v2613 = vshrl.u32 %v2612, 7
        %v2614 = vsub.s32 %v2611, %v2613
        %v2615 = vrot.slane %v2608, %v2614
        %v2616 = vcombine.low %v2386, %v2387
        %v2618 = vunpack.c.l.s4 1983009808
        %v2619 = vunpack.c.0.s8 %v2618
        %v2620 = vlaneseq
        %v2621 = vshrl.u32 %v2620, 7
        %v2622 = vsub.s32 %v2619, %v2621
        %v2623 = vrot.slane %v2616, %v2622
        %v2624 = vcombine.low %v2599, %v2607
        %v2625 = vcombine.high %v2599, %v2607
        %v2627 = vunpack.c.l.s4 1934713408
        %v2628 = vunpack.c.0.s8 %v2627
        %v2629 = vlaneseq
        %v2630 = vshrl.u32 %v2629, 7
        %v2631 = vsub.s32 %v2628, %v2630
        %v2632 = vrot.slane %v2624, %v2631
        %v2634 = vunpack.c.l.s4 1934713408
        %v2635 = vunpack.c.0.s8 %v2634
        %v2636 = vlaneseq
        %v2637 = vshrl.u32 %v2636, 7
        %v2638 = vsub.s32 %v2635, %v2637
        %v2639 = vrot.slane %v2625, %v2638
        %v2640 = vcombine.low %v2615, %v2623
        %v2641 = vcombine.high %v2615, %v2623
        %v2643 = vunpack.c.l.s4 1934713408
        %v2644 = vunpack.c.0.s8 %v2643
        %v2645 = vlaneseq
        %v2646 = vshrl.u32 %v2645, 7
        %v2647 = vsub.s32 %v2644, %v2646
        %v2648 = vrot.slane %v2640, %v2647
        %v2650 = vunpack.c.l.s4 1934713408
        %v2651 = vunpack.c.0.s8 %v2650
        %v2652 = vlaneseq
        %v2653 = vshrl.u32 %v2652, 7
        %v2654 = vsub.s32 %v2651, %v2653
        %v2655 = vrot.slane %v2641, %v2654
        %v2656 = vcombine.low %v2632, %v2648
        %v2657 = vcombine.high %v2632, %v2648
        %v2658 = vcombine.low %v2639, %v2655
        %v2659 = vcombine.high %v2639, %v2655
        %v2660 = vcombine.low %v2428, %v2435
        %v2662 = vunpack.c.l.s4 1983009808
        %v2663 = vunpack.c.0.s8 %v2662
        %v2664 = vlaneseq
        %v2665 = vshrl.u32 %v2664, 7
        %v2666 = vsub.s32 %v2663, %v2665
        %v2667 = vrot.slane %v2660, %v2666
        %v2668 = vcombine.low %v2452, %v2453
        %v2670 = vunpack.c.l.s4 1983009808
        %v2671 = vunpack.c.0.s8 %v2670
        %v2672 = vlaneseq
        %v2673 = vshrl.u32 %v2672, 7
        %v2674 = vsub.s32 %v2671, %v2673
        %v2675 = vrot.slane %v2668, %v2674
        %v2676 = vcombine.low %v2444, %v2451
        %v2678 = vunpack.c.l.s4 1983009808
        %v2679 = vunpack.c.0.s8 %v2678
        %v2680 = vlaneseq
        %v2681 = vshrl.u32 %v2680, 7
        %v2682 = vsub.s32 %v2679, %v2681
        %v2683 = vrot.slane %v2676, %v2682
        %v2684 = vcombine.low %v2454, %v2455
        %v2686 = vunpack.c.l.s4 1983009808
        %v2687 = vunpack.c.0.s8 %v2686
        %v2688 = vlaneseq
        %v2689 = vshrl.u32 %v2688, 7
        %v2690 = vsub.s32 %v2687, %v2689
        %v2691 = vrot.slane %v2684, %v2690
        %v2692 = vcombine.low %v2667, %v2675
        %v2693 = vcombine.high %v2667, %v2675
        %v2695 = vunpack.c.l.s4 1934713408
        %v2696 = vunpack.c.0.s8 %v2695
        %v2697 = vlaneseq
        %v2698 = vshrl.u32 %v2697, 7
        %v2699 = vsub.s32 %v2696, %v2698
        %v2700 = vrot.slane %v2692, %v2699
        %v2702 = vunpack.c.l.s4 1934713408
        %v2703 = vunpack.c.0.s8 %v2702
        %v2704 = vlaneseq
        %v2705 = vshrl.u32 %v2704, 7
        %v2706 = vsub.s32 %v2703, %v2705
        %v2707 = vrot.slane %v2693, %v2706
        %v2708 = vcombine.low %v2683, %v2691
        %v2709 = vcombine.high %v2683, %v2691
        %v2711 = vunpack.c.l.s4 1934713408
        %v2712 = vunpack.c.0.s8 %v2711
        %v2713 = vlaneseq
        %v2714 = vshrl.u32 %v2713, 7
        %v2715 = vsub.s32 %v2712, %v2714
        %v2716 = vrot.slane %v2708, %v2715
        %v2718 = vunpack.c.l.s4 1934713408
        %v2719 = vunpack.c.0.s8 %v2718
        %v2720 = vlaneseq
        %v2721 = vshrl.u32 %v2720, 7
        %v2722 = vsub.s32 %v2719, %v2721
        %v2723 = vrot.slane %v2709, %v2722
        %v2724 = vcombine.low %v2700, %v2716
        %v2725 = vcombine.high %v2700, %v2716
        %v2726 = vcombine.low %v2707, %v2723
        %v2727 = vcombine.high %v2707, %v2723
        %v2728 = vcombine.low %v2496, %v2503
        %v2730 = vunpack.c.l.s4 1983009808
        %v2731 = vunpack.c.0.s8 %v2730
        %v2732 = vlaneseq
        %v2733 = vshrl.u32 %v2732, 7
        %v2734 = vsub.s32 %v2731, %v2733
        %v2735 = vrot.slane %v2728, %v2734
        %v2736 = vcombine.low %v2520, %v2521
        %v2738 = vunpack.c.l.s4 1983009808
        %v2739 = vunpack.c.0.s8 %v2738
        %v2740 = vlaneseq
        %v2741 = vshrl.u32 %v2740, 7
        %v2742 = vsub.s32 %v2739, %v2741
        %v2743 = vrot.slane %v2736, %v2742
        %v2744 = vcombine.low %v2512, %v2519
        %v2746 = vunpack.c.l.s4 1983009808
        %v2747 = vunpack.c.0.s8 %v2746
        %v2748 = vlaneseq
        %v2749 = vshrl.u32 %v2748, 7
        %v2750 = vsub.s32 %v2747, %v2749
        %v2751 = vrot.slane %v2744, %v2750
        %v2752 = vcombine.low %v2522, %v2523
        %v2754 = vunpack.c.l.s4 1983009808
        %v2755 = vunpack.c.0.s8 %v2754
        %v2756 = vlaneseq
        %v2757 = vshrl.u32 %v2756, 7
        %v2758 = vsub.s32 %v2755, %v2757
        %v2759 = vrot.slane %v2752, %v2758
        %v2760 = vcombine.low %v2735, %v2743
        %v2761 = vcombine.high %v2735, %v2743
        %v2763 = vunpack.c.l.s4 1934713408
        %v2764 = vunpack.c.0.s8 %v2763
        %v2765 = vlaneseq
        %v2766 = vshrl.u32 %v2765, 7
        %v2767 = vsub.s32 %v2764, %v2766
        %v2768 = vrot.slane %v2760, %v2767
        %v2770 = vunpack.c.l.s4 1934713408
        %v2771 = vunpack.c.0.s8 %v2770
        %v2772 = vlaneseq
        %v2773 = vshrl.u32 %v2772, 7
        %v2774 = vsub.s32 %v2771, %v2773
        %v2775 = vrot.slane %v2761, %v2774
        %v2776 = vcombine.low %v2751, %v2759
        %v2777 = vcombine.high %v2751, %v2759
        %v2779 = vunpack.c.l.s4 1934713408
        %v2780 = vunpack.c.0.s8 %v2779
        %v2781 = vlaneseq
        %v2782 = vshrl.u32 %v2781, 7
        %v2783 = vsub.s32 %v2780, %v2782
        %v2784 = vrot.slane %v2776, %v2783
        %v2786 = vunpack.c.l.s4 1934713408
        %v2787 = vunpack.c.0.s8 %v2786
        %v2788 = vlaneseq
        %v2789 = vshrl.u32 %v2788, 7
        %v2790 = vsub.s32 %v2787, %v2789
        %v2791 = vrot.slane %v2777, %v2790
        %v2792 = vcombine.low %v2768, %v2784
        %v2793 = vcombine.high %v2768, %v2784
        %v2794 = vcombine.low %v2775, %v2791
        %v2795 = vcombine.high %v2775, %v2791
        %v2796 = vcombine.low %v2564, %v2571
        %v2798 = vunpack.c.l.s4 1983009808
        %v2799 = vunpack.c.0.s8 %v2798
        %v2800 = vlaneseq
        %v2801 = vshrl.u32 %v2800, 7
        %v2802 = vsub.s32 %v2799, %v2801
        %v2803 = vrot.slane %v2796, %v2802
        %v2804 = vcombine.low %v2588, %v2589
        %v2806 = vunpack.c.l.s4 1983009808
        %v2807 = vunpack.c.0.s8 %v2806
        %v2808 = vlaneseq
        %v2809 = vshrl.u32 %v2808, 7
        %v2810 = vsub.s32 %v2807, %v2809
        %v2811 = vrot.slane %v2804, %v2810
        %v2812 = vcombine.low %v2580, %v2587
        %v2814 = vunpack.c.l.s4 1983009808
        %v2815 = vunpack.c.0.s8 %v2814
        %v2816 = vlaneseq
        %v2817 = vshrl.u32 %v2816, 7
        %v2818 = vsub.s32 %v2815, %v2817
        %v2819 = vrot.slane %v2812, %v2818
        %v2820 = vcombine.low %v2590, %v2591
        %v2822 = vunpack.c.l.s4 1983009808
        %v2823 = vunpack.c.0.s8 %v2822
        %v2824 = vlaneseq
        %v2825 = vshrl.u32 %v2824, 7
        %v2826 = vsub.s32 %v2823, %v2825
        %v2827 = vrot.slane %v2820, %v2826
        %v2828 = vcombine.low %v2803, %v2811
        %v2829 = vcombine.high %v2803, %v2811
        %v2831 = vunpack.c.l.s4 1934713408
        %v2832 = vunpack.c.0.s8 %v2831
        %v2833 = vlaneseq
        %v2834 = vshrl.u32 %v2833, 7
        %v2835 = vsub.s32 %v2832, %v2834
        %v2836 = vrot.slane %v2828, %v2835
        %v2838 = vunpack.c.l.s4 1934713408
        %v2839 = vunpack.c.0.s8 %v2838
        %v2840 = vlaneseq
        %v2841 = vshrl.u32 %v2840, 7
        %v2842 = vsub.s32 %v2839, %v2841
        %v2843 = vrot.slane %v2829, %v2842
        %v2844 = vcombine.low %v2819, %v2827
        %v2845 = vcombine.high %v2819, %v2827
        %v2847 = vunpack.c.l.s4 1934713408
        %v2848 = vunpack.c.0.s8 %v2847
        %v2849 = vlaneseq
        %v2850 = vshrl.u32 %v2849, 7
        %v2851 = vsub.s32 %v2848, %v2850
        %v2852 = vrot.slane %v2844, %v2851
        %v2854 = vunpack.c.l.s4 1934713408
        %v2855 = vunpack.c.0.s8 %v2854
        %v2856 = vlaneseq
        %v2857 = vshrl.u32 %v2856, 7
        %v2858 = vsub.s32 %v2855, %v2857
        %v2859 = vrot.slane %v2845, %v2858
        %v2860 = vcombine.low %v2836, %v2852
        %v2861 = vcombine.high %v2836, %v2852
        %v2862 = vcombine.low %v2843, %v2859
        %v2863 = vcombine.high %v2843, %v2859
        %v2864 = vpack.c.bf16 %v2724, %v2656
        %v2865 = vpack.c.bf16 %v2725, %v2657
        %v2866 = vpack.c.bf16 %v2726, %v2658
        %v2867 = vpack.c.bf16 %v2727, %v2659
        %v2868 = vpack.c.bf16 %v2860, %v2792
        %v2869 = vpack.c.bf16 %v2861, %v2793
        %v2870 = vpack.c.bf16 %v2862, %v2794
        %v2871 = vpack.c.bf16 %v2863, %v2795
        %v2872 = vlaneseq
        %v2873 = vshrl.u32 %v2872, 7
        %v2874 = vadd.s32 %v2873, 8
        %v2875 = vlaneseq
        %v2876 = vand.u32 %v2875, 127
        %vm2877 = vcmp.lt.s32.totalorder %v2876, 8
        %vm2878 = vcmp.ge.s32.totalorder %v2873, 8
        %vm2879 = vcmp.ge.s32.totalorder %v2874, 8
        %vm2880 = vcmp.le.s32.totalorder %v2876, %v2873
        %vm2881 = vcmp.le.s32.totalorder %v2876, %v2874
        %vm2882 = vmand %vm2878, %vm2880
        %vm2883 = vmand %vm2879, %vm2881
        %vm2884 = vmor %vm2877, %vm2882
        %vm2885 = vmor %vm2877, %vm2883
        %v2886 = vsel %vm2884, 1.0, 0.0
        %v2887 = vsel %vm2885, 1.0, 0.0
        %v2888 = vld [vmem:[%s640] sm:$0x1]
        %v2889 = vld [vmem:[%s640 + $0x1] sm:$0x1]
        %v2892 = vlaneseq
        %v2893 = vshrl.u32 %v2892, 7
        %v2894 = vsub.s32 0, %v2893
        %v2895 = vrot.slane %v2888, %v2894
        %v2896 = vlaneseq
        %v2897 = vshrl.u32 %v2896, 7
        %v2898 = vsub.s32 0, %v2897
        %v2899 = vrot.slane %v2889, %v2898
        %v2902 = vmul.f32 %v2886, %v2895
        %v2903 = vmul.f32 %v2887, %v2895
        %v2904 = vmul.f32 %v2886, %v2899
        %v2905 = vmul.f32 %v2887, %v2899
        %v2906 = vsub.f32 1.0, %v2902
        %v2907 = vsub.f32 1.0, %v2903
        %v2908 = vsub.f32 1.0, %v2904
        %v2909 = vsub.f32 1.0, %v2905
        %v2910 = vmul.f32 %v2906, -10000.0
        %v2911 = vmul.f32 %v2907, -10000.0
        %v2912 = vmul.f32 %v2908, -10000.0
        %v2913 = vmul.f32 %v2909, -10000.0
        %vm2914 = vcmask 261120
        %v2916 = vsel %vm2914, %v1680, 0
        %v2919 = vsel %vm2914, %v2272, 0
        %2921 = vmatprep.subr.bf16.mxu0 0
        %2922 = vmatpush1.bf16.xpose.msra.mxu0 %v2919
        %2923 = vmatprep.subr.bf16.mxu0 0
        %2924 = vmatpush1.bf16.xpose.msra.mxu0 0
        %2925 = vmatprep.subr.bf16.mxu0 0
        %2926 = vmatpush1.bf16.xpose.msra.mxu0 0
        %2927 = vmatprep.subr.bf16.mxu0 0
        %2928 = vmatpush1.bf16.xpose.msra.mxu0 0
        %2929 = vmatprep.subr.bf16.mxu0 0
        %2930 = vmatpush1.bf16.xpose.msra.mxu0 0
        %2931 = vmatprep.subr.bf16.mxu0 0
        %2932 = vmatpush1.bf16.xpose.msra.mxu0 0
        %2933 = vmatprep.subr.bf16.mxu0 0
        %2934 = vmatpush1.bf16.xpose.msra.mxu0 0
        %2935 = vmatprep.subr.bf16.mxu0 0
        %2936 = vmatpush1.bf16.xpose.msra.mxu0 0
        %2937 = vmatprep.subr.bf16.mxu0 0
        %2938 = vmatpush1.bf16.xpose.msra.mxu0 0
        %2939 = vmatprep.subr.bf16.mxu0 0
        %2940 = vmatpush1.bf16.xpose.msra.mxu0 0
        %2941 = vmatprep.subr.bf16.mxu0 0
        %2942 = vmatpush1.bf16.xpose.msra.mxu0 0
        %2943 = vmatprep.subr.bf16.mxu0 0
        %2944 = vmatpush1.bf16.xpose.msra.mxu0 0
        %2945 = vmatprep.subr.bf16.mxu0 0
        %2946 = vmatpush1.bf16.xpose.msra.mxu0 0
        %2947 = vmatprep.subr.bf16.mxu0 0
        %2948 = vmatpush1.bf16.xpose.msra.mxu0 0
        %2949 = vmatprep.subr.bf16.mxu0 0
        %2950 = vmatpush1.bf16.xpose.msra.mxu0 0
        %2951 = vmatprep.subr.bf16.mxu0 0
        %2952 = vmatpush1.bf16.xpose.msra.mxu0 0
        %2953 = vmatprep.mubr.bf16.mxu0 0
        %2954 = vmatmul.mubr.bf16.gmra.mrb[0].mxu0 %v2916
        %v2955 = vpop.f32.mrb[0].mxu0
        %v2956 = vadd.f32 0.0, %v2955
        %v2957 = vpop.f32.mrb[0].mxu0
        %v2958 = vpop.f32.mrb[0].mxu0
        %v2959 = vadd.f32 0.0, %v2958
        %v2960 = vpop.f32.mrb[0].mxu0
        %2961 = vdwg.mxu0
        %v2963 = vsel %vm2914, %v1681, 0
        %v2966 = vsel %vm2914, %v2273, 0
        %2968 = vmatprep.subr.bf16.mxu0 0
        %2969 = vmatpush1.bf16.xpose.msra.mxu0 %v2966
        %2970 = vmatprep.subr.bf16.mxu0 0
        %2971 = vmatpush1.bf16.xpose.msra.mxu0 0
        %2972 = vmatprep.subr.bf16.mxu0 0
        %2973 = vmatpush1.bf16.xpose.msra.mxu0 0
        %2974 = vmatprep.subr.bf16.mxu0 0
        %2975 = vmatpush1.bf16.xpose.msra.mxu0 0
        %2976 = vmatprep.subr.bf16.mxu0 0
        %2977 = vmatpush1.bf16.xpose.msra.mxu0 0
        %2978 = vmatprep.subr.bf16.mxu0 0
        %2979 = vmatpush1.bf16.xpose.msra.mxu0 0
        %2980 = vmatprep.subr.bf16.mxu0 0
        %2981 = vmatpush1.bf16.xpose.msra.mxu0 0
        %2982 = vmatprep.subr.bf16.mxu0 0
        %2983 = vmatpush1.bf16.xpose.msra.mxu0 0
        %2984 = vmatprep.subr.bf16.mxu0 0
        %2985 = vmatpush1.bf16.xpose.msra.mxu0 0
        %2986 = vmatprep.subr.bf16.mxu0 0
        %2987 = vmatpush1.bf16.xpose.msra.mxu0 0
        %2988 = vmatprep.subr.bf16.mxu0 0
        %2989 = vmatpush1.bf16.xpose.msra.mxu0 0
        %2990 = vmatprep.subr.bf16.mxu0 0
        %2991 = vmatpush1.bf16.xpose.msra.mxu0 0
        %2992 = vmatprep.subr.bf16.mxu0 0
        %2993 = vmatpush1.bf16.xpose.msra.mxu0 0
        %2994 = vmatprep.subr.bf16.mxu0 0
        %2995 = vmatpush1.bf16.xpose.msra.mxu0 0
        %2996 = vmatprep.subr.bf16.mxu0 0
        %2997 = vmatpush1.bf16.xpose.msra.mxu0 0
        %2998 = vmatprep.subr.bf16.mxu0 0
        %2999 = vmatpush1.bf16.xpose.msra.mxu0 0
        %3000 = vmatprep.mubr.bf16.mxu0 0
        %3001 = vmatmul.mubr.bf16.gmra.mrb[0].mxu0 %v2963
        %v3002 = vpop.f32.mrb[0].mxu0
        %v3003 = vadd.f32 0.0, %v3002
        %v3004 = vpop.f32.mrb[0].mxu0
        %v3005 = vpop.f32.mrb[0].mxu0
        %v3006 = vadd.f32 0.0, %v3005
        %v3007 = vpop.f32.mrb[0].mxu0
        %3008 = vdwg.mxu0
        %v3010 = vsel %vm2914, %v1682, 0
        %v3013 = vsel %vm2914, %v2274, 0
        %3015 = vmatprep.subr.bf16.mxu0 0
        %3016 = vmatpush1.bf16.xpose.msra.mxu0 %v3013
        %3017 = vmatprep.subr.bf16.mxu0 0
        %3018 = vmatpush1.bf16.xpose.msra.mxu0 0
        %3019 = vmatprep.subr.bf16.mxu0 0
        %3020 = vmatpush1.bf16.xpose.msra.mxu0 0
        %3021 = vmatprep.subr.bf16.mxu0 0
        %3022 = vmatpush1.bf16.xpose.msra.mxu0 0
        %3023 = vmatprep.subr.bf16.mxu0 0
        %3024 = vmatpush1.bf16.xpose.msra.mxu0 0
        %3025 = vmatprep.subr.bf16.mxu0 0
        %3026 = vmatpush1.bf16.xpose.msra.mxu0 0
        %3027 = vmatprep.subr.bf16.mxu0 0
        %3028 = vmatpush1.bf16.xpose.msra.mxu0 0
        %3029 = vmatprep.subr.bf16.mxu0 0
        %3030 = vmatpush1.bf16.xpose.msra.mxu0 0
        %3031 = vmatprep.subr.bf16.mxu0 0
        %3032 = vmatpush1.bf16.xpose.msra.mxu0 0
        %3033 = vmatprep.subr.bf16.mxu0 0
        %3034 = vmatpush1.bf16.xpose.msra.mxu0 0
        %3035 = vmatprep.subr.bf16.mxu0 0
        %3036 = vmatpush1.bf16.xpose.msra.mxu0 0
        %3037 = vmatprep.subr.bf16.mxu0 0
        %3038 = vmatpush1.bf16.xpose.msra.mxu0 0
        %3039 = vmatprep.subr.bf16.mxu0 0
        %3040 = vmatpush1.bf16.xpose.msra.mxu0 0
        %3041 = vmatprep.subr.bf16.mxu0 0
        %3042 = vmatpush1.bf16.xpose.msra.mxu0 0
        %3043 = vmatprep.subr.bf16.mxu0 0
        %3044 = vmatpush1.bf16.xpose.msra.mxu0 0
        %3045 = vmatprep.subr.bf16.mxu0 0
        %3046 = vmatpush1.bf16.xpose.msra.mxu0 0
        %3047 = vmatprep.mubr.bf16.mxu0 0
        %3048 = vmatmul.mubr.bf16.gmra.mrb[0].mxu0 %v3010
        %v3049 = vpop.f32.mrb[0].mxu0
        %v3050 = vadd.f32 0.0, %v3049
        %v3051 = vpop.f32.mrb[0].mxu0
        %v3052 = vpop.f32.mrb[0].mxu0
        %v3053 = vadd.f32 0.0, %v3052
        %v3054 = vpop.f32.mrb[0].mxu0
        %3055 = vdwg.mxu0
        %v3057 = vsel %vm2914, %v1683, 0
        %v3060 = vsel %vm2914, %v2275, 0
        %3062 = vmatprep.subr.bf16.mxu0 0
        %3063 = vmatpush1.bf16.xpose.msra.mxu0 %v3060
        %3064 = vmatprep.subr.bf16.mxu0 0
        %3065 = vmatpush1.bf16.xpose.msra.mxu0 0
        %3066 = vmatprep.subr.bf16.mxu0 0
        %3067 = vmatpush1.bf16.xpose.msra.mxu0 0
        %3068 = vmatprep.subr.bf16.mxu0 0
        %3069 = vmatpush1.bf16.xpose.msra.mxu0 0
        %3070 = vmatprep.subr.bf16.mxu0 0
        %3071 = vmatpush1.bf16.xpose.msra.mxu0 0
        %3072 = vmatprep.subr.bf16.mxu0 0
        %3073 = vmatpush1.bf16.xpose.msra.mxu0 0
        %3074 = vmatprep.subr.bf16.mxu0 0
        %3075 = vmatpush1.bf16.xpose.msra.mxu0 0
        %3076 = vmatprep.subr.bf16.mxu0 0
        %3077 = vmatpush1.bf16.xpose.msra.mxu0 0
        %3078 = vmatprep.subr.bf16.mxu0 0
        %3079 = vmatpush1.bf16.xpose.msra.mxu0 0
        %3080 = vmatprep.subr.bf16.mxu0 0
        %3081 = vmatpush1.bf16.xpose.msra.mxu0 0
        %3082 = vmatprep.subr.bf16.mxu0 0
        %3083 = vmatpush1.bf16.xpose.msra.mxu0 0
        %3084 = vmatprep.subr.bf16.mxu0 0
        %3085 = vmatpush1.bf16.xpose.msra.mxu0 0
        %3086 = vmatprep.subr.bf16.mxu0 0
        %3087 = vmatpush1.bf16.xpose.msra.mxu0 0
        %3088 = vmatprep.subr.bf16.mxu0 0
        %3089 = vmatpush1.bf16.xpose.msra.mxu0 0
        %3090 = vmatprep.subr.bf16.mxu0 0
        %3091 = vmatpush1.bf16.xpose.msra.mxu0 0
        %3092 = vmatprep.subr.bf16.mxu0 0
        %3093 = vmatpush1.bf16.xpose.msra.mxu0 0
        %3094 = vmatprep.mubr.bf16.mxu0 0
        %3095 = vmatmul.mubr.bf16.gmra.mrb[0].mxu0 %v3057
        %v3096 = vpop.f32.mrb[0].mxu0
        %v3097 = vadd.f32 0.0, %v3096
        %v3098 = vpop.f32.mrb[0].mxu0
        %v3099 = vpop.f32.mrb[0].mxu0
        %v3100 = vadd.f32 0.0, %v3099
        %v3101 = vpop.f32.mrb[0].mxu0
        %3102 = vdwg.mxu0
        %v3104 = vsel %vm2914, %v1684, 0
        %v3107 = vsel %vm2914, %v2276, 0
        %3109 = vmatprep.subr.bf16.mxu0 0
        %3110 = vmatpush1.bf16.xpose.msra.mxu0 %v3107
        %3111 = vmatprep.subr.bf16.mxu0 0
        %3112 = vmatpush1.bf16.xpose.msra.mxu0 0
        %3113 = vmatprep.subr.bf16.mxu0 0
        %3114 = vmatpush1.bf16.xpose.msra.mxu0 0
        %3115 = vmatprep.subr.bf16.mxu0 0
        %3116 = vmatpush1.bf16.xpose.msra.mxu0 0
        %3117 = vmatprep.subr.bf16.mxu0 0
        %3118 = vmatpush1.bf16.xpose.msra.mxu0 0
        %3119 = vmatprep.subr.bf16.mxu0 0
        %3120 = vmatpush1.bf16.xpose.msra.mxu0 0
        %3121 = vmatprep.subr.bf16.mxu0 0
        %3122 = vmatpush1.bf16.xpose.msra.mxu0 0
        %3123 = vmatprep.subr.bf16.mxu0 0
        %3124 = vmatpush1.bf16.xpose.msra.mxu0 0
        %3125 = vmatprep.subr.bf16.mxu0 0
        %3126 = vmatpush1.bf16.xpose.msra.mxu0 0
        %3127 = vmatprep.subr.bf16.mxu0 0
        %3128 = vmatpush1.bf16.xpose.msra.mxu0 0
        %3129 = vmatprep.subr.bf16.mxu0 0
        %3130 = vmatpush1.bf16.xpose.msra.mxu0 0
        %3131 = vmatprep.subr.bf16.mxu0 0
        %3132 = vmatpush1.bf16.xpose.msra.mxu0 0
        %3133 = vmatprep.subr.bf16.mxu0 0
        %3134 = vmatpush1.bf16.xpose.msra.mxu0 0
        %3135 = vmatprep.subr.bf16.mxu0 0
        %3136 = vmatpush1.bf16.xpose.msra.mxu0 0
        %3137 = vmatprep.subr.bf16.mxu0 0
        %3138 = vmatpush1.bf16.xpose.msra.mxu0 0
        %3139 = vmatprep.subr.bf16.mxu0 0
        %3140 = vmatpush1.bf16.xpose.msra.mxu0 0
        %3141 = vmatprep.mubr.bf16.mxu0 0
        %3142 = vmatmul.mubr.bf16.gmra.mrb[0].mxu0 %v3104
        %v3143 = vpop.f32.mrb[0].mxu0
        %v3144 = vadd.f32 0.0, %v3143
        %v3145 = vpop.f32.mrb[0].mxu0
        %v3146 = vpop.f32.mrb[0].mxu0
        %v3147 = vadd.f32 0.0, %v3146
        %v3148 = vpop.f32.mrb[0].mxu0
        %3149 = vdwg.mxu0
        %v3151 = vsel %vm2914, %v1685, 0
        %v3154 = vsel %vm2914, %v2277, 0
        %3156 = vmatprep.subr.bf16.mxu0 0
        %3157 = vmatpush1.bf16.xpose.msra.mxu0 %v3154
        %3158 = vmatprep.subr.bf16.mxu0 0
        %3159 = vmatpush1.bf16.xpose.msra.mxu0 0
        %3160 = vmatprep.subr.bf16.mxu0 0
        %3161 = vmatpush1.bf16.xpose.msra.mxu0 0
        %3162 = vmatprep.subr.bf16.mxu0 0
        %3163 = vmatpush1.bf16.xpose.msra.mxu0 0
        %3164 = vmatprep.subr.bf16.mxu0 0
        %3165 = vmatpush1.bf16.xpose.msra.mxu0 0
        %3166 = vmatprep.subr.bf16.mxu0 0
        %3167 = vmatpush1.bf16.xpose.msra.mxu0 0
        %3168 = vmatprep.subr.bf16.mxu0 0
        %3169 = vmatpush1.bf16.xpose.msra.mxu0 0
        %3170 = vmatprep.subr.bf16.mxu0 0
        %3171 = vmatpush1.bf16.xpose.msra.mxu0 0
        %3172 = vmatprep.subr.bf16.mxu0 0
        %3173 = vmatpush1.bf16.xpose.msra.mxu0 0
        %3174 = vmatprep.subr.bf16.mxu0 0
        %3175 = vmatpush1.bf16.xpose.msra.mxu0 0
        %3176 = vmatprep.subr.bf16.mxu0 0
        %3177 = vmatpush1.bf16.xpose.msra.mxu0 0
        %3178 = vmatprep.subr.bf16.mxu0 0
        %3179 = vmatpush1.bf16.xpose.msra.mxu0 0
        %3180 = vmatprep.subr.bf16.mxu0 0
        %3181 = vmatpush1.bf16.xpose.msra.mxu0 0
        %3182 = vmatprep.subr.bf16.mxu0 0
        %3183 = vmatpush1.bf16.xpose.msra.mxu0 0
        %3184 = vmatprep.subr.bf16.mxu0 0
        %3185 = vmatpush1.bf16.xpose.msra.mxu0 0
        %3186 = vmatprep.subr.bf16.mxu0 0
        %3187 = vmatpush1.bf16.xpose.msra.mxu0 0
        %3188 = vmatprep.mubr.bf16.mxu0 0
        %3189 = vmatmul.mubr.bf16.gmra.mrb[0].mxu0 %v3151
        %v3190 = vpop.f32.mrb[0].mxu0
        %v3191 = vadd.f32 0.0, %v3190
        %v3192 = vpop.f32.mrb[0].mxu0
        %v3193 = vpop.f32.mrb[0].mxu0
        %v3194 = vadd.f32 0.0, %v3193
        %v3195 = vpop.f32.mrb[0].mxu0
        %3196 = vdwg.mxu0
        %v3198 = vsel %vm2914, %v1686, 0
        %v3201 = vsel %vm2914, %v2278, 0
        %3203 = vmatprep.subr.bf16.mxu0 0
        %3204 = vmatpush1.bf16.xpose.msra.mxu0 %v3201
        %3205 = vmatprep.subr.bf16.mxu0 0
        %3206 = vmatpush1.bf16.xpose.msra.mxu0 0
        %3207 = vmatprep.subr.bf16.mxu0 0
        %3208 = vmatpush1.bf16.xpose.msra.mxu0 0
        %3209 = vmatprep.subr.bf16.mxu0 0
        %3210 = vmatpush1.bf16.xpose.msra.mxu0 0
        %3211 = vmatprep.subr.bf16.mxu0 0
        %3212 = vmatpush1.bf16.xpose.msra.mxu0 0
        %3213 = vmatprep.subr.bf16.mxu0 0
        %3214 = vmatpush1.bf16.xpose.msra.mxu0 0
        %3215 = vmatprep.subr.bf16.mxu0 0
        %3216 = vmatpush1.bf16.xpose.msra.mxu0 0
        %3217 = vmatprep.subr.bf16.mxu0 0
        %3218 = vmatpush1.bf16.xpose.msra.mxu0 0
        %3219 = vmatprep.subr.bf16.mxu0 0
        %3220 = vmatpush1.bf16.xpose.msra.mxu0 0
        %3221 = vmatprep.subr.bf16.mxu0 0
        %3222 = vmatpush1.bf16.xpose.msra.mxu0 0
        %3223 = vmatprep.subr.bf16.mxu0 0
        %3224 = vmatpush1.bf16.xpose.msra.mxu0 0
        %3225 = vmatprep.subr.bf16.mxu0 0
        %3226 = vmatpush1.bf16.xpose.msra.mxu0 0
        %3227 = vmatprep.subr.bf16.mxu0 0
        %3228 = vmatpush1.bf16.xpose.msra.mxu0 0
        %3229 = vmatprep.subr.bf16.mxu0 0
        %3230 = vmatpush1.bf16.xpose.msra.mxu0 0
        %3231 = vmatprep.subr.bf16.mxu0 0
        %3232 = vmatpush1.bf16.xpose.msra.mxu0 0
        %3233 = vmatprep.subr.bf16.mxu0 0
        %3234 = vmatpush1.bf16.xpose.msra.mxu0 0
        %3235 = vmatprep.mubr.bf16.mxu0 0
        %3236 = vmatmul.mubr.bf16.gmra.mrb[0].mxu0 %v3198
        %v3237 = vpop.f32.mrb[0].mxu0
        %v3238 = vadd.f32 0.0, %v3237
        %v3239 = vpop.f32.mrb[0].mxu0
        %v3240 = vpop.f32.mrb[0].mxu0
        %v3241 = vadd.f32 0.0, %v3240
        %v3242 = vpop.f32.mrb[0].mxu0
        %3243 = vdwg.mxu0
        %v3245 = vsel %vm2914, %v1687, 0
        %v3248 = vsel %vm2914, %v2279, 0
        %3250 = vmatprep.subr.bf16.mxu0 0
        %3251 = vmatpush1.bf16.xpose.msra.mxu0 %v3248
        %3252 = vmatprep.subr.bf16.mxu0 0
        %3253 = vmatpush1.bf16.xpose.msra.mxu0 0
        %3254 = vmatprep.subr.bf16.mxu0 0
        %3255 = vmatpush1.bf16.xpose.msra.mxu0 0
        %3256 = vmatprep.subr.bf16.mxu0 0
        %3257 = vmatpush1.bf16.xpose.msra.mxu0 0
        %3258 = vmatprep.subr.bf16.mxu0 0
        %3259 = vmatpush1.bf16.xpose.msra.mxu0 0
        %3260 = vmatprep.subr.bf16.mxu0 0
        %3261 = vmatpush1.bf16.xpose.msra.mxu0 0
        %3262 = vmatprep.subr.bf16.mxu0 0
        %3263 = vmatpush1.bf16.xpose.msra.mxu0 0
        %3264 = vmatprep.subr.bf16.mxu0 0
        %3265 = vmatpush1.bf16.xpose.msra.mxu0 0
        %3266 = vmatprep.subr.bf16.mxu0 0
        %3267 = vmatpush1.bf16.xpose.msra.mxu0 0
        %3268 = vmatprep.subr.bf16.mxu0 0
        %3269 = vmatpush1.bf16.xpose.msra.mxu0 0
        %3270 = vmatprep.subr.bf16.mxu0 0
        %3271 = vmatpush1.bf16.xpose.msra.mxu0 0
        %3272 = vmatprep.subr.bf16.mxu0 0
        %3273 = vmatpush1.bf16.xpose.msra.mxu0 0
        %3274 = vmatprep.subr.bf16.mxu0 0
        %3275 = vmatpush1.bf16.xpose.msra.mxu0 0
        %3276 = vmatprep.subr.bf16.mxu0 0
        %3277 = vmatpush1.bf16.xpose.msra.mxu0 0
        %3278 = vmatprep.subr.bf16.mxu0 0
        %3279 = vmatpush1.bf16.xpose.msra.mxu0 0
        %3280 = vmatprep.subr.bf16.mxu0 0
        %3281 = vmatpush1.bf16.xpose.msra.mxu0 0
        %3282 = vmatprep.mubr.bf16.mxu0 0
        %3283 = vmatmul.mubr.bf16.gmra.mrb[0].mxu0 %v3245
        %v3284 = vpop.f32.mrb[0].mxu0
        %v3285 = vadd.f32 0.0, %v3284
        %v3286 = vpop.f32.mrb[0].mxu0
        %v3287 = vpop.f32.mrb[0].mxu0
        %v3288 = vadd.f32 0.0, %v3287
        %v3289 = vpop.f32.mrb[0].mxu0
        %3290 = vdwg.mxu0
        %v3291 = vadd.f32 %v2956, %v2910
        %v3292 = vadd.f32 %v2959, %v2911
        %v3293 = vadd.f32 %v3003, %v2910
        %v3294 = vadd.f32 %v3006, %v2911
        %v3295 = vadd.f32 %v3050, %v2910
        %v3296 = vadd.f32 %v3053, %v2911
        %v3297 = vadd.f32 %v3097, %v2910
        %v3298 = vadd.f32 %v3100, %v2911
        %v3299 = vadd.f32 %v3144, %v2912
        %v3300 = vadd.f32 %v3147, %v2913
        %v3301 = vadd.f32 %v3191, %v2912
        %v3302 = vadd.f32 %v3194, %v2913
        %v3303 = vadd.f32 %v3238, %v2912
        %v3304 = vadd.f32 %v3241, %v2913
        %v3305 = vadd.f32 %v3285, %v2912
        %v3306 = vadd.f32 %v3288, %v2913
        %vm3307 = vcmask 130048
        %v3308 = vsel %vm3307, %v3291, -inf
        %3309 = vmax.xlane.f32.xlu0 %v3308
        %v3310 = vpop.xlane.xlu0 %3309
        %v3311 = vsel %vm3307, %v3292, -inf
        %3312 = vmax.xlane.f32.xlu0 %v3311
        %v3313 = vpop.xlane.xlu0 %3312
        %v3314 = vsel %vm3307, %v3293, -inf
        %3315 = vmax.xlane.f32.xlu0 %v3314
        %v3316 = vpop.xlane.xlu0 %3315
        %v3317 = vsel %vm3307, %v3294, -inf
        %3318 = vmax.xlane.f32.xlu0 %v3317
        %v3319 = vpop.xlane.xlu0 %3318
        %v3320 = vsel %vm3307, %v3295, -inf
        %3321 = vmax.xlane.f32.xlu0 %v3320
        %v3322 = vpop.xlane.xlu0 %3321
        %v3323 = vsel %vm3307, %v3296, -inf
        %3324 = vmax.xlane.f32.xlu0 %v3323
        %v3325 = vpop.xlane.xlu0 %3324
        %v3326 = vsel %vm3307, %v3297, -inf
        %3327 = vmax.xlane.f32.xlu0 %v3326
        %v3328 = vpop.xlane.xlu0 %3327
        %v3329 = vsel %vm3307, %v3298, -inf
        %3330 = vmax.xlane.f32.xlu0 %v3329
        %v3331 = vpop.xlane.xlu0 %3330
        %v3332 = vsel %vm3307, %v3299, -inf
        %3333 = vmax.xlane.f32.xlu0 %v3332
        %v3334 = vpop.xlane.xlu0 %3333
        %v3335 = vsel %vm3307, %v3300, -inf
        %3336 = vmax.xlane.f32.xlu0 %v3335
        %v3337 = vpop.xlane.xlu0 %3336
        %v3338 = vsel %vm3307, %v3301, -inf
        %3339 = vmax.xlane.f32.xlu0 %v3338
        %v3340 = vpop.xlane.xlu0 %3339
        %v3341 = vsel %vm3307, %v3302, -inf
        %3342 = vmax.xlane.f32.xlu0 %v3341
        %v3343 = vpop.xlane.xlu0 %3342
        %v3344 = vsel %vm3307, %v3303, -inf
        %3345 = vmax.xlane.f32.xlu0 %v3344
        %v3346 = vpop.xlane.xlu0 %3345
        %v3347 = vsel %vm3307, %v3304, -inf
        %3348 = vmax.xlane.f32.xlu0 %v3347
        %v3349 = vpop.xlane.xlu0 %3348
        %v3350 = vsel %vm3307, %v3305, -inf
        %3351 = vmax.xlane.f32.xlu0 %v3350
        %v3352 = vpop.xlane.xlu0 %3351
        %v3353 = vsel %vm3307, %v3306, -inf
        %3354 = vmax.xlane.f32.xlu0 %v3353
        %v3355 = vpop.xlane.xlu0 %3354
        %v3356 = vsub.f32 %v3291, %v3310
        %v3357 = vsub.f32 %v3292, %v3313
        %v3358 = vsub.f32 %v3293, %v3316
        %v3359 = vsub.f32 %v3294, %v3319
        %v3360 = vsub.f32 %v3295, %v3322
        %v3361 = vsub.f32 %v3296, %v3325
        %v3362 = vsub.f32 %v3297, %v3328
        %v3363 = vsub.f32 %v3298, %v3331
        %v3364 = vsub.f32 %v3299, %v3334
        %v3365 = vsub.f32 %v3300, %v3337
        %v3366 = vsub.f32 %v3301, %v3340
        %v3367 = vsub.f32 %v3302, %v3343
        %v3368 = vsub.f32 %v3303, %v3346
        %v3369 = vsub.f32 %v3304, %v3349
        %v3370 = vsub.f32 %v3305, %v3352
        %v3371 = vsub.f32 %v3306, %v3355
        %v3372 = vmul.f32 %v3356, 1.442695
        %v3373 = vpow.pop %v3372
        %v3374 = vmul.f32 %v3357, 1.442695
        %v3375 = vpow.pop %v3374
        %v3376 = vmul.f32 %v3358, 1.442695
        %v3377 = vpow.pop %v3376
        %v3378 = vmul.f32 %v3359, 1.442695
        %v3379 = vpow.pop %v3378
        %v3380 = vmul.f32 %v3360, 1.442695
        %v3381 = vpow.pop %v3380
        %v3382 = vmul.f32 %v3361, 1.442695
        %v3383 = vpow.pop %v3382
        %v3384 = vmul.f32 %v3362, 1.442695
        %v3385 = vpow.pop %v3384
        %v3386 = vmul.f32 %v3363, 1.442695
        %v3387 = vpow.pop %v3386
        %v3388 = vmul.f32 %v3364, 1.442695
        %v3389 = vpow.pop %v3388
        %v3390 = vmul.f32 %v3365, 1.442695
        %v3391 = vpow.pop %v3390
        %v3392 = vmul.f32 %v3366, 1.442695
        %v3393 = vpow.pop %v3392
        %v3394 = vmul.f32 %v3367, 1.442695
        %v3395 = vpow.pop %v3394
        %v3396 = vmul.f32 %v3368, 1.442695
        %v3397 = vpow.pop %v3396
        %v3398 = vmul.f32 %v3369, 1.442695
        %v3399 = vpow.pop %v3398
        %v3400 = vmul.f32 %v3370, 1.442695
        %v3401 = vpow.pop %v3400
        %v3402 = vmul.f32 %v3371, 1.442695
        %v3403 = vpow.pop %v3402
        %v3404 = vsel %vm3307, %v3373, 0.0
        %3405 = vadd.xlane.f32.xlu0 %v3404
        %v3406 = vpop.xlane.xlu0 %3405
        %v3407 = vsel %vm3307, %v3375, 0.0
        %3408 = vadd.xlane.f32.xlu0 %v3407
        %v3409 = vpop.xlane.xlu0 %3408
        %v3410 = vsel %vm3307, %v3377, 0.0
        %3411 = vadd.xlane.f32.xlu0 %v3410
        %v3412 = vpop.xlane.xlu0 %3411
        %v3413 = vsel %vm3307, %v3379, 0.0
        %3414 = vadd.xlane.f32.xlu0 %v3413
        %v3415 = vpop.xlane.xlu0 %3414
        %v3416 = vsel %vm3307, %v3381, 0.0
        %3417 = vadd.xlane.f32.xlu0 %v3416
        %v3418 = vpop.xlane.xlu0 %3417
        %v3419 = vsel %vm3307, %v3383, 0.0
        %3420 = vadd.xlane.f32.xlu0 %v3419
        %v3421 = vpop.xlane.xlu0 %3420
        %v3422 = vsel %vm3307, %v3385, 0.0
        %3423 = vadd.xlane.f32.xlu0 %v3422
        %v3424 = vpop.xlane.xlu0 %3423
        %v3425 = vsel %vm3307, %v3387, 0.0
        %3426 = vadd.xlane.f32.xlu0 %v3425
        %v3427 = vpop.xlane.xlu0 %3426
        %v3428 = vsel %vm3307, %v3389, 0.0
        %3429 = vadd.xlane.f32.xlu0 %v3428
        %v3430 = vpop.xlane.xlu0 %3429
        %v3431 = vsel %vm3307, %v3391, 0.0
        %3432 = vadd.xlane.f32.xlu0 %v3431
        %v3433 = vpop.xlane.xlu0 %3432
        %v3434 = vsel %vm3307, %v3393, 0.0
        %3435 = vadd.xlane.f32.xlu0 %v3434
        %v3436 = vpop.xlane.xlu0 %3435
        %v3437 = vsel %vm3307, %v3395, 0.0
        %3438 = vadd.xlane.f32.xlu0 %v3437
        %v3439 = vpop.xlane.xlu0 %3438
        %v3440 = vsel %vm3307, %v3397, 0.0
        %3441 = vadd.xlane.f32.xlu0 %v3440
        %v3442 = vpop.xlane.xlu0 %3441
        %v3443 = vsel %vm3307, %v3399, 0.0
        %3444 = vadd.xlane.f32.xlu0 %v3443
        %v3445 = vpop.xlane.xlu0 %3444
        %v3446 = vsel %vm3307, %v3401, 0.0
        %3447 = vadd.xlane.f32.xlu0 %v3446
        %v3448 = vpop.xlane.xlu0 %3447
        %v3449 = vsel %vm3307, %v3403, 0.0
        %3450 = vadd.xlane.f32.xlu0 %v3449
        %v3451 = vpop.xlane.xlu0 %3450
        %v3452 = vrcp.pop %v3406
        %v3453 = vrcp.pop %v3409
        %v3454 = vrcp.pop %v3412
        %v3455 = vrcp.pop %v3415
        %v3456 = vrcp.pop %v3418
        %v3457 = vrcp.pop %v3421
        %v3458 = vrcp.pop %v3424
        %v3459 = vrcp.pop %v3427
        %v3460 = vrcp.pop %v3430
        %v3461 = vrcp.pop %v3433
        %v3462 = vrcp.pop %v3436
        %v3463 = vrcp.pop %v3439
        %v3464 = vrcp.pop %v3442
        %v3465 = vrcp.pop %v3445
        %v3466 = vrcp.pop %v3448
        %v3467 = vrcp.pop %v3451
        %v3468 = vmul.f32 %v3373, %v3452
        %v3469 = vmul.f32 %v3375, %v3453
        %v3470 = vmul.f32 %v3377, %v3454
        %v3471 = vmul.f32 %v3379, %v3455
        %v3472 = vmul.f32 %v3381, %v3456
        %v3473 = vmul.f32 %v3383, %v3457
        %v3474 = vmul.f32 %v3385, %v3458
        %v3475 = vmul.f32 %v3387, %v3459
        %v3476 = vmul.f32 %v3389, %v3460
        %v3477 = vmul.f32 %v3391, %v3461
        %v3478 = vmul.f32 %v3393, %v3462
        %v3479 = vmul.f32 %v3395, %v3463
        %v3480 = vmul.f32 %v3397, %v3464
        %v3481 = vmul.f32 %v3399, %v3465
        %v3482 = vmul.f32 %v3401, %v3466
        %v3483 = vmul.f32 %v3403, %v3467
        %v3484 = vpack.c.bf16 %v3469, %v3468
        %v3485 = vpack.c.bf16 %v3471, %v3470
        %v3486 = vpack.c.bf16 %v3473, %v3472
        %v3487 = vpack.c.bf16 %v3475, %v3474
        %v3488 = vpack.c.bf16 %v3477, %v3476
        %v3489 = vpack.c.bf16 %v3479, %v3478
        %v3490 = vpack.c.bf16 %v3481, %v3480
        %v3491 = vpack.c.bf16 %v3483, %v3482
        %v3493 = vsel %vm3307, %v3484, 0
        %3495 = vmatprep.subr.bf16.mxu0 0
        %3496 = vmatpush1.bf16.msra.mxu0 %v2864
        %3497 = vmatprep.subr.bf16.mxu0 0
        %3498 = vmatpush1.bf16.msra.mxu0 0
        %3499 = vmatprep.subr.bf16.mxu0 0
        %3500 = vmatpush1.bf16.msra.mxu0 0
        %3501 = vmatprep.subr.bf16.mxu0 0
        %3502 = vmatpush1.bf16.msra.mxu0 0
        %3503 = vmatprep.subr.bf16.mxu0 0
        %3504 = vmatpush1.bf16.msra.mxu0 0
        %3505 = vmatprep.subr.bf16.mxu0 0
        %3506 = vmatpush1.bf16.msra.mxu0 0
        %3507 = vmatprep.subr.bf16.mxu0 0
        %3508 = vmatpush1.bf16.msra.mxu0 0
        %3509 = vmatprep.subr.bf16.mxu0 0
        %3510 = vmatpush1.bf16.msra.mxu0 0
        %3511 = vmatprep.subr.bf16.mxu0 0
        %3512 = vmatpush1.bf16.msra.mxu0 0
        %3513 = vmatprep.subr.bf16.mxu0 0
        %3514 = vmatpush1.bf16.msra.mxu0 0
        %3515 = vmatprep.subr.bf16.mxu0 0
        %3516 = vmatpush1.bf16.msra.mxu0 0
        %3517 = vmatprep.subr.bf16.mxu0 0
        %3518 = vmatpush1.bf16.msra.mxu0 0
        %3519 = vmatprep.subr.bf16.mxu0 0
        %3520 = vmatpush1.bf16.msra.mxu0 0
        %3521 = vmatprep.subr.bf16.mxu0 0
        %3522 = vmatpush1.bf16.msra.mxu0 0
        %3523 = vmatprep.subr.bf16.mxu0 0
        %3524 = vmatpush1.bf16.msra.mxu0 0
        %3525 = vmatprep.subr.bf16.mxu0 0
        %3526 = vmatpush1.bf16.msra.mxu0 0
        %3527 = vmatprep.mubr.bf16.mxu0 0
        %3528 = vmatmul.mubr.bf16.gmra.mrb[0].mxu0 %v3493
        %v3529 = vpop.f32.mrb[0].mxu0
        %v3530 = vadd.f32 0.0, %v3529
        %v3531 = vpop.f32.mrb[0].mxu0
        %v3532 = vpop.f32.mrb[0].mxu0
        %v3533 = vadd.f32 0.0, %v3532
        %v3534 = vpop.f32.mrb[0].mxu0
        %3535 = vdwg.mxu0
        %v3537 = vsel %vm3307, %v3485, 0
        %3539 = vmatprep.subr.bf16.mxu0 0
        %3540 = vmatpush1.bf16.msra.mxu0 %v2865
        %3541 = vmatprep.subr.bf16.mxu0 0
        %3542 = vmatpush1.bf16.msra.mxu0 0
        %3543 = vmatprep.subr.bf16.mxu0 0
        %3544 = vmatpush1.bf16.msra.mxu0 0
        %3545 = vmatprep.subr.bf16.mxu0 0
        %3546 = vmatpush1.bf16.msra.mxu0 0
        %3547 = vmatprep.subr.bf16.mxu0 0
        %3548 = vmatpush1.bf16.msra.mxu0 0
        %3549 = vmatprep.subr.bf16.mxu0 0
        %3550 = vmatpush1.bf16.msra.mxu0 0
        %3551 = vmatprep.subr.bf16.mxu0 0
        %3552 = vmatpush1.bf16.msra.mxu0 0
        %3553 = vmatprep.subr.bf16.mxu0 0
        %3554 = vmatpush1.bf16.msra.mxu0 0
        %3555 = vmatprep.subr.bf16.mxu0 0
        %3556 = vmatpush1.bf16.msra.mxu0 0
        %3557 = vmatprep.subr.bf16.mxu0 0
        %3558 = vmatpush1.bf16.msra.mxu0 0
        %3559 = vmatprep.subr.bf16.mxu0 0
        %3560 = vmatpush1.bf16.msra.mxu0 0
        %3561 = vmatprep.subr.bf16.mxu0 0
        %3562 = vmatpush1.bf16.msra.mxu0 0
        %3563 = vmatprep.subr.bf16.mxu0 0
        %3564 = vmatpush1.bf16.msra.mxu0 0
        %3565 = vmatprep.subr.bf16.mxu0 0
        %3566 = vmatpush1.bf16.msra.mxu0 0
        %3567 = vmatprep.subr.bf16.mxu0 0
        %3568 = vmatpush1.bf16.msra.mxu0 0
        %3569 = vmatprep.subr.bf16.mxu0 0
        %3570 = vmatpush1.bf16.msra.mxu0 0
        %3571 = vmatprep.mubr.bf16.mxu0 0
        %3572 = vmatmul.mubr.bf16.gmra.mrb[0].mxu0 %v3537
        %v3573 = vpop.f32.mrb[0].mxu0
        %v3574 = vadd.f32 0.0, %v3573
        %v3575 = vpop.f32.mrb[0].mxu0
        %v3576 = vpop.f32.mrb[0].mxu0
        %v3577 = vadd.f32 0.0, %v3576
        %v3578 = vpop.f32.mrb[0].mxu0
        %3579 = vdwg.mxu0
        %v3581 = vsel %vm3307, %v3486, 0
        %3583 = vmatprep.subr.bf16.mxu0 0
        %3584 = vmatpush1.bf16.msra.mxu0 %v2866
        %3585 = vmatprep.subr.bf16.mxu0 0
        %3586 = vmatpush1.bf16.msra.mxu0 0
        %3587 = vmatprep.subr.bf16.mxu0 0
        %3588 = vmatpush1.bf16.msra.mxu0 0
        %3589 = vmatprep.subr.bf16.mxu0 0
        %3590 = vmatpush1.bf16.msra.mxu0 0
        %3591 = vmatprep.subr.bf16.mxu0 0
        %3592 = vmatpush1.bf16.msra.mxu0 0
        %3593 = vmatprep.subr.bf16.mxu0 0
        %3594 = vmatpush1.bf16.msra.mxu0 0
        %3595 = vmatprep.subr.bf16.mxu0 0
        %3596 = vmatpush1.bf16.msra.mxu0 0
        %3597 = vmatprep.subr.bf16.mxu0 0
        %3598 = vmatpush1.bf16.msra.mxu0 0
        %3599 = vmatprep.subr.bf16.mxu0 0
        %3600 = vmatpush1.bf16.msra.mxu0 0
        %3601 = vmatprep.subr.bf16.mxu0 0
        %3602 = vmatpush1.bf16.msra.mxu0 0
        %3603 = vmatprep.subr.bf16.mxu0 0
        %3604 = vmatpush1.bf16.msra.mxu0 0
        %3605 = vmatprep.subr.bf16.mxu0 0
        %3606 = vmatpush1.bf16.msra.mxu0 0
        %3607 = vmatprep.subr.bf16.mxu0 0
        %3608 = vmatpush1.bf16.msra.mxu0 0
        %3609 = vmatprep.subr.bf16.mxu0 0
        %3610 = vmatpush1.bf16.msra.mxu0 0
        %3611 = vmatprep.subr.bf16.mxu0 0
        %3612 = vmatpush1.bf16.msra.mxu0 0
        %3613 = vmatprep.subr.bf16.mxu0 0
        %3614 = vmatpush1.bf16.msra.mxu0 0
        %3615 = vmatprep.mubr.bf16.mxu0 0
        %3616 = vmatmul.mubr.bf16.gmra.mrb[0].mxu0 %v3581
        %v3617 = vpop.f32.mrb[0].mxu0
        %v3618 = vadd.f32 0.0, %v3617
        %v3619 = vpop.f32.mrb[0].mxu0
        %v3620 = vpop.f32.mrb[0].mxu0
        %v3621 = vadd.f32 0.0, %v3620
        %v3622 = vpop.f32.mrb[0].mxu0
        %3623 = vdwg.mxu0
        %v3625 = vsel %vm3307, %v3487, 0
        %3627 = vmatprep.subr.bf16.mxu0 0
        %3628 = vmatpush1.bf16.msra.mxu0 %v2867
        %3629 = vmatprep.subr.bf16.mxu0 0
        %3630 = vmatpush1.bf16.msra.mxu0 0
        %3631 = vmatprep.subr.bf16.mxu0 0
        %3632 = vmatpush1.bf16.msra.mxu0 0
        %3633 = vmatprep.subr.bf16.mxu0 0
        %3634 = vmatpush1.bf16.msra.mxu0 0
        %3635 = vmatprep.subr.bf16.mxu0 0
        %3636 = vmatpush1.bf16.msra.mxu0 0
        %3637 = vmatprep.subr.bf16.mxu0 0
        %3638 = vmatpush1.bf16.msra.mxu0 0
        %3639 = vmatprep.subr.bf16.mxu0 0
        %3640 = vmatpush1.bf16.msra.mxu0 0
        %3641 = vmatprep.subr.bf16.mxu0 0
        %3642 = vmatpush1.bf16.msra.mxu0 0
        %3643 = vmatprep.subr.bf16.mxu0 0
        %3644 = vmatpush1.bf16.msra.mxu0 0
        %3645 = vmatprep.subr.bf16.mxu0 0
        %3646 = vmatpush1.bf16.msra.mxu0 0
        %3647 = vmatprep.subr.bf16.mxu0 0
        %3648 = vmatpush1.bf16.msra.mxu0 0
        %3649 = vmatprep.subr.bf16.mxu0 0
        %3650 = vmatpush1.bf16.msra.mxu0 0
        %3651 = vmatprep.subr.bf16.mxu0 0
        %3652 = vmatpush1.bf16.msra.mxu0 0
        %3653 = vmatprep.subr.bf16.mxu0 0
        %3654 = vmatpush1.bf16.msra.mxu0 0
        %3655 = vmatprep.subr.bf16.mxu0 0
        %3656 = vmatpush1.bf16.msra.mxu0 0
        %3657 = vmatprep.subr.bf16.mxu0 0
        %3658 = vmatpush1.bf16.msra.mxu0 0
        %3659 = vmatprep.mubr.bf16.mxu0 0
        %3660 = vmatmul.mubr.bf16.gmra.mrb[0].mxu0 %v3625
        %v3661 = vpop.f32.mrb[0].mxu0
        %v3662 = vadd.f32 0.0, %v3661
        %v3663 = vpop.f32.mrb[0].mxu0
        %v3664 = vpop.f32.mrb[0].mxu0
        %v3665 = vadd.f32 0.0, %v3664
        %v3666 = vpop.f32.mrb[0].mxu0
        %3667 = vdwg.mxu0
        %v3669 = vsel %vm3307, %v3488, 0
        %3671 = vmatprep.subr.bf16.mxu0 0
        %3672 = vmatpush1.bf16.msra.mxu0 %v2868
        %3673 = vmatprep.subr.bf16.mxu0 0
        %3674 = vmatpush1.bf16.msra.mxu0 0
        %3675 = vmatprep.subr.bf16.mxu0 0
        %3676 = vmatpush1.bf16.msra.mxu0 0
        %3677 = vmatprep.subr.bf16.mxu0 0
        %3678 = vmatpush1.bf16.msra.mxu0 0
        %3679 = vmatprep.subr.bf16.mxu0 0
        %3680 = vmatpush1.bf16.msra.mxu0 0
        %3681 = vmatprep.subr.bf16.mxu0 0
        %3682 = vmatpush1.bf16.msra.mxu0 0
        %3683 = vmatprep.subr.bf16.mxu0 0
        %3684 = vmatpush1.bf16.msra.mxu0 0
        %3685 = vmatprep.subr.bf16.mxu0 0
        %3686 = vmatpush1.bf16.msra.mxu0 0
        %3687 = vmatprep.subr.bf16.mxu0 0
        %3688 = vmatpush1.bf16.msra.mxu0 0
        %3689 = vmatprep.subr.bf16.mxu0 0
        %3690 = vmatpush1.bf16.msra.mxu0 0
        %3691 = vmatprep.subr.bf16.mxu0 0
        %3692 = vmatpush1.bf16.msra.mxu0 0
        %3693 = vmatprep.subr.bf16.mxu0 0
        %3694 = vmatpush1.bf16.msra.mxu0 0
        %3695 = vmatprep.subr.bf16.mxu0 0
        %3696 = vmatpush1.bf16.msra.mxu0 0
        %3697 = vmatprep.subr.bf16.mxu0 0
        %3698 = vmatpush1.bf16.msra.mxu0 0
        %3699 = vmatprep.subr.bf16.mxu0 0
        %3700 = vmatpush1.bf16.msra.mxu0 0
        %3701 = vmatprep.subr.bf16.mxu0 0
        %3702 = vmatpush1.bf16.msra.mxu0 0
        %3703 = vmatprep.mubr.bf16.mxu0 0
        %3704 = vmatmul.mubr.bf16.gmra.mrb[0].mxu0 %v3669
        %v3705 = vpop.f32.mrb[0].mxu0
        %v3706 = vadd.f32 0.0, %v3705
        %v3707 = vpop.f32.mrb[0].mxu0
        %v3708 = vpop.f32.mrb[0].mxu0
        %v3709 = vadd.f32 0.0, %v3708
        %v3710 = vpop.f32.mrb[0].mxu0
        %3711 = vdwg.mxu0
        %v3713 = vsel %vm3307, %v3489, 0
        %3715 = vmatprep.subr.bf16.mxu0 0
        %3716 = vmatpush1.bf16.msra.mxu0 %v2869
        %3717 = vmatprep.subr.bf16.mxu0 0
        %3718 = vmatpush1.bf16.msra.mxu0 0
        %3719 = vmatprep.subr.bf16.mxu0 0
        %3720 = vmatpush1.bf16.msra.mxu0 0
        %3721 = vmatprep.subr.bf16.mxu0 0
        %3722 = vmatpush1.bf16.msra.mxu0 0
        %3723 = vmatprep.subr.bf16.mxu0 0
        %3724 = vmatpush1.bf16.msra.mxu0 0
        %3725 = vmatprep.subr.bf16.mxu0 0
        %3726 = vmatpush1.bf16.msra.mxu0 0
        %3727 = vmatprep.subr.bf16.mxu0 0
        %3728 = vmatpush1.bf16.msra.mxu0 0
        %3729 = vmatprep.subr.bf16.mxu0 0
        %3730 = vmatpush1.bf16.msra.mxu0 0
        %3731 = vmatprep.subr.bf16.mxu0 0
        %3732 = vmatpush1.bf16.msra.mxu0 0
        %3733 = vmatprep.subr.bf16.mxu0 0
        %3734 = vmatpush1.bf16.msra.mxu0 0
        %3735 = vmatprep.subr.bf16.mxu0 0
        %3736 = vmatpush1.bf16.msra.mxu0 0
        %3737 = vmatprep.subr.bf16.mxu0 0
        %3738 = vmatpush1.bf16.msra.mxu0 0
        %3739 = vmatprep.subr.bf16.mxu0 0
        %3740 = vmatpush1.bf16.msra.mxu0 0
        %3741 = vmatprep.subr.bf16.mxu0 0
        %3742 = vmatpush1.bf16.msra.mxu0 0
        %3743 = vmatprep.subr.bf16.mxu0 0
        %3744 = vmatpush1.bf16.msra.mxu0 0
        %3745 = vmatprep.subr.bf16.mxu0 0
        %3746 = vmatpush1.bf16.msra.mxu0 0
        %3747 = vmatprep.mubr.bf16.mxu0 0
        %3748 = vmatmul.mubr.bf16.gmra.mrb[0].mxu0 %v3713
        %v3749 = vpop.f32.mrb[0].mxu0
        %v3750 = vadd.f32 0.0, %v3749
        %v3751 = vpop.f32.mrb[0].mxu0
        %v3752 = vpop.f32.mrb[0].mxu0
        %v3753 = vadd.f32 0.0, %v3752
        %v3754 = vpop.f32.mrb[0].mxu0
        %3755 = vdwg.mxu0
        %v3757 = vsel %vm3307, %v3490, 0
        %3759 = vmatprep.subr.bf16.mxu0 0
        %3760 = vmatpush1.bf16.msra.mxu0 %v2870
        %3761 = vmatprep.subr.bf16.mxu0 0
        %3762 = vmatpush1.bf16.msra.mxu0 0
        %3763 = vmatprep.subr.bf16.mxu0 0
        %3764 = vmatpush1.bf16.msra.mxu0 0
        %3765 = vmatprep.subr.bf16.mxu0 0
        %3766 = vmatpush1.bf16.msra.mxu0 0
        %3767 = vmatprep.subr.bf16.mxu0 0
        %3768 = vmatpush1.bf16.msra.mxu0 0
        %3769 = vmatprep.subr.bf16.mxu0 0
        %3770 = vmatpush1.bf16.msra.mxu0 0
        %3771 = vmatprep.subr.bf16.mxu0 0
        %3772 = vmatpush1.bf16.msra.mxu0 0
        %3773 = vmatprep.subr.bf16.mxu0 0
        %3774 = vmatpush1.bf16.msra.mxu0 0
        %3775 = vmatprep.subr.bf16.mxu0 0
        %3776 = vmatpush1.bf16.msra.mxu0 0
        %3777 = vmatprep.subr.bf16.mxu0 0
        %3778 = vmatpush1.bf16.msra.mxu0 0
        %3779 = vmatprep.subr.bf16.mxu0 0
        %3780 = vmatpush1.bf16.msra.mxu0 0
        %3781 = vmatprep.subr.bf16.mxu0 0
        %3782 = vmatpush1.bf16.msra.mxu0 0
        %3783 = vmatprep.subr.bf16.mxu0 0
        %3784 = vmatpush1.bf16.msra.mxu0 0
        %3785 = vmatprep.subr.bf16.mxu0 0
        %3786 = vmatpush1.bf16.msra.mxu0 0
        %3787 = vmatprep.subr.bf16.mxu0 0
        %3788 = vmatpush1.bf16.msra.mxu0 0
        %3789 = vmatprep.subr.bf16.mxu0 0
        %3790 = vmatpush1.bf16.msra.mxu0 0
        %3791 = vmatprep.mubr.bf16.mxu0 0
        %3792 = vmatmul.mubr.bf16.gmra.mrb[0].mxu0 %v3757
        %v3793 = vpop.f32.mrb[0].mxu0
        %v3794 = vadd.f32 0.0, %v3793
        %v3795 = vpop.f32.mrb[0].mxu0
        %v3796 = vpop.f32.mrb[0].mxu0
        %v3797 = vadd.f32 0.0, %v3796
        %v3798 = vpop.f32.mrb[0].mxu0
        %3799 = vdwg.mxu0
        %v3801 = vsel %vm3307, %v3491, 0
        %3803 = vmatprep.subr.bf16.mxu0 0
        %3804 = vmatpush1.bf16.msra.mxu0 %v2871
        %3805 = vmatprep.subr.bf16.mxu0 0
        %3806 = vmatpush1.bf16.msra.mxu0 0
        %3807 = vmatprep.subr.bf16.mxu0 0
        %3808 = vmatpush1.bf16.msra.mxu0 0
        %3809 = vmatprep.subr.bf16.mxu0 0
        %3810 = vmatpush1.bf16.msra.mxu0 0
        %3811 = vmatprep.subr.bf16.mxu0 0
        %3812 = vmatpush1.bf16.msra.mxu0 0
        %3813 = vmatprep.subr.bf16.mxu0 0
        %3814 = vmatpush1.bf16.msra.mxu0 0
        %3815 = vmatprep.subr.bf16.mxu0 0
        %3816 = vmatpush1.bf16.msra.mxu0 0
        %3817 = vmatprep.subr.bf16.mxu0 0
        %3818 = vmatpush1.bf16.msra.mxu0 0
        %3819 = vmatprep.subr.bf16.mxu0 0
        %3820 = vmatpush1.bf16.msra.mxu0 0
        %3821 = vmatprep.subr.bf16.mxu0 0
        %3822 = vmatpush1.bf16.msra.mxu0 0
        %3823 = vmatprep.subr.bf16.mxu0 0
        %3824 = vmatpush1.bf16.msra.mxu0 0
        %3825 = vmatprep.subr.bf16.mxu0 0
        %3826 = vmatpush1.bf16.msra.mxu0 0
        %3827 = vmatprep.subr.bf16.mxu0 0
        %3828 = vmatpush1.bf16.msra.mxu0 0
        %3829 = vmatprep.subr.bf16.mxu0 0
        %3830 = vmatpush1.bf16.msra.mxu0 0
        %3831 = vmatprep.subr.bf16.mxu0 0
        %3832 = vmatpush1.bf16.msra.mxu0 0
        %3833 = vmatprep.subr.bf16.mxu0 0
        %3834 = vmatpush1.bf16.msra.mxu0 0
        %3835 = vmatprep.mubr.bf16.mxu0 0
        %3836 = vmatmul.mubr.bf16.gmra.mrb[0].mxu0 %v3801
        %v3837 = vpop.f32.mrb[0].mxu0
        %v3838 = vadd.f32 0.0, %v3837
        %v3839 = vpop.f32.mrb[0].mxu0
        %v3840 = vpop.f32.mrb[0].mxu0
        %v3841 = vadd.f32 0.0, %v3840
        %v3842 = vpop.f32.mrb[0].mxu0
        %3843 = vdwg.mxu0
        %v3844 = vcombine.low %v3530, %v3618
        %v3845 = vcombine.high %v3530, %v3618
        %v3847 = vunpack.c.l.s4 1983009808
        %v3848 = vunpack.c.0.s8 %v3847
        %v3849 = vlaneseq
        %v3850 = vshrl.u32 %v3849, 7
        %v3851 = vsub.s32 %v3848, %v3850
        %v3852 = vrot.slane %v3844, %v3851
        %v3854 = vunpack.c.l.s4 1983009808
        %v3855 = vunpack.c.0.s8 %v3854
        %v3856 = vlaneseq
        %v3857 = vshrl.u32 %v3856, 7
        %v3858 = vsub.s32 %v3855, %v3857
        %v3859 = vrot.slane %v3845, %v3858
        %v3860 = vcombine.low %v3574, %v3662
        %v3861 = vcombine.high %v3574, %v3662
        %v3863 = vunpack.c.l.s4 1983009808
        %v3864 = vunpack.c.0.s8 %v3863
        %v3865 = vlaneseq
        %v3866 = vshrl.u32 %v3865, 7
        %v3867 = vsub.s32 %v3864, %v3866
        %v3868 = vrot.slane %v3860, %v3867
        %v3870 = vunpack.c.l.s4 1983009808
        %v3871 = vunpack.c.0.s8 %v3870
        %v3872 = vlaneseq
        %v3873 = vshrl.u32 %v3872, 7
        %v3874 = vsub.s32 %v3871, %v3873
        %v3875 = vrot.slane %v3861, %v3874
        %v3876 = vcombine.low %v3852, %v3868
        %v3877 = vcombine.high %v3852, %v3868
        %v3879 = vunpack.c.l.s4 1934713408
        %v3880 = vunpack.c.0.s8 %v3879
        %v3881 = vlaneseq
        %v3882 = vshrl.u32 %v3881, 7
        %v3883 = vsub.s32 %v3880, %v3882
        %v3884 = vrot.slane %v3876, %v3883
        %v3886 = vunpack.c.l.s4 1934713408
        %v3887 = vunpack.c.0.s8 %v3886
        %v3888 = vlaneseq
        %v3889 = vshrl.u32 %v3888, 7
        %v3890 = vsub.s32 %v3887, %v3889
        %v3891 = vrot.slane %v3877, %v3890
        %v3892 = vcombine.low %v3859, %v3875
        %v3893 = vcombine.high %v3859, %v3875
        %v3895 = vunpack.c.l.s4 1934713408
        %v3896 = vunpack.c.0.s8 %v3895
        %v3897 = vlaneseq
        %v3898 = vshrl.u32 %v3897, 7
        %v3899 = vsub.s32 %v3896, %v3898
        %v3900 = vrot.slane %v3892, %v3899
        %v3902 = vunpack.c.l.s4 1934713408
        %v3903 = vunpack.c.0.s8 %v3902
        %v3904 = vlaneseq
        %v3905 = vshrl.u32 %v3904, 7
        %v3906 = vsub.s32 %v3903, %v3905
        %v3907 = vrot.slane %v3893, %v3906
        %v3908 = vcombine.high %v3884, 0.0
        %v3909 = vcombine.high %v3891, 0.0
        %v3910 = vcombine.high %v3900, 0.0
        %v3911 = vcombine.high %v3907, 0.0
        %v3912 = vcombine.low %v3533, %v3621
        %v3913 = vcombine.high %v3533, %v3621
        %v3915 = vunpack.c.l.s4 1983009808
        %v3916 = vunpack.c.0.s8 %v3915
        %v3917 = vlaneseq
        %v3918 = vshrl.u32 %v3917, 7
        %v3919 = vsub.s32 %v3916, %v3918
        %v3920 = vrot.slane %v3912, %v3919
        %v3922 = vunpack.c.l.s4 1983009808
        %v3923 = vunpack.c.0.s8 %v3922
        %v3924 = vlaneseq
        %v3925 = vshrl.u32 %v3924, 7
        %v3926 = vsub.s32 %v3923, %v3925
        %v3927 = vrot.slane %v3913, %v3926
        %v3928 = vcombine.low %v3577, %v3665
        %v3929 = vcombine.high %v3577, %v3665
        %v3931 = vunpack.c.l.s4 1983009808
        %v3932 = vunpack.c.0.s8 %v3931
        %v3933 = vlaneseq
        %v3934 = vshrl.u32 %v3933, 7
        %v3935 = vsub.s32 %v3932, %v3934
        %v3936 = vrot.slane %v3928, %v3935
        %v3938 = vunpack.c.l.s4 1983009808
        %v3939 = vunpack.c.0.s8 %v3938
        %v3940 = vlaneseq
        %v3941 = vshrl.u32 %v3940, 7
        %v3942 = vsub.s32 %v3939, %v3941
        %v3943 = vrot.slane %v3929, %v3942
        %v3944 = vcombine.low %v3920, %v3936
        %v3945 = vcombine.high %v3920, %v3936
        %v3947 = vunpack.c.l.s4 1934713408
        %v3948 = vunpack.c.0.s8 %v3947
        %v3949 = vlaneseq
        %v3950 = vshrl.u32 %v3949, 7
        %v3951 = vsub.s32 %v3948, %v3950
        %v3952 = vrot.slane %v3944, %v3951
        %v3954 = vunpack.c.l.s4 1934713408
        %v3955 = vunpack.c.0.s8 %v3954
        %v3956 = vlaneseq
        %v3957 = vshrl.u32 %v3956, 7
        %v3958 = vsub.s32 %v3955, %v3957
        %v3959 = vrot.slane %v3945, %v3958
        %v3960 = vcombine.low %v3927, %v3943
        %v3961 = vcombine.high %v3927, %v3943
        %v3963 = vunpack.c.l.s4 1934713408
        %v3964 = vunpack.c.0.s8 %v3963
        %v3965 = vlaneseq
        %v3966 = vshrl.u32 %v3965, 7
        %v3967 = vsub.s32 %v3964, %v3966
        %v3968 = vrot.slane %v3960, %v3967
        %v3970 = vunpack.c.l.s4 1934713408
        %v3971 = vunpack.c.0.s8 %v3970
        %v3972 = vlaneseq
        %v3973 = vshrl.u32 %v3972, 7
        %v3974 = vsub.s32 %v3971, %v3973
        %v3975 = vrot.slane %v3961, %v3974
        %v3976 = vcombine.high %v3952, 0.0
        %v3977 = vcombine.high %v3959, 0.0
        %v3978 = vcombine.high %v3968, 0.0
        %v3979 = vcombine.high %v3975, 0.0
        %v3980 = vcombine.low %v3706, %v3794
        %v3981 = vcombine.high %v3706, %v3794
        %v3983 = vunpack.c.l.s4 1983009808
        %v3984 = vunpack.c.0.s8 %v3983
        %v3985 = vlaneseq
        %v3986 = vshrl.u32 %v3985, 7
        %v3987 = vsub.s32 %v3984, %v3986
        %v3988 = vrot.slane %v3980, %v3987
        %v3990 = vunpack.c.l.s4 1983009808
        %v3991 = vunpack.c.0.s8 %v3990
        %v3992 = vlaneseq
        %v3993 = vshrl.u32 %v3992, 7
        %v3994 = vsub.s32 %v3991, %v3993
        %v3995 = vrot.slane %v3981, %v3994
        %v3996 = vcombine.low %v3750, %v3838
        %v3997 = vcombine.high %v3750, %v3838
        %v3999 = vunpack.c.l.s4 1983009808
        %v4000 = vunpack.c.0.s8 %v3999
        %v4001 = vlaneseq
        %v4002 = vshrl.u32 %v4001, 7
        %v4003 = vsub.s32 %v4000, %v4002
        %v4004 = vrot.slane %v3996, %v4003
        %v4006 = vunpack.c.l.s4 1983009808
        %v4007 = vunpack.c.0.s8 %v4006
        %v4008 = vlaneseq
        %v4009 = vshrl.u32 %v4008, 7
        %v4010 = vsub.s32 %v4007, %v4009
        %v4011 = vrot.slane %v3997, %v4010
        %v4012 = vcombine.low %v3988, %v4004
        %v4013 = vcombine.high %v3988, %v4004
        %v4015 = vunpack.c.l.s4 1934713408
        %v4016 = vunpack.c.0.s8 %v4015
        %v4017 = vlaneseq
        %v4018 = vshrl.u32 %v4017, 7
        %v4019 = vsub.s32 %v4016, %v4018
        %v4020 = vrot.slane %v4012, %v4019
        %v4022 = vunpack.c.l.s4 1934713408
        %v4023 = vunpack.c.0.s8 %v4022
        %v4024 = vlaneseq
        %v4025 = vshrl.u32 %v4024, 7
        %v4026 = vsub.s32 %v4023, %v4025
        %v4027 = vrot.slane %v4013, %v4026
        %v4028 = vcombine.low %v3995, %v4011
        %v4029 = vcombine.high %v3995, %v4011
        %v4031 = vunpack.c.l.s4 1934713408
        %v4032 = vunpack.c.0.s8 %v4031
        %v4033 = vlaneseq
        %v4034 = vshrl.u32 %v4033, 7
        %v4035 = vsub.s32 %v4032, %v4034
        %v4036 = vrot.slane %v4028, %v4035
        %v4038 = vunpack.c.l.s4 1934713408
        %v4039 = vunpack.c.0.s8 %v4038
        %v4040 = vlaneseq
        %v4041 = vshrl.u32 %v4040, 7
        %v4042 = vsub.s32 %v4039, %v4041
        %v4043 = vrot.slane %v4029, %v4042
        %v4044 = vcombine.high %v4020, 0.0
        %v4045 = vcombine.high %v4027, 0.0
        %v4046 = vcombine.high %v4036, 0.0
        %v4047 = vcombine.high %v4043, 0.0
        %v4048 = vcombine.low %v3709, %v3797
        %v4049 = vcombine.high %v3709, %v3797
        %v4051 = vunpack.c.l.s4 1983009808
        %v4052 = vunpack.c.0.s8 %v4051
        %v4053 = vlaneseq
        %v4054 = vshrl.u32 %v4053, 7
        %v4055 = vsub.s32 %v4052, %v4054
        %v4056 = vrot.slane %v4048, %v4055
        %v4058 = vunpack.c.l.s4 1983009808
        %v4059 = vunpack.c.0.s8 %v4058
        %v4060 = vlaneseq
        %v4061 = vshrl.u32 %v4060, 7
        %v4062 = vsub.s32 %v4059, %v4061
        %v4063 = vrot.slane %v4049, %v4062
        %v4064 = vcombine.low %v3753, %v3841
        %v4065 = vcombine.high %v3753, %v3841
        %v4067 = vunpack.c.l.s4 1983009808
        %v4068 = vunpack.c.0.s8 %v4067
        %v4069 = vlaneseq
        %v4070 = vshrl.u32 %v4069, 7
        %v4071 = vsub.s32 %v4068, %v4070
        %v4072 = vrot.slane %v4064, %v4071
        %v4074 = vunpack.c.l.s4 1983009808
        %v4075 = vunpack.c.0.s8 %v4074
        %v4076 = vlaneseq
        %v4077 = vshrl.u32 %v4076, 7
        %v4078 = vsub.s32 %v4075, %v4077
        %v4079 = vrot.slane %v4065, %v4078
        %v4080 = vcombine.low %v4056, %v4072
        %v4081 = vcombine.high %v4056, %v4072
        %v4083 = vunpack.c.l.s4 1934713408
        %v4084 = vunpack.c.0.s8 %v4083
        %v4085 = vlaneseq
        %v4086 = vshrl.u32 %v4085, 7
        %v4087 = vsub.s32 %v4084, %v4086
        %v4088 = vrot.slane %v4080, %v4087
        %v4090 = vunpack.c.l.s4 1934713408
        %v4091 = vunpack.c.0.s8 %v4090
        %v4092 = vlaneseq
        %v4093 = vshrl.u32 %v4092, 7
        %v4094 = vsub.s32 %v4091, %v4093
        %v4095 = vrot.slane %v4081, %v4094
        %v4096 = vcombine.low %v4063, %v4079
        %v4097 = vcombine.high %v4063, %v4079
        %v4099 = vunpack.c.l.s4 1934713408
        %v4100 = vunpack.c.0.s8 %v4099
        %v4101 = vlaneseq
        %v4102 = vshrl.u32 %v4101, 7
        %v4103 = vsub.s32 %v4100, %v4102
        %v4104 = vrot.slane %v4096, %v4103
        %v4106 = vunpack.c.l.s4 1934713408
        %v4107 = vunpack.c.0.s8 %v4106
        %v4108 = vlaneseq
        %v4109 = vshrl.u32 %v4108, 7
        %v4110 = vsub.s32 %v4107, %v4109
        %v4111 = vrot.slane %v4097, %v4110
        %v4112 = vcombine.high %v4088, 0.0
        %v4113 = vcombine.high %v4095, 0.0
        %v4114 = vcombine.high %v4104, 0.0
        %v4115 = vcombine.high %v4111, 0.0
        %v4116 = vcombine.low %v3884, %v3891
        %v4118 = vunpack.c.l.s4 1983009808
        %v4119 = vunpack.c.0.s8 %v4118
        %v4120 = vlaneseq
        %v4121 = vshrl.u32 %v4120, 7
        %v4122 = vsub.s32 %v4119, %v4121
        %v4123 = vrot.slane %v4116, %v4122
        %v4124 = vcombine.low %v3908, %v3909
        %v4126 = vunpack.c.l.s4 1983009808
        %v4127 = vunpack.c.0.s8 %v4126
        %v4128 = vlaneseq
        %v4129 = vshrl.u32 %v4128, 7
        %v4130 = vsub.s32 %v4127, %v4129
        %v4131 = vrot.slane %v4124, %v4130
        %v4132 = vcombine.low %v3900, %v3907
        %v4134 = vunpack.c.l.s4 1983009808
        %v4135 = vunpack.c.0.s8 %v4134
        %v4136 = vlaneseq
        %v4137 = vshrl.u32 %v4136, 7
        %v4138 = vsub.s32 %v4135, %v4137
        %v4139 = vrot.slane %v4132, %v4138
        %v4140 = vcombine.low %v3910, %v3911
        %v4142 = vunpack.c.l.s4 1983009808
        %v4143 = vunpack.c.0.s8 %v4142
        %v4144 = vlaneseq
        %v4145 = vshrl.u32 %v4144, 7
        %v4146 = vsub.s32 %v4143, %v4145
        %v4147 = vrot.slane %v4140, %v4146
        %v4148 = vcombine.low %v4123, %v4131
        %v4149 = vcombine.high %v4123, %v4131
        %v4151 = vunpack.c.l.s4 1934713408
        %v4152 = vunpack.c.0.s8 %v4151
        %v4153 = vlaneseq
        %v4154 = vshrl.u32 %v4153, 7
        %v4155 = vsub.s32 %v4152, %v4154
        %v4156 = vrot.slane %v4148, %v4155
        %v4158 = vunpack.c.l.s4 1934713408
        %v4159 = vunpack.c.0.s8 %v4158
        %v4160 = vlaneseq
        %v4161 = vshrl.u32 %v4160, 7
        %v4162 = vsub.s32 %v4159, %v4161
        %v4163 = vrot.slane %v4149, %v4162
        %v4164 = vcombine.low %v4139, %v4147
        %v4165 = vcombine.high %v4139, %v4147
        %v4167 = vunpack.c.l.s4 1934713408
        %v4168 = vunpack.c.0.s8 %v4167
        %v4169 = vlaneseq
        %v4170 = vshrl.u32 %v4169, 7
        %v4171 = vsub.s32 %v4168, %v4170
        %v4172 = vrot.slane %v4164, %v4171
        %v4174 = vunpack.c.l.s4 1934713408
        %v4175 = vunpack.c.0.s8 %v4174
        %v4176 = vlaneseq
        %v4177 = vshrl.u32 %v4176, 7
        %v4178 = vsub.s32 %v4175, %v4177
        %v4179 = vrot.slane %v4165, %v4178
        %v4180 = vcombine.low %v4156, %v4172
        %v4181 = vcombine.high %v4156, %v4172
        %v4182 = vcombine.low %v4163, %v4179
        %v4183 = vcombine.high %v4163, %v4179
        %v4184 = vcombine.low %v3952, %v3959
        %v4186 = vunpack.c.l.s4 1983009808
        %v4187 = vunpack.c.0.s8 %v4186
        %v4188 = vlaneseq
        %v4189 = vshrl.u32 %v4188, 7
        %v4190 = vsub.s32 %v4187, %v4189
        %v4191 = vrot.slane %v4184, %v4190
        %v4192 = vcombine.low %v3976, %v3977
        %v4194 = vunpack.c.l.s4 1983009808
        %v4195 = vunpack.c.0.s8 %v4194
        %v4196 = vlaneseq
        %v4197 = vshrl.u32 %v4196, 7
        %v4198 = vsub.s32 %v4195, %v4197
        %v4199 = vrot.slane %v4192, %v4198
        %v4200 = vcombine.low %v3968, %v3975
        %v4202 = vunpack.c.l.s4 1983009808
        %v4203 = vunpack.c.0.s8 %v4202
        %v4204 = vlaneseq
        %v4205 = vshrl.u32 %v4204, 7
        %v4206 = vsub.s32 %v4203, %v4205
        %v4207 = vrot.slane %v4200, %v4206
        %v4208 = vcombine.low %v3978, %v3979
        %v4210 = vunpack.c.l.s4 1983009808
        %v4211 = vunpack.c.0.s8 %v4210
        %v4212 = vlaneseq
        %v4213 = vshrl.u32 %v4212, 7
        %v4214 = vsub.s32 %v4211, %v4213
        %v4215 = vrot.slane %v4208, %v4214
        %v4216 = vcombine.low %v4191, %v4199
        %v4217 = vcombine.high %v4191, %v4199
        %v4219 = vunpack.c.l.s4 1934713408
        %v4220 = vunpack.c.0.s8 %v4219
        %v4221 = vlaneseq
        %v4222 = vshrl.u32 %v4221, 7
        %v4223 = vsub.s32 %v4220, %v4222
        %v4224 = vrot.slane %v4216, %v4223
        %v4226 = vunpack.c.l.s4 1934713408
        %v4227 = vunpack.c.0.s8 %v4226
        %v4228 = vlaneseq
        %v4229 = vshrl.u32 %v4228, 7
        %v4230 = vsub.s32 %v4227, %v4229
        %v4231 = vrot.slane %v4217, %v4230
        %v4232 = vcombine.low %v4207, %v4215
        %v4233 = vcombine.high %v4207, %v4215
        %v4235 = vunpack.c.l.s4 1934713408
        %v4236 = vunpack.c.0.s8 %v4235
        %v4237 = vlaneseq
        %v4238 = vshrl.u32 %v4237, 7
        %v4239 = vsub.s32 %v4236, %v4238
        %v4240 = vrot.slane %v4232, %v4239
        %v4242 = vunpack.c.l.s4 1934713408
        %v4243 = vunpack.c.0.s8 %v4242
        %v4244 = vlaneseq
        %v4245 = vshrl.u32 %v4244, 7
        %v4246 = vsub.s32 %v4243, %v4245
        %v4247 = vrot.slane %v4233, %v4246
        %v4248 = vcombine.low %v4224, %v4240
        %v4249 = vcombine.high %v4224, %v4240
        %v4250 = vcombine.low %v4231, %v4247
        %v4251 = vcombine.high %v4231, %v4247
        %v4252 = vcombine.low %v4020, %v4027
        %v4254 = vunpack.c.l.s4 1983009808
        %v4255 = vunpack.c.0.s8 %v4254
        %v4256 = vlaneseq
        %v4257 = vshrl.u32 %v4256, 7
        %v4258 = vsub.s32 %v4255, %v4257
        %v4259 = vrot.slane %v4252, %v4258
        %v4260 = vcombine.low %v4044, %v4045
        %v4262 = vunpack.c.l.s4 1983009808
        %v4263 = vunpack.c.0.s8 %v4262
        %v4264 = vlaneseq
        %v4265 = vshrl.u32 %v4264, 7
        %v4266 = vsub.s32 %v4263, %v4265
        %v4267 = vrot.slane %v4260, %v4266
        %v4268 = vcombine.low %v4036, %v4043
        %v4270 = vunpack.c.l.s4 1983009808
        %v4271 = vunpack.c.0.s8 %v4270
        %v4272 = vlaneseq
        %v4273 = vshrl.u32 %v4272, 7
        %v4274 = vsub.s32 %v4271, %v4273
        %v4275 = vrot.slane %v4268, %v4274
        %v4276 = vcombine.low %v4046, %v4047
        %v4278 = vunpack.c.l.s4 1983009808
        %v4279 = vunpack.c.0.s8 %v4278
        %v4280 = vlaneseq
        %v4281 = vshrl.u32 %v4280, 7
        %v4282 = vsub.s32 %v4279, %v4281
        %v4283 = vrot.slane %v4276, %v4282
        %v4284 = vcombine.low %v4259, %v4267
        %v4285 = vcombine.high %v4259, %v4267
        %v4287 = vunpack.c.l.s4 1934713408
        %v4288 = vunpack.c.0.s8 %v4287
        %v4289 = vlaneseq
        %v4290 = vshrl.u32 %v4289, 7
        %v4291 = vsub.s32 %v4288, %v4290
        %v4292 = vrot.slane %v4284, %v4291
        %v4294 = vunpack.c.l.s4 1934713408
        %v4295 = vunpack.c.0.s8 %v4294
        %v4296 = vlaneseq
        %v4297 = vshrl.u32 %v4296, 7
        %v4298 = vsub.s32 %v4295, %v4297
        %v4299 = vrot.slane %v4285, %v4298
        %v4300 = vcombine.low %v4275, %v4283
        %v4301 = vcombine.high %v4275, %v4283
        %v4303 = vunpack.c.l.s4 1934713408
        %v4304 = vunpack.c.0.s8 %v4303
        %v4305 = vlaneseq
        %v4306 = vshrl.u32 %v4305, 7
        %v4307 = vsub.s32 %v4304, %v4306
        %v4308 = vrot.slane %v4300, %v4307
        %v4310 = vunpack.c.l.s4 1934713408
        %v4311 = vunpack.c.0.s8 %v4310
        %v4312 = vlaneseq
        %v4313 = vshrl.u32 %v4312, 7
        %v4314 = vsub.s32 %v4311, %v4313
        %v4315 = vrot.slane %v4301, %v4314
        %v4316 = vcombine.low %v4292, %v4308
        %v4317 = vcombine.high %v4292, %v4308
        %v4318 = vcombine.low %v4299, %v4315
        %v4319 = vcombine.high %v4299, %v4315
        %v4320 = vcombine.low %v4088, %v4095
        %v4322 = vunpack.c.l.s4 1983009808
        %v4323 = vunpack.c.0.s8 %v4322
        %v4324 = vlaneseq
        %v4325 = vshrl.u32 %v4324, 7
        %v4326 = vsub.s32 %v4323, %v4325
        %v4327 = vrot.slane %v4320, %v4326
        %v4328 = vcombine.low %v4112, %v4113
        %v4330 = vunpack.c.l.s4 1983009808
        %v4331 = vunpack.c.0.s8 %v4330
        %v4332 = vlaneseq
        %v4333 = vshrl.u32 %v4332, 7
        %v4334 = vsub.s32 %v4331, %v4333
        %v4335 = vrot.slane %v4328, %v4334
        %v4336 = vcombine.low %v4104, %v4111
        %v4338 = vunpack.c.l.s4 1983009808
        %v4339 = vunpack.c.0.s8 %v4338
        %v4340 = vlaneseq
        %v4341 = vshrl.u32 %v4340, 7
        %v4342 = vsub.s32 %v4339, %v4341
        %v4343 = vrot.slane %v4336, %v4342
        %v4344 = vcombine.low %v4114, %v4115
        %v4346 = vunpack.c.l.s4 1983009808
        %v4347 = vunpack.c.0.s8 %v4346
        %v4348 = vlaneseq
        %v4349 = vshrl.u32 %v4348, 7
        %v4350 = vsub.s32 %v4347, %v4349
        %v4351 = vrot.slane %v4344, %v4350
        %v4352 = vcombine.low %v4327, %v4335
        %v4353 = vcombine.high %v4327, %v4335
        %v4355 = vunpack.c.l.s4 1934713408
        %v4356 = vunpack.c.0.s8 %v4355
        %v4357 = vlaneseq
        %v4358 = vshrl.u32 %v4357, 7
        %v4359 = vsub.s32 %v4356, %v4358
        %v4360 = vrot.slane %v4352, %v4359
        %v4362 = vunpack.c.l.s4 1934713408
        %v4363 = vunpack.c.0.s8 %v4362
        %v4364 = vlaneseq
        %v4365 = vshrl.u32 %v4364, 7
        %v4366 = vsub.s32 %v4363, %v4365
        %v4367 = vrot.slane %v4353, %v4366
        %v4368 = vcombine.low %v4343, %v4351
        %v4369 = vcombine.high %v4343, %v4351
        %v4371 = vunpack.c.l.s4 1934713408
        %v4372 = vunpack.c.0.s8 %v4371
        %v4373 = vlaneseq
        %v4374 = vshrl.u32 %v4373, 7
        %v4375 = vsub.s32 %v4372, %v4374
        %v4376 = vrot.slane %v4368, %v4375
        %v4378 = vunpack.c.l.s4 1934713408
        %v4379 = vunpack.c.0.s8 %v4378
        %v4380 = vlaneseq
        %v4381 = vshrl.u32 %v4380, 7
        %v4382 = vsub.s32 %v4379, %v4381
        %v4383 = vrot.slane %v4369, %v4382
        %v4384 = vcombine.low %v4360, %v4376
        %v4385 = vcombine.high %v4360, %v4376
        %v4386 = vcombine.low %v4367, %v4383
        %v4387 = vcombine.high %v4367, %v4383
        %4392 = vrot.lane.b32.xlu0 %v4181, 32
        %v4393 = vpop.permute.xlu0 %4392
        %4394 = vrot.lane.b32.xlu0 %v4249, 32
        %v4395 = vpop.permute.xlu0 %4394
        %4396 = vrot.lane.b32.xlu0 %v4317, 32
        %v4397 = vpop.permute.xlu0 %4396
        %4398 = vrot.lane.b32.xlu0 %v4385, 32
        %v4399 = vpop.permute.xlu0 %4398
        %4408 = vrot.lane.b32.xlu0 %v4182, 64
        %v4409 = vpop.permute.xlu0 %4408
        %4410 = vrot.lane.b32.xlu0 %v4250, 64
        %v4411 = vpop.permute.xlu0 %4410
        %4412 = vrot.lane.b32.xlu0 %v4318, 64
        %v4413 = vpop.permute.xlu0 %4412
        %4414 = vrot.lane.b32.xlu0 %v4386, 64
        %v4415 = vpop.permute.xlu0 %4414
        %4424 = vrot.lane.b32.xlu0 %v4183, 96
        %v4425 = vpop.permute.xlu0 %4424
        %4426 = vrot.lane.b32.xlu0 %v4251, 96
        %v4427 = vpop.permute.xlu0 %4426
        %4428 = vrot.lane.b32.xlu0 %v4319, 96
        %v4429 = vpop.permute.xlu0 %4428
        %4430 = vrot.lane.b32.xlu0 %v4387, 96
        %v4431 = vpop.permute.xlu0 %4430
        %v4436 = vsel %vm2914, %v4180, %v4393
        %v4437 = vsel %vm2914, %v4248, %v4395
        %v4438 = vsel %vm2914, %v4316, %v4397
        %v4439 = vsel %vm2914, %v4384, %v4399
        %vm4440 = vcmask 523264
        %v4441 = vsel %vm4440, %v4436, %v4409
        %v4442 = vsel %vm4440, %v4437, %v4411
        %v4443 = vsel %vm4440, %v4438, %v4413
        %v4444 = vsel %vm4440, %v4439, %v4415
        %vm4445 = vcmask 785408
        %v4446 = vsel %vm4445, %v4441, %v4425
        %v4447 = vsel %vm4445, %v4442, %v4427
        %v4448 = vsel %vm4445, %v4443, %v4429
        %v4449 = vsel %vm4445, %v4444, %v4431
        %v4450 = vpack.c.bf16 %v4447, %v4446
        %v4451 = vpack.c.bf16 %v4449, %v4448
        %v4452 = vld [vmem:[#allocation11] sm:$0xf]
        %v4453 = vld [vmem:[#allocation11 + $0x4] sm:$0xf]
        %v4454 = vld [vmem:[#allocation11 + $0x8] sm:$0xf]
        %v4455 = vld [vmem:[#allocation11 + $0xc] sm:$0xf]
        %v4456 = vld [vmem:[#allocation11 + $0x10] sm:$0xf]
        %v4457 = vld [vmem:[#allocation11 + $0x14] sm:$0xf]
        %v4458 = vld [vmem:[#allocation11 + $0x18] sm:$0xf]
        %v4459 = vld [vmem:[#allocation11 + $0x1c] sm:$0xf]
        %v4460 = vld [vmem:[#allocation11 + $0x20] sm:$0xf]
        %v4461 = vld [vmem:[#allocation11 + $0x24] sm:$0xf]
        %v4462 = vld [vmem:[#allocation11 + $0x28] sm:$0xf]
        %v4463 = vld [vmem:[#allocation11 + $0x2c] sm:$0xf]
        %v4464 = vld [vmem:[#allocation11 + $0x30] sm:$0xf]
        %v4465 = vld [vmem:[#allocation11 + $0x34] sm:$0xf]
        %v4466 = vld [vmem:[#allocation11 + $0x38] sm:$0xf]
        %v4467 = vld [vmem:[#allocation11 + $0x3c] sm:$0xf]
        %v4468 = vld [vmem:[%s9] sm:$0x1]
        %v4470 = vlaneseq
        %v4471 = vshrl.u32 %v4470, 7
        %v4472 = vsub.s32 0, %v4471
        %v4473 = vrot.slane %v4468, %v4472
        %v4491 = vunpack.c.l.b16 %v4452
        %v4492 = vunpack.c.l.b16 %v4453
        %v4493 = vunpack.c.l.b16 %v4454
        %v4494 = vunpack.c.l.b16 %v4455
        %v4495 = vunpack.c.l.b16 %v4456
        %v4496 = vunpack.c.l.b16 %v4457
        %v4497 = vunpack.c.l.b16 %v4458
        %v4498 = vunpack.c.l.b16 %v4459
        %v4499 = vunpack.c.l.b16 %v4460
        %v4500 = vunpack.c.l.b16 %v4461
        %v4501 = vunpack.c.l.b16 %v4462
        %v4502 = vunpack.c.l.b16 %v4463
        %v4503 = vunpack.c.l.b16 %v4464
        %v4504 = vunpack.c.l.b16 %v4465
        %v4505 = vunpack.c.l.b16 %v4466
        %v4506 = vunpack.c.l.b16 %v4467
        %v4507 = vpack.c.b16 %v4492, %v4491
        %v4508 = vpack.c.b16 %v4494, %v4493
        %v4509 = vpack.c.b16 %v4496, %v4495
        %v4510 = vpack.c.b16 %v4498, %v4497
        %v4511 = vpack.c.b16 %v4500, %v4499
        %v4512 = vpack.c.b16 %v4502, %v4501
        %v4513 = vpack.c.b16 %v4504, %v4503
        %v4514 = vpack.c.b16 %v4506, %v4505
        %4523 = vmatprep.subr.bf16.mxu0 0
        %4524 = vmatpush1.bf16.msra.mxu0 %v4507
        %4525 = vmatprep.subr.bf16.mxu0 0
        %4526 = vmatpush1.bf16.msra.mxu0 %v4508
        %4527 = vmatprep.subr.bf16.mxu0 0
        %4528 = vmatpush1.bf16.msra.mxu0 %v4509
        %4529 = vmatprep.subr.bf16.mxu0 0
        %4530 = vmatpush1.bf16.msra.mxu0 %v4510
        %4531 = vmatprep.subr.bf16.mxu0 0
        %4532 = vmatpush1.bf16.msra.mxu0 %v4511
        %4533 = vmatprep.subr.bf16.mxu0 0
        %4534 = vmatpush1.bf16.msra.mxu0 %v4512
        %4535 = vmatprep.subr.bf16.mxu0 0
        %4536 = vmatpush1.bf16.msra.mxu0 %v4513
        %4537 = vmatprep.subr.bf16.mxu0 0
        %4538 = vmatpush1.bf16.msra.mxu0 %v4514
        %4539 = vmatprep.subr.bf16.mxu0 0
        %4540 = vmatpush1.bf16.msra.mxu0 0
        %4541 = vmatprep.subr.bf16.mxu0 0
        %4542 = vmatpush1.bf16.msra.mxu0 0
        %4543 = vmatprep.subr.bf16.mxu0 0
        %4544 = vmatpush1.bf16.msra.mxu0 0
        %4545 = vmatprep.subr.bf16.mxu0 0
        %4546 = vmatpush1.bf16.msra.mxu0 0
        %4547 = vmatprep.subr.bf16.mxu0 0
        %4548 = vmatpush1.bf16.msra.mxu0 0
        %4549 = vmatprep.subr.bf16.mxu0 0
        %4550 = vmatpush1.bf16.msra.mxu0 0
        %4551 = vmatprep.subr.bf16.mxu0 0
        %4552 = vmatpush1.bf16.msra.mxu0 0
        %4553 = vmatprep.subr.bf16.mxu0 0
        %4554 = vmatpush1.bf16.msra.mxu0 0
        %4555 = vmatprep.mubr.bf16.mxu0 0
        %4556 = vmatmul.mubr.bf16.gmra.mrb[0].mxu0 %v4450
        %v4557 = vpop.f32.mrb[0].mxu0
        %v4558 = vadd.f32 %v4473, %v4557
        %v4559 = vpop.f32.mrb[0].mxu0
        %v4560 = vpop.f32.mrb[0].mxu0
        %v4561 = vadd.f32 %v4473, %v4560
        %v4562 = vpop.f32.mrb[0].mxu0
        %4563 = vmatprep.mubr.bf16.mxu0 0
        %4564 = vmatmul.mubr.bf16.gmra.mrb[0].mxu0 %v4451
        %v4565 = vpop.f32.mrb[0].mxu0
        %v4566 = vadd.f32 %v4473, %v4565
        %v4567 = vpop.f32.mrb[0].mxu0
        %v4568 = vpop.f32.mrb[0].mxu0
        %v4569 = vadd.f32 %v4473, %v4568
        %v4570 = vpop.f32.mrb[0].mxu0
        %4571 = vdwg.mxu0
        %v4572 = vadd.f32 %v4558, %v726
        %v4573 = vadd.f32 %v4561, %v727
        %v4574 = vadd.f32 %v4566, %v728
        %v4575 = vadd.f32 %v4569, %v729
        %v4576 = vld [vmem:[%s10] sm:$0x1]
        %v4577 = vld [vmem:[%s11] sm:$0x1]
        %4578 = vadd.xlane.f32.xlu0 %v4572
        %v4579 = vpop.xlane.xlu0 %4578
        %4580 = vadd.xlane.f32.xlu0 %v4573
        %v4581 = vpop.xlane.xlu0 %4580
        %4582 = vadd.xlane.f32.xlu0 %v4574
        %v4583 = vpop.xlane.xlu0 %4582
        %4584 = vadd.xlane.f32.xlu0 %v4575
        %v4585 = vpop.xlane.xlu0 %4584
        %v4586 = vrcp.pop 128.0
        %v4587 = vmul.f32 %v4579, %v4586
        %v4588 = vmul.f32 %v4581, %v4586
        %v4589 = vmul.f32 %v4583, %v4586
        %v4590 = vmul.f32 %v4585, %v4586
        %v4591 = vsub.f32 %v4572, %v4587
        %v4592 = vsub.f32 %v4573, %v4588
        %v4593 = vsub.f32 %v4574, %v4589
        %v4594 = vsub.f32 %v4575, %v4590
        %v4595 = vmul.f32 %v4591, %v4591
        %v4596 = vmul.f32 %v4592, %v4592
        %v4597 = vmul.f32 %v4593, %v4593
        %v4598 = vmul.f32 %v4594, %v4594
        %4599 = vadd.xlane.f32.xlu0 %v4595
        %v4600 = vpop.xlane.xlu0 %4599
        %4601 = vadd.xlane.f32.xlu0 %v4596
        %v4602 = vpop.xlane.xlu0 %4601
        %4603 = vadd.xlane.f32.xlu0 %v4597
        %v4604 = vpop.xlane.xlu0 %4603
        %4605 = vadd.xlane.f32.xlu0 %v4598
        %v4606 = vpop.xlane.xlu0 %4605
        %v4607 = vmul.f32 %v4600, %v4586
        %v4608 = vmul.f32 %v4602, %v4586
        %v4609 = vmul.f32 %v4604, %v4586
        %v4610 = vmul.f32 %v4606, %v4586
        %v4611 = vadd.f32 %v4607, 1e-12
        %v4612 = vadd.f32 %v4608, 1e-12
        %v4613 = vadd.f32 %v4609, 1e-12
        %v4614 = vadd.f32 %v4610, 1e-12
        %v4615 = vrsqrt.pop %v4611
        %v4616 = vrsqrt.pop %v4612
        %v4617 = vrsqrt.pop %v4613
        %v4618 = vrsqrt.pop %v4614
        %v4619 = vmul.f32 %v4591, %v4615
        %v4620 = vmul.f32 %v4592, %v4616
        %v4621 = vmul.f32 %v4593, %v4617
        %v4622 = vmul.f32 %v4594, %v4618
        %v4624 = vlaneseq
        %v4625 = vshrl.u32 %v4624, 7
        %v4626 = vsub.s32 0, %v4625
        %v4627 = vrot.slane %v4576, %v4626
        %v4629 = vmul.f32 %v4627, %v4619
        %v4630 = vmul.f32 %v4627, %v4620
        %v4631 = vmul.f32 %v4627, %v4621
        %v4632 = vmul.f32 %v4627, %v4622
        %v4634 = vlaneseq
        %v4635 = vshrl.u32 %v4634, 7
        %v4636 = vsub.s32 0, %v4635
        %v4637 = vrot.slane %v4577, %v4636
        %v4639 = vadd.f32 %v4629, %v4637
        %v4640 = vadd.f32 %v4630, %v4637
        %v4641 = vadd.f32 %v4631, %v4637
        %v4642 = vadd.f32 %v4632, %v4637
        %v4643 = vpack.c.bf16 %v4640, %v4639
        %v4644 = vpack.c.bf16 %v4642, %v4641
        %v4645 = vld [vmem:[#allocation13] sm:$0xff]
        %v4646 = vld [vmem:[#allocation13 + $0x8] sm:$0xff]
        %v4647 = vld [vmem:[#allocation13 + $0x10] sm:$0xff]
        %v4648 = vld [vmem:[#allocation13 + $0x18] sm:$0xff]
        %v4649 = vld [vmem:[#allocation13 + $0x20] sm:$0xff]
        %v4650 = vld [vmem:[#allocation13 + $0x28] sm:$0xff]
        %v4651 = vld [vmem:[#allocation13 + $0x30] sm:$0xff]
        %v4652 = vld [vmem:[#allocation13 + $0x38] sm:$0xff]
        %v4653 = vld [vmem:[#allocation13 + $0x40] sm:$0xff]
        %v4654 = vld [vmem:[#allocation13 + $0x48] sm:$0xff]
        %v4655 = vld [vmem:[#allocation13 + $0x50] sm:$0xff]
        %v4656 = vld [vmem:[#allocation13 + $0x58] sm:$0xff]
        %v4657 = vld [vmem:[#allocation13 + $0x60] sm:$0xff]
        %v4658 = vld [vmem:[#allocation13 + $0x68] sm:$0xff]
        %v4659 = vld [vmem:[#allocation13 + $0x70] sm:$0xff]
        %v4660 = vld [vmem:[#allocation13 + $0x78] sm:$0xff]
        %v4661 = vld [vmem:[%s13] sm:$0x3]
        %v4663 = vlaneseq
        %v4664 = vshrl.u32 %v4663, 7
        %v4665 = vsub.s32 0, %v4664
        %v4666 = vrot.slane %v4661, %v4665
        %v4667 = vlaneseq
        %v4668 = vshrl.u32 %v4667, 7
        %v4669 = vsub.s32 1, %v4668
        %v4670 = vrot.slane %v4661, %v4669
        %v4689 = vunpack.c.l.b16 %v4645
        %v4690 = vunpack.c.h.b16 %v4645
        %v4691 = vunpack.c.l.b16 %v4646
        %v4692 = vunpack.c.h.b16 %v4646
        %v4693 = vunpack.c.l.b16 %v4647
        %v4694 = vunpack.c.h.b16 %v4647
        %v4695 = vunpack.c.l.b16 %v4648
        %v4696 = vunpack.c.h.b16 %v4648
        %v4697 = vunpack.c.l.b16 %v4649
        %v4698 = vunpack.c.h.b16 %v4649
        %v4699 = vunpack.c.l.b16 %v4650
        %v4700 = vunpack.c.h.b16 %v4650
        %v4701 = vunpack.c.l.b16 %v4651
        %v4702 = vunpack.c.h.b16 %v4651
        %v4703 = vunpack.c.l.b16 %v4652
        %v4704 = vunpack.c.h.b16 %v4652
        %v4705 = vunpack.c.l.b16 %v4653
        %v4706 = vunpack.c.h.b16 %v4653
        %v4707 = vunpack.c.l.b16 %v4654
        %v4708 = vunpack.c.h.b16 %v4654
        %v4709 = vunpack.c.l.b16 %v4655
        %v4710 = vunpack.c.h.b16 %v4655
        %v4711 = vunpack.c.l.b16 %v4656
        %v4712 = vunpack.c.h.b16 %v4656
        %v4713 = vunpack.c.l.b16 %v4657
        %v4714 = vunpack.c.h.b16 %v4657
        %v4715 = vunpack.c.l.b16 %v4658
        %v4716 = vunpack.c.h.b16 %v4658
        %v4717 = vunpack.c.l.b16 %v4659
        %v4718 = vunpack.c.h.b16 %v4659
        %v4719 = vunpack.c.l.b16 %v4660
        %v4720 = vunpack.c.h.b16 %v4660
        %v4721 = vpack.c.b16 %v4691, %v4689
        %v4722 = vpack.c.b16 %v4692, %v4690
        %v4723 = vpack.c.b16 %v4695, %v4693
        %v4724 = vpack.c.b16 %v4696, %v4694
        %v4725 = vpack.c.b16 %v4699, %v4697
        %v4726 = vpack.c.b16 %v4700, %v4698
        %v4727 = vpack.c.b16 %v4703, %v4701
        %v4728 = vpack.c.b16 %v4704, %v4702
        %v4729 = vpack.c.b16 %v4707, %v4705
        %v4730 = vpack.c.b16 %v4708, %v4706
        %v4731 = vpack.c.b16 %v4711, %v4709
        %v4732 = vpack.c.b16 %v4712, %v4710
        %v4733 = vpack.c.b16 %v4715, %v4713
        %v4734 = vpack.c.b16 %v4716, %v4714
        %v4735 = vpack.c.b16 %v4719, %v4717
        %v4736 = vpack.c.b16 %v4720, %v4718
        %4753 = vmatprep.subr.bf16.mxu0 %v4722
        %4754 = vmatpush1.bf16.msra.mxu0 %v4721
        %4755 = vmatprep.subr.bf16.mxu0 %v4724
        %4756 = vmatpush1.bf16.msra.mxu0 %v4723
        %4757 = vmatprep.subr.bf16.mxu0 %v4726
        %4758 = vmatpush1.bf16.msra.mxu0 %v4725
        %4759 = vmatprep.subr.bf16.mxu0 %v4728
        %4760 = vmatpush1.bf16.msra.mxu0 %v4727
        %4761 = vmatprep.subr.bf16.mxu0 %v4730
        %4762 = vmatpush1.bf16.msra.mxu0 %v4729
        %4763 = vmatprep.subr.bf16.mxu0 %v4732
        %4764 = vmatpush1.bf16.msra.mxu0 %v4731
        %4765 = vmatprep.subr.bf16.mxu0 %v4734
        %4766 = vmatpush1.bf16.msra.mxu0 %v4733
        %4767 = vmatprep.subr.bf16.mxu0 %v4736
        %4768 = vmatpush1.bf16.msra.mxu0 %v4735
        %4769 = vmatprep.subr.bf16.mxu0 0
        %4770 = vmatpush1.bf16.msra.mxu0 0
        %4771 = vmatprep.subr.bf16.mxu0 0
        %4772 = vmatpush1.bf16.msra.mxu0 0
        %4773 = vmatprep.subr.bf16.mxu0 0
        %4774 = vmatpush1.bf16.msra.mxu0 0
        %4775 = vmatprep.subr.bf16.mxu0 0
        %4776 = vmatpush1.bf16.msra.mxu0 0
        %4777 = vmatprep.subr.bf16.mxu0 0
        %4778 = vmatpush1.bf16.msra.mxu0 0
        %4779 = vmatprep.subr.bf16.mxu0 0
        %4780 = vmatpush1.bf16.msra.mxu0 0
        %4781 = vmatprep.subr.bf16.mxu0 0
        %4782 = vmatpush1.bf16.msra.mxu0 0
        %4783 = vmatprep.subr.bf16.mxu0 0
        %4784 = vmatpush1.bf16.msra.mxu0 0
        %4785 = vmatprep.mubr.bf16.mxu0 0
        %4786 = vmatmul.mubr.bf16.gmra.mrb[0].mxu0 %v4643
        %v4787 = vpop.f32.mrb[0].mxu0
        %v4788 = vadd.f32 %v4666, %v4787
        %v4789 = vpop.f32.mrb[0].mxu0
        %v4790 = vadd.f32 %v4670, %v4789
        %v4791 = vpop.f32.mrb[0].mxu0
        %v4792 = vadd.f32 %v4666, %v4791
        %v4793 = vpop.f32.mrb[0].mxu0
        %v4794 = vadd.f32 %v4670, %v4793
        %4795 = vmatprep.mubr.bf16.mxu0 0
        %4796 = vmatmul.mubr.bf16.gmra.mrb[0].mxu0 %v4644
        %v4797 = vpop.f32.mrb[0].mxu0
        %v4798 = vadd.f32 %v4666, %v4797
        %v4799 = vpop.f32.mrb[0].mxu0
        %v4800 = vadd.f32 %v4670, %v4799
        %v4801 = vpop.f32.mrb[0].mxu0
        %v4802 = vadd.f32 %v4666, %v4801
        %v4803 = vpop.f32.mrb[0].mxu0
        %v4804 = vadd.f32 %v4670, %v4803
        %4805 = vdwg.mxu0
        %v4806 = vmul.f32 %v4788, 0.5
        %v4807 = vmul.f32 %v4790, 0.5
        %v4808 = vmul.f32 %v4792, 0.5
        %v4809 = vmul.f32 %v4794, 0.5
        %v4810 = vmul.f32 %v4798, 0.5
        %v4811 = vmul.f32 %v4800, 0.5
        %v4812 = vmul.f32 %v4802, 0.5
        %v4813 = vmul.f32 %v4804, 0.5
        %v4814 = vmul.f32 %v4788, 0.70710677
        %v4815 = vmul.f32 %v4790, 0.70710677
        %v4816 = vmul.f32 %v4792, 0.70710677
        %v4817 = vmul.f32 %v4794, 0.70710677
        %v4818 = vmul.f32 %v4798, 0.70710677
        %v4819 = vmul.f32 %v4800, 0.70710677
        %v4820 = vmul.f32 %v4802, 0.70710677
        %v4821 = vmul.f32 %v4804, 0.70710677
        %vm4822 = vcmp.ge.f32.partialorder %v4814, 0.0
        %vm4823 = vcmp.ge.f32.partialorder %v4815, 0.0
        %vm4824 = vcmp.ge.f32.partialorder %v4816, 0.0
        %vm4825 = vcmp.ge.f32.partialorder %v4817, 0.0
        %vm4826 = vcmp.ge.f32.partialorder %v4818, 0.0
        %vm4827 = vcmp.ge.f32.partialorder %v4819, 0.0
        %vm4828 = vcmp.ge.f32.partialorder %v4820, 0.0
        %vm4829 = vcmp.ge.f32.partialorder %v4821, 0.0
        %v4830 = vsel %vm4822, 1.0, -1.0
        %v4831 = vsel %vm4823, 1.0, -1.0
        %v4832 = vsel %vm4824, 1.0, -1.0
        %v4833 = vsel %vm4825, 1.0, -1.0
        %v4834 = vsel %vm4826, 1.0, -1.0
        %v4835 = vsel %vm4827, 1.0, -1.0
        %v4836 = vsel %vm4828, 1.0, -1.0
        %v4837 = vsel %vm4829, 1.0, -1.0
        %v4838 = vand.u32 2147483647, %v4814
        %v4839 = vand.u32 2147483647, %v4815
        %v4840 = vand.u32 2147483647, %v4816
        %v4841 = vand.u32 2147483647, %v4817
        %v4842 = vand.u32 2147483647, %v4818
        %v4843 = vand.u32 2147483647, %v4819
        %v4844 = vand.u32 2147483647, %v4820
        %v4845 = vand.u32 2147483647, %v4821
        %v4846 = vmul.f32 %v4838, 0.3275911
        %v4847 = vmul.f32 %v4839, 0.3275911
        %v4848 = vmul.f32 %v4840, 0.3275911
        %v4849 = vmul.f32 %v4841, 0.3275911
        %v4850 = vmul.f32 %v4842, 0.3275911
        %v4851 = vmul.f32 %v4843, 0.3275911
        %v4852 = vmul.f32 %v4844, 0.3275911
        %v4853 = vmul.f32 %v4845, 0.3275911
        %v4854 = vadd.f32 %v4846, 1.0
        %v4855 = vadd.f32 %v4847, 1.0
        %v4856 = vadd.f32 %v4848, 1.0
        %v4857 = vadd.f32 %v4849, 1.0
        %v4858 = vadd.f32 %v4850, 1.0
        %v4859 = vadd.f32 %v4851, 1.0
        %v4860 = vadd.f32 %v4852, 1.0
        %v4861 = vadd.f32 %v4853, 1.0
        %v4862 = vrcp.pop %v4854
        %v4863 = vmul.f32 1.0, %v4862
        %v4864 = vrcp.pop %v4855
        %v4865 = vmul.f32 1.0, %v4864
        %v4866 = vrcp.pop %v4856
        %v4867 = vmul.f32 1.0, %v4866
        %v4868 = vrcp.pop %v4857
        %v4869 = vmul.f32 1.0, %v4868
        %v4870 = vrcp.pop %v4858
        %v4871 = vmul.f32 1.0, %v4870
        %v4872 = vrcp.pop %v4859
        %v4873 = vmul.f32 1.0, %v4872
        %v4874 = vrcp.pop %v4860
        %v4875 = vmul.f32 1.0, %v4874
        %v4876 = vrcp.pop %v4861
        %v4877 = vmul.f32 1.0, %v4876
        %v4878 = vmul.f32 %v4863, 1.0614054
        %v4879 = vmul.f32 %v4865, 1.0614054
        %v4880 = vmul.f32 %v4867, 1.0614054
        %v4881 = vmul.f32 %v4869, 1.0614054
        %v4882 = vmul.f32 %v4871, 1.0614054
        %v4883 = vmul.f32 %v4873, 1.0614054
        %v4884 = vmul.f32 %v4875, 1.0614054
        %v4885 = vmul.f32 %v4877, 1.0614054
        %v4886 = vadd.f32 %v4878, -1.4531521
        %v4887 = vadd.f32 %v4879, -1.4531521
        %v4888 = vadd.f32 %v4880, -1.4531521
        %v4889 = vadd.f32 %v4881, -1.4531521
        %v4890 = vadd.f32 %v4882, -1.4531521
        %v4891 = vadd.f32 %v4883, -1.4531521
        %v4892 = vadd.f32 %v4884, -1.4531521
        %v4893 = vadd.f32 %v4885, -1.4531521
        %v4894 = vmul.f32 %v4886, %v4863
        %v4895 = vmul.f32 %v4887, %v4865
        %v4896 = vmul.f32 %v4888, %v4867
        %v4897 = vmul.f32 %v4889, %v4869
        %v4898 = vmul.f32 %v4890, %v4871
        %v4899 = vmul.f32 %v4891, %v4873
        %v4900 = vmul.f32 %v4892, %v4875
        %v4901 = vmul.f32 %v4893, %v4877
        %v4902 = vadd.f32 %v4894, 1.4214138
        %v4903 = vadd.f32 %v4895, 1.4214138
        %v4904 = vadd.f32 %v4896, 1.4214138
        %v4905 = vadd.f32 %v4897, 1.4214138
        %v4906 = vadd.f32 %v4898, 1.4214138
        %v4907 = vadd.f32 %v4899, 1.4214138
        %v4908 = vadd.f32 %v4900, 1.4214138
        %v4909 = vadd.f32 %v4901, 1.4214138
        %v4910 = vmul.f32 %v4902, %v4863
        %v4911 = vmul.f32 %v4903, %v4865
        %v4912 = vmul.f32 %v4904, %v4867
        %v4913 = vmul.f32 %v4905, %v4869
        %v4914 = vmul.f32 %v4906, %v4871
        %v4915 = vmul.f32 %v4907, %v4873
        %v4916 = vmul.f32 %v4908, %v4875
        %v4917 = vmul.f32 %v4909, %v4877
        %v4918 = vadd.f32 %v4910, -0.28449672
        %v4919 = vadd.f32 %v4911, -0.28449672
        %v4920 = vadd.f32 %v4912, -0.28449672
        %v4921 = vadd.f32 %v4913, -0.28449672
        %v4922 = vadd.f32 %v4914, -0.28449672
        %v4923 = vadd.f32 %v4915, -0.28449672
        %v4924 = vadd.f32 %v4916, -0.28449672
        %v4925 = vadd.f32 %v4917, -0.28449672
        %v4926 = vmul.f32 %v4918, %v4863
        %v4927 = vmul.f32 %v4919, %v4865
        %v4928 = vmul.f32 %v4920, %v4867
        %v4929 = vmul.f32 %v4921, %v4869
        %v4930 = vmul.f32 %v4922, %v4871
        %v4931 = vmul.f32 %v4923, %v4873
        %v4932 = vmul.f32 %v4924, %v4875
        %v4933 = vmul.f32 %v4925, %v4877
        %v4934 = vadd.f32 %v4926, 0.2548296
        %v4935 = vadd.f32 %v4927, 0.2548296
        %v4936 = vadd.f32 %v4928, 0.2548296
        %v4937 = vadd.f32 %v4929, 0.2548296
        %v4938 = vadd.f32 %v4930, 0.2548296
        %v4939 = vadd.f32 %v4931, 0.2548296
        %v4940 = vadd.f32 %v4932, 0.2548296
        %v4941 = vadd.f32 %v4933, 0.2548296
        %v4942 = vmul.f32 %v4934, %v4863
        %v4943 = vmul.f32 %v4935, %v4865
        %v4944 = vmul.f32 %v4936, %v4867
        %v4945 = vmul.f32 %v4937, %v4869
        %v4946 = vmul.f32 %v4938, %v4871
        %v4947 = vmul.f32 %v4939, %v4873
        %v4948 = vmul.f32 %v4940, %v4875
        %v4949 = vmul.f32 %v4941, %v4877
        %v4950 = vsub.f32 0.0, %v4838
        %v4951 = vsub.f32 0.0, %v4839
        %v4952 = vsub.f32 0.0, %v4840
        %v4953 = vsub.f32 0.0, %v4841
        %v4954 = vsub.f32 0.0, %v4842
        %v4955 = vsub.f32 0.0, %v4843
        %v4956 = vsub.f32 0.0, %v4844
        %v4957 = vsub.f32 0.0, %v4845
        %v4958 = vmul.f32 %v4950, %v4838
        %v4959 = vmul.f32 %v4951, %v4839
        %v4960 = vmul.f32 %v4952, %v4840
        %v4961 = vmul.f32 %v4953, %v4841
        %v4962 = vmul.f32 %v4954, %v4842
        %v4963 = vmul.f32 %v4955, %v4843
        %v4964 = vmul.f32 %v4956, %v4844
        %v4965 = vmul.f32 %v4957, %v4845
        %v4966 = vmul.f32 %v4958, 1.442695
        %v4967 = vpow.pop %v4966
        %v4968 = vmul.f32 %v4959, 1.442695
        %v4969 = vpow.pop %v4968
        %v4970 = vmul.f32 %v4960, 1.442695
        %v4971 = vpow.pop %v4970
        %v4972 = vmul.f32 %v4961, 1.442695
        %v4973 = vpow.pop %v4972
        %v4974 = vmul.f32 %v4962, 1.442695
        %v4975 = vpow.pop %v4974
        %v4976 = vmul.f32 %v4963, 1.442695
        %v4977 = vpow.pop %v4976
        %v4978 = vmul.f32 %v4964, 1.442695
        %v4979 = vpow.pop %v4978
        %v4980 = vmul.f32 %v4965, 1.442695
        %v4981 = vpow.pop %v4980
        %v4982 = vmul.f32 %v4942, %v4967
        %v4983 = vmul.f32 %v4943, %v4969
        %v4984 = vmul.f32 %v4944, %v4971
        %v4985 = vmul.f32 %v4945, %v4973
        %v4986 = vmul.f32 %v4946, %v4975
        %v4987 = vmul.f32 %v4947, %v4977
        %v4988 = vmul.f32 %v4948, %v4979
        %v4989 = vmul.f32 %v4949, %v4981
        %v4990 = vsub.f32 1.0, %v4982
        %v4991 = vsub.f32 1.0, %v4983
        %v4992 = vsub.f32 1.0, %v4984
        %v4993 = vsub.f32 1.0, %v4985
        %v4994 = vsub.f32 1.0, %v4986
        %v4995 = vsub.f32 1.0, %v4987
        %v4996 = vsub.f32 1.0, %v4988
        %v4997 = vsub.f32 1.0, %v4989
        %v4998 = vmul.f32 %v4830, %v4990
        %v4999 = vmul.f32 %v4831, %v4991
        %v5000 = vmul.f32 %v4832, %v4992
        %v5001 = vmul.f32 %v4833, %v4993
        %v5002 = vmul.f32 %v4834, %v4994
        %v5003 = vmul.f32 %v4835, %v4995
        %v5004 = vmul.f32 %v4836, %v4996
        %v5005 = vmul.f32 %v4837, %v4997
        %v5006 = vadd.f32 %v4998, 1.0
        %v5007 = vadd.f32 %v4999, 1.0
        %v5008 = vadd.f32 %v5000, 1.0
        %v5009 = vadd.f32 %v5001, 1.0
        %v5010 = vadd.f32 %v5002, 1.0
        %v5011 = vadd.f32 %v5003, 1.0
        %v5012 = vadd.f32 %v5004, 1.0
        %v5013 = vadd.f32 %v5005, 1.0
        %v5014 = vmul.f32 %v4806, %v5006
        %v5015 = vmul.f32 %v4807, %v5007
        %v5016 = vmul.f32 %v4808, %v5008
        %v5017 = vmul.f32 %v4809, %v5009
        %v5018 = vmul.f32 %v4810, %v5010
        %v5019 = vmul.f32 %v4811, %v5011
        %v5020 = vmul.f32 %v4812, %v5012
        %v5021 = vmul.f32 %v4813, %v5013
        %v5022 = vpack.c.bf16 %v5016, %v5014
        %v5023 = vpack.c.bf16 %v5017, %v5015
        %v5024 = vpack.c.bf16 %v5020, %v5018
        %v5025 = vpack.c.bf16 %v5021, %v5019
        %v5026 = vld [vmem:[#allocation14] sm:$0xf]
        %v5027 = vld [vmem:[#allocation14 + $0x4] sm:$0xf]
        %v5028 = vld [vmem:[#allocation14 + $0x8] sm:$0xf]
        %v5029 = vld [vmem:[#allocation14 + $0xc] sm:$0xf]
        %v5030 = vld [vmem:[#allocation14 + $0x10] sm:$0xf]
        %v5031 = vld [vmem:[#allocation14 + $0x14] sm:$0xf]
        %v5032 = vld [vmem:[#allocation14 + $0x18] sm:$0xf]
        %v5033 = vld [vmem:[#allocation14 + $0x1c] sm:$0xf]
        %v5034 = vld [vmem:[#allocation14 + $0x20] sm:$0xf]
        %v5035 = vld [vmem:[#allocation14 + $0x24] sm:$0xf]
        %v5036 = vld [vmem:[#allocation14 + $0x28] sm:$0xf]
        %v5037 = vld [vmem:[#allocation14 + $0x2c] sm:$0xf]
        %v5038 = vld [vmem:[#allocation14 + $0x30] sm:$0xf]
        %v5039 = vld [vmem:[#allocation14 + $0x34] sm:$0xf]
        %v5040 = vld [vmem:[#allocation14 + $0x38] sm:$0xf]
        %v5041 = vld [vmem:[#allocation14 + $0x3c] sm:$0xf]
        %v5042 = vld [vmem:[#allocation14 + $0x40] sm:$0xf]
        %v5043 = vld [vmem:[#allocation14 + $0x44] sm:$0xf]
        %v5044 = vld [vmem:[#allocation14 + $0x48] sm:$0xf]
        %v5045 = vld [vmem:[#allocation14 + $0x4c] sm:$0xf]
        %v5046 = vld [vmem:[#allocation14 + $0x50] sm:$0xf]
        %v5047 = vld [vmem:[#allocation14 + $0x54] sm:$0xf]
        %v5048 = vld [vmem:[#allocation14 + $0x58] sm:$0xf]
        %v5049 = vld [vmem:[#allocation14 + $0x5c] sm:$0xf]
        %v5050 = vld [vmem:[#allocation14 + $0x60] sm:$0xf]
        %v5051 = vld [vmem:[#allocation14 + $0x64] sm:$0xf]
        %v5052 = vld [vmem:[#allocation14 + $0x68] sm:$0xf]
        %v5053 = vld [vmem:[#allocation14 + $0x6c] sm:$0xf]
        %v5054 = vld [vmem:[#allocation14 + $0x70] sm:$0xf]
        %v5055 = vld [vmem:[#allocation14 + $0x74] sm:$0xf]
        %v5056 = vld [vmem:[#allocation14 + $0x78] sm:$0xf]
        %v5057 = vld [vmem:[#allocation14 + $0x7c] sm:$0xf]
        %v5058 = vld [vmem:[%s15] sm:$0x1]
        %v5060 = vlaneseq
        %v5061 = vshrl.u32 %v5060, 7
        %v5062 = vsub.s32 0, %v5061
        %v5063 = vrot.slane %v5058, %v5062
        %v5097 = vunpack.c.l.b16 %v5026
        %v5098 = vunpack.c.l.b16 %v5027
        %v5099 = vunpack.c.l.b16 %v5028
        %v5100 = vunpack.c.l.b16 %v5029
        %v5101 = vunpack.c.l.b16 %v5030
        %v5102 = vunpack.c.l.b16 %v5031
        %v5103 = vunpack.c.l.b16 %v5032
        %v5104 = vunpack.c.l.b16 %v5033
        %v5105 = vunpack.c.l.b16 %v5034
        %v5106 = vunpack.c.l.b16 %v5035
        %v5107 = vunpack.c.l.b16 %v5036
        %v5108 = vunpack.c.l.b16 %v5037
        %v5109 = vunpack.c.l.b16 %v5038
        %v5110 = vunpack.c.l.b16 %v5039
        %v5111 = vunpack.c.l.b16 %v5040
        %v5112 = vunpack.c.l.b16 %v5041
        %v5113 = vunpack.c.l.b16 %v5042
        %v5114 = vunpack.c.l.b16 %v5043
        %v5115 = vunpack.c.l.b16 %v5044
        %v5116 = vunpack.c.l.b16 %v5045
        %v5117 = vunpack.c.l.b16 %v5046
        %v5118 = vunpack.c.l.b16 %v5047
        %v5119 = vunpack.c.l.b16 %v5048
        %v5120 = vunpack.c.l.b16 %v5049
        %v5121 = vunpack.c.l.b16 %v5050
        %v5122 = vunpack.c.l.b16 %v5051
        %v5123 = vunpack.c.l.b16 %v5052
        %v5124 = vunpack.c.l.b16 %v5053
        %v5125 = vunpack.c.l.b16 %v5054
        %v5126 = vunpack.c.l.b16 %v5055
        %v5127 = vunpack.c.l.b16 %v5056
        %v5128 = vunpack.c.l.b16 %v5057
        %v5129 = vpack.c.b16 %v5098, %v5097
        %v5130 = vpack.c.b16 %v5100, %v5099
        %v5131 = vpack.c.b16 %v5102, %v5101
        %v5132 = vpack.c.b16 %v5104, %v5103
        %v5133 = vpack.c.b16 %v5106, %v5105
        %v5134 = vpack.c.b16 %v5108, %v5107
        %v5135 = vpack.c.b16 %v5110, %v5109
        %v5136 = vpack.c.b16 %v5112, %v5111
        %v5137 = vpack.c.b16 %v5114, %v5113
        %v5138 = vpack.c.b16 %v5116, %v5115
        %v5139 = vpack.c.b16 %v5118, %v5117
        %v5140 = vpack.c.b16 %v5120, %v5119
        %v5141 = vpack.c.b16 %v5122, %v5121
        %v5142 = vpack.c.b16 %v5124, %v5123
        %v5143 = vpack.c.b16 %v5126, %v5125
        %v5144 = vpack.c.b16 %v5128, %v5127
        %5161 = vmatprep.subr.bf16.mxu0 0
        %5162 = vmatpush1.bf16.msra.mxu0 %v5129
        %5163 = vmatprep.subr.bf16.mxu0 0
        %5164 = vmatpush1.bf16.msra.mxu0 %v5130
        %5165 = vmatprep.subr.bf16.mxu0 0
        %5166 = vmatpush1.bf16.msra.mxu0 %v5131
        %5167 = vmatprep.subr.bf16.mxu0 0
        %5168 = vmatpush1.bf16.msra.mxu0 %v5132
        %5169 = vmatprep.subr.bf16.mxu0 0
        %5170 = vmatpush1.bf16.msra.mxu0 %v5133
        %5171 = vmatprep.subr.bf16.mxu0 0
        %5172 = vmatpush1.bf16.msra.mxu0 %v5134
        %5173 = vmatprep.subr.bf16.mxu0 0
        %5174 = vmatpush1.bf16.msra.mxu0 %v5135
        %5175 = vmatprep.subr.bf16.mxu0 0
        %5176 = vmatpush1.bf16.msra.mxu0 %v5136
        %5177 = vmatprep.subr.bf16.mxu0 0
        %5178 = vmatpush1.bf16.msra.mxu0 %v5137
        %5179 = vmatprep.subr.bf16.mxu0 0
        %5180 = vmatpush1.bf16.msra.mxu0 %v5138
        %5181 = vmatprep.subr.bf16.mxu0 0
        %5182 = vmatpush1.bf16.msra.mxu0 %v5139
        %5183 = vmatprep.subr.bf16.mxu0 0
        %5184 = vmatpush1.bf16.msra.mxu0 %v5140
        %5185 = vmatprep.subr.bf16.mxu0 0
        %5186 = vmatpush1.bf16.msra.mxu0 %v5141
        %5187 = vmatprep.subr.bf16.mxu0 0
        %5188 = vmatpush1.bf16.msra.mxu0 %v5142
        %5189 = vmatprep.subr.bf16.mxu0 0
        %5190 = vmatpush1.bf16.msra.mxu0 %v5143
        %5191 = vmatprep.subr.bf16.mxu0 0
        %5192 = vmatpush1.bf16.msra.mxu0 %v5144
        %5193 = vmatprep.mubr.bf16.mxu0 %v5023
        %5194 = vmatmul.mubr.bf16.gmra.mrb[0].mxu0 %v5022
        %v5195 = vpop.f32.mrb[0].mxu0
        %v5196 = vadd.f32 %v5063, %v5195
        %v5197 = vpop.f32.mrb[0].mxu0
        %v5198 = vpop.f32.mrb[0].mxu0
        %v5199 = vadd.f32 %v5063, %v5198
        %v5200 = vpop.f32.mrb[0].mxu0
        %5201 = vmatprep.mubr.bf16.mxu0 %v5025
        %5202 = vmatmul.mubr.bf16.gmra.mrb[0].mxu0 %v5024
        %v5203 = vpop.f32.mrb[0].mxu0
        %v5204 = vadd.f32 %v5063, %v5203
        %v5205 = vpop.f32.mrb[0].mxu0
        %v5206 = vpop.f32.mrb[0].mxu0
        %v5207 = vadd.f32 %v5063, %v5206
        %v5208 = vpop.f32.mrb[0].mxu0
        %5209 = vdwg.mxu0
        %v5210 = vadd.f32 %v5196, %v4639
        %v5211 = vadd.f32 %v5199, %v4640
        %v5212 = vadd.f32 %v5204, %v4641
        %v5213 = vadd.f32 %v5207, %v4642
        %v5214 = vld [vmem:[%s16] sm:$0x1]
        %v5215 = vld [vmem:[%s17] sm:$0x1]
        %5216 = vadd.xlane.f32.xlu0 %v5210
        %v5217 = vpop.xlane.xlu0 %5216
        %5218 = vadd.xlane.f32.xlu0 %v5211
        %v5219 = vpop.xlane.xlu0 %5218
        %5220 = vadd.xlane.f32.xlu0 %v5212
        %v5221 = vpop.xlane.xlu0 %5220
        %5222 = vadd.xlane.f32.xlu0 %v5213
        %v5223 = vpop.xlane.xlu0 %5222
        %v5224 = vmul.f32 %v5217, %v4586
        %v5225 = vmul.f32 %v5219, %v4586
        %v5226 = vmul.f32 %v5221, %v4586
        %v5227 = vmul.f32 %v5223, %v4586
        %v5228 = vsub.f32 %v5210, %v5224
        %v5229 = vsub.f32 %v5211, %v5225
        %v5230 = vsub.f32 %v5212, %v5226
        %v5231 = vsub.f32 %v5213, %v5227
        %v5232 = vmul.f32 %v5228, %v5228
        %v5233 = vmul.f32 %v5229, %v5229
        %v5234 = vmul.f32 %v5230, %v5230
        %v5235 = vmul.f32 %v5231, %v5231
        %5236 = vadd.xlane.f32.xlu0 %v5232
        %v5237 = vpop.xlane.xlu0 %5236
        %5238 = vadd.xlane.f32.xlu0 %v5233
        %v5239 = vpop.xlane.xlu0 %5238
        %5240 = vadd.xlane.f32.xlu0 %v5234
        %v5241 = vpop.xlane.xlu0 %5240
        %5242 = vadd.xlane.f32.xlu0 %v5235
        %v5243 = vpop.xlane.xlu0 %5242
        %v5244 = vmul.f32 %v5237, %v4586
        %v5245 = vmul.f32 %v5239, %v4586
        %v5246 = vmul.f32 %v5241, %v4586
        %v5247 = vmul.f32 %v5243, %v4586
        %v5248 = vadd.f32 %v5244, 1e-12
        %v5249 = vadd.f32 %v5245, 1e-12
        %v5250 = vadd.f32 %v5246, 1e-12
        %v5251 = vadd.f32 %v5247, 1e-12
        %v5252 = vrsqrt.pop %v5248
        %v5253 = vrsqrt.pop %v5249
        %v5254 = vrsqrt.pop %v5250
        %v5255 = vrsqrt.pop %v5251
        %v5256 = vmul.f32 %v5228, %v5252
        %v5257 = vmul.f32 %v5229, %v5253
        %v5258 = vmul.f32 %v5230, %v5254
        %v5259 = vmul.f32 %v5231, %v5255
        %v5261 = vlaneseq
        %v5262 = vshrl.u32 %v5261, 7
        %v5263 = vsub.s32 0, %v5262
        %v5264 = vrot.slane %v5214, %v5263
        %v5266 = vmul.f32 %v5264, %v5256
        %v5267 = vmul.f32 %v5264, %v5257
        %v5268 = vmul.f32 %v5264, %v5258
        %v5269 = vmul.f32 %v5264, %v5259
        %v5271 = vlaneseq
        %v5272 = vshrl.u32 %v5271, 7
        %v5273 = vsub.s32 0, %v5272
        %v5274 = vrot.slane %v5215, %v5273
        %v5276 = vadd.f32 %v5266, %v5274
        %v5277 = vadd.f32 %v5267, %v5274
        %v5278 = vadd.f32 %v5268, %v5274
        %v5279 = vadd.f32 %v5269, %v5274
        %5280 = vst [vmem:[%s721] sm:$0xff] %v5276
        %5281 = vst [vmem:[%s721 + $0x8] sm:$0xff] %v5277
        %5282 = vst [vmem:[%s721 + $0x10] sm:$0xff] %v5278
        %5283 = vst [vmem:[%s721 + $0x18] sm:$0xff] %v5279
        %s5284 = sand.u32 %s437, 1
        %s5285 = scalar_lea.sflag [#allocation4], %s5284
        %s5286 = sand.u32 %s437, 1
        %s5287 = smul.addr %s5286, 32
        %s5288 = scalar_lea.vmem [#allocation16], %s5287
        // Predicated region
        $region125: #{tpu_custom_call.1} parent=91 // pred_check
          %p5289 = pneg %p447
        $region126: #{tpu_custom_call.1} parent=91 // pred_check_branch
          %5291 = sbr.rel (%p5289) target = $region128
        $region127: #{tpu_custom_call.1} parent=91 // pred_region
          %s5292 = smul.u32 2, %s41
          %s5294 = ssub.s32 512, 512
          %5295 = vsyncadd %s5285, %s5294
          %s5296 = smul.addr %s5292, 2
          %s5297 = smul.addr %s5296, 128
          %s5298 = scalar_lea.hbm %s18, %s5297
          %s5299 = sshll.u32 %s5288, 4
          %s5300 = int_to_ptr.vmem [resolvable:$true] %s5299
          %5305 = dma.vmem_to_hbm [thread:$0]  %s5300, 512, %s5298, %s5285, 128, 128, 8
        $region128: #{tpu_custom_call.1} parent=91 // pred_fallthru
          _
      $region92: #{tpu_custom_call.1} parent=5 // pred_fallthru
        _
      %p5306 = scmp.le.s32.totalorder 2, %s36
      // Predicated region
      $region129: #{tpu_custom_call.1} parent=5 // pred_check
        %p5307 = pneg %p5306
      $region130: #{tpu_custom_call.1} parent=5 // pred_check_branch
        %5309 = sbr.rel (%p5307) target = $region132
      $region131: #{tpu_custom_call.1} parent=5 // pred_region
        %s5310 = ssub.s32 %s36, 2
        // Predicated region
        $region133: #{tpu_custom_call.1} parent=131 // pred_check
          %p5311 = pneg %p453
        $region134: #{tpu_custom_call.1} parent=131 // pred_check_branch
          %5313 = sbr.rel (%p5311) target = $region136
        $region135: #{tpu_custom_call.1} parent=131 // pred_region
          %s5314 = sand.u32 %s438, 1
          %s5315 = scalar_lea.sflag [#allocation4], %s5314
          %s5316 = sand.u32 %s438, 1
          %s5317 = smul.addr %s5316, 32
          %s5318 = scalar_lea.vmem [#allocation16], %s5317
          %5319 = dma.done %s5315, 512
        $region136: #{tpu_custom_call.1} parent=131 // pred_fallthru
          _
      $region132: #{tpu_custom_call.1} parent=5 // pred_fallthru
        _
    $region6: #{tpu_custom_call.1} parent=1 // loop_footer
      %s40 = sadd.s32 1, %s36
    $region7: #{tpu_custom_call.1} parent=1 // loop_footer_branch
      %35 = sbr.rel target = $region3
    $region8: #{tpu_custom_call.1} parent=1 // loop_exit
      _
    %5320 = vsyncpa [#allocation3], 1
    %s5321 = scalar_lea.sflag [#allocation3], 1
    %5322 = vsyncpa %s5321, 1
    %5323 = vsyncpa [#allocation6], 1
    %s5324 = scalar_lea.sflag [#allocation6], 1
    %5325 = vsyncpa %s5324, 1
    %5326 = vsyncpa [#allocation9], 1
    %5327 = vsyncpa [#allocation12], 1
    %5328 = vsyncpa [#allocation15], 1
    %5329 = vsyncpa [#allocation4], 1
    %s5330 = scalar_lea.sflag [#allocation4], 1
    %5331 = vsyncpa %s5330, 1

// kernel: tpu_custom_call.1
$region0: #{tpu_custom_call.1}
  #allocation0 [shape = 'u32[]', space=smem, size = 0x4, offset = 0x4, fixed_abs, tag = 'smem constant byte address 0x4 - core index']
  #allocation1 [shape = 'u32[144,128]{1,0:T(1,128)}', space=vmem, size = 0x12000, scoped, tag = 'internal scratch']
  %s0 = inlined_call_operand.hbm [shape: f32[4,16,128], index: 0, kind: input, shape index: {}]
  %s1 = inlined_call_operand.hbm [shape: f32[4,1,16], index: 1, kind: input, shape index: {}]
  %s2 = inlined_call_operand.hbm [shape: bf16[128,128], index: 2, kind: input, shape index: {}]
  %s3 = inlined_call_operand.vmem [shape: f32[1,128], index: 3, kind: input, shape index: {}]
  %s4 = inlined_call_operand.hbm [shape: bf16[128,128], index: 4, kind: input, shape index: {}]
  %s5 = inlined_call_operand.vmem [shape: f32[1,128], index: 5, kind: input, shape index: {}]
  %s6 = inlined_call_operand.hbm [shape: bf16[128,128], index: 6, kind: input, shape index: {}]
  %s7 = inlined_call_operand.vmem [shape: f32[1,128], index: 7, kind: input, shape index: {}]
  %s8 = inlined_call_operand.hbm [shape: bf16[128,128], index: 8, kind: input, shape index: {}]
  %s9 = inlined_call_operand.vmem [shape: f32[1,128], index: 9, kind: input, shape index: {}]
  %s10 = inlined_call_operand.vmem [shape: f32[1,128], index: 10, kind: input, shape index: {}]
  %s11 = inlined_call_operand.vmem [shape: f32[1,128], index: 11, kind: input, shape index: {}]
  %s12 = inlined_call_operand.hbm [shape: bf16[128,256], index: 12, kind: input, shape index: {}]
  %s13 = inlined_call_operand.vmem [shape: f32[1,256], index: 13, kind: input, shape index: {}]
  %s14 = inlined_call_operand.hbm [shape: bf16[256,128], index: 14, kind: input, shape index: {}]
  %s15 = inlined_call_operand.vmem [shape: f32[1,128], index: 15, kind: input, shape index: {}]
  %s16 = inlined_call_operand.vmem [shape: f32[1,128], index: 16, kind: input, shape index: {}]
  %s17 = inlined_call_operand.vmem [shape: f32[1,128], index: 17, kind: input, shape index: {}]
  %s18 = inlined_call_operand.hbm [shape: f32[4,16,128], index: 18, kind: output, shape index: {}]
  %s19 = sld [smem:[#allocation0]]
  $region137: #{tpu_custom_call.1} parent=0
    _
  %s21 = ssub.s32 1, %s19
  %s22 = scalar_select 0, %s21, %s19
  $region1: #{tpu_custom_call.1} parent=0
    #allocation2 [shape = 'u8[32768]{0}', space=vmem, size = 0x8000, scoped, tag = 'input window, operand 0']
    #allocation3 [shape = 's32[2]{0}', space=sflag, size = 0x8, scoped, tag = 'scoped memory for tpu_custom_call.1']
    #allocation4 [shape = 's32[2]{0}', space=sflag, size = 0x8, scoped, tag = 'scoped memory for tpu_custom_call.1']
    #allocation5 [shape = 'u8[2048]{0}', space=vmem, size = 0x800, scoped, tag = 'input window, operand 1']
    #allocation6 [shape = 's32[2]{0}', space=sflag, size = 0x8, scoped, tag = 'scoped memory for tpu_custom_call.1']
    #allocation7 [shape = 'u8[32768]{0}', space=vmem, size = 0x8000, scoped, tag = 'input window, operand 2, single buffered']
    #allocation8 [shape = 'u8[32768]{0}', space=vmem, size = 0x8000, scoped, tag = 'input window, operand 4, single buffered']
    #allocation9 [shape = 's32[1]{0}', space=sflag, size = 0x4, scoped, tag = 'scoped memory for tpu_custom_call.1']
    #allocation10 [shape = 'u8[32768]{0}', space=vmem, size = 0x8000, scoped, tag = 'input window, operand 6, single buffered']
    #allocation11 [shape = 'u8[32768]{0}', space=vmem, size = 0x8000, scoped, tag = 'input window, operand 8, single buffered']
    #allocation12 [shape = 's32[1]{0}', space=sflag, size = 0x4, scoped, tag = 'scoped memory for tpu_custom_call.1']
    #allocation13 [shape = 'u8[65536]{0}', space=vmem, size = 0x10000, scoped, tag = 'input window, operand 12, single buffered']
    #allocation14 [shape = 'u8[65536]{0}', space=vmem, size = 0x10000, scoped, tag = 'input window, operand 14, single buffered']
    #allocation15 [shape = 's32[1]{0}', space=sflag, size = 0x4, scoped, tag = 'scoped memory for tpu_custom_call.1']
    #allocation16 [shape = 'u8[32768]{0}', space=vmem, size = 0x8000, scoped, tag = 'output window, operand 0']
    %23 = vsyncpa [#allocation3], 0
    %s24 = scalar_lea.sflag [#allocation3], 1
    %25 = vsyncpa %s24, 0
    %26 = vsyncpa [#allocation6], 0
    %s27 = scalar_lea.sflag [#allocation6], 1
    %28 = vsyncpa %s27, 0
    %29 = vsyncpa [#allocation9], 0
    %30 = vsyncpa [#allocation12], 0
    %31 = vsyncpa [#allocation15], 0
    %32 = vsyncpa [#allocation4], 0
    %s33 = scalar_lea.sflag [#allocation4], 1
    %34 = vsyncpa %s33, 0
    loop: start=0, step=1, limit=4
    $region2: #{tpu_custom_call.1} parent=1 // loop_pre_header
      _
    $region3: #{tpu_custom_call.1} parent=1 // loop_header
      %s36 = sphi 0, %s40
      %p37 = scmp.ge.s32.totalorder %s36, 4
      %s46 = sphi 0, %s48
      %s49 = sphi 0, %s46
      %s50 = sphi 0, %s49
      %s66 = sphi 0, %s50
      %s72 = sphi 0, %s74
      %s75 = sphi 0, %s72
      %s76 = sphi 0, %s75
      %s92 = sphi 0, %s76
      %s96 = sphi 0, %s96
      %s98 = sphi 0, %s96
      %s99 = sphi 0, %s98
      %s113 = sphi 0, %s99
      %s117 = sphi 0, %s117
      %s119 = sphi 0, %s117
      %s120 = sphi 0, %s119
      %s134 = sphi 0, %s120
      %s138 = sphi 0, %s138
      %s140 = sphi 0, %s138
      %s141 = sphi 0, %s140
      %s155 = sphi 0, %s141
      %s159 = sphi 0, %s159
      %s161 = sphi 0, %s159
      %s162 = sphi 0, %s161
      %s176 = sphi 0, %s162
      %s180 = sphi 0, %s180
      %s182 = sphi 0, %s180
      %s183 = sphi 0, %s182
      %s197 = sphi 0, %s183
      %s201 = sphi 0, %s201
      %s203 = sphi 0, %s201
      %s204 = sphi 0, %s203
      %s218 = sphi 0, %s204
      %s222 = sphi 0, %s222
      %s224 = sphi 0, %s222
      %s225 = sphi 0, %s224
      %s239 = sphi 0, %s225
      %s243 = sphi 0, %s243
      %s245 = sphi 0, %s243
      %s246 = sphi 0, %s245
      %s260 = sphi 0, %s246
      %s264 = sphi 0, %s264
      %s266 = sphi 0, %s264
      %s267 = sphi 0, %s266
      %s281 = sphi 0, %s267
      %s285 = sphi 0, %s285
      %s287 = sphi 0, %s285
      %s288 = sphi 0, %s287
      %s302 = sphi 0, %s288
      %s306 = sphi 0, %s306
      %s308 = sphi 0, %s306
      %s309 = sphi 0, %s308
      %s323 = sphi 0, %s309
      %s327 = sphi 0, %s327
      %s329 = sphi 0, %s327
      %s330 = sphi 0, %s329
      %s344 = sphi 0, %s330
      %s348 = sphi 0, %s348
      %s350 = sphi 0, %s348
      %s351 = sphi 0, %s350
      %s365 = sphi 0, %s351
      %s369 = sphi 0, %s369
      %s371 = sphi 0, %s369
      %s372 = sphi 0, %s371
      %s386 = sphi 0, %s372
      %s390 = sphi 0, %s390
      %s392 = sphi 0, %s390
      %s393 = sphi 0, %s392
      %s407 = sphi 0, %s393
      %s411 = sphi 0, %s411
      %s413 = sphi 0, %s411
      %s414 = sphi 0, %s413
      %s428 = sphi 0, %s414
      %s434 = sphi 0, %s436
      %s437 = sphi 0, %s434
      %s438 = sphi 0, %s437
      %s454 = sphi 0, %s438
    $region4: #{tpu_custom_call.1} parent=1 // loop_header_branch
      %39 = sbr.rel (%p37) target = $region8
    $region5: #{tpu_custom_call.1} parent=1 // loop_body
      %s41 = ssub.s32 %s36, 1
      %s42 = ssub.s32 %s36, 2
      %s43 = sadd.s32 %s36, 1
      %s44 = ssub.s32 %s36, %s43
      %p45 = scmp.eq.s32.totalorder %s44, 0
      %s47 = sadd.s32 %s46, 1
      %s48 = scalar_select %p45, %s46, %s47
      %p51 = pneg %p45
      %p52 = scmp.eq.s32.totalorder %s36, 1
      %p53 = por %p51, %p52
      %p54 = scmp.ne.s32.totalorder %s46, %s49
      %p55 = scmp.eq.s32.totalorder %s36, 0
      %p56 = por %p54, %p55
      %p57 = scmp.ne.s32.totalorder %s46, %s49
      %p58 = scmp.eq.s32.totalorder %s41, 1
      %p59 = por %p57, %p58
      %p60 = scmp.ne.s32.totalorder %s49, %s50
      %p61 = scmp.eq.s32.totalorder %s41, 0
      %p62 = por %p60, %p61
      %p63 = scmp.ne.s32.totalorder %s49, %s50
      %p64 = scmp.eq.s32.totalorder %s42, 1
      %p65 = por %p63, %p64
      %p67 = scmp.ne.s32.totalorder %s50, %s66
      %p68 = scmp.eq.s32.totalorder %s42, 0
      %p69 = por %p67, %p68
      %s70 = ssub.s32 %s36, %s43
      %p71 = scmp.eq.s32.totalorder %s70, 0
      %s73 = sadd.s32 %s72, 1
      %s74 = scalar_select %p71, %s72, %s73
      %p77 = pneg %p71
      %p78 = scmp.eq.s32.totalorder %s36, 1
      %p79 = por %p77, %p78
      %p80 = scmp.ne.s32.totalorder %s72, %s75
      %p81 = scmp.eq.s32.totalorder %s36, 0
      %p82 = por %p80, %p81
      %p83 = scmp.ne.s32.totalorder %s72, %s75
      %p84 = scmp.eq.s32.totalorder %s41, 1
      %p85 = por %p83, %p84
      %p86 = scmp.ne.s32.totalorder %s75, %s76
      %p87 = scmp.eq.s32.totalorder %s41, 0
      %p88 = por %p86, %p87
      %p89 = scmp.ne.s32.totalorder %s75, %s76
      %p90 = scmp.eq.s32.totalorder %s42, 1
      %p91 = por %p89, %p90
      %p93 = scmp.ne.s32.totalorder %s76, %s92
      %p94 = scmp.eq.s32.totalorder %s42, 0
      %p95 = por %p93, %p94
      %s97 = sadd.s32 %s96, 1
      %p100 = scmp.eq.s32.totalorder %s36, 1
      %p101 = scmp.ne.s32.totalorder %s96, %s98
      %p102 = scmp.eq.s32.totalorder %s36, 0
      %p103 = por %p101, %p102
      %p104 = scmp.ne.s32.totalorder %s96, %s98
      %p105 = scmp.eq.s32.totalorder %s41, 1
      %p106 = por %p104, %p105
      %p107 = scmp.ne.s32.totalorder %s98, %s99
      %p108 = scmp.eq.s32.totalorder %s41, 0
      %p109 = por %p107, %p108
      %p110 = scmp.ne.s32.totalorder %s98, %s99
      %p111 = scmp.eq.s32.totalorder %s42, 1
      %p112 = por %p110, %p111
      %p114 = scmp.ne.s32.totalorder %s99, %s113
      %p115 = scmp.eq.s32.totalorder %s42, 0
      %p116 = por %p114, %p115
      %s118 = sadd.s32 %s117, 1
      %p121 = scmp.eq.s32.totalorder %s36, 1
      %p122 = scmp.ne.s32.totalorder %s117, %s119
      %p123 = scmp.eq.s32.totalorder %s36, 0
      %p124 = por %p122, %p123
      %p125 = scmp.ne.s32.totalorder %s117, %s119
      %p126 = scmp.eq.s32.totalorder %s41, 1
      %p127 = por %p125, %p126
      %p128 = scmp.ne.s32.totalorder %s119, %s120
      %p129 = scmp.eq.s32.totalorder %s41, 0
      %p130 = por %p128, %p129
      %p131 = scmp.ne.s32.totalorder %s119, %s120
      %p132 = scmp.eq.s32.totalorder %s42, 1
      %p133 = por %p131, %p132
      %p135 = scmp.ne.s32.totalorder %s120, %s134
      %p136 = scmp.eq.s32.totalorder %s42, 0
      %p137 = por %p135, %p136
      %s139 = sadd.s32 %s138, 1
      %p142 = scmp.eq.s32.totalorder %s36, 1
      %p143 = scmp.ne.s32.totalorder %s138, %s140
      %p144 = scmp.eq.s32.totalorder %s36, 0
      %p145 = por %p143, %p144
      %p146 = scmp.ne.s32.totalorder %s138, %s140
      %p147 = scmp.eq.s32.totalorder %s41, 1
      %p148 = por %p146, %p147
      %p149 = scmp.ne.s32.totalorder %s140, %s141
      %p150 = scmp.eq.s32.totalorder %s41, 0
      %p151 = por %p149, %p150
      %p152 = scmp.ne.s32.totalorder %s140, %s141
      %p153 = scmp.eq.s32.totalorder %s42, 1
      %p154 = por %p152, %p153
      %p156 = scmp.ne.s32.totalorder %s141, %s155
      %p157 = scmp.eq.s32.totalorder %s42, 0
      %p158 = por %p156, %p157
      %s160 = sadd.s32 %s159, 1
      %p163 = scmp.eq.s32.totalorder %s36, 1
      %p164 = scmp.ne.s32.totalorder %s159, %s161
      %p165 = scmp.eq.s32.totalorder %s36, 0
      %p166 = por %p164, %p165
      %p167 = scmp.ne.s32.totalorder %s159, %s161
      %p168 = scmp.eq.s32.totalorder %s41, 1
      %p169 = por %p167, %p168
      %p170 = scmp.ne.s32.totalorder %s161, %s162
      %p171 = scmp.eq.s32.totalorder %s41, 0
      %p172 = por %p170, %p171
      %p173 = scmp.ne.s32.totalorder %s161, %s162
      %p174 = scmp.eq.s32.totalorder %s42, 1
      %p175 = por %p173, %p174
      %p177 = scmp.ne.s32.totalorder %s162, %s176
      %p178 = scmp.eq.s32.totalorder %s42, 0
      %p179 = por %p177, %p178
      %s181 = sadd.s32 %s180, 1
      %p184 = scmp.eq.s32.totalorder %s36, 1
      %p185 = scmp.ne.s32.totalorder %s180, %s182
      %p186 = scmp.eq.s32.totalorder %s36, 0
      %p187 = por %p185, %p186
      %p188 = scmp.ne.s32.totalorder %s180, %s182
      %p189 = scmp.eq.s32.totalorder %s41, 1
      %p190 = por %p188, %p189
      %p191 = scmp.ne.s32.totalorder %s182, %s183
      %p192 = scmp.eq.s32.totalorder %s41, 0
      %p193 = por %p191, %p192
      %p194 = scmp.ne.s32.totalorder %s182, %s183
      %p195 = scmp.eq.s32.totalorder %s42, 1
      %p196 = por %p194, %p195
      %p198 = scmp.ne.s32.totalorder %s183, %s197
      %p199 = scmp.eq.s32.totalorder %s42, 0
      %p200 = por %p198, %p199
      %s202 = sadd.s32 %s201, 1
      %p205 = scmp.eq.s32.totalorder %s36, 1
      %p206 = scmp.ne.s32.totalorder %s201, %s203
      %p207 = scmp.eq.s32.totalorder %s36, 0
      %p208 = por %p206, %p207
      %p209 = scmp.ne.s32.totalorder %s201, %s203
      %p210 = scmp.eq.s32.totalorder %s41, 1
      %p211 = por %p209, %p210
      %p212 = scmp.ne.s32.totalorder %s203, %s204
      %p213 = scmp.eq.s32.totalorder %s41, 0
      %p214 = por %p212, %p213
      %p215 = scmp.ne.s32.totalorder %s203, %s204
      %p216 = scmp.eq.s32.totalorder %s42, 1
      %p217 = por %p215, %p216
      %p219 = scmp.ne.s32.totalorder %s204, %s218
      %p220 = scmp.eq.s32.totalorder %s42, 0
      %p221 = por %p219, %p220
      %s223 = sadd.s32 %s222, 1
      %p226 = scmp.eq.s32.totalorder %s36, 1
      %p227 = scmp.ne.s32.totalorder %s222, %s224
      %p228 = scmp.eq.s32.totalorder %s36, 0
      %p229 = por %p227, %p228
      %p230 = scmp.ne.s32.totalorder %s222, %s224
      %p231 = scmp.eq.s32.totalorder %s41, 1
      %p232 = por %p230, %p231
      %p233 = scmp.ne.s32.totalorder %s224, %s225
      %p234 = scmp.eq.s32.totalorder %s41, 0
      %p235 = por %p233, %p234
      %p236 = scmp.ne.s32.totalorder %s224, %s225
      %p237 = scmp.eq.s32.totalorder %s42, 1
      %p238 = por %p236, %p237
      %p240 = scmp.ne.s32.totalorder %s225, %s239
      %p241 = scmp.eq.s32.totalorder %s42, 0
      %p242 = por %p240, %p241
      %s244 = sadd.s32 %s243, 1
      %p247 = scmp.eq.s32.totalorder %s36, 1
      %p248 = scmp.ne.s32.totalorder %s243, %s245
      %p249 = scmp.eq.s32.totalorder %s36, 0
      %p250 = por %p248, %p249
      %p251 = scmp.ne.s32.totalorder %s243, %s245
      %p252 = scmp.eq.s32.totalorder %s41, 1
      %p253 = por %p251, %p252
      %p254 = scmp.ne.s32.totalorder %s245, %s246
      %p255 = scmp.eq.s32.totalorder %s41, 0
      %p256 = por %p254, %p255
      %p257 = scmp.ne.s32.totalorder %s245, %s246
      %p258 = scmp.eq.s32.totalorder %s42, 1
      %p259 = por %p257, %p258
      %p261 = scmp.ne.s32.totalorder %s246, %s260
      %p262 = scmp.eq.s32.totalorder %s42, 0
      %p263 = por %p261, %p262
      %s265 = sadd.s32 %s264, 1
      %p268 = scmp.eq.s32.totalorder %s36, 1
      %p269 = scmp.ne.s32.totalorder %s264, %s266
      %p270 = scmp.eq.s32.totalorder %s36, 0
      %p271 = por %p269, %p270
      %p272 = scmp.ne.s32.totalorder %s264, %s266
      %p273 = scmp.eq.s32.totalorder %s41, 1
      %p274 = por %p272, %p273
      %p275 = scmp.ne.s32.totalorder %s266, %s267
      %p276 = scmp.eq.s32.totalorder %s41, 0
      %p277 = por %p275, %p276
      %p278 = scmp.ne.s32.totalorder %s266, %s267
      %p279 = scmp.eq.s32.totalorder %s42, 1
      %p280 = por %p278, %p279
      %p282 = scmp.ne.s32.totalorder %s267, %s281
      %p283 = scmp.eq.s32.totalorder %s42, 0
      %p284 = por %p282, %p283
      %s286 = sadd.s32 %s285, 1
      %p289 = scmp.eq.s32.totalorder %s36, 1
      %p290 = scmp.ne.s32.totalorder %s285, %s287
      %p291 = scmp.eq.s32.totalorder %s36, 0
      %p292 = por %p290, %p291
      %p293 = scmp.ne.s32.totalorder %s285, %s287
      %p294 = scmp.eq.s32.totalorder %s41, 1
      %p295 = por %p293, %p294
      %p296 = scmp.ne.s32.totalorder %s287, %s288
      %p297 = scmp.eq.s32.totalorder %s41, 0
      %p298 = por %p296, %p297
      %p299 = scmp.ne.s32.totalorder %s287, %s288
      %p300 = scmp.eq.s32.totalorder %s42, 1
      %p301 = por %p299, %p300
      %p303 = scmp.ne.s32.totalorder %s288, %s302
      %p304 = scmp.eq.s32.totalorder %s42, 0
      %p305 = por %p303, %p304
      %s307 = sadd.s32 %s306, 1
      %p310 = scmp.eq.s32.totalorder %s36, 1
      %p311 = scmp.ne.s32.totalorder %s306, %s308
      %p312 = scmp.eq.s32.totalorder %s36, 0
      %p313 = por %p311, %p312
      %p314 = scmp.ne.s32.totalorder %s306, %s308
      %p315 = scmp.eq.s32.totalorder %s41, 1
      %p316 = por %p314, %p315
      %p317 = scmp.ne.s32.totalorder %s308, %s309
      %p318 = scmp.eq.s32.totalorder %s41, 0
      %p319 = por %p317, %p318
      %p320 = scmp.ne.s32.totalorder %s308, %s309
      %p321 = scmp.eq.s32.totalorder %s42, 1
      %p322 = por %p320, %p321
      %p324 = scmp.ne.s32.totalorder %s309, %s323
      %p325 = scmp.eq.s32.totalorder %s42, 0
      %p326 = por %p324, %p325
      %s328 = sadd.s32 %s327, 1
      %p331 = scmp.eq.s32.totalorder %s36, 1
      %p332 = scmp.ne.s32.totalorder %s327, %s329
      %p333 = scmp.eq.s32.totalorder %s36, 0
      %p334 = por %p332, %p333
      %p335 = scmp.ne.s32.totalorder %s327, %s329
      %p336 = scmp.eq.s32.totalorder %s41, 1
      %p337 = por %p335, %p336
      %p338 = scmp.ne.s32.totalorder %s329, %s330
      %p339 = scmp.eq.s32.totalorder %s41, 0
      %p340 = por %p338, %p339
      %p341 = scmp.ne.s32.totalorder %s329, %s330
      %p342 = scmp.eq.s32.totalorder %s42, 1
      %p343 = por %p341, %p342
      %p345 = scmp.ne.s32.totalorder %s330, %s344
      %p346 = scmp.eq.s32.totalorder %s42, 0
      %p347 = por %p345, %p346
      %s349 = sadd.s32 %s348, 1
      %p352 = scmp.eq.s32.totalorder %s36, 1
      %p353 = scmp.ne.s32.totalorder %s348, %s350
      %p354 = scmp.eq.s32.totalorder %s36, 0
      %p355 = por %p353, %p354
      %p356 = scmp.ne.s32.totalorder %s348, %s350
      %p357 = scmp.eq.s32.totalorder %s41, 1
      %p358 = por %p356, %p357
      %p359 = scmp.ne.s32.totalorder %s350, %s351
      %p360 = scmp.eq.s32.totalorder %s41, 0
      %p361 = por %p359, %p360
      %p362 = scmp.ne.s32.totalorder %s350, %s351
      %p363 = scmp.eq.s32.totalorder %s42, 1
      %p364 = por %p362, %p363
      %p366 = scmp.ne.s32.totalorder %s351, %s365
      %p367 = scmp.eq.s32.totalorder %s42, 0
      %p368 = por %p366, %p367
      %s370 = sadd.s32 %s369, 1
      %p373 = scmp.eq.s32.totalorder %s36, 1
      %p374 = scmp.ne.s32.totalorder %s369, %s371
      %p375 = scmp.eq.s32.totalorder %s36, 0
      %p376 = por %p374, %p375
      %p377 = scmp.ne.s32.totalorder %s369, %s371
      %p378 = scmp.eq.s32.totalorder %s41, 1
      %p379 = por %p377, %p378
      %p380 = scmp.ne.s32.totalorder %s371, %s372
      %p381 = scmp.eq.s32.totalorder %s41, 0
      %p382 = por %p380, %p381
      %p383 = scmp.ne.s32.totalorder %s371, %s372
      %p384 = scmp.eq.s32.totalorder %s42, 1
      %p385 = por %p383, %p384
      %p387 = scmp.ne.s32.totalorder %s372, %s386
      %p388 = scmp.eq.s32.totalorder %s42, 0
      %p389 = por %p387, %p388
      %s391 = sadd.s32 %s390, 1
      %p394 = scmp.eq.s32.totalorder %s36, 1
      %p395 = scmp.ne.s32.totalorder %s390, %s392
      %p396 = scmp.eq.s32.totalorder %s36, 0
      %p397 = por %p395, %p396
      %p398 = scmp.ne.s32.totalorder %s390, %s392
      %p399 = scmp.eq.s32.totalorder %s41, 1
      %p400 = por %p398, %p399
      %p401 = scmp.ne.s32.totalorder %s392, %s393
      %p402 = scmp.eq.s32.totalorder %s41, 0
      %p403 = por %p401, %p402
      %p404 = scmp.ne.s32.totalorder %s392, %s393
      %p405 = scmp.eq.s32.totalorder %s42, 1
      %p406 = por %p404, %p405
      %p408 = scmp.ne.s32.totalorder %s393, %s407
      %p409 = scmp.eq.s32.totalorder %s42, 0
      %p410 = por %p408, %p409
      %s412 = sadd.s32 %s411, 1
      %p415 = scmp.eq.s32.totalorder %s36, 1
      %p416 = scmp.ne.s32.totalorder %s411, %s413
      %p417 = scmp.eq.s32.totalorder %s36, 0
      %p418 = por %p416, %p417
      %p419 = scmp.ne.s32.totalorder %s411, %s413
      %p420 = scmp.eq.s32.totalorder %s41, 1
      %p421 = por %p419, %p420
      %p422 = scmp.ne.s32.totalorder %s413, %s414
      %p423 = scmp.eq.s32.totalorder %s41, 0
      %p424 = por %p422, %p423
      %p425 = scmp.ne.s32.totalorder %s413, %s414
      %p426 = scmp.eq.s32.totalorder %s42, 1
      %p427 = por %p425, %p426
      %p429 = scmp.ne.s32.totalorder %s414, %s428
      %p430 = scmp.eq.s32.totalorder %s42, 0
      %p431 = por %p429, %p430
      %s432 = ssub.s32 %s36, %s43
      %p433 = scmp.eq.s32.totalorder %s432, 0
      %s435 = sadd.s32 %s434, 1
      %s436 = scalar_select %p433, %s434, %s435
      %p439 = pneg %p433
      %p440 = scmp.eq.s32.totalorder %s36, 1
      %p441 = por %p439, %p440
      %p442 = scmp.ne.s32.totalorder %s434, %s437
      %p443 = scmp.eq.s32.totalorder %s36, 0
      %p444 = por %p442, %p443
      %p445 = scmp.ne.s32.totalorder %s434, %s437
      %p446 = scmp.eq.s32.totalorder %s41, 1
      %p447 = por %p445, %p446
      %p448 = scmp.ne.s32.totalorder %s437, %s438
      %p449 = scmp.eq.s32.totalorder %s41, 0
      %p450 = por %p448, %p449
      %p451 = scmp.ne.s32.totalorder %s437, %s438
      %p452 = scmp.eq.s32.totalorder %s42, 1
      %p453 = por %p451, %p452
      %p455 = scmp.ne.s32.totalorder %s438, %s454
      %p456 = scmp.eq.s32.totalorder %s42, 0
      %p457 = por %p455, %p456
      %p458 = scmp.le.s32.totalorder 1, %s36
      %p459 = scmp.lt.s32.totalorder %s36, 3
      %p460 = pnand %p458, %p459
      %p461 = pneg %p460
      // Predicated region
      $region9: #{tpu_custom_call.1} parent=5 // pred_check
        _
      $region10: #{tpu_custom_call.1} parent=5 // pred_check_branch
        %463 = sbr.rel (%p460) target = $region12
      $region11: #{tpu_custom_call.1} parent=5 // pred_region
        %s464 = ssub.s32 %s36, 1
        // Predicated region
        $region13: #{tpu_custom_call.1} parent=11 // pred_check
          %p465 = pneg %p109
        $region14: #{tpu_custom_call.1} parent=11 // pred_check_branch
          %467 = sbr.rel (%p465) target = $region16
        $region15: #{tpu_custom_call.1} parent=11 // pred_region
          %s469 = ssub.s32 1024, 1024
          %470 = vsyncadd [#allocation6], %s469
          %s471 = sshll.u32 [#allocation7], 4
          %s472 = int_to_ptr.vmem [resolvable:$true] %s471
          %477 = dma.hbm_to_vmem [thread:$0]  %s2, 1024, %s472, [#allocation6], 64, 64, 4
        $region16: #{tpu_custom_call.1} parent=11 // pred_fallthru
          _
        // Predicated region
        $region17: #{tpu_custom_call.1} parent=11 // pred_check
          %p478 = pneg %p130
        $region18: #{tpu_custom_call.1} parent=11 // pred_check_branch
          %480 = sbr.rel (%p478) target = $region20
        $region19: #{tpu_custom_call.1} parent=11 // pred_region
          _
        $region20: #{tpu_custom_call.1} parent=11 // pred_fallthru
          _
        // Predicated region
        $region21: #{tpu_custom_call.1} parent=11 // pred_check
          %p481 = pneg %p151
        $region22: #{tpu_custom_call.1} parent=11 // pred_check_branch
          %483 = sbr.rel (%p481) target = $region24
        $region23: #{tpu_custom_call.1} parent=11 // pred_region
          %s485 = ssub.s32 1024, 1024
          %486 = vsyncadd [#allocation9], %s485
          %s487 = sshll.u32 [#allocation8], 4
          %s488 = int_to_ptr.vmem [resolvable:$true] %s487
          %493 = dma.hbm_to_vmem [thread:$0]  %s4, 1024, %s488, [#allocation9], 64, 64, 4
        $region24: #{tpu_custom_call.1} parent=11 // pred_fallthru
          _
        // Predicated region
        $region25: #{tpu_custom_call.1} parent=11 // pred_check
          %p494 = pneg %p172
        $region26: #{tpu_custom_call.1} parent=11 // pred_check_branch
          %496 = sbr.rel (%p494) target = $region28
        $region27: #{tpu_custom_call.1} parent=11 // pred_region
          _
        $region28: #{tpu_custom_call.1} parent=11 // pred_fallthru
          _
        // Predicated region
        $region29: #{tpu_custom_call.1} parent=11 // pred_check
          %p497 = pneg %p193
        $region30: #{tpu_custom_call.1} parent=11 // pred_check_branch
          %499 = sbr.rel (%p497) target = $region32
        $region31: #{tpu_custom_call.1} parent=11 // pred_region
          %s501 = ssub.s32 1024, 1024
          %502 = vsyncadd [#allocation9], %s501
          %s503 = sshll.u32 [#allocation10], 4
          %s504 = int_to_ptr.vmem [resolvable:$true] %s503
          %509 = dma.hbm_to_vmem [thread:$0]  %s6, 1024, %s504, [#allocation9], 64, 64, 4
        $region32: #{tpu_custom_call.1} parent=11 // pred_fallthru
          _
        // Predicated region
        $region33: #{tpu_custom_call.1} parent=11 // pred_check
          %p510 = pneg %p214
        $region34: #{tpu_custom_call.1} parent=11 // pred_check_branch
          %512 = sbr.rel (%p510) target = $region36
        $region35: #{tpu_custom_call.1} parent=11 // pred_region
          _
        $region36: #{tpu_custom_call.1} parent=11 // pred_fallthru
          _
        // Predicated region
        $region37: #{tpu_custom_call.1} parent=11 // pred_check
          %p513 = pneg %p235
        $region38: #{tpu_custom_call.1} parent=11 // pred_check_branch
          %515 = sbr.rel (%p513) target = $region40
        $region39: #{tpu_custom_call.1} parent=11 // pred_region
          %s517 = ssub.s32 1024, 1024
          %518 = vsyncadd [#allocation12], %s517
          %s519 = sshll.u32 [#allocation11], 4
          %s520 = int_to_ptr.vmem [resolvable:$true] %s519
          %525 = dma.hbm_to_vmem [thread:$0]  %s8, 1024, %s520, [#allocation12], 64, 64, 4
        $region40: #{tpu_custom_call.1} parent=11 // pred_fallthru
          _
        // Predicated region
        $region41: #{tpu_custom_call.1} parent=11 // pred_check
          %p526 = pneg %p256
        $region42: #{tpu_custom_call.1} parent=11 // pred_check_branch
          %528 = sbr.rel (%p526) target = $region44
        $region43: #{tpu_custom_call.1} parent=11 // pred_region
          _
        $region44: #{tpu_custom_call.1} parent=11 // pred_fallthru
          _
        // Predicated region
        $region45: #{tpu_custom_call.1} parent=11 // pred_check
          %p529 = pneg %p277
        $region46: #{tpu_custom_call.1} parent=11 // pred_check_branch
          %531 = sbr.rel (%p529) target = $region48
        $region47: #{tpu_custom_call.1} parent=11 // pred_region
          _
        $region48: #{tpu_custom_call.1} parent=11 // pred_fallthru
          _
        // Predicated region
        $region49: #{tpu_custom_call.1} parent=11 // pred_check
          %p532 = pneg %p298
        $region50: #{tpu_custom_call.1} parent=11 // pred_check_branch
          %534 = sbr.rel (%p532) target = $region52
        $region51: #{tpu_custom_call.1} parent=11 // pred_region
          _
        $region52: #{tpu_custom_call.1} parent=11 // pred_fallthru
          _
        // Predicated region
        $region53: #{tpu_custom_call.1} parent=11 // pred_check
          %p535 = pneg %p319
        $region54: #{tpu_custom_call.1} parent=11 // pred_check_branch
          %537 = sbr.rel (%p535) target = $region56
        $region55: #{tpu_custom_call.1} parent=11 // pred_region
          %s539 = ssub.s32 2048, 2048
          %540 = vsyncadd [#allocation12], %s539
          %s541 = sshll.u32 [#allocation13], 4
          %s542 = int_to_ptr.vmem [resolvable:$true] %s541
          %547 = dma.hbm_to_vmem [thread:$0]  %s12, 2048, %s542, [#allocation12], 128, 128, 8
        $region56: #{tpu_custom_call.1} parent=11 // pred_fallthru
          _
        // Predicated region
        $region57: #{tpu_custom_call.1} parent=11 // pred_check
          %p548 = pneg %p340
        $region58: #{tpu_custom_call.1} parent=11 // pred_check_branch
          %550 = sbr.rel (%p548) target = $region60
        $region59: #{tpu_custom_call.1} parent=11 // pred_region
          _
        $region60: #{tpu_custom_call.1} parent=11 // pred_fallthru
          _
        // Predicated region
        $region61: #{tpu_custom_call.1} parent=11 // pred_check
          %p551 = pneg %p361
        $region62: #{tpu_custom_call.1} parent=11 // pred_check_branch
          %553 = sbr.rel (%p551) target = $region64
        $region63: #{tpu_custom_call.1} parent=11 // pred_region
          %s555 = ssub.s32 2048, 2048
          %556 = vsyncadd [#allocation15], %s555
          %s557 = sshll.u32 [#allocation14], 4
          %s558 = int_to_ptr.vmem [resolvable:$true] %s557
          %563 = dma.hbm_to_vmem [thread:$0]  %s14, 2048, %s558, [#allocation15], 64, 64, 4
        $region64: #{tpu_custom_call.1} parent=11 // pred_fallthru
          _
        // Predicated region
        $region65: #{tpu_custom_call.1} parent=11 // pred_check
          %p564 = pneg %p382
        $region66: #{tpu_custom_call.1} parent=11 // pred_check_branch
          %566 = sbr.rel (%p564) target = $region68
        $region67: #{tpu_custom_call.1} parent=11 // pred_region
          _
        $region68: #{tpu_custom_call.1} parent=11 // pred_fallthru
          _
        // Predicated region
        $region69: #{tpu_custom_call.1} parent=11 // pred_check
          %p567 = pneg %p403
        $region70: #{tpu_custom_call.1} parent=11 // pred_check_branch
          %569 = sbr.rel (%p567) target = $region72
        $region71: #{tpu_custom_call.1} parent=11 // pred_region
          _
        $region72: #{tpu_custom_call.1} parent=11 // pred_fallthru
          _
        // Predicated region
        $region73: #{tpu_custom_call.1} parent=11 // pred_check
          %p570 = pneg %p424
        $region74: #{tpu_custom_call.1} parent=11 // pred_check_branch
          %572 = sbr.rel (%p570) target = $region76
        $region75: #{tpu_custom_call.1} parent=11 // pred_region
          _
        $region76: #{tpu_custom_call.1} parent=11 // pred_fallthru
          _
      $region12: #{tpu_custom_call.1} parent=5 // pred_fallthru
        _
      %p573 = scmp.lt.s32.totalorder %s36, 2
      // Predicated region
      $region77: #{tpu_custom_call.1} parent=5 // pred_check
        %p574 = pneg %p573
      $region78: #{tpu_custom_call.1} parent=5 // pred_check_branch
        %576 = sbr.rel (%p574) target = $region80
      $region79: #{tpu_custom_call.1} parent=5 // pred_region
        // Predicated region
        $region81: #{tpu_custom_call.1} parent=79 // pred_check
          %p577 = pneg %p56
        $region82: #{tpu_custom_call.1} parent=79 // pred_check_branch
          %579 = sbr.rel (%p577) target = $region84
        $region83: #{tpu_custom_call.1} parent=79 // pred_region
          %s580 = sand.u32 %s46, 1
          %s581 = scalar_lea.sflag [#allocation3], %s580
          %s582 = sand.u32 %s46, 1
          %s583 = smul.addr %s582, 32
          %s584 = scalar_lea.vmem [#allocation2], %s583
          %s585 = smul.u32 2, %s36
          %s587 = ssub.s32 512, 512
          %588 = vsyncadd %s581, %s587
          %s589 = smul.addr %s585, 2
          %s590 = smul.addr %s589, 128
          %s591 = scalar_lea.hbm %s0, %s590
          %s592 = sshll.u32 %s584, 4
          %s593 = int_to_ptr.vmem [resolvable:$true] %s592
          %598 = dma.hbm_to_vmem [thread:$0]  %s591, 512, %s593, %s581, 128, 128, 8
        $region84: #{tpu_custom_call.1} parent=79 // pred_fallthru
          _
        // Predicated region
        $region85: #{tpu_custom_call.1} parent=79 // pred_check
          %p599 = pneg %p82
        $region86: #{tpu_custom_call.1} parent=79 // pred_check_branch
          %601 = sbr.rel (%p599) target = $region88
        $region87: #{tpu_custom_call.1} parent=79 // pred_region
          %s602 = sand.u32 %s36, 1
          %s603 = scalar_lea.sflag [#allocation6], %s602
          %s604 = sand.u32 %s72, 1
          %s605 = smul.addr %s604, 2
          %s606 = scalar_lea.vmem [#allocation5], %s605
          %s607 = smul.u32 2, %s36
          %s609 = ssub.s32 32, 32
          %610 = vsyncadd %s603, %s609
          %s611 = smul.addr %s607, 16
          %s612 = scalar_lea.hbm %s1, %s611
          %s613 = sshll.u32 %s606, 4
          %s614 = int_to_ptr.vmem [resolvable:$true] %s613
          %619 = dma.hbm_to_vmem [thread:$0]  %s612, 32, %s614, %s603, 16, 16, 1
        $region88: #{tpu_custom_call.1} parent=79 // pred_fallthru
          _
      $region80: #{tpu_custom_call.1} parent=5 // pred_fallthru
        _
      %p620 = scmp.le.s32.totalorder 1, %s36
      %p621 = scmp.lt.s32.totalorder %s36, 3
      %p622 = pnand %p620, %p621
      %p623 = pneg %p622
      // Predicated region
      $region89: #{tpu_custom_call.1} parent=5 // pred_check
        _
      $region90: #{tpu_custom_call.1} parent=5 // pred_check_branch
        %625 = sbr.rel (%p622) target = $region92
      $region91: #{tpu_custom_call.1} parent=5 // pred_region
        %s626 = ssub.s32 %s36, 1
        %s627 = sand.u32 %s49, 1
        %s628 = scalar_lea.sflag [#allocation3], %s627
        %s629 = sand.u32 %s49, 1
        %s630 = smul.addr %s629, 32
        %s631 = scalar_lea.vmem [#allocation2], %s630
        // Predicated region
        $region93: #{tpu_custom_call.1} parent=91 // pred_check
          %p632 = pneg %p62
        $region94: #{tpu_custom_call.1} parent=91 // pred_check_branch
          %634 = sbr.rel (%p632) target = $region96
        $region95: #{tpu_custom_call.1} parent=91 // pred_region
          %635 = dma.done %s628, 512
        $region96: #{tpu_custom_call.1} parent=91 // pred_fallthru
          _
        %s636 = sand.u32 %s41, 1
        %s637 = scalar_lea.sflag [#allocation6], %s636
        %s638 = sand.u32 %s75, 1
        %s639 = smul.addr %s638, 2
        %s640 = scalar_lea.vmem [#allocation5], %s639
        // Predicated region
        $region97: #{tpu_custom_call.1} parent=91 // pred_check
          %p641 = pneg %p88
        $region98: #{tpu_custom_call.1} parent=91 // pred_check_branch
          %643 = sbr.rel (%p641) target = $region100
        $region99: #{tpu_custom_call.1} parent=91 // pred_region
          %644 = dma.done %s637, 32
        $region100: #{tpu_custom_call.1} parent=91 // pred_fallthru
          _
        // Predicated region
        $region101: #{tpu_custom_call.1} parent=91 // pred_check
          %p645 = pneg %p109
        $region102: #{tpu_custom_call.1} parent=91 // pred_check_branch
          %647 = sbr.rel (%p645) target = $region104
        $region103: #{tpu_custom_call.1} parent=91 // pred_region
          %648 = dma.done [#allocation6], 1024
        $region104: #{tpu_custom_call.1} parent=91 // pred_fallthru
          _
        // Predicated region
        $region105: #{tpu_custom_call.1} parent=91 // pred_check
          %p649 = pneg %p151
        $region106: #{tpu_custom_call.1} parent=91 // pred_check_branch
          %651 = sbr.rel (%p649) target = $region108
        $region107: #{tpu_custom_call.1} parent=91 // pred_region
          %652 = dma.done [#allocation9], 1024
        $region108: #{tpu_custom_call.1} parent=91 // pred_fallthru
          _
        // Predicated region
        $region109: #{tpu_custom_call.1} parent=91 // pred_check
          %p653 = pneg %p193
        $region110: #{tpu_custom_call.1} parent=91 // pred_check_branch
          %655 = sbr.rel (%p653) target = $region112
        $region111: #{tpu_custom_call.1} parent=91 // pred_region
          %656 = dma.done [#allocation9], 1024
        $region112: #{tpu_custom_call.1} parent=91 // pred_fallthru
          _
        // Predicated region
        $region113: #{tpu_custom_call.1} parent=91 // pred_check
          %p657 = pneg %p235
        $region114: #{tpu_custom_call.1} parent=91 // pred_check_branch
          %659 = sbr.rel (%p657) target = $region116
        $region115: #{tpu_custom_call.1} parent=91 // pred_region
          %660 = dma.done [#allocation12], 1024
        $region116: #{tpu_custom_call.1} parent=91 // pred_fallthru
          _
        // Predicated region
        $region117: #{tpu_custom_call.1} parent=91 // pred_check
          %p661 = pneg %p319
        $region118: #{tpu_custom_call.1} parent=91 // pred_check_branch
          %663 = sbr.rel (%p661) target = $region120
        $region119: #{tpu_custom_call.1} parent=91 // pred_region
          %664 = dma.done [#allocation12], 2048
        $region120: #{tpu_custom_call.1} parent=91 // pred_fallthru
          _
        // Predicated region
        $region121: #{tpu_custom_call.1} parent=91 // pred_check
          %p665 = pneg %p361
        $region122: #{tpu_custom_call.1} parent=91 // pred_check_branch
          %667 = sbr.rel (%p665) target = $region124
        $region123: #{tpu_custom_call.1} parent=91 // pred_region
          %668 = dma.done [#allocation15], 2048
        $region124: #{tpu_custom_call.1} parent=91 // pred_fallthru
          _
        %s669 = sand.u32 %s49, 1
        %s670 = scalar_lea.sflag [#allocation3], %s669
        %s671 = sand.u32 %s49, 1
        %s672 = smul.addr %s671, 32
        %s673 = scalar_lea.vmem [#allocation2], %s672
        %p674 = pneg %p62
        %p675 = pneg %p59
        %s676 = sand.u32 %s41, 1
        %s677 = scalar_lea.sflag [#allocation6], %s676
        %s678 = sand.u32 %s75, 1
        %s679 = smul.addr %s678, 2
        %s680 = scalar_lea.vmem [#allocation5], %s679
        %p681 = pneg %p88
        %p682 = pneg %p85
        %p683 = pneg %p109
        %p684 = pneg %p106
        %p685 = pneg %p130
        %p686 = pneg %p127
        %p687 = pneg %p151
        %p688 = pneg %p148
        %p689 = pneg %p172
        %p690 = pneg %p169
        %p691 = pneg %p193
        %p692 = pneg %p190
        %p693 = pneg %p214
        %p694 = pneg %p211
        %p695 = pneg %p235
        %p696 = pneg %p232
        %p697 = pneg %p256
        %p698 = pneg %p253
        %p699 = pneg %p277
        %p700 = pneg %p274
        %p701 = pneg %p298
        %p702 = pneg %p295
        %p703 = pneg %p319
        %p704 = pneg %p316
        %p705 = pneg %p340
        %p706 = pneg %p337
        %p707 = pneg %p361
        %p708 = pneg %p358
        %p709 = pneg %p382
        %p710 = pneg %p379
        %p711 = pneg %p403
        %p712 = pneg %p400
        %p713 = pneg %p424
        %p714 = pneg %p421
        %p715 = pneg %p450
        %p716 = pneg %p447
        %s717 = sand.u32 %s437, 1
        %s718 = scalar_lea.sflag [#allocation4], %s717
        %s719 = sand.u32 %s437, 1
        %s720 = smul.addr %s719, 32
        %s721 = scalar_lea.vmem [#allocation16], %s720
        %s722 = smul.u32 2, %s41
        %s723 = smul.u32 2, %s41
        %s724 = smul.u32 2, %s41
        %v726 = vld [vmem:[%s631] sm:$0xff]
        %v727 = vld [vmem:[%s631 + $0x8] sm:$0xff]
        %v728 = vld [vmem:[%s631 + $0x10] sm:$0xff]
        %v729 = vld [vmem:[%s631 + $0x18] sm:$0xff]
        %v730 = vpack.c.bf16 %v727, %v726
        %v731 = vpack.c.bf16 %v729, %v728
        %v732 = vld [vmem:[#allocation7] sm:$0xf]
        %v733 = vld [vmem:[#allocation7 + $0x4] sm:$0xf]
        %v734 = vld [vmem:[#allocation7 + $0x8] sm:$0xf]
        %v735 = vld [vmem:[#allocation7 + $0xc] sm:$0xf]
        %v736 = vld [vmem:[#allocation7 + $0x10] sm:$0xf]
        %v737 = vld [vmem:[#allocation7 + $0x14] sm:$0xf]
        %v738 = vld [vmem:[#allocation7 + $0x18] sm:$0xf]
        %v739 = vld [vmem:[#allocation7 + $0x1c] sm:$0xf]
        %v740 = vld [vmem:[#allocation7 + $0x20] sm:$0xf]
        %v741 = vld [vmem:[#allocation7 + $0x24] sm:$0xf]
        %v742 = vld [vmem:[#allocation7 + $0x28] sm:$0xf]
        %v743 = vld [vmem:[#allocation7 + $0x2c] sm:$0xf]
        %v744 = vld [vmem:[#allocation7 + $0x30] sm:$0xf]
        %v745 = vld [vmem:[#allocation7 + $0x34] sm:$0xf]
        %v746 = vld [vmem:[#allocation7 + $0x38] sm:$0xf]
        %v747 = vld [vmem:[#allocation7 + $0x3c] sm:$0xf]
        %v748 = vld [vmem:[%s3] sm:$0x1]
        %v750 = vlaneseq
        %v751 = vshrl.u32 %v750, 7
        %v752 = vsub.s32 0, %v751
        %v753 = vrot.slane %v748, %v752
        %v771 = vunpack.c.l.b16 %v732
        %v772 = vunpack.c.l.b16 %v733
        %v773 = vunpack.c.l.b16 %v734
        %v774 = vunpack.c.l.b16 %v735
        %v775 = vunpack.c.l.b16 %v736
        %v776 = vunpack.c.l.b16 %v737
        %v777 = vunpack.c.l.b16 %v738
        %v778 = vunpack.c.l.b16 %v739
        %v779 = vunpack.c.l.b16 %v740
        %v780 = vunpack.c.l.b16 %v741
        %v781 = vunpack.c.l.b16 %v742
        %v782 = vunpack.c.l.b16 %v743
        %v783 = vunpack.c.l.b16 %v744
        %v784 = vunpack.c.l.b16 %v745
        %v785 = vunpack.c.l.b16 %v746
        %v786 = vunpack.c.l.b16 %v747
        %v787 = vpack.c.b16 %v772, %v771
        %v788 = vpack.c.b16 %v774, %v773
        %v789 = vpack.c.b16 %v776, %v775
        %v790 = vpack.c.b16 %v778, %v777
        %v791 = vpack.c.b16 %v780, %v779
        %v792 = vpack.c.b16 %v782, %v781
        %v793 = vpack.c.b16 %v784, %v783
        %v794 = vpack.c.b16 %v786, %v785
        %803 = vmatprep.subr.bf16.mxu0 0
        %804 = vmatpush1.bf16.msra.mxu0 %v787
        %805 = vmatprep.subr.bf16.mxu0 0
        %806 = vmatpush1.bf16.msra.mxu0 %v788
        %807 = vmatprep.subr.bf16.mxu0 0
        %808 = vmatpush1.bf16.msra.mxu0 %v789
        %809 = vmatprep.subr.bf16.mxu0 0
        %810 = vmatpush1.bf16.msra.mxu0 %v790
        %811 = vmatprep.subr.bf16.mxu0 0
        %812 = vmatpush1.bf16.msra.mxu0 %v791
        %813 = vmatprep.subr.bf16.mxu0 0
        %814 = vmatpush1.bf16.msra.mxu0 %v792
        %815 = vmatprep.subr.bf16.mxu0 0
        %816 = vmatpush1.bf16.msra.mxu0 %v793
        %817 = vmatprep.subr.bf16.mxu0 0
        %818 = vmatpush1.bf16.msra.mxu0 %v794
        %819 = vmatprep.subr.bf16.mxu0 0
        %820 = vmatpush1.bf16.msra.mxu0 0
        %821 = vmatprep.subr.bf16.mxu0 0
        %822 = vmatpush1.bf16.msra.mxu0 0
        %823 = vmatprep.subr.bf16.mxu0 0
        %824 = vmatpush1.bf16.msra.mxu0 0
        %825 = vmatprep.subr.bf16.mxu0 0
        %826 = vmatpush1.bf16.msra.mxu0 0
        %827 = vmatprep.subr.bf16.mxu0 0
        %828 = vmatpush1.bf16.msra.mxu0 0
        %829 = vmatprep.subr.bf16.mxu0 0
        %830 = vmatpush1.bf16.msra.mxu0 0
        %831 = vmatprep.subr.bf16.mxu0 0
        %832 = vmatpush1.bf16.msra.mxu0 0
        %833 = vmatprep.subr.bf16.mxu0 0
        %834 = vmatpush1.bf16.msra.mxu0 0
        %835 = vmatprep.mubr.bf16.mxu0 0
        %836 = vmatmul.mubr.bf16.gmra.mrb[0].mxu0 %v730
        %v837 = vpop.f32.mrb[0].mxu0
        %v838 = vadd.f32 %v753, %v837
        %v839 = vpop.f32.mrb[0].mxu0
        %v840 = vpop.f32.mrb[0].mxu0
        %v841 = vadd.f32 %v753, %v840
        %v842 = vpop.f32.mrb[0].mxu0
        %843 = vmatprep.mubr.bf16.mxu0 0
        %844 = vmatmul.mubr.bf16.gmra.mrb[0].mxu0 %v731
        %v845 = vpop.f32.mrb[0].mxu0
        %v846 = vadd.f32 %v753, %v845
        %v847 = vpop.f32.mrb[0].mxu0
        %v848 = vpop.f32.mrb[0].mxu0
        %v849 = vadd.f32 %v753, %v848
        %v850 = vpop.f32.mrb[0].mxu0
        %851 = vdwg.mxu0
        %v852 = vmul.f32 %v838, 0.17677669
        %v853 = vmul.f32 %v841, 0.17677669
        %v854 = vmul.f32 %v846, 0.17677669
        %v855 = vmul.f32 %v849, 0.17677669
        %v856 = vld [vmem:[#allocation8] sm:$0xf]
        %v857 = vld [vmem:[#allocation8 + $0x4] sm:$0xf]
        %v858 = vld [vmem:[#allocation8 + $0x8] sm:$0xf]
        %v859 = vld [vmem:[#allocation8 + $0xc] sm:$0xf]
        %v860 = vld [vmem:[#allocation8 + $0x10] sm:$0xf]
        %v861 = vld [vmem:[#allocation8 + $0x14] sm:$0xf]
        %v862 = vld [vmem:[#allocation8 + $0x18] sm:$0xf]
        %v863 = vld [vmem:[#allocation8 + $0x1c] sm:$0xf]
        %v864 = vld [vmem:[#allocation8 + $0x20] sm:$0xf]
        %v865 = vld [vmem:[#allocation8 + $0x24] sm:$0xf]
        %v866 = vld [vmem:[#allocation8 + $0x28] sm:$0xf]
        %v867 = vld [vmem:[#allocation8 + $0x2c] sm:$0xf]
        %v868 = vld [vmem:[#allocation8 + $0x30] sm:$0xf]
        %v869 = vld [vmem:[#allocation8 + $0x34] sm:$0xf]
        %v870 = vld [vmem:[#allocation8 + $0x38] sm:$0xf]
        %v871 = vld [vmem:[#allocation8 + $0x3c] sm:$0xf]
        %v872 = vld [vmem:[%s5] sm:$0x1]
        %v874 = vlaneseq
        %v875 = vshrl.u32 %v874, 7
        %v876 = vsub.s32 0, %v875
        %v877 = vrot.slane %v872, %v876
        %v895 = vunpack.c.l.b16 %v856
        %v896 = vunpack.c.l.b16 %v857
        %v897 = vunpack.c.l.b16 %v858
        %v898 = vunpack.c.l.b16 %v859
        %v899 = vunpack.c.l.b16 %v860
        %v900 = vunpack.c.l.b16 %v861
        %v901 = vunpack.c.l.b16 %v862
        %v902 = vunpack.c.l.b16 %v863
        %v903 = vunpack.c.l.b16 %v864
        %v904 = vunpack.c.l.b16 %v865
        %v905 = vunpack.c.l.b16 %v866
        %v906 = vunpack.c.l.b16 %v867
        %v907 = vunpack.c.l.b16 %v868
        %v908 = vunpack.c.l.b16 %v869
        %v909 = vunpack.c.l.b16 %v870
        %v910 = vunpack.c.l.b16 %v871
        %v911 = vpack.c.b16 %v896, %v895
        %v912 = vpack.c.b16 %v898, %v897
        %v913 = vpack.c.b16 %v900, %v899
        %v914 = vpack.c.b16 %v902, %v901
        %v915 = vpack.c.b16 %v904, %v903
        %v916 = vpack.c.b16 %v906, %v905
        %v917 = vpack.c.b16 %v908, %v907
        %v918 = vpack.c.b16 %v910, %v909
        %927 = vmatprep.subr.bf16.mxu0 0
        %928 = vmatpush1.bf16.msra.mxu0 %v911
        %929 = vmatprep.subr.bf16.mxu0 0
        %930 = vmatpush1.bf16.msra.mxu0 %v912
        %931 = vmatprep.subr.bf16.mxu0 0
        %932 = vmatpush1.bf16.msra.mxu0 %v913
        %933 = vmatprep.subr.bf16.mxu0 0
        %934 = vmatpush1.bf16.msra.mxu0 %v914
        %935 = vmatprep.subr.bf16.mxu0 0
        %936 = vmatpush1.bf16.msra.mxu0 %v915
        %937 = vmatprep.subr.bf16.mxu0 0
        %938 = vmatpush1.bf16.msra.mxu0 %v916
        %939 = vmatprep.subr.bf16.mxu0 0
        %940 = vmatpush1.bf16.msra.mxu0 %v917
        %941 = vmatprep.subr.bf16.mxu0 0
        %942 = vmatpush1.bf16.msra.mxu0 %v918
        %943 = vmatprep.subr.bf16.mxu0 0
        %944 = vmatpush1.bf16.msra.mxu0 0
        %945 = vmatprep.subr.bf16.mxu0 0
        %946 = vmatpush1.bf16.msra.mxu0 0
        %947 = vmatprep.subr.bf16.mxu0 0
        %948 = vmatpush1.bf16.msra.mxu0 0
        %949 = vmatprep.subr.bf16.mxu0 0
        %950 = vmatpush1.bf16.msra.mxu0 0
        %951 = vmatprep.subr.bf16.mxu0 0
        %952 = vmatpush1.bf16.msra.mxu0 0
        %953 = vmatprep.subr.bf16.mxu0 0
        %954 = vmatpush1.bf16.msra.mxu0 0
        %955 = vmatprep.subr.bf16.mxu0 0
        %956 = vmatpush1.bf16.msra.mxu0 0
        %957 = vmatprep.subr.bf16.mxu0 0
        %958 = vmatpush1.bf16.msra.mxu0 0
        %959 = vmatprep.mubr.bf16.mxu0 0
        %960 = vmatmul.mubr.bf16.gmra.mrb[0].mxu0 %v730
        %v961 = vpop.f32.mrb[0].mxu0
        %v962 = vadd.f32 %v877, %v961
        %v963 = vpop.f32.mrb[0].mxu0
        %v964 = vpop.f32.mrb[0].mxu0
        %v965 = vadd.f32 %v877, %v964
        %v966 = vpop.f32.mrb[0].mxu0
        %967 = vmatprep.mubr.bf16.mxu0 0
        %968 = vmatmul.mubr.bf16.gmra.mrb[0].mxu0 %v731
        %v969 = vpop.f32.mrb[0].mxu0
        %v970 = vadd.f32 %v877, %v969
        %v971 = vpop.f32.mrb[0].mxu0
        %v972 = vpop.f32.mrb[0].mxu0
        %v973 = vadd.f32 %v877, %v972
        %v974 = vpop.f32.mrb[0].mxu0
        %975 = vdwg.mxu0
        %v976 = vld [vmem:[#allocation10] sm:$0xf]
        %v977 = vld [vmem:[#allocation10 + $0x4] sm:$0xf]
        %v978 = vld [vmem:[#allocation10 + $0x8] sm:$0xf]
        %v979 = vld [vmem:[#allocation10 + $0xc] sm:$0xf]
        %v980 = vld [vmem:[#allocation10 + $0x10] sm:$0xf]
        %v981 = vld [vmem:[#allocation10 + $0x14] sm:$0xf]
        %v982 = vld [vmem:[#allocation10 + $0x18] sm:$0xf]
        %v983 = vld [vmem:[#allocation10 + $0x1c] sm:$0xf]
        %v984 = vld [vmem:[#allocation10 + $0x20] sm:$0xf]
        %v985 = vld [vmem:[#allocation10 + $0x24] sm:$0xf]
        %v986 = vld [vmem:[#allocation10 + $0x28] sm:$0xf]
        %v987 = vld [vmem:[#allocation10 + $0x2c] sm:$0xf]
        %v988 = vld [vmem:[#allocation10 + $0x30] sm:$0xf]
        %v989 = vld [vmem:[#allocation10 + $0x34] sm:$0xf]
        %v990 = vld [vmem:[#allocation10 + $0x38] sm:$0xf]
        %v991 = vld [vmem:[#allocation10 + $0x3c] sm:$0xf]
        %v992 = vld [vmem:[%s7] sm:$0x1]
        %v994 = vlaneseq
        %v995 = vshrl.u32 %v994, 7
        %v996 = vsub.s32 0, %v995
        %v997 = vrot.slane %v992, %v996
        %v1015 = vunpack.c.l.b16 %v976
        %v1016 = vunpack.c.l.b16 %v977
        %v1017 = vunpack.c.l.b16 %v978
        %v1018 = vunpack.c.l.b16 %v979
        %v1019 = vunpack.c.l.b16 %v980
        %v1020 = vunpack.c.l.b16 %v981
        %v1021 = vunpack.c.l.b16 %v982
        %v1022 = vunpack.c.l.b16 %v983
        %v1023 = vunpack.c.l.b16 %v984
        %v1024 = vunpack.c.l.b16 %v985
        %v1025 = vunpack.c.l.b16 %v986
        %v1026 = vunpack.c.l.b16 %v987
        %v1027 = vunpack.c.l.b16 %v988
        %v1028 = vunpack.c.l.b16 %v989
        %v1029 = vunpack.c.l.b16 %v990
        %v1030 = vunpack.c.l.b16 %v991
        %v1031 = vpack.c.b16 %v1016, %v1015
        %v1032 = vpack.c.b16 %v1018, %v1017
        %v1033 = vpack.c.b16 %v1020, %v1019
        %v1034 = vpack.c.b16 %v1022, %v1021
        %v1035 = vpack.c.b16 %v1024, %v1023
        %v1036 = vpack.c.b16 %v1026, %v1025
        %v1037 = vpack.c.b16 %v1028, %v1027
        %v1038 = vpack.c.b16 %v1030, %v1029
        %1047 = vmatprep.subr.bf16.mxu0 0
        %1048 = vmatpush1.bf16.msra.mxu0 %v1031
        %1049 = vmatprep.subr.bf16.mxu0 0
        %1050 = vmatpush1.bf16.msra.mxu0 %v1032
        %1051 = vmatprep.subr.bf16.mxu0 0
        %1052 = vmatpush1.bf16.msra.mxu0 %v1033
        %1053 = vmatprep.subr.bf16.mxu0 0
        %1054 = vmatpush1.bf16.msra.mxu0 %v1034
        %1055 = vmatprep.subr.bf16.mxu0 0
        %1056 = vmatpush1.bf16.msra.mxu0 %v1035
        %1057 = vmatprep.subr.bf16.mxu0 0
        %1058 = vmatpush1.bf16.msra.mxu0 %v1036
        %1059 = vmatprep.subr.bf16.mxu0 0
        %1060 = vmatpush1.bf16.msra.mxu0 %v1037
        %1061 = vmatprep.subr.bf16.mxu0 0
        %1062 = vmatpush1.bf16.msra.mxu0 %v1038
        %1063 = vmatprep.subr.bf16.mxu0 0
        %1064 = vmatpush1.bf16.msra.mxu0 0
        %1065 = vmatprep.subr.bf16.mxu0 0
        %1066 = vmatpush1.bf16.msra.mxu0 0
        %1067 = vmatprep.subr.bf16.mxu0 0
        %1068 = vmatpush1.bf16.msra.mxu0 0
        %1069 = vmatprep.subr.bf16.mxu0 0
        %1070 = vmatpush1.bf16.msra.mxu0 0
        %1071 = vmatprep.subr.bf16.mxu0 0
        %1072 = vmatpush1.bf16.msra.mxu0 0
        %1073 = vmatprep.subr.bf16.mxu0 0
        %1074 = vmatpush1.bf16.msra.mxu0 0
        %1075 = vmatprep.subr.bf16.mxu0 0
        %1076 = vmatpush1.bf16.msra.mxu0 0
        %1077 = vmatprep.subr.bf16.mxu0 0
        %1078 = vmatpush1.bf16.msra.mxu0 0
        %1079 = vmatprep.mubr.bf16.mxu0 0
        %1080 = vmatmul.mubr.bf16.gmra.mrb[0].mxu0 %v730
        %v1081 = vpop.f32.mrb[0].mxu0
        %v1082 = vadd.f32 %v997, %v1081
        %v1083 = vpop.f32.mrb[0].mxu0
        %v1084 = vpop.f32.mrb[0].mxu0
        %v1085 = vadd.f32 %v997, %v1084
        %v1086 = vpop.f32.mrb[0].mxu0
        %1087 = vmatprep.mubr.bf16.mxu0 0
        %1088 = vmatmul.mubr.bf16.gmra.mrb[0].mxu0 %v731
        %v1089 = vpop.f32.mrb[0].mxu0
        %v1090 = vadd.f32 %v997, %v1089
        %v1091 = vpop.f32.mrb[0].mxu0
        %v1092 = vpop.f32.mrb[0].mxu0
        %v1093 = vadd.f32 %v997, %v1092
        %v1094 = vpop.f32.mrb[0].mxu0
        %1095 = vdwg.mxu0
        %1100 = vrot.lane.b32.xlu0 %v852, 96
        %v1101 = vpop.permute.xlu0 %1100
        %1102 = vrot.lane.b32.xlu0 %v853, 96
        %v1103 = vpop.permute.xlu0 %1102
        %1104 = vrot.lane.b32.xlu0 %v854, 96
        %v1105 = vpop.permute.xlu0 %1104
        %1106 = vrot.lane.b32.xlu0 %v855, 96
        %v1107 = vpop.permute.xlu0 %1106
        %1112 = vrot.lane.b32.xlu0 %v852, 64
        %v1113 = vpop.permute.xlu0 %1112
        %1114 = vrot.lane.b32.xlu0 %v853, 64
        %v1115 = vpop.permute.xlu0 %1114
        %1116 = vrot.lane.b32.xlu0 %v854, 64
        %v1117 = vpop.permute.xlu0 %1116
        %1118 = vrot.lane.b32.xlu0 %v855, 64
        %v1119 = vpop.permute.xlu0 %1118
        %1124 = vrot.lane.b32.xlu0 %v852, 32
        %v1125 = vpop.permute.xlu0 %1124
        %1126 = vrot.lane.b32.xlu0 %v853, 32
        %v1127 = vpop.permute.xlu0 %1126
        %1128 = vrot.lane.b32.xlu0 %v854, 32
        %v1129 = vpop.permute.xlu0 %1128
        %1130 = vrot.lane.b32.xlu0 %v855, 32
        %v1131 = vpop.permute.xlu0 %1130
        %v1136 = vcombine.low %v852, %v1113
        %v1137 = vcombine.high %v852, %v1113
        %v1139 = vunpack.c.l.s4 1983009808
        %v1140 = vunpack.c.0.s8 %v1139
        %v1141 = vlaneseq
        %v1142 = vshrl.u32 %v1141, 7
        %v1143 = vsub.s32 %v1140, %v1142
        %v1144 = vrot.slane %v1136, %v1143
        %v1146 = vunpack.c.l.s4 1983009808
        %v1147 = vunpack.c.0.s8 %v1146
        %v1148 = vlaneseq
        %v1149 = vshrl.u32 %v1148, 7
        %v1150 = vsub.s32 %v1147, %v1149
        %v1151 = vrot.slane %v1137, %v1150
        %v1152 = vcombine.low %v1101, %v1125
        %v1153 = vcombine.high %v1101, %v1125
        %v1155 = vunpack.c.l.s4 1983009808
        %v1156 = vunpack.c.0.s8 %v1155
        %v1157 = vlaneseq
        %v1158 = vshrl.u32 %v1157, 7
        %v1159 = vsub.s32 %v1156, %v1158
        %v1160 = vrot.slane %v1152, %v1159
        %v1162 = vunpack.c.l.s4 1983009808
        %v1163 = vunpack.c.0.s8 %v1162
        %v1164 = vlaneseq
        %v1165 = vshrl.u32 %v1164, 7
        %v1166 = vsub.s32 %v1163, %v1165
        %v1167 = vrot.slane %v1153, %v1166
        %v1168 = vcombine.low %v1144, %v1160
        %v1169 = vcombine.high %v1144, %v1160
        %v1171 = vunpack.c.l.s4 1934713408
        %v1172 = vunpack.c.0.s8 %v1171
        %v1173 = vlaneseq
        %v1174 = vshrl.u32 %v1173, 7
        %v1175 = vsub.s32 %v1172, %v1174
        %v1176 = vrot.slane %v1168, %v1175
        %v1178 = vunpack.c.l.s4 1934713408
        %v1179 = vunpack.c.0.s8 %v1178
        %v1180 = vlaneseq
        %v1181 = vshrl.u32 %v1180, 7
        %v1182 = vsub.s32 %v1179, %v1181
        %v1183 = vrot.slane %v1169, %v1182
        %v1184 = vcombine.low %v1151, %v1167
        %v1185 = vcombine.high %v1151, %v1167
        %v1187 = vunpack.c.l.s4 1934713408
        %v1188 = vunpack.c.0.s8 %v1187
        %v1189 = vlaneseq
        %v1190 = vshrl.u32 %v1189, 7
        %v1191 = vsub.s32 %v1188, %v1190
        %v1192 = vrot.slane %v1184, %v1191
        %v1194 = vunpack.c.l.s4 1934713408
        %v1195 = vunpack.c.0.s8 %v1194
        %v1196 = vlaneseq
        %v1197 = vshrl.u32 %v1196, 7
        %v1198 = vsub.s32 %v1195, %v1197
        %v1199 = vrot.slane %v1185, %v1198
        %v1200 = vcombine.high %v1176, 0.0
        %v1201 = vcombine.high %v1183, 0.0
        %v1202 = vcombine.high %v1192, 0.0
        %v1203 = vcombine.high %v1199, 0.0
        %v1204 = vcombine.low %v853, %v1115
        %v1205 = vcombine.high %v853, %v1115
        %v1207 = vunpack.c.l.s4 1983009808
        %v1208 = vunpack.c.0.s8 %v1207
        %v1209 = vlaneseq
        %v1210 = vshrl.u32 %v1209, 7
        %v1211 = vsub.s32 %v1208, %v1210
        %v1212 = vrot.slane %v1204, %v1211
        %v1214 = vunpack.c.l.s4 1983009808
        %v1215 = vunpack.c.0.s8 %v1214
        %v1216 = vlaneseq
        %v1217 = vshrl.u32 %v1216, 7
        %v1218 = vsub.s32 %v1215, %v1217
        %v1219 = vrot.slane %v1205, %v1218
        %v1220 = vcombine.low %v1103, %v1127
        %v1221 = vcombine.high %v1103, %v1127
        %v1223 = vunpack.c.l.s4 1983009808
        %v1224 = vunpack.c.0.s8 %v1223
        %v1225 = vlaneseq
        %v1226 = vshrl.u32 %v1225, 7
        %v1227 = vsub.s32 %v1224, %v1226
        %v1228 = vrot.slane %v1220, %v1227
        %v1230 = vunpack.c.l.s4 1983009808
        %v1231 = vunpack.c.0.s8 %v1230
        %v1232 = vlaneseq
        %v1233 = vshrl.u32 %v1232, 7
        %v1234 = vsub.s32 %v1231, %v1233
        %v1235 = vrot.slane %v1221, %v1234
        %v1236 = vcombine.low %v1212, %v1228
        %v1237 = vcombine.high %v1212, %v1228
        %v1239 = vunpack.c.l.s4 1934713408
        %v1240 = vunpack.c.0.s8 %v1239
        %v1241 = vlaneseq
        %v1242 = vshrl.u32 %v1241, 7
        %v1243 = vsub.s32 %v1240, %v1242
        %v1244 = vrot.slane %v1236, %v1243
        %v1246 = vunpack.c.l.s4 1934713408
        %v1247 = vunpack.c.0.s8 %v1246
        %v1248 = vlaneseq
        %v1249 = vshrl.u32 %v1248, 7
        %v1250 = vsub.s32 %v1247, %v1249
        %v1251 = vrot.slane %v1237, %v1250
        %v1252 = vcombine.low %v1219, %v1235
        %v1253 = vcombine.high %v1219, %v1235
        %v1255 = vunpack.c.l.s4 1934713408
        %v1256 = vunpack.c.0.s8 %v1255
        %v1257 = vlaneseq
        %v1258 = vshrl.u32 %v1257, 7
        %v1259 = vsub.s32 %v1256, %v1258
        %v1260 = vrot.slane %v1252, %v1259
        %v1262 = vunpack.c.l.s4 1934713408
        %v1263 = vunpack.c.0.s8 %v1262
        %v1264 = vlaneseq
        %v1265 = vshrl.u32 %v1264, 7
        %v1266 = vsub.s32 %v1263, %v1265
        %v1267 = vrot.slane %v1253, %v1266
        %v1268 = vcombine.high %v1244, 0.0
        %v1269 = vcombine.high %v1251, 0.0
        %v1270 = vcombine.high %v1260, 0.0
        %v1271 = vcombine.high %v1267, 0.0
        %v1272 = vcombine.low %v854, %v1117
        %v1273 = vcombine.high %v854, %v1117
        %v1275 = vunpack.c.l.s4 1983009808
        %v1276 = vunpack.c.0.s8 %v1275
        %v1277 = vlaneseq
        %v1278 = vshrl.u32 %v1277, 7
        %v1279 = vsub.s32 %v1276, %v1278
        %v1280 = vrot.slane %v1272, %v1279
        %v1282 = vunpack.c.l.s4 1983009808
        %v1283 = vunpack.c.0.s8 %v1282
        %v1284 = vlaneseq
        %v1285 = vshrl.u32 %v1284, 7
        %v1286 = vsub.s32 %v1283, %v1285
        %v1287 = vrot.slane %v1273, %v1286
        %v1288 = vcombine.low %v1105, %v1129
        %v1289 = vcombine.high %v1105, %v1129
        %v1291 = vunpack.c.l.s4 1983009808
        %v1292 = vunpack.c.0.s8 %v1291
        %v1293 = vlaneseq
        %v1294 = vshrl.u32 %v1293, 7
        %v1295 = vsub.s32 %v1292, %v1294
        %v1296 = vrot.slane %v1288, %v1295
        %v1298 = vunpack.c.l.s4 1983009808
        %v1299 = vunpack.c.0.s8 %v1298
        %v1300 = vlaneseq
        %v1301 = vshrl.u32 %v1300, 7
        %v1302 = vsub.s32 %v1299, %v1301
        %v1303 = vrot.slane %v1289, %v1302
        %v1304 = vcombine.low %v1280, %v1296
        %v1305 = vcombine.high %v1280, %v1296
        %v1307 = vunpack.c.l.s4 1934713408
        %v1308 = vunpack.c.0.s8 %v1307
        %v1309 = vlaneseq
        %v1310 = vshrl.u32 %v1309, 7
        %v1311 = vsub.s32 %v1308, %v1310
        %v1312 = vrot.slane %v1304, %v1311
        %v1314 = vunpack.c.l.s4 1934713408
        %v1315 = vunpack.c.0.s8 %v1314
        %v1316 = vlaneseq
        %v1317 = vshrl.u32 %v1316, 7
        %v1318 = vsub.s32 %v1315, %v1317
        %v1319 = vrot.slane %v1305, %v1318
        %v1320 = vcombine.low %v1287, %v1303
        %v1321 = vcombine.high %v1287, %v1303
        %v1323 = vunpack.c.l.s4 1934713408
        %v1324 = vunpack.c.0.s8 %v1323
        %v1325 = vlaneseq
        %v1326 = vshrl.u32 %v1325, 7
        %v1327 = vsub.s32 %v1324, %v1326
        %v1328 = vrot.slane %v1320, %v1327
        %v1330 = vunpack.c.l.s4 1934713408
        %v1331 = vunpack.c.0.s8 %v1330
        %v1332 = vlaneseq
        %v1333 = vshrl.u32 %v1332, 7
        %v1334 = vsub.s32 %v1331, %v1333
        %v1335 = vrot.slane %v1321, %v1334
        %v1336 = vcombine.high %v1312, 0.0
        %v1337 = vcombine.high %v1319, 0.0
        %v1338 = vcombine.high %v1328, 0.0
        %v1339 = vcombine.high %v1335, 0.0
        %v1340 = vcombine.low %v855, %v1119
        %v1341 = vcombine.high %v855, %v1119
        %v1343 = vunpack.c.l.s4 1983009808
        %v1344 = vunpack.c.0.s8 %v1343
        %v1345 = vlaneseq
        %v1346 = vshrl.u32 %v1345, 7
        %v1347 = vsub.s32 %v1344, %v1346
        %v1348 = vrot.slane %v1340, %v1347
        %v1350 = vunpack.c.l.s4 1983009808
        %v1351 = vunpack.c.0.s8 %v1350
        %v1352 = vlaneseq
        %v1353 = vshrl.u32 %v1352, 7
        %v1354 = vsub.s32 %v1351, %v1353
        %v1355 = vrot.slane %v1341, %v1354
        %v1356 = vcombine.low %v1107, %v1131
        %v1357 = vcombine.high %v1107, %v1131
        %v1359 = vunpack.c.l.s4 1983009808
        %v1360 = vunpack.c.0.s8 %v1359
        %v1361 = vlaneseq
        %v1362 = vshrl.u32 %v1361, 7
        %v1363 = vsub.s32 %v1360, %v1362
        %v1364 = vrot.slane %v1356, %v1363
        %v1366 = vunpack.c.l.s4 1983009808
        %v1367 = vunpack.c.0.s8 %v1366
        %v1368 = vlaneseq
        %v1369 = vshrl.u32 %v1368, 7
        %v1370 = vsub.s32 %v1367, %v1369
        %v1371 = vrot.slane %v1357, %v1370
        %v1372 = vcombine.low %v1348, %v1364
        %v1373 = vcombine.high %v1348, %v1364
        %v1375 = vunpack.c.l.s4 1934713408
        %v1376 = vunpack.c.0.s8 %v1375
        %v1377 = vlaneseq
        %v1378 = vshrl.u32 %v1377, 7
        %v1379 = vsub.s32 %v1376, %v1378
        %v1380 = vrot.slane %v1372, %v1379
        %v1382 = vunpack.c.l.s4 1934713408
        %v1383 = vunpack.c.0.s8 %v1382
        %v1384 = vlaneseq
        %v1385 = vshrl.u32 %v1384, 7
        %v1386 = vsub.s32 %v1383, %v1385
        %v1387 = vrot.slane %v1373, %v1386
        %v1388 = vcombine.low %v1355, %v1371
        %v1389 = vcombine.high %v1355, %v1371
        %v1391 = vunpack.c.l.s4 1934713408
        %v1392 = vunpack.c.0.s8 %v1391
        %v1393 = vlaneseq
        %v1394 = vshrl.u32 %v1393, 7
        %v1395 = vsub.s32 %v1392, %v1394
        %v1396 = vrot.slane %v1388, %v1395
        %v1398 = vunpack.c.l.s4 1934713408
        %v1399 = vunpack.c.0.s8 %v1398
        %v1400 = vlaneseq
        %v1401 = vshrl.u32 %v1400, 7
        %v1402 = vsub.s32 %v1399, %v1401
        %v1403 = vrot.slane %v1389, %v1402
        %v1404 = vcombine.high %v1380, 0.0
        %v1405 = vcombine.high %v1387, 0.0
        %v1406 = vcombine.high %v1396, 0.0
        %v1407 = vcombine.high %v1403, 0.0
        %v1408 = vcombine.low %v1176, %v1183
        %v1410 = vunpack.c.l.s4 1983009808
        %v1411 = vunpack.c.0.s8 %v1410
        %v1412 = vlaneseq
        %v1413 = vshrl.u32 %v1412, 7
        %v1414 = vsub.s32 %v1411, %v1413
        %v1415 = vrot.slane %v1408, %v1414
        %v1416 = vcombine.low %v1200, %v1201
        %v1418 = vunpack.c.l.s4 1983009808
        %v1419 = vunpack.c.0.s8 %v1418
        %v1420 = vlaneseq
        %v1421 = vshrl.u32 %v1420, 7
        %v1422 = vsub.s32 %v1419, %v1421
        %v1423 = vrot.slane %v1416, %v1422
        %v1424 = vcombine.low %v1192, %v1199
        %v1426 = vunpack.c.l.s4 1983009808
        %v1427 = vunpack.c.0.s8 %v1426
        %v1428 = vlaneseq
        %v1429 = vshrl.u32 %v1428, 7
        %v1430 = vsub.s32 %v1427, %v1429
        %v1431 = vrot.slane %v1424, %v1430
        %v1432 = vcombine.low %v1202, %v1203
        %v1434 = vunpack.c.l.s4 1983009808
        %v1435 = vunpack.c.0.s8 %v1434
        %v1436 = vlaneseq
        %v1437 = vshrl.u32 %v1436, 7
        %v1438 = vsub.s32 %v1435, %v1437
        %v1439 = vrot.slane %v1432, %v1438
        %v1440 = vcombine.low %v1415, %v1423
        %v1441 = vcombine.high %v1415, %v1423
        %v1443 = vunpack.c.l.s4 1934713408
        %v1444 = vunpack.c.0.s8 %v1443
        %v1445 = vlaneseq
        %v1446 = vshrl.u32 %v1445, 7
        %v1447 = vsub.s32 %v1444, %v1446
        %v1448 = vrot.slane %v1440, %v1447
        %v1450 = vunpack.c.l.s4 1934713408
        %v1451 = vunpack.c.0.s8 %v1450
        %v1452 = vlaneseq
        %v1453 = vshrl.u32 %v1452, 7
        %v1454 = vsub.s32 %v1451, %v1453
        %v1455 = vrot.slane %v1441, %v1454
        %v1456 = vcombine.low %v1431, %v1439
        %v1457 = vcombine.high %v1431, %v1439
        %v1459 = vunpack.c.l.s4 1934713408
        %v1460 = vunpack.c.0.s8 %v1459
        %v1461 = vlaneseq
        %v1462 = vshrl.u32 %v1461, 7
        %v1463 = vsub.s32 %v1460, %v1462
        %v1464 = vrot.slane %v1456, %v1463
        %v1466 = vunpack.c.l.s4 1934713408
        %v1467 = vunpack.c.0.s8 %v1466
        %v1468 = vlaneseq
        %v1469 = vshrl.u32 %v1468, 7
        %v1470 = vsub.s32 %v1467, %v1469
        %v1471 = vrot.slane %v1457, %v1470
        %v1472 = vcombine.low %v1448, %v1464
        %v1473 = vcombine.high %v1448, %v1464
        %v1474 = vcombine.low %v1455, %v1471
        %v1475 = vcombine.high %v1455, %v1471
        %v1476 = vcombine.low %v1244, %v1251
        %v1478 = vunpack.c.l.s4 1983009808
        %v1479 = vunpack.c.0.s8 %v1478
        %v1480 = vlaneseq
        %v1481 = vshrl.u32 %v1480, 7
        %v1482 = vsub.s32 %v1479, %v1481
        %v1483 = vrot.slane %v1476, %v1482
        %v1484 = vcombine.low %v1268, %v1269
        %v1486 = vunpack.c.l.s4 1983009808
        %v1487 = vunpack.c.0.s8 %v1486
        %v1488 = vlaneseq
        %v1489 = vshrl.u32 %v1488, 7
        %v1490 = vsub.s32 %v1487, %v1489
        %v1491 = vrot.slane %v1484, %v1490
        %v1492 = vcombine.low %v1260, %v1267
        %v1494 = vunpack.c.l.s4 1983009808
        %v1495 = vunpack.c.0.s8 %v1494
        %v1496 = vlaneseq
        %v1497 = vshrl.u32 %v1496, 7
        %v1498 = vsub.s32 %v1495, %v1497
        %v1499 = vrot.slane %v1492, %v1498
        %v1500 = vcombine.low %v1270, %v1271
        %v1502 = vunpack.c.l.s4 1983009808
        %v1503 = vunpack.c.0.s8 %v1502
        %v1504 = vlaneseq
        %v1505 = vshrl.u32 %v1504, 7
        %v1506 = vsub.s32 %v1503, %v1505
        %v1507 = vrot.slane %v1500, %v1506
        %v1508 = vcombine.low %v1483, %v1491
        %v1509 = vcombine.high %v1483, %v1491
        %v1511 = vunpack.c.l.s4 1934713408
        %v1512 = vunpack.c.0.s8 %v1511
        %v1513 = vlaneseq
        %v1514 = vshrl.u32 %v1513, 7
        %v1515 = vsub.s32 %v1512, %v1514
        %v1516 = vrot.slane %v1508, %v1515
        %v1518 = vunpack.c.l.s4 1934713408
        %v1519 = vunpack.c.0.s8 %v1518
        %v1520 = vlaneseq
        %v1521 = vshrl.u32 %v1520, 7
        %v1522 = vsub.s32 %v1519, %v1521
        %v1523 = vrot.slane %v1509, %v1522
        %v1524 = vcombine.low %v1499, %v1507
        %v1525 = vcombine.high %v1499, %v1507
        %v1527 = vunpack.c.l.s4 1934713408
        %v1528 = vunpack.c.0.s8 %v1527
        %v1529 = vlaneseq
        %v1530 = vshrl.u32 %v1529, 7
        %v1531 = vsub.s32 %v1528, %v1530
        %v1532 = vrot.slane %v1524, %v1531
        %v1534 = vunpack.c.l.s4 1934713408
        %v1535 = vunpack.c.0.s8 %v1534
        %v1536 = vlaneseq
        %v1537 = vshrl.u32 %v1536, 7
        %v1538 = vsub.s32 %v1535, %v1537
        %v1539 = vrot.slane %v1525, %v1538
        %v1540 = vcombine.low %v1516, %v1532
        %v1541 = vcombine.high %v1516, %v1532
        %v1542 = vcombine.low %v1523, %v1539
        %v1543 = vcombine.high %v1523, %v1539
        %v1544 = vcombine.low %v1312, %v1319
        %v1546 = vunpack.c.l.s4 1983009808
        %v1547 = vunpack.c.0.s8 %v1546
        %v1548 = vlaneseq
        %v1549 = vshrl.u32 %v1548, 7
        %v1550 = vsub.s32 %v1547, %v1549
        %v1551 = vrot.slane %v1544, %v1550
        %v1552 = vcombine.low %v1336, %v1337
        %v1554 = vunpack.c.l.s4 1983009808
        %v1555 = vunpack.c.0.s8 %v1554
        %v1556 = vlaneseq
        %v1557 = vshrl.u32 %v1556, 7
        %v1558 = vsub.s32 %v1555, %v1557
        %v1559 = vrot.slane %v1552, %v1558
        %v1560 = vcombine.low %v1328, %v1335
        %v1562 = vunpack.c.l.s4 1983009808
        %v1563 = vunpack.c.0.s8 %v1562
        %v1564 = vlaneseq
        %v1565 = vshrl.u32 %v1564, 7
        %v1566 = vsub.s32 %v1563, %v1565
        %v1567 = vrot.slane %v1560, %v1566
        %v1568 = vcombine.low %v1338, %v1339
        %v1570 = vunpack.c.l.s4 1983009808
        %v1571 = vunpack.c.0.s8 %v1570
        %v1572 = vlaneseq
        %v1573 = vshrl.u32 %v1572, 7
        %v1574 = vsub.s32 %v1571, %v1573
        %v1575 = vrot.slane %v1568, %v1574
        %v1576 = vcombine.low %v1551, %v1559
        %v1577 = vcombine.high %v1551, %v1559
        %v1579 = vunpack.c.l.s4 1934713408
        %v1580 = vunpack.c.0.s8 %v1579
        %v1581 = vlaneseq
        %v1582 = vshrl.u32 %v1581, 7
        %v1583 = vsub.s32 %v1580, %v1582
        %v1584 = vrot.slane %v1576, %v1583
        %v1586 = vunpack.c.l.s4 1934713408
        %v1587 = vunpack.c.0.s8 %v1586
        %v1588 = vlaneseq
        %v1589 = vshrl.u32 %v1588, 7
        %v1590 = vsub.s32 %v1587, %v1589
        %v1591 = vrot.slane %v1577, %v1590
        %v1592 = vcombine.low %v1567, %v1575
        %v1593 = vcombine.high %v1567, %v1575
        %v1595 = vunpack.c.l.s4 1934713408
        %v1596 = vunpack.c.0.s8 %v1595
        %v1597 = vlaneseq
        %v1598 = vshrl.u32 %v1597, 7
        %v1599 = vsub.s32 %v1596, %v1598
        %v1600 = vrot.slane %v1592, %v1599
        %v1602 = vunpack.c.l.s4 1934713408
        %v1603 = vunpack.c.0.s8 %v1602
        %v1604 = vlaneseq
        %v1605 = vshrl.u32 %v1604, 7
        %v1606 = vsub.s32 %v1603, %v1605
        %v1607 = vrot.slane %v1593, %v1606
        %v1608 = vcombine.low %v1584, %v1600
        %v1609 = vcombine.high %v1584, %v1600
        %v1610 = vcombine.low %v1591, %v1607
        %v1611 = vcombine.high %v1591, %v1607
        %v1612 = vcombine.low %v1380, %v1387
        %v1614 = vunpack.c.l.s4 1983009808
        %v1615 = vunpack.c.0.s8 %v1614
        %v1616 = vlaneseq
        %v1617 = vshrl.u32 %v1616, 7
        %v1618 = vsub.s32 %v1615, %v1617
        %v1619 = vrot.slane %v1612, %v1618
        %v1620 = vcombine.low %v1404, %v1405
        %v1622 = vunpack.c.l.s4 1983009808
        %v1623 = vunpack.c.0.s8 %v1622
        %v1624 = vlaneseq
        %v1625 = vshrl.u32 %v1624, 7
        %v1626 = vsub.s32 %v1623, %v1625
        %v1627 = vrot.slane %v1620, %v1626
        %v1628 = vcombine.low %v1396, %v1403
        %v1630 = vunpack.c.l.s4 1983009808
        %v1631 = vunpack.c.0.s8 %v1630
        %v1632 = vlaneseq
        %v1633 = vshrl.u32 %v1632, 7
        %v1634 = vsub.s32 %v1631, %v1633
        %v1635 = vrot.slane %v1628, %v1634
        %v1636 = vcombine.low %v1406, %v1407
        %v1638 = vunpack.c.l.s4 1983009808
        %v1639 = vunpack.c.0.s8 %v1638
        %v1640 = vlaneseq
        %v1641 = vshrl.u32 %v1640, 7
        %v1642 = vsub.s32 %v1639, %v1641
        %v1643 = vrot.slane %v1636, %v1642
        %v1644 = vcombine.low %v1619, %v1627
        %v1645 = vcombine.high %v1619, %v1627
        %v1647 = vunpack.c.l.s4 1934713408
        %v1648 = vunpack.c.0.s8 %v1647
        %v1649 = vlaneseq
        %v1650 = vshrl.u32 %v1649, 7
        %v1651 = vsub.s32 %v1648, %v1650
        %v1652 = vrot.slane %v1644, %v1651
        %v1654 = vunpack.c.l.s4 1934713408
        %v1655 = vunpack.c.0.s8 %v1654
        %v1656 = vlaneseq
        %v1657 = vshrl.u32 %v1656, 7
        %v1658 = vsub.s32 %v1655, %v1657
        %v1659 = vrot.slane %v1645, %v1658
        %v1660 = vcombine.low %v1635, %v1643
        %v1661 = vcombine.high %v1635, %v1643
        %v1663 = vunpack.c.l.s4 1934713408
        %v1664 = vunpack.c.0.s8 %v1663
        %v1665 = vlaneseq
        %v1666 = vshrl.u32 %v1665, 7
        %v1667 = vsub.s32 %v1664, %v1666
        %v1668 = vrot.slane %v1660, %v1667
        %v1670 = vunpack.c.l.s4 1934713408
        %v1671 = vunpack.c.0.s8 %v1670
        %v1672 = vlaneseq
        %v1673 = vshrl.u32 %v1672, 7
        %v1674 = vsub.s32 %v1671, %v1673
        %v1675 = vrot.slane %v1661, %v1674
        %v1676 = vcombine.low %v1652, %v1668
        %v1677 = vcombine.high %v1652, %v1668
        %v1678 = vcombine.low %v1659, %v1675
        %v1679 = vcombine.high %v1659, %v1675
        %v1680 = vpack.c.bf16 %v1540, %v1472
        %v1681 = vpack.c.bf16 %v1541, %v1473
        %v1682 = vpack.c.bf16 %v1542, %v1474
        %v1683 = vpack.c.bf16 %v1543, %v1475
        %v1684 = vpack.c.bf16 %v1676, %v1608
        %v1685 = vpack.c.bf16 %v1677, %v1609
        %v1686 = vpack.c.bf16 %v1678, %v1610
        %v1687 = vpack.c.bf16 %v1679, %v1611
        %1692 = vrot.lane.b32.xlu0 %v962, 96
        %v1693 = vpop.permute.xlu0 %1692
        %1694 = vrot.lane.b32.xlu0 %v965, 96
        %v1695 = vpop.permute.xlu0 %1694
        %1696 = vrot.lane.b32.xlu0 %v970, 96
        %v1697 = vpop.permute.xlu0 %1696
        %1698 = vrot.lane.b32.xlu0 %v973, 96
        %v1699 = vpop.permute.xlu0 %1698
        %1704 = vrot.lane.b32.xlu0 %v962, 64
        %v1705 = vpop.permute.xlu0 %1704
        %1706 = vrot.lane.b32.xlu0 %v965, 64
        %v1707 = vpop.permute.xlu0 %1706
        %1708 = vrot.lane.b32.xlu0 %v970, 64
        %v1709 = vpop.permute.xlu0 %1708
        %1710 = vrot.lane.b32.xlu0 %v973, 64
        %v1711 = vpop.permute.xlu0 %1710
        %1716 = vrot.lane.b32.xlu0 %v962, 32
        %v1717 = vpop.permute.xlu0 %1716
        %1718 = vrot.lane.b32.xlu0 %v965, 32
        %v1719 = vpop.permute.xlu0 %1718
        %1720 = vrot.lane.b32.xlu0 %v970, 32
        %v1721 = vpop.permute.xlu0 %1720
        %1722 = vrot.lane.b32.xlu0 %v973, 32
        %v1723 = vpop.permute.xlu0 %1722
        %v1728 = vcombine.low %v962, %v1705
        %v1729 = vcombine.high %v962, %v1705
        %v1731 = vunpack.c.l.s4 1983009808
        %v1732 = vunpack.c.0.s8 %v1731
        %v1733 = vlaneseq
        %v1734 = vshrl.u32 %v1733, 7
        %v1735 = vsub.s32 %v1732, %v1734
        %v1736 = vrot.slane %v1728, %v1735
        %v1738 = vunpack.c.l.s4 1983009808
        %v1739 = vunpack.c.0.s8 %v1738
        %v1740 = vlaneseq
        %v1741 = vshrl.u32 %v1740, 7
        %v1742 = vsub.s32 %v1739, %v1741
        %v1743 = vrot.slane %v1729, %v1742
        %v1744 = vcombine.low %v1693, %v1717
        %v1745 = vcombine.high %v1693, %v1717
        %v1747 = vunpack.c.l.s4 1983009808
        %v1748 = vunpack.c.0.s8 %v1747
        %v1749 = vlaneseq
        %v1750 = vshrl.u32 %v1749, 7
        %v1751 = vsub.s32 %v1748, %v1750
        %v1752 = vrot.slane %v1744, %v1751
        %v1754 = vunpack.c.l.s4 1983009808
        %v1755 = vunpack.c.0.s8 %v1754
        %v1756 = vlaneseq
        %v1757 = vshrl.u32 %v1756, 7
        %v1758 = vsub.s32 %v1755, %v1757
        %v1759 = vrot.slane %v1745, %v1758
        %v1760 = vcombine.low %v1736, %v1752
        %v1761 = vcombine.high %v1736, %v1752
        %v1763 = vunpack.c.l.s4 1934713408
        %v1764 = vunpack.c.0.s8 %v1763
        %v1765 = vlaneseq
        %v1766 = vshrl.u32 %v1765, 7
        %v1767 = vsub.s32 %v1764, %v1766
        %v1768 = vrot.slane %v1760, %v1767
        %v1770 = vunpack.c.l.s4 1934713408
        %v1771 = vunpack.c.0.s8 %v1770
        %v1772 = vlaneseq
        %v1773 = vshrl.u32 %v1772, 7
        %v1774 = vsub.s32 %v1771, %v1773
        %v1775 = vrot.slane %v1761, %v1774
        %v1776 = vcombine.low %v1743, %v1759
        %v1777 = vcombine.high %v1743, %v1759
        %v1779 = vunpack.c.l.s4 1934713408
        %v1780 = vunpack.c.0.s8 %v1779
        %v1781 = vlaneseq
        %v1782 = vshrl.u32 %v1781, 7
        %v1783 = vsub.s32 %v1780, %v1782
        %v1784 = vrot.slane %v1776, %v1783
        %v1786 = vunpack.c.l.s4 1934713408
        %v1787 = vunpack.c.0.s8 %v1786
        %v1788 = vlaneseq
        %v1789 = vshrl.u32 %v1788, 7
        %v1790 = vsub.s32 %v1787, %v1789
        %v1791 = vrot.slane %v1777, %v1790
        %v1792 = vcombine.high %v1768, 0.0
        %v1793 = vcombine.high %v1775, 0.0
        %v1794 = vcombine.high %v1784, 0.0
        %v1795 = vcombine.high %v1791, 0.0
        %v1796 = vcombine.low %v965, %v1707
        %v1797 = vcombine.high %v965, %v1707
        %v1799 = vunpack.c.l.s4 1983009808
        %v1800 = vunpack.c.0.s8 %v1799
        %v1801 = vlaneseq
        %v1802 = vshrl.u32 %v1801, 7
        %v1803 = vsub.s32 %v1800, %v1802
        %v1804 = vrot.slane %v1796, %v1803
        %v1806 = vunpack.c.l.s4 1983009808
        %v1807 = vunpack.c.0.s8 %v1806
        %v1808 = vlaneseq
        %v1809 = vshrl.u32 %v1808, 7
        %v1810 = vsub.s32 %v1807, %v1809
        %v1811 = vrot.slane %v1797, %v1810
        %v1812 = vcombine.low %v1695, %v1719
        %v1813 = vcombine.high %v1695, %v1719
        %v1815 = vunpack.c.l.s4 1983009808
        %v1816 = vunpack.c.0.s8 %v1815
        %v1817 = vlaneseq
        %v1818 = vshrl.u32 %v1817, 7
        %v1819 = vsub.s32 %v1816, %v1818
        %v1820 = vrot.slane %v1812, %v1819
        %v1822 = vunpack.c.l.s4 1983009808
        %v1823 = vunpack.c.0.s8 %v1822
        %v1824 = vlaneseq
        %v1825 = vshrl.u32 %v1824, 7
        %v1826 = vsub.s32 %v1823, %v1825
        %v1827 = vrot.slane %v1813, %v1826
        %v1828 = vcombine.low %v1804, %v1820
        %v1829 = vcombine.high %v1804, %v1820
        %v1831 = vunpack.c.l.s4 1934713408
        %v1832 = vunpack.c.0.s8 %v1831
        %v1833 = vlaneseq
        %v1834 = vshrl.u32 %v1833, 7
        %v1835 = vsub.s32 %v1832, %v1834
        %v1836 = vrot.slane %v1828, %v1835
        %v1838 = vunpack.c.l.s4 1934713408
        %v1839 = vunpack.c.0.s8 %v1838
        %v1840 = vlaneseq
        %v1841 = vshrl.u32 %v1840, 7
        %v1842 = vsub.s32 %v1839, %v1841
        %v1843 = vrot.slane %v1829, %v1842
        %v1844 = vcombine.low %v1811, %v1827
        %v1845 = vcombine.high %v1811, %v1827
        %v1847 = vunpack.c.l.s4 1934713408
        %v1848 = vunpack.c.0.s8 %v1847
        %v1849 = vlaneseq
        %v1850 = vshrl.u32 %v1849, 7
        %v1851 = vsub.s32 %v1848, %v1850
        %v1852 = vrot.slane %v1844, %v1851
        %v1854 = vunpack.c.l.s4 1934713408
        %v1855 = vunpack.c.0.s8 %v1854
        %v1856 = vlaneseq
        %v1857 = vshrl.u32 %v1856, 7
        %v1858 = vsub.s32 %v1855, %v1857
        %v1859 = vrot.slane %v1845, %v1858
        %v1860 = vcombine.high %v1836, 0.0
        %v1861 = vcombine.high %v1843, 0.0
        %v1862 = vcombine.high %v1852, 0.0
        %v1863 = vcombine.high %v1859, 0.0
        %v1864 = vcombine.low %v970, %v1709
        %v1865 = vcombine.high %v970, %v1709
        %v1867 = vunpack.c.l.s4 1983009808
        %v1868 = vunpack.c.0.s8 %v1867
        %v1869 = vlaneseq
        %v1870 = vshrl.u32 %v1869, 7
        %v1871 = vsub.s32 %v1868, %v1870
        %v1872 = vrot.slane %v1864, %v1871
        %v1874 = vunpack.c.l.s4 1983009808
        %v1875 = vunpack.c.0.s8 %v1874
        %v1876 = vlaneseq
        %v1877 = vshrl.u32 %v1876, 7
        %v1878 = vsub.s32 %v1875, %v1877
        %v1879 = vrot.slane %v1865, %v1878
        %v1880 = vcombine.low %v1697, %v1721
        %v1881 = vcombine.high %v1697, %v1721
        %v1883 = vunpack.c.l.s4 1983009808
        %v1884 = vunpack.c.0.s8 %v1883
        %v1885 = vlaneseq
        %v1886 = vshrl.u32 %v1885, 7
        %v1887 = vsub.s32 %v1884, %v1886
        %v1888 = vrot.slane %v1880, %v1887
        %v1890 = vunpack.c.l.s4 1983009808
        %v1891 = vunpack.c.0.s8 %v1890
        %v1892 = vlaneseq
        %v1893 = vshrl.u32 %v1892, 7
        %v1894 = vsub.s32 %v1891, %v1893
        %v1895 = vrot.slane %v1881, %v1894
        %v1896 = vcombine.low %v1872, %v1888
        %v1897 = vcombine.high %v1872, %v1888
        %v1899 = vunpack.c.l.s4 1934713408
        %v1900 = vunpack.c.0.s8 %v1899
        %v1901 = vlaneseq
        %v1902 = vshrl.u32 %v1901, 7
        %v1903 = vsub.s32 %v1900, %v1902
        %v1904 = vrot.slane %v1896, %v1903
        %v1906 = vunpack.c.l.s4 1934713408
        %v1907 = vunpack.c.0.s8 %v1906
        %v1908 = vlaneseq
        %v1909 = vshrl.u32 %v1908, 7
        %v1910 = vsub.s32 %v1907, %v1909
        %v1911 = vrot.slane %v1897, %v1910
        %v1912 = vcombine.low %v1879, %v1895
        %v1913 = vcombine.high %v1879, %v1895
        %v1915 = vunpack.c.l.s4 1934713408
        %v1916 = vunpack.c.0.s8 %v1915
        %v1917 = vlaneseq
        %v1918 = vshrl.u32 %v1917, 7
        %v1919 = vsub.s32 %v1916, %v1918
        %v1920 = vrot.slane %v1912, %v1919
        %v1922 = vunpack.c.l.s4 1934713408
        %v1923 = vunpack.c.0.s8 %v1922
        %v1924 = vlaneseq
        %v1925 = vshrl.u32 %v1924, 7
        %v1926 = vsub.s32 %v1923, %v1925
        %v1927 = vrot.slane %v1913, %v1926
        %v1928 = vcombine.high %v1904, 0.0
        %v1929 = vcombine.high %v1911, 0.0
        %v1930 = vcombine.high %v1920, 0.0
        %v1931 = vcombine.high %v1927, 0.0
        %v1932 = vcombine.low %v973, %v1711
        %v1933 = vcombine.high %v973, %v1711
        %v1935 = vunpack.c.l.s4 1983009808
        %v1936 = vunpack.c.0.s8 %v1935
        %v1937 = vlaneseq
        %v1938 = vshrl.u32 %v1937, 7
        %v1939 = vsub.s32 %v1936, %v1938
        %v1940 = vrot.slane %v1932, %v1939
        %v1942 = vunpack.c.l.s4 1983009808
        %v1943 = vunpack.c.0.s8 %v1942
        %v1944 = vlaneseq
        %v1945 = vshrl.u32 %v1944, 7
        %v1946 = vsub.s32 %v1943, %v1945
        %v1947 = vrot.slane %v1933, %v1946
        %v1948 = vcombine.low %v1699, %v1723
        %v1949 = vcombine.high %v1699, %v1723
        %v1951 = vunpack.c.l.s4 1983009808
        %v1952 = vunpack.c.0.s8 %v1951
        %v1953 = vlaneseq
        %v1954 = vshrl.u32 %v1953, 7
        %v1955 = vsub.s32 %v1952, %v1954
        %v1956 = vrot.slane %v1948, %v1955
        %v1958 = vunpack.c.l.s4 1983009808
        %v1959 = vunpack.c.0.s8 %v1958
        %v1960 = vlaneseq
        %v1961 = vshrl.u32 %v1960, 7
        %v1962 = vsub.s32 %v1959, %v1961
        %v1963 = vrot.slane %v1949, %v1962
        %v1964 = vcombine.low %v1940, %v1956
        %v1965 = vcombine.high %v1940, %v1956
        %v1967 = vunpack.c.l.s4 1934713408
        %v1968 = vunpack.c.0.s8 %v1967
        %v1969 = vlaneseq
        %v1970 = vshrl.u32 %v1969, 7
        %v1971 = vsub.s32 %v1968, %v1970
        %v1972 = vrot.slane %v1964, %v1971
        %v1974 = vunpack.c.l.s4 1934713408
        %v1975 = vunpack.c.0.s8 %v1974
        %v1976 = vlaneseq
        %v1977 = vshrl.u32 %v1976, 7
        %v1978 = vsub.s32 %v1975, %v1977
        %v1979 = vrot.slane %v1965, %v1978
        %v1980 = vcombine.low %v1947, %v1963
        %v1981 = vcombine.high %v1947, %v1963
        %v1983 = vunpack.c.l.s4 1934713408
        %v1984 = vunpack.c.0.s8 %v1983
        %v1985 = vlaneseq
        %v1986 = vshrl.u32 %v1985, 7
        %v1987 = vsub.s32 %v1984, %v1986
        %v1988 = vrot.slane %v1980, %v1987
        %v1990 = vunpack.c.l.s4 1934713408
        %v1991 = vunpack.c.0.s8 %v1990
        %v1992 = vlaneseq
        %v1993 = vshrl.u32 %v1992, 7
        %v1994 = vsub.s32 %v1991, %v1993
        %v1995 = vrot.slane %v1981, %v1994
        %v1996 = vcombine.high %v1972, 0.0
        %v1997 = vcombine.high %v1979, 0.0
        %v1998 = vcombine.high %v1988, 0.0
        %v1999 = vcombine.high %v1995, 0.0
        %v2000 = vcombine.low %v1768, %v1775
        %v2002 = vunpack.c.l.s4 1983009808
        %v2003 = vunpack.c.0.s8 %v2002
        %v2004 = vlaneseq
        %v2005 = vshrl.u32 %v2004, 7
        %v2006 = vsub.s32 %v2003, %v2005
        %v2007 = vrot.slane %v2000, %v2006
        %v2008 = vcombine.low %v1792, %v1793
        %v2010 = vunpack.c.l.s4 1983009808
        %v2011 = vunpack.c.0.s8 %v2010
        %v2012 = vlaneseq
        %v2013 = vshrl.u32 %v2012, 7
        %v2014 = vsub.s32 %v2011, %v2013
        %v2015 = vrot.slane %v2008, %v2014
        %v2016 = vcombine.low %v1784, %v1791
        %v2018 = vunpack.c.l.s4 1983009808
        %v2019 = vunpack.c.0.s8 %v2018
        %v2020 = vlaneseq
        %v2021 = vshrl.u32 %v2020, 7
        %v2022 = vsub.s32 %v2019, %v2021
        %v2023 = vrot.slane %v2016, %v2022
        %v2024 = vcombine.low %v1794, %v1795
        %v2026 = vunpack.c.l.s4 1983009808
        %v2027 = vunpack.c.0.s8 %v2026
        %v2028 = vlaneseq
        %v2029 = vshrl.u32 %v2028, 7
        %v2030 = vsub.s32 %v2027, %v2029
        %v2031 = vrot.slane %v2024, %v2030
        %v2032 = vcombine.low %v2007, %v2015
        %v2033 = vcombine.high %v2007, %v2015
        %v2035 = vunpack.c.l.s4 1934713408
        %v2036 = vunpack.c.0.s8 %v2035
        %v2037 = vlaneseq
        %v2038 = vshrl.u32 %v2037, 7
        %v2039 = vsub.s32 %v2036, %v2038
        %v2040 = vrot.slane %v2032, %v2039
        %v2042 = vunpack.c.l.s4 1934713408
        %v2043 = vunpack.c.0.s8 %v2042
        %v2044 = vlaneseq
        %v2045 = vshrl.u32 %v2044, 7
        %v2046 = vsub.s32 %v2043, %v2045
        %v2047 = vrot.slane %v2033, %v2046
        %v2048 = vcombine.low %v2023, %v2031
        %v2049 = vcombine.high %v2023, %v2031
        %v2051 = vunpack.c.l.s4 1934713408
        %v2052 = vunpack.c.0.s8 %v2051
        %v2053 = vlaneseq
        %v2054 = vshrl.u32 %v2053, 7
        %v2055 = vsub.s32 %v2052, %v2054
        %v2056 = vrot.slane %v2048, %v2055
        %v2058 = vunpack.c.l.s4 1934713408
        %v2059 = vunpack.c.0.s8 %v2058
        %v2060 = vlaneseq
        %v2061 = vshrl.u32 %v2060, 7
        %v2062 = vsub.s32 %v2059, %v2061
        %v2063 = vrot.slane %v2049, %v2062
        %v2064 = vcombine.low %v2040, %v2056
        %v2065 = vcombine.high %v2040, %v2056
        %v2066 = vcombine.low %v2047, %v2063
        %v2067 = vcombine.high %v2047, %v2063
        %v2068 = vcombine.low %v1836, %v1843
        %v2070 = vunpack.c.l.s4 1983009808
        %v2071 = vunpack.c.0.s8 %v2070
        %v2072 = vlaneseq
        %v2073 = vshrl.u32 %v2072, 7
        %v2074 = vsub.s32 %v2071, %v2073
        %v2075 = vrot.slane %v2068, %v2074
        %v2076 = vcombine.low %v1860, %v1861
        %v2078 = vunpack.c.l.s4 1983009808
        %v2079 = vunpack.c.0.s8 %v2078
        %v2080 = vlaneseq
        %v2081 = vshrl.u32 %v2080, 7
        %v2082 = vsub.s32 %v2079, %v2081
        %v2083 = vrot.slane %v2076, %v2082
        %v2084 = vcombine.low %v1852, %v1859
        %v2086 = vunpack.c.l.s4 1983009808
        %v2087 = vunpack.c.0.s8 %v2086
        %v2088 = vlaneseq
        %v2089 = vshrl.u32 %v2088, 7
        %v2090 = vsub.s32 %v2087, %v2089
        %v2091 = vrot.slane %v2084, %v2090
        %v2092 = vcombine.low %v1862, %v1863
        %v2094 = vunpack.c.l.s4 1983009808
        %v2095 = vunpack.c.0.s8 %v2094
        %v2096 = vlaneseq
        %v2097 = vshrl.u32 %v2096, 7
        %v2098 = vsub.s32 %v2095, %v2097
        %v2099 = vrot.slane %v2092, %v2098
        %v2100 = vcombine.low %v2075, %v2083
        %v2101 = vcombine.high %v2075, %v2083
        %v2103 = vunpack.c.l.s4 1934713408
        %v2104 = vunpack.c.0.s8 %v2103
        %v2105 = vlaneseq
        %v2106 = vshrl.u32 %v2105, 7
        %v2107 = vsub.s32 %v2104, %v2106
        %v2108 = vrot.slane %v2100, %v2107
        %v2110 = vunpack.c.l.s4 1934713408
        %v2111 = vunpack.c.0.s8 %v2110
        %v2112 = vlaneseq
        %v2113 = vshrl.u32 %v2112, 7
        %v2114 = vsub.s32 %v2111, %v2113
        %v2115 = vrot.slane %v2101, %v2114
        %v2116 = vcombine.low %v2091, %v2099
        %v2117 = vcombine.high %v2091, %v2099
        %v2119 = vunpack.c.l.s4 1934713408
        %v2120 = vunpack.c.0.s8 %v2119
        %v2121 = vlaneseq
        %v2122 = vshrl.u32 %v2121, 7
        %v2123 = vsub.s32 %v2120, %v2122
        %v2124 = vrot.slane %v2116, %v2123
        %v2126 = vunpack.c.l.s4 1934713408
        %v2127 = vunpack.c.0.s8 %v2126
        %v2128 = vlaneseq
        %v2129 = vshrl.u32 %v2128, 7
        %v2130 = vsub.s32 %v2127, %v2129
        %v2131 = vrot.slane %v2117, %v2130
        %v2132 = vcombine.low %v2108, %v2124
        %v2133 = vcombine.high %v2108, %v2124
        %v2134 = vcombine.low %v2115, %v2131
        %v2135 = vcombine.high %v2115, %v2131
        %v2136 = vcombine.low %v1904, %v1911
        %v2138 = vunpack.c.l.s4 1983009808
        %v2139 = vunpack.c.0.s8 %v2138
        %v2140 = vlaneseq
        %v2141 = vshrl.u32 %v2140, 7
        %v2142 = vsub.s32 %v2139, %v2141
        %v2143 = vrot.slane %v2136, %v2142
        %v2144 = vcombine.low %v1928, %v1929
        %v2146 = vunpack.c.l.s4 1983009808
        %v2147 = vunpack.c.0.s8 %v2146
        %v2148 = vlaneseq
        %v2149 = vshrl.u32 %v2148, 7
        %v2150 = vsub.s32 %v2147, %v2149
        %v2151 = vrot.slane %v2144, %v2150
        %v2152 = vcombine.low %v1920, %v1927
        %v2154 = vunpack.c.l.s4 1983009808
        %v2155 = vunpack.c.0.s8 %v2154
        %v2156 = vlaneseq
        %v2157 = vshrl.u32 %v2156, 7
        %v2158 = vsub.s32 %v2155, %v2157
        %v2159 = vrot.slane %v2152, %v2158
        %v2160 = vcombine.low %v1930, %v1931
        %v2162 = vunpack.c.l.s4 1983009808
        %v2163 = vunpack.c.0.s8 %v2162
        %v2164 = vlaneseq
        %v2165 = vshrl.u32 %v2164, 7
        %v2166 = vsub.s32 %v2163, %v2165
        %v2167 = vrot.slane %v2160, %v2166
        %v2168 = vcombine.low %v2143, %v2151
        %v2169 = vcombine.high %v2143, %v2151
        %v2171 = vunpack.c.l.s4 1934713408
        %v2172 = vunpack.c.0.s8 %v2171
        %v2173 = vlaneseq
        %v2174 = vshrl.u32 %v2173, 7
        %v2175 = vsub.s32 %v2172, %v2174
        %v2176 = vrot.slane %v2168, %v2175
        %v2178 = vunpack.c.l.s4 1934713408
        %v2179 = vunpack.c.0.s8 %v2178
        %v2180 = vlaneseq
        %v2181 = vshrl.u32 %v2180, 7
        %v2182 = vsub.s32 %v2179, %v2181
        %v2183 = vrot.slane %v2169, %v2182
        %v2184 = vcombine.low %v2159, %v2167
        %v2185 = vcombine.high %v2159, %v2167
        %v2187 = vunpack.c.l.s4 1934713408
        %v2188 = vunpack.c.0.s8 %v2187
        %v2189 = vlaneseq
        %v2190 = vshrl.u32 %v2189, 7
        %v2191 = vsub.s32 %v2188, %v2190
        %v2192 = vrot.slane %v2184, %v2191
        %v2194 = vunpack.c.l.s4 1934713408
        %v2195 = vunpack.c.0.s8 %v2194
        %v2196 = vlaneseq
        %v2197 = vshrl.u32 %v2196, 7
        %v2198 = vsub.s32 %v2195, %v2197
        %v2199 = vrot.slane %v2185, %v2198
        %v2200 = vcombine.low %v2176, %v2192
        %v2201 = vcombine.high %v2176, %v2192
        %v2202 = vcombine.low %v2183, %v2199
        %v2203 = vcombine.high %v2183, %v2199
        %v2204 = vcombine.low %v1972, %v1979
        %v2206 = vunpack.c.l.s4 1983009808
        %v2207 = vunpack.c.0.s8 %v2206
        %v2208 = vlaneseq
        %v2209 = vshrl.u32 %v2208, 7
        %v2210 = vsub.s32 %v2207, %v2209
        %v2211 = vrot.slane %v2204, %v2210
        %v2212 = vcombine.low %v1996, %v1997
        %v2214 = vunpack.c.l.s4 1983009808
        %v2215 = vunpack.c.0.s8 %v2214
        %v2216 = vlaneseq
        %v2217 = vshrl.u32 %v2216, 7
        %v2218 = vsub.s32 %v2215, %v2217
        %v2219 = vrot.slane %v2212, %v2218
        %v2220 = vcombine.low %v1988, %v1995
        %v2222 = vunpack.c.l.s4 1983009808
        %v2223 = vunpack.c.0.s8 %v2222
        %v2224 = vlaneseq
        %v2225 = vshrl.u32 %v2224, 7
        %v2226 = vsub.s32 %v2223, %v2225
        %v2227 = vrot.slane %v2220, %v2226
        %v2228 = vcombine.low %v1998, %v1999
        %v2230 = vunpack.c.l.s4 1983009808
        %v2231 = vunpack.c.0.s8 %v2230
        %v2232 = vlaneseq
        %v2233 = vshrl.u32 %v2232, 7
        %v2234 = vsub.s32 %v2231, %v2233
        %v2235 = vrot.slane %v2228, %v2234
        %v2236 = vcombine.low %v2211, %v2219
        %v2237 = vcombine.high %v2211, %v2219
        %v2239 = vunpack.c.l.s4 1934713408
        %v2240 = vunpack.c.0.s8 %v2239
        %v2241 = vlaneseq
        %v2242 = vshrl.u32 %v2241, 7
        %v2243 = vsub.s32 %v2240, %v2242
        %v2244 = vrot.slane %v2236, %v2243
        %v2246 = vunpack.c.l.s4 1934713408
        %v2247 = vunpack.c.0.s8 %v2246
        %v2248 = vlaneseq
        %v2249 = vshrl.u32 %v2248, 7
        %v2250 = vsub.s32 %v2247, %v2249
        %v2251 = vrot.slane %v2237, %v2250
        %v2252 = vcombine.low %v2227, %v2235
        %v2253 = vcombine.high %v2227, %v2235
        %v2255 = vunpack.c.l.s4 1934713408
        %v2256 = vunpack.c.0.s8 %v2255
        %v2257 = vlaneseq
        %v2258 = vshrl.u32 %v2257, 7
        %v2259 = vsub.s32 %v2256, %v2258
        %v2260 = vrot.slane %v2252, %v2259
        %v2262 = vunpack.c.l.s4 1934713408
        %v2263 = vunpack.c.0.s8 %v2262
        %v2264 = vlaneseq
        %v2265 = vshrl.u32 %v2264, 7
        %v2266 = vsub.s32 %v2263, %v2265
        %v2267 = vrot.slane %v2253, %v2266
        %v2268 = vcombine.low %v2244, %v2260
        %v2269 = vcombine.high %v2244, %v2260
        %v2270 = vcombine.low %v2251, %v2267
        %v2271 = vcombine.high %v2251, %v2267
        %v2272 = vpack.c.bf16 %v2132, %v2064
        %v2273 = vpack.c.bf16 %v2133, %v2065
        %v2274 = vpack.c.bf16 %v2134, %v2066
        %v2275 = vpack.c.bf16 %v2135, %v2067
        %v2276 = vpack.c.bf16 %v2268, %v2200
        %v2277 = vpack.c.bf16 %v2269, %v2201
        %v2278 = vpack.c.bf16 %v2270, %v2202
        %v2279 = vpack.c.bf16 %v2271, %v2203
        %2284 = vrot.lane.b32.xlu0 %v1082, 96
        %v2285 = vpop.permute.xlu0 %2284
        %2286 = vrot.lane.b32.xlu0 %v1085, 96
        %v2287 = vpop.permute.xlu0 %2286
        %2288 = vrot.lane.b32.xlu0 %v1090, 96
        %v2289 = vpop.permute.xlu0 %2288
        %2290 = vrot.lane.b32.xlu0 %v1093, 96
        %v2291 = vpop.permute.xlu0 %2290
        %2296 = vrot.lane.b32.xlu0 %v1082, 64
        %v2297 = vpop.permute.xlu0 %2296
        %2298 = vrot.lane.b32.xlu0 %v1085, 64
        %v2299 = vpop.permute.xlu0 %2298
        %2300 = vrot.lane.b32.xlu0 %v1090, 64
        %v2301 = vpop.permute.xlu0 %2300
        %2302 = vrot.lane.b32.xlu0 %v1093, 64
        %v2303 = vpop.permute.xlu0 %2302
        %2308 = vrot.lane.b32.xlu0 %v1082, 32
        %v2309 = vpop.permute.xlu0 %2308
        %2310 = vrot.lane.b32.xlu0 %v1085, 32
        %v2311 = vpop.permute.xlu0 %2310
        %2312 = vrot.lane.b32.xlu0 %v1090, 32
        %v2313 = vpop.permute.xlu0 %2312
        %2314 = vrot.lane.b32.xlu0 %v1093, 32
        %v2315 = vpop.permute.xlu0 %2314
        %v2320 = vcombine.low %v1082, %v2297
        %v2321 = vcombine.high %v1082, %v2297
        %v2323 = vunpack.c.l.s4 1983009808
        %v2324 = vunpack.c.0.s8 %v2323
        %v2325 = vlaneseq
        %v2326 = vshrl.u32 %v2325, 7
        %v2327 = vsub.s32 %v2324, %v2326
        %v2328 = vrot.slane %v2320, %v2327
        %v2330 = vunpack.c.l.s4 1983009808
        %v2331 = vunpack.c.0.s8 %v2330
        %v2332 = vlaneseq
        %v2333 = vshrl.u32 %v2332, 7
        %v2334 = vsub.s32 %v2331, %v2333
        %v2335 = vrot.slane %v2321, %v2334
        %v2336 = vcombine.low %v2285, %v2309
        %v2337 = vcombine.high %v2285, %v2309
        %v2339 = vunpack.c.l.s4 1983009808
        %v2340 = vunpack.c.0.s8 %v2339
        %v2341 = vlaneseq
        %v2342 = vshrl.u32 %v2341, 7
        %v2343 = vsub.s32 %v2340, %v2342
        %v2344 = vrot.slane %v2336, %v2343
        %v2346 = vunpack.c.l.s4 1983009808
        %v2347 = vunpack.c.0.s8 %v2346
        %v2348 = vlaneseq
        %v2349 = vshrl.u32 %v2348, 7
        %v2350 = vsub.s32 %v2347, %v2349
        %v2351 = vrot.slane %v2337, %v2350
        %v2352 = vcombine.low %v2328, %v2344
        %v2353 = vcombine.high %v2328, %v2344
        %v2355 = vunpack.c.l.s4 1934713408
        %v2356 = vunpack.c.0.s8 %v2355
        %v2357 = vlaneseq
        %v2358 = vshrl.u32 %v2357, 7
        %v2359 = vsub.s32 %v2356, %v2358
        %v2360 = vrot.slane %v2352, %v2359
        %v2362 = vunpack.c.l.s4 1934713408
        %v2363 = vunpack.c.0.s8 %v2362
        %v2364 = vlaneseq
        %v2365 = vshrl.u32 %v2364, 7
        %v2366 = vsub.s32 %v2363, %v2365
        %v2367 = vrot.slane %v2353, %v2366
        %v2368 = vcombine.low %v2335, %v2351
        %v2369 = vcombine.high %v2335, %v2351
        %v2371 = vunpack.c.l.s4 1934713408
        %v2372 = vunpack.c.0.s8 %v2371
        %v2373 = vlaneseq
        %v2374 = vshrl.u32 %v2373, 7
        %v2375 = vsub.s32 %v2372, %v2374
        %v2376 = vrot.slane %v2368, %v2375
        %v2378 = vunpack.c.l.s4 1934713408
        %v2379 = vunpack.c.0.s8 %v2378
        %v2380 = vlaneseq
        %v2381 = vshrl.u32 %v2380, 7
        %v2382 = vsub.s32 %v2379, %v2381
        %v2383 = vrot.slane %v2369, %v2382
        %v2384 = vcombine.high %v2360, 0.0
        %v2385 = vcombine.high %v2367, 0.0
        %v2386 = vcombine.high %v2376, 0.0
        %v2387 = vcombine.high %v2383, 0.0
        %v2388 = vcombine.low %v1085, %v2299
        %v2389 = vcombine.high %v1085, %v2299
        %v2391 = vunpack.c.l.s4 1983009808
        %v2392 = vunpack.c.0.s8 %v2391
        %v2393 = vlaneseq
        %v2394 = vshrl.u32 %v2393, 7
        %v2395 = vsub.s32 %v2392, %v2394
        %v2396 = vrot.slane %v2388, %v2395
        %v2398 = vunpack.c.l.s4 1983009808
        %v2399 = vunpack.c.0.s8 %v2398
        %v2400 = vlaneseq
        %v2401 = vshrl.u32 %v2400, 7
        %v2402 = vsub.s32 %v2399, %v2401
        %v2403 = vrot.slane %v2389, %v2402
        %v2404 = vcombine.low %v2287, %v2311
        %v2405 = vcombine.high %v2287, %v2311
        %v2407 = vunpack.c.l.s4 1983009808
        %v2408 = vunpack.c.0.s8 %v2407
        %v2409 = vlaneseq
        %v2410 = vshrl.u32 %v2409, 7
        %v2411 = vsub.s32 %v2408, %v2410
        %v2412 = vrot.slane %v2404, %v2411
        %v2414 = vunpack.c.l.s4 1983009808
        %v2415 = vunpack.c.0.s8 %v2414
        %v2416 = vlaneseq
        %v2417 = vshrl.u32 %v2416, 7
        %v2418 = vsub.s32 %v2415, %v2417
        %v2419 = vrot.slane %v2405, %v2418
        %v2420 = vcombine.low %v2396, %v2412
        %v2421 = vcombine.high %v2396, %v2412
        %v2423 = vunpack.c.l.s4 1934713408
        %v2424 = vunpack.c.0.s8 %v2423
        %v2425 = vlaneseq
        %v2426 = vshrl.u32 %v2425, 7
        %v2427 = vsub.s32 %v2424, %v2426
        %v2428 = vrot.slane %v2420, %v2427
        %v2430 = vunpack.c.l.s4 1934713408
        %v2431 = vunpack.c.0.s8 %v2430
        %v2432 = vlaneseq
        %v2433 = vshrl.u32 %v2432, 7
        %v2434 = vsub.s32 %v2431, %v2433
        %v2435 = vrot.slane %v2421, %v2434
        %v2436 = vcombine.low %v2403, %v2419
        %v2437 = vcombine.high %v2403, %v2419
        %v2439 = vunpack.c.l.s4 1934713408
        %v2440 = vunpack.c.0.s8 %v2439
        %v2441 = vlaneseq
        %v2442 = vshrl.u32 %v2441, 7
        %v2443 = vsub.s32 %v2440, %v2442
        %v2444 = vrot.slane %v2436, %v2443
        %v2446 = vunpack.c.l.s4 1934713408
        %v2447 = vunpack.c.0.s8 %v2446
        %v2448 = vlaneseq
        %v2449 = vshrl.u32 %v2448, 7
        %v2450 = vsub.s32 %v2447, %v2449
        %v2451 = vrot.slane %v2437, %v2450
        %v2452 = vcombine.high %v2428, 0.0
        %v2453 = vcombine.high %v2435, 0.0
        %v2454 = vcombine.high %v2444, 0.0
        %v2455 = vcombine.high %v2451, 0.0
        %v2456 = vcombine.low %v1090, %v2301
        %v2457 = vcombine.high %v1090, %v2301
        %v2459 = vunpack.c.l.s4 1983009808
        %v2460 = vunpack.c.0.s8 %v2459
        %v2461 = vlaneseq
        %v2462 = vshrl.u32 %v2461, 7
        %v2463 = vsub.s32 %v2460, %v2462
        %v2464 = vrot.slane %v2456, %v2463
        %v2466 = vunpack.c.l.s4 1983009808
        %v2467 = vunpack.c.0.s8 %v2466
        %v2468 = vlaneseq
        %v2469 = vshrl.u32 %v2468, 7
        %v2470 = vsub.s32 %v2467, %v2469
        %v2471 = vrot.slane %v2457, %v2470
        %v2472 = vcombine.low %v2289, %v2313
        %v2473 = vcombine.high %v2289, %v2313
        %v2475 = vunpack.c.l.s4 1983009808
        %v2476 = vunpack.c.0.s8 %v2475
        %v2477 = vlaneseq
        %v2478 = vshrl.u32 %v2477, 7
        %v2479 = vsub.s32 %v2476, %v2478
        %v2480 = vrot.slane %v2472, %v2479
        %v2482 = vunpack.c.l.s4 1983009808
        %v2483 = vunpack.c.0.s8 %v2482
        %v2484 = vlaneseq
        %v2485 = vshrl.u32 %v2484, 7
        %v2486 = vsub.s32 %v2483, %v2485
        %v2487 = vrot.slane %v2473, %v2486
        %v2488 = vcombine.low %v2464, %v2480
        %v2489 = vcombine.high %v2464, %v2480
        %v2491 = vunpack.c.l.s4 1934713408
        %v2492 = vunpack.c.0.s8 %v2491
        %v2493 = vlaneseq
        %v2494 = vshrl.u32 %v2493, 7
        %v2495 = vsub.s32 %v2492, %v2494
        %v2496 = vrot.slane %v2488, %v2495
        %v2498 = vunpack.c.l.s4 1934713408
        %v2499 = vunpack.c.0.s8 %v2498
        %v2500 = vlaneseq
        %v2501 = vshrl.u32 %v2500, 7
        %v2502 = vsub.s32 %v2499, %v2501
        %v2503 = vrot.slane %v2489, %v2502
        %v2504 = vcombine.low %v2471, %v2487
        %v2505 = vcombine.high %v2471, %v2487
        %v2507 = vunpack.c.l.s4 1934713408
        %v2508 = vunpack.c.0.s8 %v2507
        %v2509 = vlaneseq
        %v2510 = vshrl.u32 %v2509, 7
        %v2511 = vsub.s32 %v2508, %v2510
        %v2512 = vrot.slane %v2504, %v2511
        %v2514 = vunpack.c.l.s4 1934713408
        %v2515 = vunpack.c.0.s8 %v2514
        %v2516 = vlaneseq
        %v2517 = vshrl.u32 %v2516, 7
        %v2518 = vsub.s32 %v2515, %v2517
        %v2519 = vrot.slane %v2505, %v2518
        %v2520 = vcombine.high %v2496, 0.0
        %v2521 = vcombine.high %v2503, 0.0
        %v2522 = vcombine.high %v2512, 0.0
        %v2523 = vcombine.high %v2519, 0.0
        %v2524 = vcombine.low %v1093, %v2303
        %v2525 = vcombine.high %v1093, %v2303
        %v2527 = vunpack.c.l.s4 1983009808
        %v2528 = vunpack.c.0.s8 %v2527
        %v2529 = vlaneseq
        %v2530 = vshrl.u32 %v2529, 7
        %v2531 = vsub.s32 %v2528, %v2530
        %v2532 = vrot.slane %v2524, %v2531
        %v2534 = vunpack.c.l.s4 1983009808
        %v2535 = vunpack.c.0.s8 %v2534
        %v2536 = vlaneseq
        %v2537 = vshrl.u32 %v2536, 7
        %v2538 = vsub.s32 %v2535, %v2537
        %v2539 = vrot.slane %v2525, %v2538
        %v2540 = vcombine.low %v2291, %v2315
        %v2541 = vcombine.high %v2291, %v2315
        %v2543 = vunpack.c.l.s4 1983009808
        %v2544 = vunpack.c.0.s8 %v2543
        %v2545 = vlaneseq
        %v2546 = vshrl.u32 %v2545, 7
        %v2547 = vsub.s32 %v2544, %v2546
        %v2548 = vrot.slane %v2540, %v2547
        %v2550 = vunpack.c.l.s4 1983009808
        %v2551 = vunpack.c.0.s8 %v2550
        %v2552 = vlaneseq
        %v2553 = vshrl.u32 %v2552, 7
        %v2554 = vsub.s32 %v2551, %v2553
        %v2555 = vrot.slane %v2541, %v2554
        %v2556 = vcombine.low %v2532, %v2548
        %v2557 = vcombine.high %v2532, %v2548
        %v2559 = vunpack.c.l.s4 1934713408
        %v2560 = vunpack.c.0.s8 %v2559
        %v2561 = vlaneseq
        %v2562 = vshrl.u32 %v2561, 7
        %v2563 = vsub.s32 %v2560, %v2562
        %v2564 = vrot.slane %v2556, %v2563
        %v2566 = vunpack.c.l.s4 1934713408
        %v2567 = vunpack.c.0.s8 %v2566
        %v2568 = vlaneseq
        %v2569 = vshrl.u32 %v2568, 7
        %v2570 = vsub.s32 %v2567, %v2569
        %v2571 = vrot.slane %v2557, %v2570
        %v2572 = vcombine.low %v2539, %v2555
        %v2573 = vcombine.high %v2539, %v2555
        %v2575 = vunpack.c.l.s4 1934713408
        %v2576 = vunpack.c.0.s8 %v2575
        %v2577 = vlaneseq
        %v2578 = vshrl.u32 %v2577, 7
        %v2579 = vsub.s32 %v2576, %v2578
        %v2580 = vrot.slane %v2572, %v2579
        %v2582 = vunpack.c.l.s4 1934713408
        %v2583 = vunpack.c.0.s8 %v2582
        %v2584 = vlaneseq
        %v2585 = vshrl.u32 %v2584, 7
        %v2586 = vsub.s32 %v2583, %v2585
        %v2587 = vrot.slane %v2573, %v2586
        %v2588 = vcombine.high %v2564, 0.0
        %v2589 = vcombine.high %v2571, 0.0
        %v2590 = vcombine.high %v2580, 0.0
        %v2591 = vcombine.high %v2587, 0.0
        %v2592 = vcombine.low %v2360, %v2367
        %v2594 = vunpack.c.l.s4 1983009808
        %v2595 = vunpack.c.0.s8 %v2594
        %v2596 = vlaneseq
        %v2597 = vshrl.u32 %v2596, 7
        %v2598 = vsub.s32 %v2595, %v2597
        %v2599 = vrot.slane %v2592, %v2598
        %v2600 = vcombine.low %v2384, %v2385
        %v2602 = vunpack.c.l.s4 1983009808
        %v2603 = vunpack.c.0.s8 %v2602
        %v2604 = vlaneseq
        %v2605 = vshrl.u32 %v2604, 7
        %v2606 = vsub.s32 %v2603, %v2605
        %v2607 = vrot.slane %v2600, %v2606
        %v2608 = vcombine.low %v2376, %v2383
        %v2610 = vunpack.c.l.s4 1983009808
        %v2611 = vunpack.c.0.s8 %v2610
        %v2612 = vlaneseq
        %v2613 = vshrl.u32 %v2612, 7
        %v2614 = vsub.s32 %v2611, %v2613
        %v2615 = vrot.slane %v2608, %v2614
        %v2616 = vcombine.low %v2386, %v2387
        %v2618 = vunpack.c.l.s4 1983009808
        %v2619 = vunpack.c.0.s8 %v2618
        %v2620 = vlaneseq
        %v2621 = vshrl.u32 %v2620, 7
        %v2622 = vsub.s32 %v2619, %v2621
        %v2623 = vrot.slane %v2616, %v2622
        %v2624 = vcombine.low %v2599, %v2607
        %v2625 = vcombine.high %v2599, %v2607
        %v2627 = vunpack.c.l.s4 1934713408
        %v2628 = vunpack.c.0.s8 %v2627
        %v2629 = vlaneseq
        %v2630 = vshrl.u32 %v2629, 7
        %v2631 = vsub.s32 %v2628, %v2630
        %v2632 = vrot.slane %v2624, %v2631
        %v2634 = vunpack.c.l.s4 1934713408
        %v2635 = vunpack.c.0.s8 %v2634
        %v2636 = vlaneseq
        %v2637 = vshrl.u32 %v2636, 7
        %v2638 = vsub.s32 %v2635, %v2637
        %v2639 = vrot.slane %v2625, %v2638
        %v2640 = vcombine.low %v2615, %v2623
        %v2641 = vcombine.high %v2615, %v2623
        %v2643 = vunpack.c.l.s4 1934713408
        %v2644 = vunpack.c.0.s8 %v2643
        %v2645 = vlaneseq
        %v2646 = vshrl.u32 %v2645, 7
        %v2647 = vsub.s32 %v2644, %v2646
        %v2648 = vrot.slane %v2640, %v2647
        %v2650 = vunpack.c.l.s4 1934713408
        %v2651 = vunpack.c.0.s8 %v2650
        %v2652 = vlaneseq
        %v2653 = vshrl.u32 %v2652, 7
        %v2654 = vsub.s32 %v2651, %v2653
        %v2655 = vrot.slane %v2641, %v2654
        %v2656 = vcombine.low %v2632, %v2648
        %v2657 = vcombine.high %v2632, %v2648
        %v2658 = vcombine.low %v2639, %v2655
        %v2659 = vcombine.high %v2639, %v2655
        %v2660 = vcombine.low %v2428, %v2435
        %v2662 = vunpack.c.l.s4 1983009808
        %v2663 = vunpack.c.0.s8 %v2662
        %v2664 = vlaneseq
        %v2665 = vshrl.u32 %v2664, 7
        %v2666 = vsub.s32 %v2663, %v2665
        %v2667 = vrot.slane %v2660, %v2666
        %v2668 = vcombine.low %v2452, %v2453
        %v2670 = vunpack.c.l.s4 1983009808
        %v2671 = vunpack.c.0.s8 %v2670
        %v2672 = vlaneseq
        %v2673 = vshrl.u32 %v2672, 7
        %v2674 = vsub.s32 %v2671, %v2673
        %v2675 = vrot.slane %v2668, %v2674
        %v2676 = vcombine.low %v2444, %v2451
        %v2678 = vunpack.c.l.s4 1983009808
        %v2679 = vunpack.c.0.s8 %v2678
        %v2680 = vlaneseq
        %v2681 = vshrl.u32 %v2680, 7
        %v2682 = vsub.s32 %v2679, %v2681
        %v2683 = vrot.slane %v2676, %v2682
        %v2684 = vcombine.low %v2454, %v2455
        %v2686 = vunpack.c.l.s4 1983009808
        %v2687 = vunpack.c.0.s8 %v2686
        %v2688 = vlaneseq
        %v2689 = vshrl.u32 %v2688, 7
        %v2690 = vsub.s32 %v2687, %v2689
        %v2691 = vrot.slane %v2684, %v2690
        %v2692 = vcombine.low %v2667, %v2675
        %v2693 = vcombine.high %v2667, %v2675
        %v2695 = vunpack.c.l.s4 1934713408
        %v2696 = vunpack.c.0.s8 %v2695
        %v2697 = vlaneseq
        %v2698 = vshrl.u32 %v2697, 7
        %v2699 = vsub.s32 %v2696, %v2698
        %v2700 = vrot.slane %v2692, %v2699
        %v2702 = vunpack.c.l.s4 1934713408
        %v2703 = vunpack.c.0.s8 %v2702
        %v2704 = vlaneseq
        %v2705 = vshrl.u32 %v2704, 7
        %v2706 = vsub.s32 %v2703, %v2705
        %v2707 = vrot.slane %v2693, %v2706
        %v2708 = vcombine.low %v2683, %v2691
        %v2709 = vcombine.high %v2683, %v2691
        %v2711 = vunpack.c.l.s4 1934713408
        %v2712 = vunpack.c.0.s8 %v2711
        %v2713 = vlaneseq
        %v2714 = vshrl.u32 %v2713, 7
        %v2715 = vsub.s32 %v2712, %v2714
        %v2716 = vrot.slane %v2708, %v2715
        %v2718 = vunpack.c.l.s4 1934713408
        %v2719 = vunpack.c.0.s8 %v2718
        %v2720 = vlaneseq
        %v2721 = vshrl.u32 %v2720, 7
        %v2722 = vsub.s32 %v2719, %v2721
        %v2723 = vrot.slane %v2709, %v2722
        %v2724 = vcombine.low %v2700, %v2716
        %v2725 = vcombine.high %v2700, %v2716
        %v2726 = vcombine.low %v2707, %v2723
        %v2727 = vcombine.high %v2707, %v2723
        %v2728 = vcombine.low %v2496, %v2503
        %v2730 = vunpack.c.l.s4 1983009808
        %v2731 = vunpack.c.0.s8 %v2730
        %v2732 = vlaneseq
        %v2733 = vshrl.u32 %v2732, 7
        %v2734 = vsub.s32 %v2731, %v2733
        %v2735 = vrot.slane %v2728, %v2734
        %v2736 = vcombine.low %v2520, %v2521
        %v2738 = vunpack.c.l.s4 1983009808
        %v2739 = vunpack.c.0.s8 %v2738
        %v2740 = vlaneseq
        %v2741 = vshrl.u32 %v2740, 7
        %v2742 = vsub.s32 %v2739, %v2741
        %v2743 = vrot.slane %v2736, %v2742
        %v2744 = vcombine.low %v2512, %v2519
        %v2746 = vunpack.c.l.s4 1983009808
        %v2747 = vunpack.c.0.s8 %v2746
        %v2748 = vlaneseq
        %v2749 = vshrl.u32 %v2748, 7
        %v2750 = vsub.s32 %v2747, %v2749
        %v2751 = vrot.slane %v2744, %v2750
        %v2752 = vcombine.low %v2522, %v2523
        %v2754 = vunpack.c.l.s4 1983009808
        %v2755 = vunpack.c.0.s8 %v2754
        %v2756 = vlaneseq
        %v2757 = vshrl.u32 %v2756, 7
        %v2758 = vsub.s32 %v2755, %v2757
        %v2759 = vrot.slane %v2752, %v2758
        %v2760 = vcombine.low %v2735, %v2743
        %v2761 = vcombine.high %v2735, %v2743
        %v2763 = vunpack.c.l.s4 1934713408
        %v2764 = vunpack.c.0.s8 %v2763
        %v2765 = vlaneseq
        %v2766 = vshrl.u32 %v2765, 7
        %v2767 = vsub.s32 %v2764, %v2766
        %v2768 = vrot.slane %v2760, %v2767
        %v2770 = vunpack.c.l.s4 1934713408
        %v2771 = vunpack.c.0.s8 %v2770
        %v2772 = vlaneseq
        %v2773 = vshrl.u32 %v2772, 7
        %v2774 = vsub.s32 %v2771, %v2773
        %v2775 = vrot.slane %v2761, %v2774
        %v2776 = vcombine.low %v2751, %v2759
        %v2777 = vcombine.high %v2751, %v2759
        %v2779 = vunpack.c.l.s4 1934713408
        %v2780 = vunpack.c.0.s8 %v2779
        %v2781 = vlaneseq
        %v2782 = vshrl.u32 %v2781, 7
        %v2783 = vsub.s32 %v2780, %v2782
        %v2784 = vrot.slane %v2776, %v2783
        %v2786 = vunpack.c.l.s4 1934713408
        %v2787 = vunpack.c.0.s8 %v2786
        %v2788 = vlaneseq
        %v2789 = vshrl.u32 %v2788, 7
        %v2790 = vsub.s32 %v2787, %v2789
        %v2791 = vrot.slane %v2777, %v2790
        %v2792 = vcombine.low %v2768, %v2784
        %v2793 = vcombine.high %v2768, %v2784
        %v2794 = vcombine.low %v2775, %v2791
        %v2795 = vcombine.high %v2775, %v2791
        %v2796 = vcombine.low %v2564, %v2571
        %v2798 = vunpack.c.l.s4 1983009808
        %v2799 = vunpack.c.0.s8 %v2798
        %v2800 = vlaneseq
        %v2801 = vshrl.u32 %v2800, 7
        %v2802 = vsub.s32 %v2799, %v2801
        %v2803 = vrot.slane %v2796, %v2802
        %v2804 = vcombine.low %v2588, %v2589
        %v2806 = vunpack.c.l.s4 1983009808
        %v2807 = vunpack.c.0.s8 %v2806
        %v2808 = vlaneseq
        %v2809 = vshrl.u32 %v2808, 7
        %v2810 = vsub.s32 %v2807, %v2809
        %v2811 = vrot.slane %v2804, %v2810
        %v2812 = vcombine.low %v2580, %v2587
        %v2814 = vunpack.c.l.s4 1983009808
        %v2815 = vunpack.c.0.s8 %v2814
        %v2816 = vlaneseq
        %v2817 = vshrl.u32 %v2816, 7
        %v2818 = vsub.s32 %v2815, %v2817
        %v2819 = vrot.slane %v2812, %v2818
        %v2820 = vcombine.low %v2590, %v2591
        %v2822 = vunpack.c.l.s4 1983009808
        %v2823 = vunpack.c.0.s8 %v2822
        %v2824 = vlaneseq
        %v2825 = vshrl.u32 %v2824, 7
        %v2826 = vsub.s32 %v2823, %v2825
        %v2827 = vrot.slane %v2820, %v2826
        %v2828 = vcombine.low %v2803, %v2811
        %v2829 = vcombine.high %v2803, %v2811
        %v2831 = vunpack.c.l.s4 1934713408
        %v2832 = vunpack.c.0.s8 %v2831
        %v2833 = vlaneseq
        %v2834 = vshrl.u32 %v2833, 7
        %v2835 = vsub.s32 %v2832, %v2834
        %v2836 = vrot.slane %v2828, %v2835
        %v2838 = vunpack.c.l.s4 1934713408
        %v2839 = vunpack.c.0.s8 %v2838
        %v2840 = vlaneseq
        %v2841 = vshrl.u32 %v2840, 7
        %v2842 = vsub.s32 %v2839, %v2841
        %v2843 = vrot.slane %v2829, %v2842
        %v2844 = vcombine.low %v2819, %v2827
        %v2845 = vcombine.high %v2819, %v2827
        %v2847 = vunpack.c.l.s4 1934713408
        %v2848 = vunpack.c.0.s8 %v2847
        %v2849 = vlaneseq
        %v2850 = vshrl.u32 %v2849, 7
        %v2851 = vsub.s32 %v2848, %v2850
        %v2852 = vrot.slane %v2844, %v2851
        %v2854 = vunpack.c.l.s4 1934713408
        %v2855 = vunpack.c.0.s8 %v2854
        %v2856 = vlaneseq
        %v2857 = vshrl.u32 %v2856, 7
        %v2858 = vsub.s32 %v2855, %v2857
        %v2859 = vrot.slane %v2845, %v2858
        %v2860 = vcombine.low %v2836, %v2852
        %v2861 = vcombine.high %v2836, %v2852
        %v2862 = vcombine.low %v2843, %v2859
        %v2863 = vcombine.high %v2843, %v2859
        %v2864 = vpack.c.bf16 %v2724, %v2656
        %v2865 = vpack.c.bf16 %v2725, %v2657
        %v2866 = vpack.c.bf16 %v2726, %v2658
        %v2867 = vpack.c.bf16 %v2727, %v2659
        %v2868 = vpack.c.bf16 %v2860, %v2792
        %v2869 = vpack.c.bf16 %v2861, %v2793
        %v2870 = vpack.c.bf16 %v2862, %v2794
        %v2871 = vpack.c.bf16 %v2863, %v2795
        %v2872 = vlaneseq
        %v2873 = vshrl.u32 %v2872, 7
        %v2874 = vadd.s32 %v2873, 8
        %v2875 = vlaneseq
        %v2876 = vand.u32 %v2875, 127
        %vm2877 = vcmp.lt.s32.totalorder %v2876, 8
        %vm2878 = vcmp.ge.s32.totalorder %v2873, 8
        %vm2879 = vcmp.ge.s32.totalorder %v2874, 8
        %vm2880 = vcmp.le.s32.totalorder %v2876, %v2873
        %vm2881 = vcmp.le.s32.totalorder %v2876, %v2874
        %vm2882 = vmand %vm2878, %vm2880
        %vm2883 = vmand %vm2879, %vm2881
        %vm2884 = vmor %vm2877, %vm2882
        %vm2885 = vmor %vm2877, %vm2883
        %v2886 = vsel %vm2884, 1.0, 0.0
        %v2887 = vsel %vm2885, 1.0, 0.0
        %v2888 = vld [vmem:[%s640] sm:$0x1]
        %v2889 = vld [vmem:[%s640 + $0x1] sm:$0x1]
        %v2892 = vlaneseq
        %v2893 = vshrl.u32 %v2892, 7
        %v2894 = vsub.s32 0, %v2893
        %v2895 = vrot.slane %v2888, %v2894
        %v2896 = vlaneseq
        %v2897 = vshrl.u32 %v2896, 7
        %v2898 = vsub.s32 0, %v2897
        %v2899 = vrot.slane %v2889, %v2898
        %v2902 = vmul.f32 %v2886, %v2895
        %v2903 = vmul.f32 %v2887, %v2895
        %v2904 = vmul.f32 %v2886, %v2899
        %v2905 = vmul.f32 %v2887, %v2899
        %v2906 = vsub.f32 1.0, %v2902
        %v2907 = vsub.f32 1.0, %v2903
        %v2908 = vsub.f32 1.0, %v2904
        %v2909 = vsub.f32 1.0, %v2905
        %v2910 = vmul.f32 %v2906, -10000.0
        %v2911 = vmul.f32 %v2907, -10000.0
        %v2912 = vmul.f32 %v2908, -10000.0
        %v2913 = vmul.f32 %v2909, -10000.0
        %vm2914 = vcmask 261120
        %v2916 = vsel %vm2914, %v1680, 0
        %v2919 = vsel %vm2914, %v2272, 0
        %2921 = vmatprep.subr.bf16.mxu0 0
        %2922 = vmatpush1.bf16.xpose.msra.mxu0 %v2919
        %2923 = vmatprep.subr.bf16.mxu0 0
        %2924 = vmatpush1.bf16.xpose.msra.mxu0 0
        %2925 = vmatprep.subr.bf16.mxu0 0
        %2926 = vmatpush1.bf16.xpose.msra.mxu0 0
        %2927 = vmatprep.subr.bf16.mxu0 0
        %2928 = vmatpush1.bf16.xpose.msra.mxu0 0
        %2929 = vmatprep.subr.bf16.mxu0 0
        %2930 = vmatpush1.bf16.xpose.msra.mxu0 0
        %2931 = vmatprep.subr.bf16.mxu0 0
        %2932 = vmatpush1.bf16.xpose.msra.mxu0 0
        %2933 = vmatprep.subr.bf16.mxu0 0
        %2934 = vmatpush1.bf16.xpose.msra.mxu0 0
        %2935 = vmatprep.subr.bf16.mxu0 0
        %2936 = vmatpush1.bf16.xpose.msra.mxu0 0
        %2937 = vmatprep.subr.bf16.mxu0 0
        %2938 = vmatpush1.bf16.xpose.msra.mxu0 0
        %2939 = vmatprep.subr.bf16.mxu0 0
        %2940 = vmatpush1.bf16.xpose.msra.mxu0 0
        %2941 = vmatprep.subr.bf16.mxu0 0
        %2942 = vmatpush1.bf16.xpose.msra.mxu0 0
        %2943 = vmatprep.subr.bf16.mxu0 0
        %2944 = vmatpush1.bf16.xpose.msra.mxu0 0
        %2945 = vmatprep.subr.bf16.mxu0 0
        %2946 = vmatpush1.bf16.xpose.msra.mxu0 0
        %2947 = vmatprep.subr.bf16.mxu0 0
        %2948 = vmatpush1.bf16.xpose.msra.mxu0 0
        %2949 = vmatprep.subr.bf16.mxu0 0
        %2950 = vmatpush1.bf16.xpose.msra.mxu0 0
        %2951 = vmatprep.subr.bf16.mxu0 0
        %2952 = vmatpush1.bf16.xpose.msra.mxu0 0
        %2953 = vmatprep.mubr.bf16.mxu0 0
        %2954 = vmatmul.mubr.bf16.gmra.mrb[0].mxu0 %v2916
        %v2955 = vpop.f32.mrb[0].mxu0
        %v2956 = vadd.f32 0.0, %v2955
        %v2957 = vpop.f32.mrb[0].mxu0
        %v2958 = vpop.f32.mrb[0].mxu0
        %v2959 = vadd.f32 0.0, %v2958
        %v2960 = vpop.f32.mrb[0].mxu0
        %2961 = vdwg.mxu0
        %v2963 = vsel %vm2914, %v1681, 0
        %v2966 = vsel %vm2914, %v2273, 0
        %2968 = vmatprep.subr.bf16.mxu0 0
        %2969 = vmatpush1.bf16.xpose.msra.mxu0 %v2966
        %2970 = vmatprep.subr.bf16.mxu0 0
        %2971 = vmatpush1.bf16.xpose.msra.mxu0 0
        %2972 = vmatprep.subr.bf16.mxu0 0
        %2973 = vmatpush1.bf16.xpose.msra.mxu0 0
        %2974 = vmatprep.subr.bf16.mxu0 0
        %2975 = vmatpush1.bf16.xpose.msra.mxu0 0
        %2976 = vmatprep.subr.bf16.mxu0 0
        %2977 = vmatpush1.bf16.xpose.msra.mxu0 0
        %2978 = vmatprep.subr.bf16.mxu0 0
        %2979 = vmatpush1.bf16.xpose.msra.mxu0 0
        %2980 = vmatprep.subr.bf16.mxu0 0
        %2981 = vmatpush1.bf16.xpose.msra.mxu0 0
        %2982 = vmatprep.subr.bf16.mxu0 0
        %2983 = vmatpush1.bf16.xpose.msra.mxu0 0
        %2984 = vmatprep.subr.bf16.mxu0 0
        %2985 = vmatpush1.bf16.xpose.msra.mxu0 0
        %2986 = vmatprep.subr.bf16.mxu0 0
        %2987 = vmatpush1.bf16.xpose.msra.mxu0 0
        %2988 = vmatprep.subr.bf16.mxu0 0
        %2989 = vmatpush1.bf16.xpose.msra.mxu0 0
        %2990 = vmatprep.subr.bf16.mxu0 0
        %2991 = vmatpush1.bf16.xpose.msra.mxu0 0
        %2992 = vmatprep.subr.bf16.mxu0 0
        %2993 = vmatpush1.bf16.xpose.msra.mxu0 0
        %2994 = vmatprep.subr.bf16.mxu0 0
        %2995 = vmatpush1.bf16.xpose.msra.mxu0 0
        %2996 = vmatprep.subr.bf16.mxu0 0
        %2997 = vmatpush1.bf16.xpose.msra.mxu0 0
        %2998 = vmatprep.subr.bf16.mxu0 0
        %2999 = vmatpush1.bf16.xpose.msra.mxu0 0
        %3000 = vmatprep.mubr.bf16.mxu0 0
        %3001 = vmatmul.mubr.bf16.gmra.mrb[0].mxu0 %v2963
        %v3002 = vpop.f32.mrb[0].mxu0
        %v3003 = vadd.f32 0.0, %v3002
        %v3004 = vpop.f32.mrb[0].mxu0
        %v3005 = vpop.f32.mrb[0].mxu0
        %v3006 = vadd.f32 0.0, %v3005
        %v3007 = vpop.f32.mrb[0].mxu0
        %3008 = vdwg.mxu0
        %v3010 = vsel %vm2914, %v1682, 0
        %v3013 = vsel %vm2914, %v2274, 0
        %3015 = vmatprep.subr.bf16.mxu0 0
        %3016 = vmatpush1.bf16.xpose.msra.mxu0 %v3013
        %3017 = vmatprep.subr.bf16.mxu0 0
        %3018 = vmatpush1.bf16.xpose.msra.mxu0 0
        %3019 = vmatprep.subr.bf16.mxu0 0
        %3020 = vmatpush1.bf16.xpose.msra.mxu0 0
        %3021 = vmatprep.subr.bf16.mxu0 0
        %3022 = vmatpush1.bf16.xpose.msra.mxu0 0
        %3023 = vmatprep.subr.bf16.mxu0 0
        %3024 = vmatpush1.bf16.xpose.msra.mxu0 0
        %3025 = vmatprep.subr.bf16.mxu0 0
        %3026 = vmatpush1.bf16.xpose.msra.mxu0 0
        %3027 = vmatprep.subr.bf16.mxu0 0
        %3028 = vmatpush1.bf16.xpose.msra.mxu0 0
        %3029 = vmatprep.subr.bf16.mxu0 0
        %3030 = vmatpush1.bf16.xpose.msra.mxu0 0
        %3031 = vmatprep.subr.bf16.mxu0 0
        %3032 = vmatpush1.bf16.xpose.msra.mxu0 0
        %3033 = vmatprep.subr.bf16.mxu0 0
        %3034 = vmatpush1.bf16.xpose.msra.mxu0 0
        %3035 = vmatprep.subr.bf16.mxu0 0
        %3036 = vmatpush1.bf16.xpose.msra.mxu0 0
        %3037 = vmatprep.subr.bf16.mxu0 0
        %3038 = vmatpush1.bf16.xpose.msra.mxu0 0
        %3039 = vmatprep.subr.bf16.mxu0 0
        %3040 = vmatpush1.bf16.xpose.msra.mxu0 0
        %3041 = vmatprep.subr.bf16.mxu0 0
        %3042 = vmatpush1.bf16.xpose.msra.mxu0 0
        %3043 = vmatprep.subr.bf16.mxu0 0
        %3044 = vmatpush1.bf16.xpose.msra.mxu0 0
        %3045 = vmatprep.subr.bf16.mxu0 0
        %3046 = vmatpush1.bf16.xpose.msra.mxu0 0
        %3047 = vmatprep.mubr.bf16.mxu0 0
        %3048 = vmatmul.mubr.bf16.gmra.mrb[0].mxu0 %v3010
        %v3049 = vpop.f32.mrb[0].mxu0
        %v3050 = vadd.f32 0.0, %v3049
        %v3051 = vpop.f32.mrb[0].mxu0
        %v3052 = vpop.f32.mrb[0].mxu0
        %v3053 = vadd.f32 0.0, %v3052
        %v3054 = vpop.f32.mrb[0].mxu0
        %3055 = vdwg.mxu0
        %v3057 = vsel %vm2914, %v1683, 0
        %v3060 = vsel %vm2914, %v2275, 0
        %3062 = vmatprep.subr.bf16.mxu0 0
        %3063 = vmatpush1.bf16.xpose.msra.mxu0 %v3060
        %3064 = vmatprep.subr.bf16.mxu0 0
        %3065 = vmatpush1.bf16.xpose.msra.mxu0 0
        %3066 = vmatprep.subr.bf16.mxu0 0
        %3067 = vmatpush1.bf16.xpose.msra.mxu0 0
        %3068 = vmatprep.subr.bf16.mxu0 0
        %3069 = vmatpush1.bf16.xpose.msra.mxu0 0
        %3070 = vmatprep.subr.bf16.mxu0 0
        %3071 = vmatpush1.bf16.xpose.msra.mxu0 0
        %3072 = vmatprep.subr.bf16.mxu0 0
        %3073 = vmatpush1.bf16.xpose.msra.mxu0 0
        %3074 = vmatprep.subr.bf16.mxu0 0
        %3075 = vmatpush1.bf16.xpose.msra.mxu0 0
        %3076 = vmatprep.subr.bf16.mxu0 0
        %3077 = vmatpush1.bf16.xpose.msra.mxu0 0
        %3078 = vmatprep.subr.bf16.mxu0 0
        %3079 = vmatpush1.bf16.xpose.msra.mxu0 0
        %3080 = vmatprep.subr.bf16.mxu0 0
        %3081 = vmatpush1.bf16.xpose.msra.mxu0 0
        %3082 = vmatprep.subr.bf16.mxu0 0
        %3083 = vmatpush1.bf16.xpose.msra.mxu0 0
        %3084 = vmatprep.subr.bf16.mxu0 0
        %3085 = vmatpush1.bf16.xpose.msra.mxu0 0
        %3086 = vmatprep.subr.bf16.mxu0 0
        %3087 = vmatpush1.bf16.xpose.msra.mxu0 0
        %3088 = vmatprep.subr.bf16.mxu0 0
        %3089 = vmatpush1.bf16.xpose.msra.mxu0 0
        %3090 = vmatprep.subr.bf16.mxu0 0
        %3091 = vmatpush1.bf16.xpose.msra.mxu0 0
        %3092 = vmatprep.subr.bf16.mxu0 0
        %3093 = vmatpush1.bf16.xpose.msra.mxu0 0
        %3094 = vmatprep.mubr.bf16.mxu0 0
        %3095 = vmatmul.mubr.bf16.gmra.mrb[0].mxu0 %v3057
        %v3096 = vpop.f32.mrb[0].mxu0
        %v3097 = vadd.f32 0.0, %v3096
        %v3098 = vpop.f32.mrb[0].mxu0
        %v3099 = vpop.f32.mrb[0].mxu0
        %v3100 = vadd.f32 0.0, %v3099
        %v3101 = vpop.f32.mrb[0].mxu0
        %3102 = vdwg.mxu0
        %v3104 = vsel %vm2914, %v1684, 0
        %v3107 = vsel %vm2914, %v2276, 0
        %3109 = vmatprep.subr.bf16.mxu0 0
        %3110 = vmatpush1.bf16.xpose.msra.mxu0 %v3107
        %3111 = vmatprep.subr.bf16.mxu0 0
        %3112 = vmatpush1.bf16.xpose.msra.mxu0 0
        %3113 = vmatprep.subr.bf16.mxu0 0
        %3114 = vmatpush1.bf16.xpose.msra.mxu0 0
        %3115 = vmatprep.subr.bf16.mxu0 0
        %3116 = vmatpush1.bf16.xpose.msra.mxu0 0
        %3117 = vmatprep.subr.bf16.mxu0 0
        %3118 = vmatpush1.bf16.xpose.msra.mxu0 0
        %3119 = vmatprep.subr.bf16.mxu0 0
        %3120 = vmatpush1.bf16.xpose.msra.mxu0 0
        %3121 = vmatprep.subr.bf16.mxu0 0
        %3122 = vmatpush1.bf16.xpose.msra.mxu0 0
        %3123 = vmatprep.subr.bf16.mxu0 0
        %3124 = vmatpush1.bf16.xpose.msra.mxu0 0
        %3125 = vmatprep.subr.bf16.mxu0 0
        %3126 = vmatpush1.bf16.xpose.msra.mxu0 0
        %3127 = vmatprep.subr.bf16.mxu0 0
        %3128 = vmatpush1.bf16.xpose.msra.mxu0 0
        %3129 = vmatprep.subr.bf16.mxu0 0
        %3130 = vmatpush1.bf16.xpose.msra.mxu0 0
        %3131 = vmatprep.subr.bf16.mxu0 0
        %3132 = vmatpush1.bf16.xpose.msra.mxu0 0
        %3133 = vmatprep.subr.bf16.mxu0 0
        %3134 = vmatpush1.bf16.xpose.msra.mxu0 0
        %3135 = vmatprep.subr.bf16.mxu0 0
        %3136 = vmatpush1.bf16.xpose.msra.mxu0 0
        %3137 = vmatprep.subr.bf16.mxu0 0
        %3138 = vmatpush1.bf16.xpose.msra.mxu0 0
        %3139 = vmatprep.subr.bf16.mxu0 0
        %3140 = vmatpush1.bf16.xpose.msra.mxu0 0
        %3141 = vmatprep.mubr.bf16.mxu0 0
        %3142 = vmatmul.mubr.bf16.gmra.mrb[0].mxu0 %v3104
        %v3143 = vpop.f32.mrb[0].mxu0
        %v3144 = vadd.f32 0.0, %v3143
        %v3145 = vpop.f32.mrb[0].mxu0
        %v3146 = vpop.f32.mrb[0].mxu0
        %v3147 = vadd.f32 0.0, %v3146
        %v3148 = vpop.f32.mrb[0].mxu0
        %3149 = vdwg.mxu0
        %v3151 = vsel %vm2914, %v1685, 0
        %v3154 = vsel %vm2914, %v2277, 0
        %3156 = vmatprep.subr.bf16.mxu0 0
        %3157 = vmatpush1.bf16.xpose.msra.mxu0 %v3154
        %3158 = vmatprep.subr.bf16.mxu0 0
        %3159 = vmatpush1.bf16.xpose.msra.mxu0 0
        %3160 = vmatprep.subr.bf16.mxu0 0
        %3161 = vmatpush1.bf16.xpose.msra.mxu0 0
        %3162 = vmatprep.subr.bf16.mxu0 0
        %3163 = vmatpush1.bf16.xpose.msra.mxu0 0
        %3164 = vmatprep.subr.bf16.mxu0 0
        %3165 = vmatpush1.bf16.xpose.msra.mxu0 0
        %3166 = vmatprep.subr.bf16.mxu0 0
        %3167 = vmatpush1.bf16.xpose.msra.mxu0 0
        %3168 = vmatprep.subr.bf16.mxu0 0
        %3169 = vmatpush1.bf16.xpose.msra.mxu0 0
        %3170 = vmatprep.subr.bf16.mxu0 0
        %3171 = vmatpush1.bf16.xpose.msra.mxu0 0
        %3172 = vmatprep.subr.bf16.mxu0 0
        %3173 = vmatpush1.bf16.xpose.msra.mxu0 0
        %3174 = vmatprep.subr.bf16.mxu0 0
        %3175 = vmatpush1.bf16.xpose.msra.mxu0 0
        %3176 = vmatprep.subr.bf16.mxu0 0
        %3177 = vmatpush1.bf16.xpose.msra.mxu0 0
        %3178 = vmatprep.subr.bf16.mxu0 0
        %3179 = vmatpush1.bf16.xpose.msra.mxu0 0
        %3180 = vmatprep.subr.bf16.mxu0 0
        %3181 = vmatpush1.bf16.xpose.msra.mxu0 0
        %3182 = vmatprep.subr.bf16.mxu0 0
        %3183 = vmatpush1.bf16.xpose.msra.mxu0 0
        %3184 = vmatprep.subr.bf16.mxu0 0
        %3185 = vmatpush1.bf16.xpose.msra.mxu0 0
        %3186 = vmatprep.subr.bf16.mxu0 0
        %3187 = vmatpush1.bf16.xpose.msra.mxu0 0
        %3188 = vmatprep.mubr.bf16.mxu0 0
        %3189 = vmatmul.mubr.bf16.gmra.mrb[0].mxu0 %v3151
        %v3190 = vpop.f32.mrb[0].mxu0
        %v3191 = vadd.f32 0.0, %v3190
        %v3192 = vpop.f32.mrb[0].mxu0
        %v3193 = vpop.f32.mrb[0].mxu0
        %v3194 = vadd.f32 0.0, %v3193
        %v3195 = vpop.f32.mrb[0].mxu0
        %3196 = vdwg.mxu0
        %v3198 = vsel %vm2914, %v1686, 0
        %v3201 = vsel %vm2914, %v2278, 0
        %3203 = vmatprep.subr.bf16.mxu0 0
        %3204 = vmatpush1.bf16.xpose.msra.mxu0 %v3201
        %3205 = vmatprep.subr.bf16.mxu0 0
        %3206 = vmatpush1.bf16.xpose.msra.mxu0 0
        %3207 = vmatprep.subr.bf16.mxu0 0
        %3208 = vmatpush1.bf16.xpose.msra.mxu0 0
        %3209 = vmatprep.subr.bf16.mxu0 0
        %3210 = vmatpush1.bf16.xpose.msra.mxu0 0
        %3211 = vmatprep.subr.bf16.mxu0 0
        %3212 = vmatpush1.bf16.xpose.msra.mxu0 0
        %3213 = vmatprep.subr.bf16.mxu0 0
        %3214 = vmatpush1.bf16.xpose.msra.mxu0 0
        %3215 = vmatprep.subr.bf16.mxu0 0
        %3216 = vmatpush1.bf16.xpose.msra.mxu0 0
        %3217 = vmatprep.subr.bf16.mxu0 0
        %3218 = vmatpush1.bf16.xpose.msra.mxu0 0
        %3219 = vmatprep.subr.bf16.mxu0 0
        %3220 = vmatpush1.bf16.xpose.msra.mxu0 0
        %3221 = vmatprep.subr.bf16.mxu0 0
        %3222 = vmatpush1.bf16.xpose.msra.mxu0 0
        %3223 = vmatprep.subr.bf16.mxu0 0
        %3224 = vmatpush1.bf16.xpose.msra.mxu0 0
        %3225 = vmatprep.subr.bf16.mxu0 0
        %3226 = vmatpush1.bf16.xpose.msra.mxu0 0
        %3227 = vmatprep.subr.bf16.mxu0 0
        %3228 = vmatpush1.bf16.xpose.msra.mxu0 0
        %3229 = vmatprep.subr.bf16.mxu0 0
        %3230 = vmatpush1.bf16.xpose.msra.mxu0 0
        %3231 = vmatprep.subr.bf16.mxu0 0
        %3232 = vmatpush1.bf16.xpose.msra.mxu0 0
        %3233 = vmatprep.subr.bf16.mxu0 0
        %3234 = vmatpush1.bf16.xpose.msra.mxu0 0
        %3235 = vmatprep.mubr.bf16.mxu0 0
        %3236 = vmatmul.mubr.bf16.gmra.mrb[0].mxu0 %v3198
        %v3237 = vpop.f32.mrb[0].mxu0
        %v3238 = vadd.f32 0.0, %v3237
        %v3239 = vpop.f32.mrb[0].mxu0
        %v3240 = vpop.f32.mrb[0].mxu0
        %v3241 = vadd.f32 0.0, %v3240
        %v3242 = vpop.f32.mrb[0].mxu0
        %3243 = vdwg.mxu0
        %v3245 = vsel %vm2914, %v1687, 0
        %v3248 = vsel %vm2914, %v2279, 0
        %3250 = vmatprep.subr.bf16.mxu0 0
        %3251 = vmatpush1.bf16.xpose.msra.mxu0 %v3248
        %3252 = vmatprep.subr.bf16.mxu0 0
        %3253 = vmatpush1.bf16.xpose.msra.mxu0 0
        %3254 = vmatprep.subr.bf16.mxu0 0
        %3255 = vmatpush1.bf16.xpose.msra.mxu0 0
        %3256 = vmatprep.subr.bf16.mxu0 0
        %3257 = vmatpush1.bf16.xpose.msra.mxu0 0
        %3258 = vmatprep.subr.bf16.mxu0 0
        %3259 = vmatpush1.bf16.xpose.msra.mxu0 0
        %3260 = vmatprep.subr.bf16.mxu0 0
        %3261 = vmatpush1.bf16.xpose.msra.mxu0 0
        %3262 = vmatprep.subr.bf16.mxu0 0
        %3263 = vmatpush1.bf16.xpose.msra.mxu0 0
        %3264 = vmatprep.subr.bf16.mxu0 0
        %3265 = vmatpush1.bf16.xpose.msra.mxu0 0
        %3266 = vmatprep.subr.bf16.mxu0 0
        %3267 = vmatpush1.bf16.xpose.msra.mxu0 0
        %3268 = vmatprep.subr.bf16.mxu0 0
        %3269 = vmatpush1.bf16.xpose.msra.mxu0 0
        %3270 = vmatprep.subr.bf16.mxu0 0
        %3271 = vmatpush1.bf16.xpose.msra.mxu0 0
        %3272 = vmatprep.subr.bf16.mxu0 0
        %3273 = vmatpush1.bf16.xpose.msra.mxu0 0
        %3274 = vmatprep.subr.bf16.mxu0 0
        %3275 = vmatpush1.bf16.xpose.msra.mxu0 0
        %3276 = vmatprep.subr.bf16.mxu0 0
        %3277 = vmatpush1.bf16.xpose.msra.mxu0 0
        %3278 = vmatprep.subr.bf16.mxu0 0
        %3279 = vmatpush1.bf16.xpose.msra.mxu0 0
        %3280 = vmatprep.subr.bf16.mxu0 0
        %3281 = vmatpush1.bf16.xpose.msra.mxu0 0
        %3282 = vmatprep.mubr.bf16.mxu0 0
        %3283 = vmatmul.mubr.bf16.gmra.mrb[0].mxu0 %v3245
        %v3284 = vpop.f32.mrb[0].mxu0
        %v3285 = vadd.f32 0.0, %v3284
        %v3286 = vpop.f32.mrb[0].mxu0
        %v3287 = vpop.f32.mrb[0].mxu0
        %v3288 = vadd.f32 0.0, %v3287
        %v3289 = vpop.f32.mrb[0].mxu0
        %3290 = vdwg.mxu0
        %v3291 = vadd.f32 %v2956, %v2910
        %v3292 = vadd.f32 %v2959, %v2911
        %v3293 = vadd.f32 %v3003, %v2910
        %v3294 = vadd.f32 %v3006, %v2911
        %v3295 = vadd.f32 %v3050, %v2910
        %v3296 = vadd.f32 %v3053, %v2911
        %v3297 = vadd.f32 %v3097, %v2910
        %v3298 = vadd.f32 %v3100, %v2911
        %v3299 = vadd.f32 %v3144, %v2912
        %v3300 = vadd.f32 %v3147, %v2913
        %v3301 = vadd.f32 %v3191, %v2912
        %v3302 = vadd.f32 %v3194, %v2913
        %v3303 = vadd.f32 %v3238, %v2912
        %v3304 = vadd.f32 %v3241, %v2913
        %v3305 = vadd.f32 %v3285, %v2912
        %v3306 = vadd.f32 %v3288, %v2913
        %vm3307 = vcmask 130048
        %v3308 = vsel %vm3307, %v3291, -inf
        %3309 = vmax.xlane.f32.xlu0 %v3308
        %v3310 = vpop.xlane.xlu0 %3309
        %v3311 = vsel %vm3307, %v3292, -inf
        %3312 = vmax.xlane.f32.xlu0 %v3311
        %v3313 = vpop.xlane.xlu0 %3312
        %v3314 = vsel %vm3307, %v3293, -inf
        %3315 = vmax.xlane.f32.xlu0 %v3314
        %v3316 = vpop.xlane.xlu0 %3315
        %v3317 = vsel %vm3307, %v3294, -inf
        %3318 = vmax.xlane.f32.xlu0 %v3317
        %v3319 = vpop.xlane.xlu0 %3318
        %v3320 = vsel %vm3307, %v3295, -inf
        %3321 = vmax.xlane.f32.xlu0 %v3320
        %v3322 = vpop.xlane.xlu0 %3321
        %v3323 = vsel %vm3307, %v3296, -inf
        %3324 = vmax.xlane.f32.xlu0 %v3323
        %v3325 = vpop.xlane.xlu0 %3324
        %v3326 = vsel %vm3307, %v3297, -inf
        %3327 = vmax.xlane.f32.xlu0 %v3326
        %v3328 = vpop.xlane.xlu0 %3327
        %v3329 = vsel %vm3307, %v3298, -inf
        %3330 = vmax.xlane.f32.xlu0 %v3329
        %v3331 = vpop.xlane.xlu0 %3330
        %v3332 = vsel %vm3307, %v3299, -inf
        %3333 = vmax.xlane.f32.xlu0 %v3332
        %v3334 = vpop.xlane.xlu0 %3333
        %v3335 = vsel %vm3307, %v3300, -inf
        %3336 = vmax.xlane.f32.xlu0 %v3335
        %v3337 = vpop.xlane.xlu0 %3336
        %v3338 = vsel %vm3307, %v3301, -inf
        %3339 = vmax.xlane.f32.xlu0 %v3338
        %v3340 = vpop.xlane.xlu0 %3339
        %v3341 = vsel %vm3307, %v3302, -inf
        %3342 = vmax.xlane.f32.xlu0 %v3341
        %v3343 = vpop.xlane.xlu0 %3342
        %v3344 = vsel %vm3307, %v3303, -inf
        %3345 = vmax.xlane.f32.xlu0 %v3344
        %v3346 = vpop.xlane.xlu0 %3345
        %v3347 = vsel %vm3307, %v3304, -inf
        %3348 = vmax.xlane.f32.xlu0 %v3347
        %v3349 = vpop.xlane.xlu0 %3348
        %v3350 = vsel %vm3307, %v3305, -inf
        %3351 = vmax.xlane.f32.xlu0 %v3350
        %v3352 = vpop.xlane.xlu0 %3351
        %v3353 = vsel %vm3307, %v3306, -inf
        %3354 = vmax.xlane.f32.xlu0 %v3353
        %v3355 = vpop.xlane.xlu0 %3354
        %v3356 = vsub.f32 %v3291, %v3310
        %v3357 = vsub.f32 %v3292, %v3313
        %v3358 = vsub.f32 %v3293, %v3316
        %v3359 = vsub.f32 %v3294, %v3319
        %v3360 = vsub.f32 %v3295, %v3322
        %v3361 = vsub.f32 %v3296, %v3325
        %v3362 = vsub.f32 %v3297, %v3328
        %v3363 = vsub.f32 %v3298, %v3331
        %v3364 = vsub.f32 %v3299, %v3334
        %v3365 = vsub.f32 %v3300, %v3337
        %v3366 = vsub.f32 %v3301, %v3340
        %v3367 = vsub.f32 %v3302, %v3343
        %v3368 = vsub.f32 %v3303, %v3346
        %v3369 = vsub.f32 %v3304, %v3349
        %v3370 = vsub.f32 %v3305, %v3352
        %v3371 = vsub.f32 %v3306, %v3355
        %v3372 = vmul.f32 %v3356, 1.442695
        %v3373 = vpow.pop %v3372
        %v3374 = vmul.f32 %v3357, 1.442695
        %v3375 = vpow.pop %v3374
        %v3376 = vmul.f32 %v3358, 1.442695
        %v3377 = vpow.pop %v3376
        %v3378 = vmul.f32 %v3359, 1.442695
        %v3379 = vpow.pop %v3378
        %v3380 = vmul.f32 %v3360, 1.442695
        %v3381 = vpow.pop %v3380
        %v3382 = vmul.f32 %v3361, 1.442695
        %v3383 = vpow.pop %v3382
        %v3384 = vmul.f32 %v3362, 1.442695
        %v3385 = vpow.pop %v3384
        %v3386 = vmul.f32 %v3363, 1.442695
        %v3387 = vpow.pop %v3386
        %v3388 = vmul.f32 %v3364, 1.442695
        %v3389 = vpow.pop %v3388
        %v3390 = vmul.f32 %v3365, 1.442695
        %v3391 = vpow.pop %v3390
        %v3392 = vmul.f32 %v3366, 1.442695
        %v3393 = vpow.pop %v3392
        %v3394 = vmul.f32 %v3367, 1.442695
        %v3395 = vpow.pop %v3394
        %v3396 = vmul.f32 %v3368, 1.442695
        %v3397 = vpow.pop %v3396
        %v3398 = vmul.f32 %v3369, 1.442695
        %v3399 = vpow.pop %v3398
        %v3400 = vmul.f32 %v3370, 1.442695
        %v3401 = vpow.pop %v3400
        %v3402 = vmul.f32 %v3371, 1.442695
        %v3403 = vpow.pop %v3402
        %v3404 = vsel %vm3307, %v3373, 0.0
        %3405 = vadd.xlane.f32.xlu0 %v3404
        %v3406 = vpop.xlane.xlu0 %3405
        %v3407 = vsel %vm3307, %v3375, 0.0
        %3408 = vadd.xlane.f32.xlu0 %v3407
        %v3409 = vpop.xlane.xlu0 %3408
        %v3410 = vsel %vm3307, %v3377, 0.0
        %3411 = vadd.xlane.f32.xlu0 %v3410
        %v3412 = vpop.xlane.xlu0 %3411
        %v3413 = vsel %vm3307, %v3379, 0.0
        %3414 = vadd.xlane.f32.xlu0 %v3413
        %v3415 = vpop.xlane.xlu0 %3414
        %v3416 = vsel %vm3307, %v3381, 0.0
        %3417 = vadd.xlane.f32.xlu0 %v3416
        %v3418 = vpop.xlane.xlu0 %3417
        %v3419 = vsel %vm3307, %v3383, 0.0
        %3420 = vadd.xlane.f32.xlu0 %v3419
        %v3421 = vpop.xlane.xlu0 %3420
        %v3422 = vsel %vm3307, %v3385, 0.0
        %3423 = vadd.xlane.f32.xlu0 %v3422
        %v3424 = vpop.xlane.xlu0 %3423
        %v3425 = vsel %vm3307, %v3387, 0.0
        %3426 = vadd.xlane.f32.xlu0 %v3425
        %v3427 = vpop.xlane.xlu0 %3426
        %v3428 = vsel %vm3307, %v3389, 0.0
        %3429 = vadd.xlane.f32.xlu0 %v3428
        %v3430 = vpop.xlane.xlu0 %3429
        %v3431 = vsel %vm3307, %v3391, 0.0
        %3432 = vadd.xlane.f32.xlu0 %v3431
        %v3433 = vpop.xlane.xlu0 %3432
        %v3434 = vsel %vm3307, %v3393, 0.0
        %3435 = vadd.xlane.f32.xlu0 %v3434
        %v3436 = vpop.xlane.xlu0 %3435
        %v3437 = vsel %vm3307, %v3395, 0.0
        %3438 = vadd.xlane.f32.xlu0 %v3437
        %v3439 = vpop.xlane.xlu0 %3438
        %v3440 = vsel %vm3307, %v3397, 0.0
        %3441 = vadd.xlane.f32.xlu0 %v3440
        %v3442 = vpop.xlane.xlu0 %3441
        %v3443 = vsel %vm3307, %v3399, 0.0
        %3444 = vadd.xlane.f32.xlu0 %v3443
        %v3445 = vpop.xlane.xlu0 %3444
        %v3446 = vsel %vm3307, %v3401, 0.0
        %3447 = vadd.xlane.f32.xlu0 %v3446
        %v3448 = vpop.xlane.xlu0 %3447
        %v3449 = vsel %vm3307, %v3403, 0.0
        %3450 = vadd.xlane.f32.xlu0 %v3449
        %v3451 = vpop.xlane.xlu0 %3450
        %v3452 = vrcp.pop %v3406
        %v3453 = vrcp.pop %v3409
        %v3454 = vrcp.pop %v3412
        %v3455 = vrcp.pop %v3415
        %v3456 = vrcp.pop %v3418
        %v3457 = vrcp.pop %v3421
        %v3458 = vrcp.pop %v3424
        %v3459 = vrcp.pop %v3427
        %v3460 = vrcp.pop %v3430
        %v3461 = vrcp.pop %v3433
        %v3462 = vrcp.pop %v3436
        %v3463 = vrcp.pop %v3439
        %v3464 = vrcp.pop %v3442
        %v3465 = vrcp.pop %v3445
        %v3466 = vrcp.pop %v3448
        %v3467 = vrcp.pop %v3451
        %v3468 = vmul.f32 %v3373, %v3452
        %v3469 = vmul.f32 %v3375, %v3453
        %v3470 = vmul.f32 %v3377, %v3454
        %v3471 = vmul.f32 %v3379, %v3455
        %v3472 = vmul.f32 %v3381, %v3456
        %v3473 = vmul.f32 %v3383, %v3457
        %v3474 = vmul.f32 %v3385, %v3458
        %v3475 = vmul.f32 %v3387, %v3459
        %v3476 = vmul.f32 %v3389, %v3460
        %v3477 = vmul.f32 %v3391, %v3461
        %v3478 = vmul.f32 %v3393, %v3462
        %v3479 = vmul.f32 %v3395, %v3463
        %v3480 = vmul.f32 %v3397, %v3464
        %v3481 = vmul.f32 %v3399, %v3465
        %v3482 = vmul.f32 %v3401, %v3466
        %v3483 = vmul.f32 %v3403, %v3467
        %v3484 = vpack.c.bf16 %v3469, %v3468
        %v3485 = vpack.c.bf16 %v3471, %v3470
        %v3486 = vpack.c.bf16 %v3473, %v3472
        %v3487 = vpack.c.bf16 %v3475, %v3474
        %v3488 = vpack.c.bf16 %v3477, %v3476
        %v3489 = vpack.c.bf16 %v3479, %v3478
        %v3490 = vpack.c.bf16 %v3481, %v3480
        %v3491 = vpack.c.bf16 %v3483, %v3482
        %v3493 = vsel %vm3307, %v3484, 0
        %3495 = vmatprep.subr.bf16.mxu0 0
        %3496 = vmatpush1.bf16.msra.mxu0 %v2864
        %3497 = vmatprep.subr.bf16.mxu0 0
        %3498 = vmatpush1.bf16.msra.mxu0 0
        %3499 = vmatprep.subr.bf16.mxu0 0
        %3500 = vmatpush1.bf16.msra.mxu0 0
        %3501 = vmatprep.subr.bf16.mxu0 0
        %3502 = vmatpush1.bf16.msra.mxu0 0
        %3503 = vmatprep.subr.bf16.mxu0 0
        %3504 = vmatpush1.bf16.msra.mxu0 0
        %3505 = vmatprep.subr.bf16.mxu0 0
        %3506 = vmatpush1.bf16.msra.mxu0 0
        %3507 = vmatprep.subr.bf16.mxu0 0
        %3508 = vmatpush1.bf16.msra.mxu0 0
        %3509 = vmatprep.subr.bf16.mxu0 0
        %3510 = vmatpush1.bf16.msra.mxu0 0
        %3511 = vmatprep.subr.bf16.mxu0 0
        %3512 = vmatpush1.bf16.msra.mxu0 0
        %3513 = vmatprep.subr.bf16.mxu0 0
        %3514 = vmatpush1.bf16.msra.mxu0 0
        %3515 = vmatprep.subr.bf16.mxu0 0
        %3516 = vmatpush1.bf16.msra.mxu0 0
        %3517 = vmatprep.subr.bf16.mxu0 0
        %3518 = vmatpush1.bf16.msra.mxu0 0
        %3519 = vmatprep.subr.bf16.mxu0 0
        %3520 = vmatpush1.bf16.msra.mxu0 0
        %3521 = vmatprep.subr.bf16.mxu0 0
        %3522 = vmatpush1.bf16.msra.mxu0 0
        %3523 = vmatprep.subr.bf16.mxu0 0
        %3524 = vmatpush1.bf16.msra.mxu0 0
        %3525 = vmatprep.subr.bf16.mxu0 0
        %3526 = vmatpush1.bf16.msra.mxu0 0
        %3527 = vmatprep.mubr.bf16.mxu0 0
        %3528 = vmatmul.mubr.bf16.gmra.mrb[0].mxu0 %v3493
        %v3529 = vpop.f32.mrb[0].mxu0
        %v3530 = vadd.f32 0.0, %v3529
        %v3531 = vpop.f32.mrb[0].mxu0
        %v3532 = vpop.f32.mrb[0].mxu0
        %v3533 = vadd.f32 0.0, %v3532
        %v3534 = vpop.f32.mrb[0].mxu0
        %3535 = vdwg.mxu0
        %v3537 = vsel %vm3307, %v3485, 0
        %3539 = vmatprep.subr.bf16.mxu0 0
        %3540 = vmatpush1.bf16.msra.mxu0 %v2865
        %3541 = vmatprep.subr.bf16.mxu0 0
        %3542 = vmatpush1.bf16.msra.mxu0 0
        %3543 = vmatprep.subr.bf16.mxu0 0
        %3544 = vmatpush1.bf16.msra.mxu0 0
        %3545 = vmatprep.subr.bf16.mxu0 0
        %3546 = vmatpush1.bf16.msra.mxu0 0
        %3547 = vmatprep.subr.bf16.mxu0 0
        %3548 = vmatpush1.bf16.msra.mxu0 0
        %3549 = vmatprep.subr.bf16.mxu0 0
        %3550 = vmatpush1.bf16.msra.mxu0 0
        %3551 = vmatprep.subr.bf16.mxu0 0
        %3552 = vmatpush1.bf16.msra.mxu0 0
        %3553 = vmatprep.subr.bf16.mxu0 0
        %3554 = vmatpush1.bf16.msra.mxu0 0
        %3555 = vmatprep.subr.bf16.mxu0 0
        %3556 = vmatpush1.bf16.msra.mxu0 0
        %3557 = vmatprep.subr.bf16.mxu0 0
        %3558 = vmatpush1.bf16.msra.mxu0 0
        %3559 = vmatprep.subr.bf16.mxu0 0
        %3560 = vmatpush1.bf16.msra.mxu0 0
        %3561 = vmatprep.subr.bf16.mxu0 0
        %3562 = vmatpush1.bf16.msra.mxu0 0
        %3563 = vmatprep.subr.bf16.mxu0 0
        %3564 = vmatpush1.bf16.msra.mxu0 0
        %3565 = vmatprep.subr.bf16.mxu0 0
        %3566 = vmatpush1.bf16.msra.mxu0 0
        %3567 = vmatprep.subr.bf16.mxu0 0
        %3568 = vmatpush1.bf16.msra.mxu0 0
        %3569 = vmatprep.subr.bf16.mxu0 0
        %3570 = vmatpush1.bf16.msra.mxu0 0
        %3571 = vmatprep.mubr.bf16.mxu0 0
        %3572 = vmatmul.mubr.bf16.gmra.mrb[0].mxu0 %v3537
        %v3573 = vpop.f32.mrb[0].mxu0
        %v3574 = vadd.f32 0.0, %v3573
        %v3575 = vpop.f32.mrb[0].mxu0
        %v3576 = vpop.f32.mrb[0].mxu0
        %v3577 = vadd.f32 0.0, %v3576
        %v3578 = vpop.f32.mrb[0].mxu0
        %3579 = vdwg.mxu0
        %v3581 = vsel %vm3307, %v3486, 0
        %3583 = vmatprep.subr.bf16.mxu0 0
        %3584 = vmatpush1.bf16.msra.mxu0 %v2866
        %3585 = vmatprep.subr.bf16.mxu0 0
        %3586 = vmatpush1.bf16.msra.mxu0 0
        %3587 = vmatprep.subr.bf16.mxu0 0
        %3588 = vmatpush1.bf16.msra.mxu0 0
        %3589 = vmatprep.subr.bf16.mxu0 0
        %3590 = vmatpush1.bf16.msra.mxu0 0
        %3591 = vmatprep.subr.bf16.mxu0 0
        %3592 = vmatpush1.bf16.msra.mxu0 0
        %3593 = vmatprep.subr.bf16.mxu0 0
        %3594 = vmatpush1.bf16.msra.mxu0 0
        %3595 = vmatprep.subr.bf16.mxu0 0
        %3596 = vmatpush1.bf16.msra.mxu0 0
        %3597 = vmatprep.subr.bf16.mxu0 0
        %3598 = vmatpush1.bf16.msra.mxu0 0
        %3599 = vmatprep.subr.bf16.mxu0 0
        %3600 = vmatpush1.bf16.msra.mxu0 0
        %3601 = vmatprep.subr.bf16.mxu0 0
        %3602 = vmatpush1.bf16.msra.mxu0 0
        %3603 = vmatprep.subr.bf16.mxu0 0
        %3604 = vmatpush1.bf16.msra.mxu0 0
        %3605 = vmatprep.subr.bf16.mxu0 0
        %3606 = vmatpush1.bf16.msra.mxu0 0
        %3607 = vmatprep.subr.bf16.mxu0 0
        %3608 = vmatpush1.bf16.msra.mxu0 0
        %3609 = vmatprep.subr.bf16.mxu0 0
        %3610 = vmatpush1.bf16.msra.mxu0 0
        %3611 = vmatprep.subr.bf16.mxu0 0
        %3612 = vmatpush1.bf16.msra.mxu0 0
        %3613 = vmatprep.subr.bf16.mxu0 0
        %3614 = vmatpush1.bf16.msra.mxu0 0
        %3615 = vmatprep.mubr.bf16.mxu0 0
        %3616 = vmatmul.mubr.bf16.gmra.mrb[0].mxu0 %v3581
        %v3617 = vpop.f32.mrb[0].mxu0
        %v3618 = vadd.f32 0.0, %v3617
        %v3619 = vpop.f32.mrb[0].mxu0
        %v3620 = vpop.f32.mrb[0].mxu0
        %v3621 = vadd.f32 0.0, %v3620
        %v3622 = vpop.f32.mrb[0].mxu0
        %3623 = vdwg.mxu0
        %v3625 = vsel %vm3307, %v3487, 0
        %3627 = vmatprep.subr.bf16.mxu0 0
        %3628 = vmatpush1.bf16.msra.mxu0 %v2867
        %3629 = vmatprep.subr.bf16.mxu0 0
        %3630 = vmatpush1.bf16.msra.mxu0 0
        %3631 = vmatprep.subr.bf16.mxu0 0
        %3632 = vmatpush1.bf16.msra.mxu0 0
        %3633 = vmatprep.subr.bf16.mxu0 0
        %3634 = vmatpush1.bf16.msra.mxu0 0
        %3635 = vmatprep.subr.bf16.mxu0 0
        %3636 = vmatpush1.bf16.msra.mxu0 0
        %3637 = vmatprep.subr.bf16.mxu0 0
        %3638 = vmatpush1.bf16.msra.mxu0 0
        %3639 = vmatprep.subr.bf16.mxu0 0
        %3640 = vmatpush1.bf16.msra.mxu0 0
        %3641 = vmatprep.subr.bf16.mxu0 0
        %3642 = vmatpush1.bf16.msra.mxu0 0
        %3643 = vmatprep.subr.bf16.mxu0 0
        %3644 = vmatpush1.bf16.msra.mxu0 0
        %3645 = vmatprep.subr.bf16.mxu0 0
        %3646 = vmatpush1.bf16.msra.mxu0 0
        %3647 = vmatprep.subr.bf16.mxu0 0
        %3648 = vmatpush1.bf16.msra.mxu0 0
        %3649 = vmatprep.subr.bf16.mxu0 0
        %3650 = vmatpush1.bf16.msra.mxu0 0
        %3651 = vmatprep.subr.bf16.mxu0 0
        %3652 = vmatpush1.bf16.msra.mxu0 0
        %3653 = vmatprep.subr.bf16.mxu0 0
        %3654 = vmatpush1.bf16.msra.mxu0 0
        %3655 = vmatprep.subr.bf16.mxu0 0
        %3656 = vmatpush1.bf16.msra.mxu0 0
        %3657 = vmatprep.subr.bf16.mxu0 0
        %3658 = vmatpush1.bf16.msra.mxu0 0
        %3659 = vmatprep.mubr.bf16.mxu0 0
        %3660 = vmatmul.mubr.bf16.gmra.mrb[0].mxu0 %v3625
        %v3661 = vpop.f32.mrb[0].mxu0
        %v3662 = vadd.f32 0.0, %v3661
        %v3663 = vpop.f32.mrb[0].mxu0
        %v3664 = vpop.f32.mrb[0].mxu0
        %v3665 = vadd.f32 0.0, %v3664
        %v3666 = vpop.f32.mrb[0].mxu0
        %3667 = vdwg.mxu0
        %v3669 = vsel %vm3307, %v3488, 0
        %3671 = vmatprep.subr.bf16.mxu0 0
        %3672 = vmatpush1.bf16.msra.mxu0 %v2868
        %3673 = vmatprep.subr.bf16.mxu0 0
        %3674 = vmatpush1.bf16.msra.mxu0 0
        %3675 = vmatprep.subr.bf16.mxu0 0
        %3676 = vmatpush1.bf16.msra.mxu0 0
        %3677 = vmatprep.subr.bf16.mxu0 0
        %3678 = vmatpush1.bf16.msra.mxu0 0
        %3679 = vmatprep.subr.bf16.mxu0 0
        %3680 = vmatpush1.bf16.msra.mxu0 0
        %3681 = vmatprep.subr.bf16.mxu0 0
        %3682 = vmatpush1.bf16.msra.mxu0 0
        %3683 = vmatprep.subr.bf16.mxu0 0
        %3684 = vmatpush1.bf16.msra.mxu0 0
        %3685 = vmatprep.subr.bf16.mxu0 0
        %3686 = vmatpush1.bf16.msra.mxu0 0
        %3687 = vmatprep.subr.bf16.mxu0 0
        %3688 = vmatpush1.bf16.msra.mxu0 0
        %3689 = vmatprep.subr.bf16.mxu0 0
        %3690 = vmatpush1.bf16.msra.mxu0 0
        %3691 = vmatprep.subr.bf16.mxu0 0
        %3692 = vmatpush1.bf16.msra.mxu0 0
        %3693 = vmatprep.subr.bf16.mxu0 0
        %3694 = vmatpush1.bf16.msra.mxu0 0
        %3695 = vmatprep.subr.bf16.mxu0 0
        %3696 = vmatpush1.bf16.msra.mxu0 0
        %3697 = vmatprep.subr.bf16.mxu0 0
        %3698 = vmatpush1.bf16.msra.mxu0 0
        %3699 = vmatprep.subr.bf16.mxu0 0
        %3700 = vmatpush1.bf16.msra.mxu0 0
        %3701 = vmatprep.subr.bf16.mxu0 0
        %3702 = vmatpush1.bf16.msra.mxu0 0
        %3703 = vmatprep.mubr.bf16.mxu0 0
        %3704 = vmatmul.mubr.bf16.gmra.mrb[0].mxu0 %v3669
        %v3705 = vpop.f32.mrb[0].mxu0
        %v3706 = vadd.f32 0.0, %v3705
        %v3707 = vpop.f32.mrb[0].mxu0
        %v3708 = vpop.f32.mrb[0].mxu0
        %v3709 = vadd.f32 0.0, %v3708
        %v3710 = vpop.f32.mrb[0].mxu0
        %3711 = vdwg.mxu0
        %v3713 = vsel %vm3307, %v3489, 0
        %3715 = vmatprep.subr.bf16.mxu0 0
        %3716 = vmatpush1.bf16.msra.mxu0 %v2869
        %3717 = vmatprep.subr.bf16.mxu0 0
        %3718 = vmatpush1.bf16.msra.mxu0 0
        %3719 = vmatprep.subr.bf16.mxu0 0
        %3720 = vmatpush1.bf16.msra.mxu0 0
        %3721 = vmatprep.subr.bf16.mxu0 0
        %3722 = vmatpush1.bf16.msra.mxu0 0
        %3723 = vmatprep.subr.bf16.mxu0 0
        %3724 = vmatpush1.bf16.msra.mxu0 0
        %3725 = vmatprep.subr.bf16.mxu0 0
        %3726 = vmatpush1.bf16.msra.mxu0 0
        %3727 = vmatprep.subr.bf16.mxu0 0
        %3728 = vmatpush1.bf16.msra.mxu0 0
        %3729 = vmatprep.subr.bf16.mxu0 0
        %3730 = vmatpush1.bf16.msra.mxu0 0
        %3731 = vmatprep.subr.bf16.mxu0 0
        %3732 = vmatpush1.bf16.msra.mxu0 0
        %3733 = vmatprep.subr.bf16.mxu0 0
        %3734 = vmatpush1.bf16.msra.mxu0 0
        %3735 = vmatprep.subr.bf16.mxu0 0
        %3736 = vmatpush1.bf16.msra.mxu0 0
        %3737 = vmatprep.subr.bf16.mxu0 0
        %3738 = vmatpush1.bf16.msra.mxu0 0
        %3739 = vmatprep.subr.bf16.mxu0 0
        %3740 = vmatpush1.bf16.msra.mxu0 0
        %3741 = vmatprep.subr.bf16.mxu0 0
        %3742 = vmatpush1.bf16.msra.mxu0 0
        %3743 = vmatprep.subr.bf16.mxu0 0
        %3744 = vmatpush1.bf16.msra.mxu0 0
        %3745 = vmatprep.subr.bf16.mxu0 0
        %3746 = vmatpush1.bf16.msra.mxu0 0
        %3747 = vmatprep.mubr.bf16.mxu0 0
        %3748 = vmatmul.mubr.bf16.gmra.mrb[0].mxu0 %v3713
        %v3749 = vpop.f32.mrb[0].mxu0
        %v3750 = vadd.f32 0.0, %v3749
        %v3751 = vpop.f32.mrb[0].mxu0
        %v3752 = vpop.f32.mrb[0].mxu0
        %v3753 = vadd.f32 0.0, %v3752
        %v3754 = vpop.f32.mrb[0].mxu0
        %3755 = vdwg.mxu0
        %v3757 = vsel %vm3307, %v3490, 0
        %3759 = vmatprep.subr.bf16.mxu0 0
        %3760 = vmatpush1.bf16.msra.mxu0 %v2870
        %3761 = vmatprep.subr.bf16.mxu0 0
        %3762 = vmatpush1.bf16.msra.mxu0 0
        %3763 = vmatprep.subr.bf16.mxu0 0
        %3764 = vmatpush1.bf16.msra.mxu0 0
        %3765 = vmatprep.subr.bf16.mxu0 0
        %3766 = vmatpush1.bf16.msra.mxu0 0
        %3767 = vmatprep.subr.bf16.mxu0 0
        %3768 = vmatpush1.bf16.msra.mxu0 0
        %3769 = vmatprep.subr.bf16.mxu0 0
        %3770 = vmatpush1.bf16.msra.mxu0 0
        %3771 = vmatprep.subr.bf16.mxu0 0
        %3772 = vmatpush1.bf16.msra.mxu0 0
        %3773 = vmatprep.subr.bf16.mxu0 0
        %3774 = vmatpush1.bf16.msra.mxu0 0
        %3775 = vmatprep.subr.bf16.mxu0 0
        %3776 = vmatpush1.bf16.msra.mxu0 0
        %3777 = vmatprep.subr.bf16.mxu0 0
        %3778 = vmatpush1.bf16.msra.mxu0 0
        %3779 = vmatprep.subr.bf16.mxu0 0
        %3780 = vmatpush1.bf16.msra.mxu0 0
        %3781 = vmatprep.subr.bf16.mxu0 0
        %3782 = vmatpush1.bf16.msra.mxu0 0
        %3783 = vmatprep.subr.bf16.mxu0 0
        %3784 = vmatpush1.bf16.msra.mxu0 0
        %3785 = vmatprep.subr.bf16.mxu0 0
        %3786 = vmatpush1.bf16.msra.mxu0 0
        %3787 = vmatprep.subr.bf16.mxu0 0
        %3788 = vmatpush1.bf16.msra.mxu0 0
        %3789 = vmatprep.subr.bf16.mxu0 0
        %3790 = vmatpush1.bf16.msra.mxu0 0
        %3791 = vmatprep.mubr.bf16.mxu0 0
        %3792 = vmatmul.mubr.bf16.gmra.mrb[0].mxu0 %v3757
        %v3793 = vpop.f32.mrb[0].mxu0
        %v3794 = vadd.f32 0.0, %v3793
        %v3795 = vpop.f32.mrb[0].mxu0
        %v3796 = vpop.f32.mrb[0].mxu0
        %v3797 = vadd.f32 0.0, %v3796
        %v3798 = vpop.f32.mrb[0].mxu0
        %3799 = vdwg.mxu0
        %v3801 = vsel %vm3307, %v3491, 0
        %3803 = vmatprep.subr.bf16.mxu0 0
        %3804 = vmatpush1.bf16.msra.mxu0 %v2871
        %3805 = vmatprep.subr.bf16.mxu0 0
        %3806 = vmatpush1.bf16.msra.mxu0 0
        %3807 = vmatprep.subr.bf16.mxu0 0
        %3808 = vmatpush1.bf16.msra.mxu0 0
        %3809 = vmatprep.subr.bf16.mxu0 0
        %3810 = vmatpush1.bf16.msra.mxu0 0
        %3811 = vmatprep.subr.bf16.mxu0 0
        %3812 = vmatpush1.bf16.msra.mxu0 0
        %3813 = vmatprep.subr.bf16.mxu0 0
        %3814 = vmatpush1.bf16.msra.mxu0 0
        %3815 = vmatprep.subr.bf16.mxu0 0
        %3816 = vmatpush1.bf16.msra.mxu0 0
        %3817 = vmatprep.subr.bf16.mxu0 0
        %3818 = vmatpush1.bf16.msra.mxu0 0
        %3819 = vmatprep.subr.bf16.mxu0 0
        %3820 = vmatpush1.bf16.msra.mxu0 0
        %3821 = vmatprep.subr.bf16.mxu0 0
        %3822 = vmatpush1.bf16.msra.mxu0 0
        %3823 = vmatprep.subr.bf16.mxu0 0
        %3824 = vmatpush1.bf16.msra.mxu0 0
        %3825 = vmatprep.subr.bf16.mxu0 0
        %3826 = vmatpush1.bf16.msra.mxu0 0
        %3827 = vmatprep.subr.bf16.mxu0 0
        %3828 = vmatpush1.bf16.msra.mxu0 0
        %3829 = vmatprep.subr.bf16.mxu0 0
        %3830 = vmatpush1.bf16.msra.mxu0 0
        %3831 = vmatprep.subr.bf16.mxu0 0
        %3832 = vmatpush1.bf16.msra.mxu0 0
        %3833 = vmatprep.subr.bf16.mxu0 0
        %3834 = vmatpush1.bf16.msra.mxu0 0
        %3835 = vmatprep.mubr.bf16.mxu0 0
        %3836 = vmatmul.mubr.bf16.gmra.mrb[0].mxu0 %v3801
        %v3837 = vpop.f32.mrb[0].mxu0
        %v3838 = vadd.f32 0.0, %v3837
        %v3839 = vpop.f32.mrb[0].mxu0
        %v3840 = vpop.f32.mrb[0].mxu0
        %v3841 = vadd.f32 0.0, %v3840
        %v3842 = vpop.f32.mrb[0].mxu0
        %3843 = vdwg.mxu0
        %v3844 = vcombine.low %v3530, %v3618
        %v3845 = vcombine.high %v3530, %v3618
        %v3847 = vunpack.c.l.s4 1983009808
        %v3848 = vunpack.c.0.s8 %v3847
        %v3849 = vlaneseq
        %v3850 = vshrl.u32 %v3849, 7
        %v3851 = vsub.s32 %v3848, %v3850
        %v3852 = vrot.slane %v3844, %v3851
        %v3854 = vunpack.c.l.s4 1983009808
        %v3855 = vunpack.c.0.s8 %v3854
        %v3856 = vlaneseq
        %v3857 = vshrl.u32 %v3856, 7
        %v3858 = vsub.s32 %v3855, %v3857
        %v3859 = vrot.slane %v3845, %v3858
        %v3860 = vcombine.low %v3574, %v3662
        %v3861 = vcombine.high %v3574, %v3662
        %v3863 = vunpack.c.l.s4 1983009808
        %v3864 = vunpack.c.0.s8 %v3863
        %v3865 = vlaneseq
        %v3866 = vshrl.u32 %v3865, 7
        %v3867 = vsub.s32 %v3864, %v3866
        %v3868 = vrot.slane %v3860, %v3867
        %v3870 = vunpack.c.l.s4 1983009808
        %v3871 = vunpack.c.0.s8 %v3870
        %v3872 = vlaneseq
        %v3873 = vshrl.u32 %v3872, 7
        %v3874 = vsub.s32 %v3871, %v3873
        %v3875 = vrot.slane %v3861, %v3874
        %v3876 = vcombine.low %v3852, %v3868
        %v3877 = vcombine.high %v3852, %v3868
        %v3879 = vunpack.c.l.s4 1934713408
        %v3880 = vunpack.c.0.s8 %v3879
        %v3881 = vlaneseq
        %v3882 = vshrl.u32 %v3881, 7
        %v3883 = vsub.s32 %v3880, %v3882
        %v3884 = vrot.slane %v3876, %v3883
        %v3886 = vunpack.c.l.s4 1934713408
        %v3887 = vunpack.c.0.s8 %v3886
        %v3888 = vlaneseq
        %v3889 = vshrl.u32 %v3888, 7
        %v3890 = vsub.s32 %v3887, %v3889
        %v3891 = vrot.slane %v3877, %v3890
        %v3892 = vcombine.low %v3859, %v3875
        %v3893 = vcombine.high %v3859, %v3875
        %v3895 = vunpack.c.l.s4 1934713408
        %v3896 = vunpack.c.0.s8 %v3895
        %v3897 = vlaneseq
        %v3898 = vshrl.u32 %v3897, 7
        %v3899 = vsub.s32 %v3896, %v3898
        %v3900 = vrot.slane %v3892, %v3899
        %v3902 = vunpack.c.l.s4 1934713408
        %v3903 = vunpack.c.0.s8 %v3902
        %v3904 = vlaneseq
        %v3905 = vshrl.u32 %v3904, 7
        %v3906 = vsub.s32 %v3903, %v3905
        %v3907 = vrot.slane %v3893, %v3906
        %v3908 = vcombine.high %v3884, 0.0
        %v3909 = vcombine.high %v3891, 0.0
        %v3910 = vcombine.high %v3900, 0.0
        %v3911 = vcombine.high %v3907, 0.0
        %v3912 = vcombine.low %v3533, %v3621
        %v3913 = vcombine.high %v3533, %v3621
        %v3915 = vunpack.c.l.s4 1983009808
        %v3916 = vunpack.c.0.s8 %v3915
        %v3917 = vlaneseq
        %v3918 = vshrl.u32 %v3917, 7
        %v3919 = vsub.s32 %v3916, %v3918
        %v3920 = vrot.slane %v3912, %v3919
        %v3922 = vunpack.c.l.s4 1983009808
        %v3923 = vunpack.c.0.s8 %v3922
        %v3924 = vlaneseq
        %v3925 = vshrl.u32 %v3924, 7
        %v3926 = vsub.s32 %v3923, %v3925
        %v3927 = vrot.slane %v3913, %v3926
        %v3928 = vcombine.low %v3577, %v3665
        %v3929 = vcombine.high %v3577, %v3665
        %v3931 = vunpack.c.l.s4 1983009808
        %v3932 = vunpack.c.0.s8 %v3931
        %v3933 = vlaneseq
        %v3934 = vshrl.u32 %v3933, 7
        %v3935 = vsub.s32 %v3932, %v3934
        %v3936 = vrot.slane %v3928, %v3935
        %v3938 = vunpack.c.l.s4 1983009808
        %v3939 = vunpack.c.0.s8 %v3938
        %v3940 = vlaneseq
        %v3941 = vshrl.u32 %v3940, 7
        %v3942 = vsub.s32 %v3939, %v3941
        %v3943 = vrot.slane %v3929, %v3942
        %v3944 = vcombine.low %v3920, %v3936
        %v3945 = vcombine.high %v3920, %v3936
        %v3947 = vunpack.c.l.s4 1934713408
        %v3948 = vunpack.c.0.s8 %v3947
        %v3949 = vlaneseq
        %v3950 = vshrl.u32 %v3949, 7
        %v3951 = vsub.s32 %v3948, %v3950
        %v3952 = vrot.slane %v3944, %v3951
        %v3954 = vunpack.c.l.s4 1934713408
        %v3955 = vunpack.c.0.s8 %v3954
        %v3956 = vlaneseq
        %v3957 = vshrl.u32 %v3956, 7
        %v3958 = vsub.s32 %v3955, %v3957
        %v3959 = vrot.slane %v3945, %v3958
        %v3960 = vcombine.low %v3927, %v3943
        %v3961 = vcombine.high %v3927, %v3943
        %v3963 = vunpack.c.l.s4 1934713408
        %v3964 = vunpack.c.0.s8 %v3963
        %v3965 = vlaneseq
        %v3966 = vshrl.u32 %v3965, 7
        %v3967 = vsub.s32 %v3964, %v3966
        %v3968 = vrot.slane %v3960, %v3967
        %v3970 = vunpack.c.l.s4 1934713408
        %v3971 = vunpack.c.0.s8 %v3970
        %v3972 = vlaneseq
        %v3973 = vshrl.u32 %v3972, 7
        %v3974 = vsub.s32 %v3971, %v3973
        %v3975 = vrot.slane %v3961, %v3974
        %v3976 = vcombine.high %v3952, 0.0
        %v3977 = vcombine.high %v3959, 0.0
        %v3978 = vcombine.high %v3968, 0.0
        %v3979 = vcombine.high %v3975, 0.0
        %v3980 = vcombine.low %v3706, %v3794
        %v3981 = vcombine.high %v3706, %v3794
        %v3983 = vunpack.c.l.s4 1983009808
        %v3984 = vunpack.c.0.s8 %v3983
        %v3985 = vlaneseq
        %v3986 = vshrl.u32 %v3985, 7
        %v3987 = vsub.s32 %v3984, %v3986
        %v3988 = vrot.slane %v3980, %v3987
        %v3990 = vunpack.c.l.s4 1983009808
        %v3991 = vunpack.c.0.s8 %v3990
        %v3992 = vlaneseq
        %v3993 = vshrl.u32 %v3992, 7
        %v3994 = vsub.s32 %v3991, %v3993
        %v3995 = vrot.slane %v3981, %v3994
        %v3996 = vcombine.low %v3750, %v3838
        %v3997 = vcombine.high %v3750, %v3838
        %v3999 = vunpack.c.l.s4 1983009808
        %v4000 = vunpack.c.0.s8 %v3999
        %v4001 = vlaneseq
        %v4002 = vshrl.u32 %v4001, 7
        %v4003 = vsub.s32 %v4000, %v4002
        %v4004 = vrot.slane %v3996, %v4003
        %v4006 = vunpack.c.l.s4 1983009808
        %v4007 = vunpack.c.0.s8 %v4006
        %v4008 = vlaneseq
        %v4009 = vshrl.u32 %v4008, 7
        %v4010 = vsub.s32 %v4007, %v4009
        %v4011 = vrot.slane %v3997, %v4010
        %v4012 = vcombine.low %v3988, %v4004
        %v4013 = vcombine.high %v3988, %v4004
        %v4015 = vunpack.c.l.s4 1934713408
        %v4016 = vunpack.c.0.s8 %v4015
        %v4017 = vlaneseq
        %v4018 = vshrl.u32 %v4017, 7
        %v4019 = vsub.s32 %v4016, %v4018
        %v4020 = vrot.slane %v4012, %v4019
        %v4022 = vunpack.c.l.s4 1934713408
        %v4023 = vunpack.c.0.s8 %v4022
        %v4024 = vlaneseq
        %v4025 = vshrl.u32 %v4024, 7
        %v4026 = vsub.s32 %v4023, %v4025
        %v4027 = vrot.slane %v4013, %v4026
        %v4028 = vcombine.low %v3995, %v4011
        %v4029 = vcombine.high %v3995, %v4011
        %v4031 = vunpack.c.l.s4 1934713408
        %v4032 = vunpack.c.0.s8 %v4031
        %v4033 = vlaneseq
        %v4034 = vshrl.u32 %v4033, 7
        %v4035 = vsub.s32 %v4032, %v4034
        %v4036 = vrot.slane %v4028, %v4035
        %v4038 = vunpack.c.l.s4 1934713408
        %v4039 = vunpack.c.0.s8 %v4038
        %v4040 = vlaneseq
        %v4041 = vshrl.u32 %v4040, 7
        %v4042 = vsub.s32 %v4039, %v4041
        %v4043 = vrot.slane %v4029, %v4042
        %v4044 = vcombine.high %v4020, 0.0
        %v4045 = vcombine.high %v4027, 0.0
        %v4046 = vcombine.high %v4036, 0.0
        %v4047 = vcombine.high %v4043, 0.0
        %v4048 = vcombine.low %v3709, %v3797
        %v4049 = vcombine.high %v3709, %v3797
        %v4051 = vunpack.c.l.s4 1983009808
        %v4052 = vunpack.c.0.s8 %v4051
        %v4053 = vlaneseq
        %v4054 = vshrl.u32 %v4053, 7
        %v4055 = vsub.s32 %v4052, %v4054
        %v4056 = vrot.slane %v4048, %v4055
        %v4058 = vunpack.c.l.s4 1983009808
        %v4059 = vunpack.c.0.s8 %v4058
        %v4060 = vlaneseq
        %v4061 = vshrl.u32 %v4060, 7
        %v4062 = vsub.s32 %v4059, %v4061
        %v4063 = vrot.slane %v4049, %v4062
        %v4064 = vcombine.low %v3753, %v3841
        %v4065 = vcombine.high %v3753, %v3841
        %v4067 = vunpack.c.l.s4 1983009808
        %v4068 = vunpack.c.0.s8 %v4067
        %v4069 = vlaneseq
        %v4070 = vshrl.u32 %v4069, 7
        %v4071 = vsub.s32 %v4068, %v4070
        %v4072 = vrot.slane %v4064, %v4071
        %v4074 = vunpack.c.l.s4 1983009808
        %v4075 = vunpack.c.0.s8 %v4074
        %v4076 = vlaneseq
        %v4077 = vshrl.u32 %v4076, 7
        %v4078 = vsub.s32 %v4075, %v4077
        %v4079 = vrot.slane %v4065, %v4078
        %v4080 = vcombine.low %v4056, %v4072
        %v4081 = vcombine.high %v4056, %v4072
        %v4083 = vunpack.c.l.s4 1934713408
        %v4084 = vunpack.c.0.s8 %v4083
        %v4085 = vlaneseq
        %v4086 = vshrl.u32 %v4085, 7
        %v4087 = vsub.s32 %v4084, %v4086
        %v4088 = vrot.slane %v4080, %v4087
        %v4090 = vunpack.c.l.s4 1934713408
        %v4091 = vunpack.c.0.s8 %v4090
        %v4092 = vlaneseq
        %v4093 = vshrl.u32 %v4092, 7
        %v4094 = vsub.s32 %v4091, %v4093
        %v4095 = vrot.slane %v4081, %v4094
        %v4096 = vcombine.low %v4063, %v4079
        %v4097 = vcombine.high %v4063, %v4079
        %v4099 = vunpack.c.l.s4 1934713408
        %v4100 = vunpack.c.0.s8 %v4099
        %v4101 = vlaneseq
        %v4102 = vshrl.u32 %v4101, 7
        %v4103 = vsub.s32 %v4100, %v4102
        %v4104 = vrot.slane %v4096, %v4103
        %v4106 = vunpack.c.l.s4 1934713408
        %v4107 = vunpack.c.0.s8 %v4106
        %v4108 = vlaneseq
        %v4109 = vshrl.u32 %v4108, 7
        %v4110 = vsub.s32 %v4107, %v4109
        %v4111 = vrot.slane %v4097, %v4110
        %v4112 = vcombine.high %v4088, 0.0
        %v4113 = vcombine.high %v4095, 0.0
        %v4114 = vcombine.high %v4104, 0.0
        %v4115 = vcombine.high %v4111, 0.0
        %v4116 = vcombine.low %v3884, %v3891
        %v4118 = vunpack.c.l.s4 1983009808
        %v4119 = vunpack.c.0.s8 %v4118
        %v4120 = vlaneseq
        %v4121 = vshrl.u32 %v4120, 7
        %v4122 = vsub.s32 %v4119, %v4121
        %v4123 = vrot.slane %v4116, %v4122
        %v4124 = vcombine.low %v3908, %v3909
        %v4126 = vunpack.c.l.s4 1983009808
        %v4127 = vunpack.c.0.s8 %v4126
        %v4128 = vlaneseq
        %v4129 = vshrl.u32 %v4128, 7
        %v4130 = vsub.s32 %v4127, %v4129
        %v4131 = vrot.slane %v4124, %v4130
        %v4132 = vcombine.low %v3900, %v3907
        %v4134 = vunpack.c.l.s4 1983009808
        %v4135 = vunpack.c.0.s8 %v4134
        %v4136 = vlaneseq
        %v4137 = vshrl.u32 %v4136, 7
        %v4138 = vsub.s32 %v4135, %v4137
        %v4139 = vrot.slane %v4132, %v4138
        %v4140 = vcombine.low %v3910, %v3911
        %v4142 = vunpack.c.l.s4 1983009808
        %v4143 = vunpack.c.0.s8 %v4142
        %v4144 = vlaneseq
        %v4145 = vshrl.u32 %v4144, 7
        %v4146 = vsub.s32 %v4143, %v4145
        %v4147 = vrot.slane %v4140, %v4146
        %v4148 = vcombine.low %v4123, %v4131
        %v4149 = vcombine.high %v4123, %v4131
        %v4151 = vunpack.c.l.s4 1934713408
        %v4152 = vunpack.c.0.s8 %v4151
        %v4153 = vlaneseq
        %v4154 = vshrl.u32 %v4153, 7
        %v4155 = vsub.s32 %v4152, %v4154
        %v4156 = vrot.slane %v4148, %v4155
        %v4158 = vunpack.c.l.s4 1934713408
        %v4159 = vunpack.c.0.s8 %v4158
        %v4160 = vlaneseq
        %v4161 = vshrl.u32 %v4160, 7
        %v4162 = vsub.s32 %v4159, %v4161
        %v4163 = vrot.slane %v4149, %v4162
        %v4164 = vcombine.low %v4139, %v4147
        %v4165 = vcombine.high %v4139, %v4147
        %v4167 = vunpack.c.l.s4 1934713408
        %v4168 = vunpack.c.0.s8 %v4167
        %v4169 = vlaneseq
        %v4170 = vshrl.u32 %v4169, 7
        %v4171 = vsub.s32 %v4168, %v4170
        %v4172 = vrot.slane %v4164, %v4171
        %v4174 = vunpack.c.l.s4 1934713408
        %v4175 = vunpack.c.0.s8 %v4174
        %v4176 = vlaneseq
        %v4177 = vshrl.u32 %v4176, 7
        %v4178 = vsub.s32 %v4175, %v4177
        %v4179 = vrot.slane %v4165, %v4178
        %v4180 = vcombine.low %v4156, %v4172
        %v4181 = vcombine.high %v4156, %v4172
        %v4182 = vcombine.low %v4163, %v4179
        %v4183 = vcombine.high %v4163, %v4179
        %v4184 = vcombine.low %v3952, %v3959
        %v4186 = vunpack.c.l.s4 1983009808
        %v4187 = vunpack.c.0.s8 %v4186
        %v4188 = vlaneseq
        %v4189 = vshrl.u32 %v4188, 7
        %v4190 = vsub.s32 %v4187, %v4189
        %v4191 = vrot.slane %v4184, %v4190
        %v4192 = vcombine.low %v3976, %v3977
        %v4194 = vunpack.c.l.s4 1983009808
        %v4195 = vunpack.c.0.s8 %v4194
        %v4196 = vlaneseq
        %v4197 = vshrl.u32 %v4196, 7
        %v4198 = vsub.s32 %v4195, %v4197
        %v4199 = vrot.slane %v4192, %v4198
        %v4200 = vcombine.low %v3968, %v3975
        %v4202 = vunpack.c.l.s4 1983009808
        %v4203 = vunpack.c.0.s8 %v4202
        %v4204 = vlaneseq
        %v4205 = vshrl.u32 %v4204, 7
        %v4206 = vsub.s32 %v4203, %v4205
        %v4207 = vrot.slane %v4200, %v4206
        %v4208 = vcombine.low %v3978, %v3979
        %v4210 = vunpack.c.l.s4 1983009808
        %v4211 = vunpack.c.0.s8 %v4210
        %v4212 = vlaneseq
        %v4213 = vshrl.u32 %v4212, 7
        %v4214 = vsub.s32 %v4211, %v4213
        %v4215 = vrot.slane %v4208, %v4214
        %v4216 = vcombine.low %v4191, %v4199
        %v4217 = vcombine.high %v4191, %v4199
        %v4219 = vunpack.c.l.s4 1934713408
        %v4220 = vunpack.c.0.s8 %v4219
        %v4221 = vlaneseq
        %v4222 = vshrl.u32 %v4221, 7
        %v4223 = vsub.s32 %v4220, %v4222
        %v4224 = vrot.slane %v4216, %v4223
        %v4226 = vunpack.c.l.s4 1934713408
        %v4227 = vunpack.c.0.s8 %v4226
        %v4228 = vlaneseq
        %v4229 = vshrl.u32 %v4228, 7
        %v4230 = vsub.s32 %v4227, %v4229
        %v4231 = vrot.slane %v4217, %v4230
        %v4232 = vcombine.low %v4207, %v4215
        %v4233 = vcombine.high %v4207, %v4215
        %v4235 = vunpack.c.l.s4 1934713408
        %v4236 = vunpack.c.0.s8 %v4235
        %v4237 = vlaneseq
        %v4238 = vshrl.u32 %v4237, 7
        %v4239 = vsub.s32 %v4236, %v4238
        %v4240 = vrot.slane %v4232, %v4239
        %v4242 = vunpack.c.l.s4 1934713408
        %v4243 = vunpack.c.0.s8 %v4242
        %v4244 = vlaneseq
        %v4245 = vshrl.u32 %v4244, 7
        %v4246 = vsub.s32 %v4243, %v4245
        %v4247 = vrot.slane %v4233, %v4246
        %v4248 = vcombine.low %v4224, %v4240
        %v4249 = vcombine.high %v4224, %v4240
        %v4250 = vcombine.low %v4231, %v4247
        %v4251 = vcombine.high %v4231, %v4247
        %v4252 = vcombine.low %v4020, %v4027
        %v4254 = vunpack.c.l.s4 1983009808
        %v4255 = vunpack.c.0.s8 %v4254
        %v4256 = vlaneseq
        %v4257 = vshrl.u32 %v4256, 7
        %v4258 = vsub.s32 %v4255, %v4257
        %v4259 = vrot.slane %v4252, %v4258
        %v4260 = vcombine.low %v4044, %v4045
        %v4262 = vunpack.c.l.s4 1983009808
        %v4263 = vunpack.c.0.s8 %v4262
        %v4264 = vlaneseq
        %v4265 = vshrl.u32 %v4264, 7
        %v4266 = vsub.s32 %v4263, %v4265
        %v4267 = vrot.slane %v4260, %v4266
        %v4268 = vcombine.low %v4036, %v4043
        %v4270 = vunpack.c.l.s4 1983009808
        %v4271 = vunpack.c.0.s8 %v4270
        %v4272 = vlaneseq
        %v4273 = vshrl.u32 %v4272, 7
        %v4274 = vsub.s32 %v4271, %v4273
        %v4275 = vrot.slane %v4268, %v4274
        %v4276 = vcombine.low %v4046, %v4047
        %v4278 = vunpack.c.l.s4 1983009808
        %v4279 = vunpack.c.0.s8 %v4278
        %v4280 = vlaneseq
        %v4281 = vshrl.u32 %v4280, 7
        %v4282 = vsub.s32 %v4279, %v4281
        %v4283 = vrot.slane %v4276, %v4282
        %v4284 = vcombine.low %v4259, %v4267
        %v4285 = vcombine.high %v4259, %v4267
        %v4287 = vunpack.c.l.s4 1934713408
        %v4288 = vunpack.c.0.s8 %v4287
        %v4289 = vlaneseq
        %v4290 = vshrl.u32 %v4289, 7
        %v4291 = vsub.s32 %v4288, %v4290
        %v4292 = vrot.slane %v4284, %v4291
        %v4294 = vunpack.c.l.s4 1934713408
        %v4295 = vunpack.c.0.s8 %v4294
        %v4296 = vlaneseq
        %v4297 = vshrl.u32 %v4296, 7
        %v4298 = vsub.s32 %v4295, %v4297
        %v4299 = vrot.slane %v4285, %v4298
        %v4300 = vcombine.low %v4275, %v4283
        %v4301 = vcombine.high %v4275, %v4283
        %v4303 = vunpack.c.l.s4 1934713408
        %v4304 = vunpack.c.0.s8 %v4303
        %v4305 = vlaneseq
        %v4306 = vshrl.u32 %v4305, 7
        %v4307 = vsub.s32 %v4304, %v4306
        %v4308 = vrot.slane %v4300, %v4307
        %v4310 = vunpack.c.l.s4 1934713408
        %v4311 = vunpack.c.0.s8 %v4310
        %v4312 = vlaneseq
        %v4313 = vshrl.u32 %v4312, 7
        %v4314 = vsub.s32 %v4311, %v4313
        %v4315 = vrot.slane %v4301, %v4314
        %v4316 = vcombine.low %v4292, %v4308
        %v4317 = vcombine.high %v4292, %v4308
        %v4318 = vcombine.low %v4299, %v4315
        %v4319 = vcombine.high %v4299, %v4315
        %v4320 = vcombine.low %v4088, %v4095
        %v4322 = vunpack.c.l.s4 1983009808
        %v4323 = vunpack.c.0.s8 %v4322
        %v4324 = vlaneseq
        %v4325 = vshrl.u32 %v4324, 7
        %v4326 = vsub.s32 %v4323, %v4325
        %v4327 = vrot.slane %v4320, %v4326
        %v4328 = vcombine.low %v4112, %v4113
        %v4330 = vunpack.c.l.s4 1983009808
        %v4331 = vunpack.c.0.s8 %v4330
        %v4332 = vlaneseq
        %v4333 = vshrl.u32 %v4332, 7
        %v4334 = vsub.s32 %v4331, %v4333
        %v4335 = vrot.slane %v4328, %v4334
        %v4336 = vcombine.low %v4104, %v4111
        %v4338 = vunpack.c.l.s4 1983009808
        %v4339 = vunpack.c.0.s8 %v4338
        %v4340 = vlaneseq
        %v4341 = vshrl.u32 %v4340, 7
        %v4342 = vsub.s32 %v4339, %v4341
        %v4343 = vrot.slane %v4336, %v4342
        %v4344 = vcombine.low %v4114, %v4115
        %v4346 = vunpack.c.l.s4 1983009808
        %v4347 = vunpack.c.0.s8 %v4346
        %v4348 = vlaneseq
        %v4349 = vshrl.u32 %v4348, 7
        %v4350 = vsub.s32 %v4347, %v4349
        %v4351 = vrot.slane %v4344, %v4350
        %v4352 = vcombine.low %v4327, %v4335
        %v4353 = vcombine.high %v4327, %v4335
        %v4355 = vunpack.c.l.s4 1934713408
        %v4356 = vunpack.c.0.s8 %v4355
        %v4357 = vlaneseq
        %v4358 = vshrl.u32 %v4357, 7
        %v4359 = vsub.s32 %v4356, %v4358
        %v4360 = vrot.slane %v4352, %v4359
        %v4362 = vunpack.c.l.s4 1934713408
        %v4363 = vunpack.c.0.s8 %v4362
        %v4364 = vlaneseq
        %v4365 = vshrl.u32 %v4364, 7
        %v4366 = vsub.s32 %v4363, %v4365
        %v4367 = vrot.slane %v4353, %v4366
        %v4368 = vcombine.low %v4343, %v4351
        %v4369 = vcombine.high %v4343, %v4351
        %v4371 = vunpack.c.l.s4 1934713408
        %v4372 = vunpack.c.0.s8 %v4371
        %v4373 = vlaneseq
        %v4374 = vshrl.u32 %v4373, 7
        %v4375 = vsub.s32 %v4372, %v4374
        %v4376 = vrot.slane %v4368, %v4375
        %v4378 = vunpack.c.l.s4 1934713408
        %v4379 = vunpack.c.0.s8 %v4378
        %v4380 = vlaneseq
        %v4381 = vshrl.u32 %v4380, 7
        %v4382 = vsub.s32 %v4379, %v4381
        %v4383 = vrot.slane %v4369, %v4382
        %v4384 = vcombine.low %v4360, %v4376
        %v4385 = vcombine.high %v4360, %v4376
        %v4386 = vcombine.low %v4367, %v4383
        %v4387 = vcombine.high %v4367, %v4383
        %4392 = vrot.lane.b32.xlu0 %v4181, 32
        %v4393 = vpop.permute.xlu0 %4392
        %4394 = vrot.lane.b32.xlu0 %v4249, 32
        %v4395 = vpop.permute.xlu0 %4394
        %4396 = vrot.lane.b32.xlu0 %v4317, 32
        %v4397 = vpop.permute.xlu0 %4396
        %4398 = vrot.lane.b32.xlu0 %v4385, 32
        %v4399 = vpop.permute.xlu0 %4398
        %4408 = vrot.lane.b32.xlu0 %v4182, 64
        %v4409 = vpop.permute.xlu0 %4408
        %4410 = vrot.lane.b32.xlu0 %v4250, 64
        %v4411 = vpop.permute.xlu0 %4410
        %4412 = vrot.lane.b32.xlu0 %v4318, 64
        %v4413 = vpop.permute.xlu0 %4412
        %4414 = vrot.lane.b32.xlu0 %v4386, 64
        %v4415 = vpop.permute.xlu0 %4414
        %4424 = vrot.lane.b32.xlu0 %v4183, 96
        %v4425 = vpop.permute.xlu0 %4424
        %4426 = vrot.lane.b32.xlu0 %v4251, 96
        %v4427 = vpop.permute.xlu0 %4426
        %4428 = vrot.lane.b32.xlu0 %v4319, 96
        %v4429 = vpop.permute.xlu0 %4428
        %4430 = vrot.lane.b32.xlu0 %v4387, 96
        %v4431 = vpop.permute.xlu0 %4430
        %v4436 = vsel %vm2914, %v4180, %v4393
        %v4437 = vsel %vm2914, %v4248, %v4395
        %v4438 = vsel %vm2914, %v4316, %v4397
        %v4439 = vsel %vm2914, %v4384, %v4399
        %vm4440 = vcmask 523264
        %v4441 = vsel %vm4440, %v4436, %v4409
        %v4442 = vsel %vm4440, %v4437, %v4411
        %v4443 = vsel %vm4440, %v4438, %v4413
        %v4444 = vsel %vm4440, %v4439, %v4415
        %vm4445 = vcmask 785408
        %v4446 = vsel %vm4445, %v4441, %v4425
        %v4447 = vsel %vm4445, %v4442, %v4427
        %v4448 = vsel %vm4445, %v4443, %v4429
        %v4449 = vsel %vm4445, %v4444, %v4431
        %v4450 = vpack.c.bf16 %v4447, %v4446
        %v4451 = vpack.c.bf16 %v4449, %v4448
        %v4452 = vld [vmem:[#allocation11] sm:$0xf]
        %v4453 = vld [vmem:[#allocation11 + $0x4] sm:$0xf]
        %v4454 = vld [vmem:[#allocation11 + $0x8] sm:$0xf]
        %v4455 = vld [vmem:[#allocation11 + $0xc] sm:$0xf]
        %v4456 = vld [vmem:[#allocation11 + $0x10] sm:$0xf]
        %v4457 = vld [vmem:[#allocation11 + $0x14] sm:$0xf]
        %v4458 = vld [vmem:[#allocation11 + $0x18] sm:$0xf]
        %v4459 = vld [vmem:[#allocation11 + $0x1c] sm:$0xf]
        %v4460 = vld [vmem:[#allocation11 + $0x20] sm:$0xf]
        %v4461 = vld [vmem:[#allocation11 + $0x24] sm:$0xf]
        %v4462 = vld [vmem:[#allocation11 + $0x28] sm:$0xf]
        %v4463 = vld [vmem:[#allocation11 + $0x2c] sm:$0xf]
        %v4464 = vld [vmem:[#allocation11 + $0x30] sm:$0xf]
        %v4465 = vld [vmem:[#allocation11 + $0x34] sm:$0xf]
        %v4466 = vld [vmem:[#allocation11 + $0x38] sm:$0xf]
        %v4467 = vld [vmem:[#allocation11 + $0x3c] sm:$0xf]
        %v4468 = vld [vmem:[%s9] sm:$0x1]
        %v4470 = vlaneseq
        %v4471 = vshrl.u32 %v4470, 7
        %v4472 = vsub.s32 0, %v4471
        %v4473 = vrot.slane %v4468, %v4472
        %v4491 = vunpack.c.l.b16 %v4452
        %v4492 = vunpack.c.l.b16 %v4453
        %v4493 = vunpack.c.l.b16 %v4454
        %v4494 = vunpack.c.l.b16 %v4455
        %v4495 = vunpack.c.l.b16 %v4456
        %v4496 = vunpack.c.l.b16 %v4457
        %v4497 = vunpack.c.l.b16 %v4458
        %v4498 = vunpack.c.l.b16 %v4459
        %v4499 = vunpack.c.l.b16 %v4460
        %v4500 = vunpack.c.l.b16 %v4461
        %v4501 = vunpack.c.l.b16 %v4462
        %v4502 = vunpack.c.l.b16 %v4463
        %v4503 = vunpack.c.l.b16 %v4464
        %v4504 = vunpack.c.l.b16 %v4465
        %v4505 = vunpack.c.l.b16 %v4466
        %v4506 = vunpack.c.l.b16 %v4467
        %v4507 = vpack.c.b16 %v4492, %v4491
        %v4508 = vpack.c.b16 %v4494, %v4493
        %v4509 = vpack.c.b16 %v4496, %v4495
        %v4510 = vpack.c.b16 %v4498, %v4497
        %v4511 = vpack.c.b16 %v4500, %v4499
        %v4512 = vpack.c.b16 %v4502, %v4501
        %v4513 = vpack.c.b16 %v4504, %v4503
        %v4514 = vpack.c.b16 %v4506, %v4505
        %4523 = vmatprep.subr.bf16.mxu0 0
        %4524 = vmatpush1.bf16.msra.mxu0 %v4507
        %4525 = vmatprep.subr.bf16.mxu0 0
        %4526 = vmatpush1.bf16.msra.mxu0 %v4508
        %4527 = vmatprep.subr.bf16.mxu0 0
        %4528 = vmatpush1.bf16.msra.mxu0 %v4509
        %4529 = vmatprep.subr.bf16.mxu0 0
        %4530 = vmatpush1.bf16.msra.mxu0 %v4510
        %4531 = vmatprep.subr.bf16.mxu0 0
        %4532 = vmatpush1.bf16.msra.mxu0 %v4511
        %4533 = vmatprep.subr.bf16.mxu0 0
        %4534 = vmatpush1.bf16.msra.mxu0 %v4512
        %4535 = vmatprep.subr.bf16.mxu0 0
        %4536 = vmatpush1.bf16.msra.mxu0 %v4513
        %4537 = vmatprep.subr.bf16.mxu0 0
        %4538 = vmatpush1.bf16.msra.mxu0 %v4514
        %4539 = vmatprep.subr.bf16.mxu0 0
        %4540 = vmatpush1.bf16.msra.mxu0 0
        %4541 = vmatprep.subr.bf16.mxu0 0
        %4542 = vmatpush1.bf16.msra.mxu0 0
        %4543 = vmatprep.subr.bf16.mxu0 0
        %4544 = vmatpush1.bf16.msra.mxu0 0
        %4545 = vmatprep.subr.bf16.mxu0 0
        %4546 = vmatpush1.bf16.msra.mxu0 0
        %4547 = vmatprep.subr.bf16.mxu0 0
        %4548 = vmatpush1.bf16.msra.mxu0 0
        %4549 = vmatprep.subr.bf16.mxu0 0
        %4550 = vmatpush1.bf16.msra.mxu0 0
        %4551 = vmatprep.subr.bf16.mxu0 0
        %4552 = vmatpush1.bf16.msra.mxu0 0
        %4553 = vmatprep.subr.bf16.mxu0 0
        %4554 = vmatpush1.bf16.msra.mxu0 0
        %4555 = vmatprep.mubr.bf16.mxu0 0
        %4556 = vmatmul.mubr.bf16.gmra.mrb[0].mxu0 %v4450
        %v4557 = vpop.f32.mrb[0].mxu0
        %v4558 = vadd.f32 %v4473, %v4557
        %v4559 = vpop.f32.mrb[0].mxu0
        %v4560 = vpop.f32.mrb[0].mxu0
        %v4561 = vadd.f32 %v4473, %v4560
        %v4562 = vpop.f32.mrb[0].mxu0
        %4563 = vmatprep.mubr.bf16.mxu0 0
        %4564 = vmatmul.mubr.bf16.gmra.mrb[0].mxu0 %v4451
        %v4565 = vpop.f32.mrb[0].mxu0
        %v4566 = vadd.f32 %v4473, %v4565
        %v4567 = vpop.f32.mrb[0].mxu0
        %v4568 = vpop.f32.mrb[0].mxu0
        %v4569 = vadd.f32 %v4473, %v4568
        %v4570 = vpop.f32.mrb[0].mxu0
        %4571 = vdwg.mxu0
        %v4572 = vadd.f32 %v4558, %v726
        %v4573 = vadd.f32 %v4561, %v727
        %v4574 = vadd.f32 %v4566, %v728
        %v4575 = vadd.f32 %v4569, %v729
        %v4576 = vld [vmem:[%s10] sm:$0x1]
        %v4577 = vld [vmem:[%s11] sm:$0x1]
        %4578 = vadd.xlane.f32.xlu0 %v4572
        %v4579 = vpop.xlane.xlu0 %4578
        %4580 = vadd.xlane.f32.xlu0 %v4573
        %v4581 = vpop.xlane.xlu0 %4580
        %4582 = vadd.xlane.f32.xlu0 %v4574
        %v4583 = vpop.xlane.xlu0 %4582
        %4584 = vadd.xlane.f32.xlu0 %v4575
        %v4585 = vpop.xlane.xlu0 %4584
        %v4586 = vrcp.pop 128.0
        %v4587 = vmul.f32 %v4579, %v4586
        %v4588 = vmul.f32 %v4581, %v4586
        %v4589 = vmul.f32 %v4583, %v4586
        %v4590 = vmul.f32 %v4585, %v4586
        %v4591 = vsub.f32 %v4572, %v4587
        %v4592 = vsub.f32 %v4573, %v4588
        %v4593 = vsub.f32 %v4574, %v4589
        %v4594 = vsub.f32 %v4575, %v4590
        %v4595 = vmul.f32 %v4591, %v4591
        %v4596 = vmul.f32 %v4592, %v4592
        %v4597 = vmul.f32 %v4593, %v4593
        %v4598 = vmul.f32 %v4594, %v4594
        %4599 = vadd.xlane.f32.xlu0 %v4595
        %v4600 = vpop.xlane.xlu0 %4599
        %4601 = vadd.xlane.f32.xlu0 %v4596
        %v4602 = vpop.xlane.xlu0 %4601
        %4603 = vadd.xlane.f32.xlu0 %v4597
        %v4604 = vpop.xlane.xlu0 %4603
        %4605 = vadd.xlane.f32.xlu0 %v4598
        %v4606 = vpop.xlane.xlu0 %4605
        %v4607 = vmul.f32 %v4600, %v4586
        %v4608 = vmul.f32 %v4602, %v4586
        %v4609 = vmul.f32 %v4604, %v4586
        %v4610 = vmul.f32 %v4606, %v4586
        %v4611 = vadd.f32 %v4607, 1e-12
        %v4612 = vadd.f32 %v4608, 1e-12
        %v4613 = vadd.f32 %v4609, 1e-12
        %v4614 = vadd.f32 %v4610, 1e-12
        %v4615 = vrsqrt.pop %v4611
        %v4616 = vrsqrt.pop %v4612
        %v4617 = vrsqrt.pop %v4613
        %v4618 = vrsqrt.pop %v4614
        %v4619 = vmul.f32 %v4591, %v4615
        %v4620 = vmul.f32 %v4592, %v4616
        %v4621 = vmul.f32 %v4593, %v4617
        %v4622 = vmul.f32 %v4594, %v4618
        %v4624 = vlaneseq
        %v4625 = vshrl.u32 %v4624, 7
        %v4626 = vsub.s32 0, %v4625
        %v4627 = vrot.slane %v4576, %v4626
        %v4629 = vmul.f32 %v4627, %v4619
        %v4630 = vmul.f32 %v4627, %v4620
        %v4631 = vmul.f32 %v4627, %v4621
        %v4632 = vmul.f32 %v4627, %v4622
        %v4634 = vlaneseq
        %v4635 = vshrl.u32 %v4634, 7
        %v4636 = vsub.s32 0, %v4635
        %v4637 = vrot.slane %v4577, %v4636
        %v4639 = vadd.f32 %v4629, %v4637
        %v4640 = vadd.f32 %v4630, %v4637
        %v4641 = vadd.f32 %v4631, %v4637
        %v4642 = vadd.f32 %v4632, %v4637
        %v4643 = vpack.c.bf16 %v4640, %v4639
        %v4644 = vpack.c.bf16 %v4642, %v4641
        %v4645 = vld [vmem:[#allocation13] sm:$0xff]
        %v4646 = vld [vmem:[#allocation13 + $0x8] sm:$0xff]
        %v4647 = vld [vmem:[#allocation13 + $0x10] sm:$0xff]
        %v4648 = vld [vmem:[#allocation13 + $0x18] sm:$0xff]
        %v4649 = vld [vmem:[#allocation13 + $0x20] sm:$0xff]
        %v4650 = vld [vmem:[#allocation13 + $0x28] sm:$0xff]
        %v4651 = vld [vmem:[#allocation13 + $0x30] sm:$0xff]
        %v4652 = vld [vmem:[#allocation13 + $0x38] sm:$0xff]
        %v4653 = vld [vmem:[#allocation13 + $0x40] sm:$0xff]
        %v4654 = vld [vmem:[#allocation13 + $0x48] sm:$0xff]
        %v4655 = vld [vmem:[#allocation13 + $0x50] sm:$0xff]
        %v4656 = vld [vmem:[#allocation13 + $0x58] sm:$0xff]
        %v4657 = vld [vmem:[#allocation13 + $0x60] sm:$0xff]
        %v4658 = vld [vmem:[#allocation13 + $0x68] sm:$0xff]
        %v4659 = vld [vmem:[#allocation13 + $0x70] sm:$0xff]
        %v4660 = vld [vmem:[#allocation13 + $0x78] sm:$0xff]
        %v4661 = vld [vmem:[%s13] sm:$0x3]
        %v4663 = vlaneseq
        %v4664 = vshrl.u32 %v4663, 7
        %v4665 = vsub.s32 0, %v4664
        %v4666 = vrot.slane %v4661, %v4665
        %v4667 = vlaneseq
        %v4668 = vshrl.u32 %v4667, 7
        %v4669 = vsub.s32 1, %v4668
        %v4670 = vrot.slane %v4661, %v4669
        %v4689 = vunpack.c.l.b16 %v4645
        %v4690 = vunpack.c.h.b16 %v4645
        %v4691 = vunpack.c.l.b16 %v4646
        %v4692 = vunpack.c.h.b16 %v4646
        %v4693 = vunpack.c.l.b16 %v4647
        %v4694 = vunpack.c.h.b16 %v4647
        %v4695 = vunpack.c.l.b16 %v4648
        %v4696 = vunpack.c.h.b16 %v4648
        %v4697 = vunpack.c.l.b16 %v4649
        %v4698 = vunpack.c.h.b16 %v4649
        %v4699 = vunpack.c.l.b16 %v4650
        %v4700 = vunpack.c.h.b16 %v4650
        %v4701 = vunpack.c.l.b16 %v4651
        %v4702 = vunpack.c.h.b16 %v4651
        %v4703 = vunpack.c.l.b16 %v4652
        %v4704 = vunpack.c.h.b16 %v4652
        %v4705 = vunpack.c.l.b16 %v4653
        %v4706 = vunpack.c.h.b16 %v4653
        %v4707 = vunpack.c.l.b16 %v4654
        %v4708 = vunpack.c.h.b16 %v4654
        %v4709 = vunpack.c.l.b16 %v4655
        %v4710 = vunpack.c.h.b16 %v4655
        %v4711 = vunpack.c.l.b16 %v4656
        %v4712 = vunpack.c.h.b16 %v4656
        %v4713 = vunpack.c.l.b16 %v4657
        %v4714 = vunpack.c.h.b16 %v4657
        %v4715 = vunpack.c.l.b16 %v4658
        %v4716 = vunpack.c.h.b16 %v4658
        %v4717 = vunpack.c.l.b16 %v4659
        %v4718 = vunpack.c.h.b16 %v4659
        %v4719 = vunpack.c.l.b16 %v4660
        %v4720 = vunpack.c.h.b16 %v4660
        %v4721 = vpack.c.b16 %v4691, %v4689
        %v4722 = vpack.c.b16 %v4692, %v4690
        %v4723 = vpack.c.b16 %v4695, %v4693
        %v4724 = vpack.c.b16 %v4696, %v4694
        %v4725 = vpack.c.b16 %v4699, %v4697
        %v4726 = vpack.c.b16 %v4700, %v4698
        %v4727 = vpack.c.b16 %v4703, %v4701
        %v4728 = vpack.c.b16 %v4704, %v4702
        %v4729 = vpack.c.b16 %v4707, %v4705
        %v4730 = vpack.c.b16 %v4708, %v4706
        %v4731 = vpack.c.b16 %v4711, %v4709
        %v4732 = vpack.c.b16 %v4712, %v4710
        %v4733 = vpack.c.b16 %v4715, %v4713
        %v4734 = vpack.c.b16 %v4716, %v4714
        %v4735 = vpack.c.b16 %v4719, %v4717
        %v4736 = vpack.c.b16 %v4720, %v4718
        %4753 = vmatprep.subr.bf16.mxu0 %v4722
        %4754 = vmatpush1.bf16.msra.mxu0 %v4721
        %4755 = vmatprep.subr.bf16.mxu0 %v4724
        %4756 = vmatpush1.bf16.msra.mxu0 %v4723
        %4757 = vmatprep.subr.bf16.mxu0 %v4726
        %4758 = vmatpush1.bf16.msra.mxu0 %v4725
        %4759 = vmatprep.subr.bf16.mxu0 %v4728
        %4760 = vmatpush1.bf16.msra.mxu0 %v4727
        %4761 = vmatprep.subr.bf16.mxu0 %v4730
        %4762 = vmatpush1.bf16.msra.mxu0 %v4729
        %4763 = vmatprep.subr.bf16.mxu0 %v4732
        %4764 = vmatpush1.bf16.msra.mxu0 %v4731
        %4765 = vmatprep.subr.bf16.mxu0 %v4734
        %4766 = vmatpush1.bf16.msra.mxu0 %v4733
        %4767 = vmatprep.subr.bf16.mxu0 %v4736
        %4768 = vmatpush1.bf16.msra.mxu0 %v4735
        %4769 = vmatprep.subr.bf16.mxu0 0
        %4770 = vmatpush1.bf16.msra.mxu0 0
        %4771 = vmatprep.subr.bf16.mxu0 0
        %4772 = vmatpush1.bf16.msra.mxu0 0
        %4773 = vmatprep.subr.bf16.mxu0 0
        %4774 = vmatpush1.bf16.msra.mxu0 0
        %4775 = vmatprep.subr.bf16.mxu0 0
        %4776 = vmatpush1.bf16.msra.mxu0 0
        %4777 = vmatprep.subr.bf16.mxu0 0
        %4778 = vmatpush1.bf16.msra.mxu0 0
        %4779 = vmatprep.subr.bf16.mxu0 0
        %4780 = vmatpush1.bf16.msra.mxu0 0
        %4781 = vmatprep.subr.bf16.mxu0 0
        %4782 = vmatpush1.bf16.msra.mxu0 0
        %4783 = vmatprep.subr.bf16.mxu0 0
        %4784 = vmatpush1.bf16.msra.mxu0 0
        %4785 = vmatprep.mubr.bf16.mxu0 0
        %4786 = vmatmul.mubr.bf16.gmra.mrb[0].mxu0 %v4643
        %v4787 = vpop.f32.mrb[0].mxu0
        %v4788 = vadd.f32 %v4666, %v4787
        %v4789 = vpop.f32.mrb[0].mxu0
        %v4790 = vadd.f32 %v4670, %v4789
        %v4791 = vpop.f32.mrb[0].mxu0
        %v4792 = vadd.f32 %v4666, %v4791
        %v4793 = vpop.f32.mrb[0].mxu0
        %v4794 = vadd.f32 %v4670, %v4793
        %4795 = vmatprep.mubr.bf16.mxu0 0
        %4796 = vmatmul.mubr.bf16.gmra.mrb[0].mxu0 %v4644
        %v4797 = vpop.f32.mrb[0].mxu0
        %v4798 = vadd.f32 %v4666, %v4797
        %v4799 = vpop.f32.mrb[0].mxu0
        %v4800 = vadd.f32 %v4670, %v4799
        %v4801 = vpop.f32.mrb[0].mxu0
        %v4802 = vadd.f32 %v4666, %v4801
        %v4803 = vpop.f32.mrb[0].mxu0
        %v4804 = vadd.f32 %v4670, %v4803
        %4805 = vdwg.mxu0
        %v4806 = vmul.f32 %v4788, 0.5
        %v4807 = vmul.f32 %v4790, 0.5
        %v4808 = vmul.f32 %v4792, 0.5
        %v4809 = vmul.f32 %v4794, 0.5
        %v4810 = vmul.f32 %v4798, 0.5
        %v4811 = vmul.f32 %v4800, 0.5
        %v4812 = vmul.f32 %v4802, 0.5
        %v4813 = vmul.f32 %v4804, 0.5
        %v4814 = vmul.f32 %v4788, 0.70710677
        %v4815 = vmul.f32 %v4790, 0.70710677
        %v4816 = vmul.f32 %v4792, 0.70710677
        %v4817 = vmul.f32 %v4794, 0.70710677
        %v4818 = vmul.f32 %v4798, 0.70710677
        %v4819 = vmul.f32 %v4800, 0.70710677
        %v4820 = vmul.f32 %v4802, 0.70710677
        %v4821 = vmul.f32 %v4804, 0.70710677
        %vm4822 = vcmp.ge.f32.partialorder %v4814, 0.0
        %vm4823 = vcmp.ge.f32.partialorder %v4815, 0.0
        %vm4824 = vcmp.ge.f32.partialorder %v4816, 0.0
        %vm4825 = vcmp.ge.f32.partialorder %v4817, 0.0
        %vm4826 = vcmp.ge.f32.partialorder %v4818, 0.0
        %vm4827 = vcmp.ge.f32.partialorder %v4819, 0.0
        %vm4828 = vcmp.ge.f32.partialorder %v4820, 0.0
        %vm4829 = vcmp.ge.f32.partialorder %v4821, 0.0
        %v4830 = vsel %vm4822, 1.0, -1.0
        %v4831 = vsel %vm4823, 1.0, -1.0
        %v4832 = vsel %vm4824, 1.0, -1.0
        %v4833 = vsel %vm4825, 1.0, -1.0
        %v4834 = vsel %vm4826, 1.0, -1.0
        %v4835 = vsel %vm4827, 1.0, -1.0
        %v4836 = vsel %vm4828, 1.0, -1.0
        %v4837 = vsel %vm4829, 1.0, -1.0
        %v4838 = vand.u32 2147483647, %v4814
        %v4839 = vand.u32 2147483647, %v4815
        %v4840 = vand.u32 2147483647, %v4816
        %v4841 = vand.u32 2147483647, %v4817
        %v4842 = vand.u32 2147483647, %v4818
        %v4843 = vand.u32 2147483647, %v4819
        %v4844 = vand.u32 2147483647, %v4820
        %v4845 = vand.u32 2147483647, %v4821
        %v4846 = vmul.f32 %v4838, 0.3275911
        %v4847 = vmul.f32 %v4839, 0.3275911
        %v4848 = vmul.f32 %v4840, 0.3275911
        %v4849 = vmul.f32 %v4841, 0.3275911
        %v4850 = vmul.f32 %v4842, 0.3275911
        %v4851 = vmul.f32 %v4843, 0.3275911
        %v4852 = vmul.f32 %v4844, 0.3275911
        %v4853 = vmul.f32 %v4845, 0.3275911
        %v4854 = vadd.f32 %v4846, 1.0
        %v4855 = vadd.f32 %v4847, 1.0
        %v4856 = vadd.f32 %v4848, 1.0
        %v4857 = vadd.f32 %v4849, 1.0
        %v4858 = vadd.f32 %v4850, 1.0
        %v4859 = vadd.f32 %v4851, 1.0
        %v4860 = vadd.f32 %v4852, 1.0
        %v4861 = vadd.f32 %v4853, 1.0
        %v4862 = vrcp.pop %v4854
        %v4863 = vmul.f32 1.0, %v4862
        %v4864 = vrcp.pop %v4855
        %v4865 = vmul.f32 1.0, %v4864
        %v4866 = vrcp.pop %v4856
        %v4867 = vmul.f32 1.0, %v4866
        %v4868 = vrcp.pop %v4857
        %v4869 = vmul.f32 1.0, %v4868
        %v4870 = vrcp.pop %v4858
        %v4871 = vmul.f32 1.0, %v4870
        %v4872 = vrcp.pop %v4859
        %v4873 = vmul.f32 1.0, %v4872
        %v4874 = vrcp.pop %v4860
        %v4875 = vmul.f32 1.0, %v4874
        %v4876 = vrcp.pop %v4861
        %v4877 = vmul.f32 1.0, %v4876
        %v4878 = vmul.f32 %v4863, 1.0614054
        %v4879 = vmul.f32 %v4865, 1.0614054
        %v4880 = vmul.f32 %v4867, 1.0614054
        %v4881 = vmul.f32 %v4869, 1.0614054
        %v4882 = vmul.f32 %v4871, 1.0614054
        %v4883 = vmul.f32 %v4873, 1.0614054
        %v4884 = vmul.f32 %v4875, 1.0614054
        %v4885 = vmul.f32 %v4877, 1.0614054
        %v4886 = vadd.f32 %v4878, -1.4531521
        %v4887 = vadd.f32 %v4879, -1.4531521
        %v4888 = vadd.f32 %v4880, -1.4531521
        %v4889 = vadd.f32 %v4881, -1.4531521
        %v4890 = vadd.f32 %v4882, -1.4531521
        %v4891 = vadd.f32 %v4883, -1.4531521
        %v4892 = vadd.f32 %v4884, -1.4531521
        %v4893 = vadd.f32 %v4885, -1.4531521
        %v4894 = vmul.f32 %v4886, %v4863
        %v4895 = vmul.f32 %v4887, %v4865
        %v4896 = vmul.f32 %v4888, %v4867
        %v4897 = vmul.f32 %v4889, %v4869
        %v4898 = vmul.f32 %v4890, %v4871
        %v4899 = vmul.f32 %v4891, %v4873
        %v4900 = vmul.f32 %v4892, %v4875
        %v4901 = vmul.f32 %v4893, %v4877
        %v4902 = vadd.f32 %v4894, 1.4214138
        %v4903 = vadd.f32 %v4895, 1.4214138
        %v4904 = vadd.f32 %v4896, 1.4214138
        %v4905 = vadd.f32 %v4897, 1.4214138
        %v4906 = vadd.f32 %v4898, 1.4214138
        %v4907 = vadd.f32 %v4899, 1.4214138
        %v4908 = vadd.f32 %v4900, 1.4214138
        %v4909 = vadd.f32 %v4901, 1.4214138
        %v4910 = vmul.f32 %v4902, %v4863
        %v4911 = vmul.f32 %v4903, %v4865
        %v4912 = vmul.f32 %v4904, %v4867
        %v4913 = vmul.f32 %v4905, %v4869
        %v4914 = vmul.f32 %v4906, %v4871
        %v4915 = vmul.f32 %v4907, %v4873
        %v4916 = vmul.f32 %v4908, %v4875
        %v4917 = vmul.f32 %v4909, %v4877
        %v4918 = vadd.f32 %v4910, -0.28449672
        %v4919 = vadd.f32 %v4911, -0.28449672
        %v4920 = vadd.f32 %v4912, -0.28449672
        %v4921 = vadd.f32 %v4913, -0.28449672
        %v4922 = vadd.f32 %v4914, -0.28449672
        %v4923 = vadd.f32 %v4915, -0.28449672
        %v4924 = vadd.f32 %v4916, -0.28449672
        %v4925 = vadd.f32 %v4917, -0.28449672
        %v4926 = vmul.f32 %v4918, %v4863
        %v4927 = vmul.f32 %v4919, %v4865
        %v4928 = vmul.f32 %v4920, %v4867
        %v4929 = vmul.f32 %v4921, %v4869
        %v4930 = vmul.f32 %v4922, %v4871
        %v4931 = vmul.f32 %v4923, %v4873
        %v4932 = vmul.f32 %v4924, %v4875
        %v4933 = vmul.f32 %v4925, %v4877
        %v4934 = vadd.f32 %v4926, 0.2548296
        %v4935 = vadd.f32 %v4927, 0.2548296
        %v4936 = vadd.f32 %v4928, 0.2548296
        %v4937 = vadd.f32 %v4929, 0.2548296
        %v4938 = vadd.f32 %v4930, 0.2548296
        %v4939 = vadd.f32 %v4931, 0.2548296
        %v4940 = vadd.f32 %v4932, 0.2548296
        %v4941 = vadd.f32 %v4933, 0.2548296
        %v4942 = vmul.f32 %v4934, %v4863
        %v4943 = vmul.f32 %v4935, %v4865
        %v4944 = vmul.f32 %v4936, %v4867
        %v4945 = vmul.f32 %v4937, %v4869
        %v4946 = vmul.f32 %v4938, %v4871
        %v4947 = vmul.f32 %v4939, %v4873
        %v4948 = vmul.f32 %v4940, %v4875
        %v4949 = vmul.f32 %v4941, %v4877
        %v4950 = vsub.f32 0.0, %v4838
        %v4951 = vsub.f32 0.0, %v4839
        %v4952 = vsub.f32 0.0, %v4840
        %v4953 = vsub.f32 0.0, %v4841
        %v4954 = vsub.f32 0.0, %v4842
        %v4955 = vsub.f32 0.0, %v4843
        %v4956 = vsub.f32 0.0, %v4844
        %v4957 = vsub.f32 0.0, %v4845
        %v4958 = vmul.f32 %v4950, %v4838
        %v4959 = vmul.f32 %v4951, %v4839
        %v4960 = vmul.f32 %v4952, %v4840
        %v4961 = vmul.f32 %v4953, %v4841
        %v4962 = vmul.f32 %v4954, %v4842
        %v4963 = vmul.f32 %v4955, %v4843
        %v4964 = vmul.f32 %v4956, %v4844
        %v4965 = vmul.f32 %v4957, %v4845
        %v4966 = vmul.f32 %v4958, 1.442695
        %v4967 = vpow.pop %v4966
        %v4968 = vmul.f32 %v4959, 1.442695
        %v4969 = vpow.pop %v4968
        %v4970 = vmul.f32 %v4960, 1.442695
        %v4971 = vpow.pop %v4970
        %v4972 = vmul.f32 %v4961, 1.442695
        %v4973 = vpow.pop %v4972
        %v4974 = vmul.f32 %v4962, 1.442695
        %v4975 = vpow.pop %v4974
        %v4976 = vmul.f32 %v4963, 1.442695
        %v4977 = vpow.pop %v4976
        %v4978 = vmul.f32 %v4964, 1.442695
        %v4979 = vpow.pop %v4978
        %v4980 = vmul.f32 %v4965, 1.442695
        %v4981 = vpow.pop %v4980
        %v4982 = vmul.f32 %v4942, %v4967
        %v4983 = vmul.f32 %v4943, %v4969
        %v4984 = vmul.f32 %v4944, %v4971
        %v4985 = vmul.f32 %v4945, %v4973
        %v4986 = vmul.f32 %v4946, %v4975
        %v4987 = vmul.f32 %v4947, %v4977
        %v4988 = vmul.f32 %v4948, %v4979
        %v4989 = vmul.f32 %v4949, %v4981
        %v4990 = vsub.f32 1.0, %v4982
        %v4991 = vsub.f32 1.0, %v4983
        %v4992 = vsub.f32 1.0, %v4984
        %v4993 = vsub.f32 1.0, %v4985
        %v4994 = vsub.f32 1.0, %v4986
        %v4995 = vsub.f32 1.0, %v4987
        %v4996 = vsub.f32 1.0, %v4988
        %v4997 = vsub.f32 1.0, %v4989
        %v4998 = vmul.f32 %v4830, %v4990
        %v4999 = vmul.f32 %v4831, %v4991
        %v5000 = vmul.f32 %v4832, %v4992
        %v5001 = vmul.f32 %v4833, %v4993
        %v5002 = vmul.f32 %v4834, %v4994
        %v5003 = vmul.f32 %v4835, %v4995
        %v5004 = vmul.f32 %v4836, %v4996
        %v5005 = vmul.f32 %v4837, %v4997
        %v5006 = vadd.f32 %v4998, 1.0
        %v5007 = vadd.f32 %v4999, 1.0
        %v5008 = vadd.f32 %v5000, 1.0
        %v5009 = vadd.f32 %v5001, 1.0
        %v5010 = vadd.f32 %v5002, 1.0
        %v5011 = vadd.f32 %v5003, 1.0
        %v5012 = vadd.f32 %v5004, 1.0
        %v5013 = vadd.f32 %v5005, 1.0
        %v5014 = vmul.f32 %v4806, %v5006
        %v5015 = vmul.f32 %v4807, %v5007
        %v5016 = vmul.f32 %v4808, %v5008
        %v5017 = vmul.f32 %v4809, %v5009
        %v5018 = vmul.f32 %v4810, %v5010
        %v5019 = vmul.f32 %v4811, %v5011
        %v5020 = vmul.f32 %v4812, %v5012
        %v5021 = vmul.f32 %v4813, %v5013
        %v5022 = vpack.c.bf16 %v5016, %v5014
        %v5023 = vpack.c.bf16 %v5017, %v5015
        %v5024 = vpack.c.bf16 %v5020, %v5018
        %v5025 = vpack.c.bf16 %v5021, %v5019
        %v5026 = vld [vmem:[#allocation14] sm:$0xf]
        %v5027 = vld [vmem:[#allocation14 + $0x4] sm:$0xf]
        %v5028 = vld [vmem:[#allocation14 + $0x8] sm:$0xf]
        %v5029 = vld [vmem:[#allocation14 + $0xc] sm:$0xf]
        %v5030 = vld [vmem:[#allocation14 + $0x10] sm:$0xf]
        %v5031 = vld [vmem:[#allocation14 + $0x14] sm:$0xf]
        %v5032 = vld [vmem:[#allocation14 + $0x18] sm:$0xf]
        %v5033 = vld [vmem:[#allocation14 + $0x1c] sm:$0xf]
        %v5034 = vld [vmem:[#allocation14 + $0x20] sm:$0xf]
        %v5035 = vld [vmem:[#allocation14 + $0x24] sm:$0xf]
        %v5036 = vld [vmem:[#allocation14 + $0x28] sm:$0xf]
        %v5037 = vld [vmem:[#allocation14 + $0x2c] sm:$0xf]
        %v5038 = vld [vmem:[#allocation14 + $0x30] sm:$0xf]
        %v5039 = vld [vmem:[#allocation14 + $0x34] sm:$0xf]
        %v5040 = vld [vmem:[#allocation14 + $0x38] sm:$0xf]
        %v5041 = vld [vmem:[#allocation14 + $0x3c] sm:$0xf]
        %v5042 = vld [vmem:[#allocation14 + $0x40] sm:$0xf]
        %v5043 = vld [vmem:[#allocation14 + $0x44] sm:$0xf]
        %v5044 = vld [vmem:[#allocation14 + $0x48] sm:$0xf]
        %v5045 = vld [vmem:[#allocation14 + $0x4c] sm:$0xf]
        %v5046 = vld [vmem:[#allocation14 + $0x50] sm:$0xf]
        %v5047 = vld [vmem:[#allocation14 + $0x54] sm:$0xf]
        %v5048 = vld [vmem:[#allocation14 + $0x58] sm:$0xf]
        %v5049 = vld [vmem:[#allocation14 + $0x5c] sm:$0xf]
        %v5050 = vld [vmem:[#allocation14 + $0x60] sm:$0xf]
        %v5051 = vld [vmem:[#allocation14 + $0x64] sm:$0xf]
        %v5052 = vld [vmem:[#allocation14 + $0x68] sm:$0xf]
        %v5053 = vld [vmem:[#allocation14 + $0x6c] sm:$0xf]
        %v5054 = vld [vmem:[#allocation14 + $0x70] sm:$0xf]
        %v5055 = vld [vmem:[#allocation14 + $0x74] sm:$0xf]
        %v5056 = vld [vmem:[#allocation14 + $0x78] sm:$0xf]
        %v5057 = vld [vmem:[#allocation14 + $0x7c] sm:$0xf]
        %v5058 = vld [vmem:[%s15] sm:$0x1]
        %v5060 = vlaneseq
        %v5061 = vshrl.u32 %v5060, 7
        %v5062 = vsub.s32 0, %v5061
        %v5063 = vrot.slane %v5058, %v5062
        %v5097 = vunpack.c.l.b16 %v5026
        %v5098 = vunpack.c.l.b16 %v5027
        %v5099 = vunpack.c.l.b16 %v5028
        %v5100 = vunpack.c.l.b16 %v5029
        %v5101 = vunpack.c.l.b16 %v5030
        %v5102 = vunpack.c.l.b16 %v5031
        %v5103 = vunpack.c.l.b16 %v5032
        %v5104 = vunpack.c.l.b16 %v5033
        %v5105 = vunpack.c.l.b16 %v5034
        %v5106 = vunpack.c.l.b16 %v5035
        %v5107 = vunpack.c.l.b16 %v5036
        %v5108 = vunpack.c.l.b16 %v5037
        %v5109 = vunpack.c.l.b16 %v5038
        %v5110 = vunpack.c.l.b16 %v5039
        %v5111 = vunpack.c.l.b16 %v5040
        %v5112 = vunpack.c.l.b16 %v5041
        %v5113 = vunpack.c.l.b16 %v5042
        %v5114 = vunpack.c.l.b16 %v5043
        %v5115 = vunpack.c.l.b16 %v5044
        %v5116 = vunpack.c.l.b16 %v5045
        %v5117 = vunpack.c.l.b16 %v5046
        %v5118 = vunpack.c.l.b16 %v5047
        %v5119 = vunpack.c.l.b16 %v5048
        %v5120 = vunpack.c.l.b16 %v5049
        %v5121 = vunpack.c.l.b16 %v5050
        %v5122 = vunpack.c.l.b16 %v5051
        %v5123 = vunpack.c.l.b16 %v5052
        %v5124 = vunpack.c.l.b16 %v5053
        %v5125 = vunpack.c.l.b16 %v5054
        %v5126 = vunpack.c.l.b16 %v5055
        %v5127 = vunpack.c.l.b16 %v5056
        %v5128 = vunpack.c.l.b16 %v5057
        %v5129 = vpack.c.b16 %v5098, %v5097
        %v5130 = vpack.c.b16 %v5100, %v5099
        %v5131 = vpack.c.b16 %v5102, %v5101
        %v5132 = vpack.c.b16 %v5104, %v5103
        %v5133 = vpack.c.b16 %v5106, %v5105
        %v5134 = vpack.c.b16 %v5108, %v5107
        %v5135 = vpack.c.b16 %v5110, %v5109
        %v5136 = vpack.c.b16 %v5112, %v5111
        %v5137 = vpack.c.b16 %v5114, %v5113
        %v5138 = vpack.c.b16 %v5116, %v5115
        %v5139 = vpack.c.b16 %v5118, %v5117
        %v5140 = vpack.c.b16 %v5120, %v5119
        %v5141 = vpack.c.b16 %v5122, %v5121
        %v5142 = vpack.c.b16 %v5124, %v5123
        %v5143 = vpack.c.b16 %v5126, %v5125
        %v5144 = vpack.c.b16 %v5128, %v5127
        %5161 = vmatprep.subr.bf16.mxu0 0
        %5162 = vmatpush1.bf16.msra.mxu0 %v5129
        %5163 = vmatprep.subr.bf16.mxu0 0
        %5164 = vmatpush1.bf16.msra.mxu0 %v5130
        %5165 = vmatprep.subr.bf16.mxu0 0
        %5166 = vmatpush1.bf16.msra.mxu0 %v5131
        %5167 = vmatprep.subr.bf16.mxu0 0
        %5168 = vmatpush1.bf16.msra.mxu0 %v5132
        %5169 = vmatprep.subr.bf16.mxu0 0
        %5170 = vmatpush1.bf16.msra.mxu0 %v5133
        %5171 = vmatprep.subr.bf16.mxu0 0
        %5172 = vmatpush1.bf16.msra.mxu0 %v5134
        %5173 = vmatprep.subr.bf16.mxu0 0
        %5174 = vmatpush1.bf16.msra.mxu0 %v5135
        %5175 = vmatprep.subr.bf16.mxu0 0
        %5176 = vmatpush1.bf16.msra.mxu0 %v5136
        %5177 = vmatprep.subr.bf16.mxu0 0
        %5178 = vmatpush1.bf16.msra.mxu0 %v5137
        %5179 = vmatprep.subr.bf16.mxu0 0
        %5180 = vmatpush1.bf16.msra.mxu0 %v5138
        %5181 = vmatprep.subr.bf16.mxu0 0
        %5182 = vmatpush1.bf16.msra.mxu0 %v5139
        %5183 = vmatprep.subr.bf16.mxu0 0
        %5184 = vmatpush1.bf16.msra.mxu0 %v5140
        %5185 = vmatprep.subr.bf16.mxu0 0
        %5186 = vmatpush1.bf16.msra.mxu0 %v5141
        %5187 = vmatprep.subr.bf16.mxu0 0
        %5188 = vmatpush1.bf16.msra.mxu0 %v5142
        %5189 = vmatprep.subr.bf16.mxu0 0
        %5190 = vmatpush1.bf16.msra.mxu0 %v5143
        %5191 = vmatprep.subr.bf16.mxu0 0
        %5192 = vmatpush1.bf16.msra.mxu0 %v5144
        %5193 = vmatprep.mubr.bf16.mxu0 %v5023
        %5194 = vmatmul.mubr.bf16.gmra.mrb[0].mxu0 %v5022
        %v5195 = vpop.f32.mrb[0].mxu0
        %v5196 = vadd.f32 %v5063, %v5195
        %v5197 = vpop.f32.mrb[0].mxu0
        %v5198 = vpop.f32.mrb[0].mxu0
        %v5199 = vadd.f32 %v5063, %v5198
        %v5200 = vpop.f32.mrb[0].mxu0
        %5201 = vmatprep.mubr.bf16.mxu0 %v5025
        %5202 = vmatmul.mubr.bf16.gmra.mrb[0].mxu0 %v5024
        %v5203 = vpop.f32.mrb[0].mxu0
        %v5204 = vadd.f32 %v5063, %v5203
        %v5205 = vpop.f32.mrb[0].mxu0
        %v5206 = vpop.f32.mrb[0].mxu0
        %v5207 = vadd.f32 %v5063, %v5206
        %v5208 = vpop.f32.mrb[0].mxu0
        %5209 = vdwg.mxu0
        %v5210 = vadd.f32 %v5196, %v4639
        %v5211 = vadd.f32 %v5199, %v4640
        %v5212 = vadd.f32 %v5204, %v4641
        %v5213 = vadd.f32 %v5207, %v4642
        %v5214 = vld [vmem:[%s16] sm:$0x1]
        %v5215 = vld [vmem:[%s17] sm:$0x1]
        %5216 = vadd.xlane.f32.xlu0 %v5210
        %v5217 = vpop.xlane.xlu0 %5216
        %5218 = vadd.xlane.f32.xlu0 %v5211
        %v5219 = vpop.xlane.xlu0 %5218
        %5220 = vadd.xlane.f32.xlu0 %v5212
        %v5221 = vpop.xlane.xlu0 %5220
        %5222 = vadd.xlane.f32.xlu0 %v5213
        %v5223 = vpop.xlane.xlu0 %5222
        %v5224 = vmul.f32 %v5217, %v4586
        %v5225 = vmul.f32 %v5219, %v4586
        %v5226 = vmul.f32 %v5221, %v4586
        %v5227 = vmul.f32 %v5223, %v4586
        %v5228 = vsub.f32 %v5210, %v5224
        %v5229 = vsub.f32 %v5211, %v5225
        %v5230 = vsub.f32 %v5212, %v5226
        %v5231 = vsub.f32 %v5213, %v5227
        %v5232 = vmul.f32 %v5228, %v5228
        %v5233 = vmul.f32 %v5229, %v5229
        %v5234 = vmul.f32 %v5230, %v5230
        %v5235 = vmul.f32 %v5231, %v5231
        %5236 = vadd.xlane.f32.xlu0 %v5232
        %v5237 = vpop.xlane.xlu0 %5236
        %5238 = vadd.xlane.f32.xlu0 %v5233
        %v5239 = vpop.xlane.xlu0 %5238
        %5240 = vadd.xlane.f32.xlu0 %v5234
        %v5241 = vpop.xlane.xlu0 %5240
        %5242 = vadd.xlane.f32.xlu0 %v5235
        %v5243 = vpop.xlane.xlu0 %5242
        %v5244 = vmul.f32 %v5237, %v4586
        %v5245 = vmul.f32 %v5239, %v4586
        %v5246 = vmul.f32 %v5241, %v4586
        %v5247 = vmul.f32 %v5243, %v4586
        %v5248 = vadd.f32 %v5244, 1e-12
        %v5249 = vadd.f32 %v5245, 1e-12
        %v5250 = vadd.f32 %v5246, 1e-12
        %v5251 = vadd.f32 %v5247, 1e-12
        %v5252 = vrsqrt.pop %v5248
        %v5253 = vrsqrt.pop %v5249
        %v5254 = vrsqrt.pop %v5250
        %v5255 = vrsqrt.pop %v5251
        %v5256 = vmul.f32 %v5228, %v5252
        %v5257 = vmul.f32 %v5229, %v5253
        %v5258 = vmul.f32 %v5230, %v5254
        %v5259 = vmul.f32 %v5231, %v5255
        %v5261 = vlaneseq
        %v5262 = vshrl.u32 %v5261, 7
        %v5263 = vsub.s32 0, %v5262
        %v5264 = vrot.slane %v5214, %v5263
        %v5266 = vmul.f32 %v5264, %v5256
        %v5267 = vmul.f32 %v5264, %v5257
        %v5268 = vmul.f32 %v5264, %v5258
        %v5269 = vmul.f32 %v5264, %v5259
        %v5271 = vlaneseq
        %v5272 = vshrl.u32 %v5271, 7
        %v5273 = vsub.s32 0, %v5272
        %v5274 = vrot.slane %v5215, %v5273
        %v5276 = vadd.f32 %v5266, %v5274
        %v5277 = vadd.f32 %v5267, %v5274
        %v5278 = vadd.f32 %v5268, %v5274
        %v5279 = vadd.f32 %v5269, %v5274
        %5280 = vst [vmem:[%s721] sm:$0xff] %v5276
        %5281 = vst [vmem:[%s721 + $0x8] sm:$0xff] %v5277
        %5282 = vst [vmem:[%s721 + $0x10] sm:$0xff] %v5278
        %5283 = vst [vmem:[%s721 + $0x18] sm:$0xff] %v5279
        %s5284 = sand.u32 %s437, 1
        %s5285 = scalar_lea.sflag [#allocation4], %s5284
        %s5286 = sand.u32 %s437, 1
        %s5287 = smul.addr %s5286, 32
        %s5288 = scalar_lea.vmem [#allocation16], %s5287
        // Predicated region
        $region125: #{tpu_custom_call.1} parent=91 // pred_check
          %p5289 = pneg %p447
        $region126: #{tpu_custom_call.1} parent=91 // pred_check_branch
          %5291 = sbr.rel (%p5289) target = $region128
        $region127: #{tpu_custom_call.1} parent=91 // pred_region
          %s5292 = smul.u32 2, %s41
          %s5294 = ssub.s32 512, 512
          %5295 = vsyncadd %s5285, %s5294
          %s5296 = smul.addr %s5292, 2
          %s5297 = smul.addr %s5296, 128
          %s5298 = scalar_lea.hbm %s18, %s5297
          %s5299 = sshll.u32 %s5288, 4
          %s5300 = int_to_ptr.vmem [resolvable:$true] %s5299
          %5305 = dma.vmem_to_hbm [thread:$0]  %s5300, 512, %s5298, %s5285, 128, 128, 8
        $region128: #{tpu_custom_call.1} parent=91 // pred_fallthru
          _
      $region92: #{tpu_custom_call.1} parent=5 // pred_fallthru
        _
      %p5306 = scmp.le.s32.totalorder 2, %s36
      // Predicated region
      $region129: #{tpu_custom_call.1} parent=5 // pred_check
        %p5307 = pneg %p5306
      $region130: #{tpu_custom_call.1} parent=5 // pred_check_branch
        %5309 = sbr.rel (%p5307) target = $region132
      $region131: #{tpu_custom_call.1} parent=5 // pred_region
        %s5310 = ssub.s32 %s36, 2
        // Predicated region
        $region133: #{tpu_custom_call.1} parent=131 // pred_check
          %p5311 = pneg %p453
        $region134: #{tpu_custom_call.1} parent=131 // pred_check_branch
          %5313 = sbr.rel (%p5311) target = $region136
        $region135: #{tpu_custom_call.1} parent=131 // pred_region
          %s5314 = sand.u32 %s438, 1
          %s5315 = scalar_lea.sflag [#allocation4], %s5314
          %s5316 = sand.u32 %s438, 1
          %s5317 = smul.addr %s5316, 32
          %s5318 = scalar_lea.vmem [#allocation16], %s5317
          %5319 = dma.done %s5315, 512
        $region136: #{tpu_custom_call.1} parent=131 // pred_fallthru
          _
      $region132: #{tpu_custom_call.1} parent=5 // pred_fallthru
        _
    $region6: #{tpu_custom_call.1} parent=1 // loop_footer
      %s40 = sadd.s32 1, %s36
    $region7: #{tpu_custom_call.1} parent=1 // loop_footer_branch
      %35 = sbr.rel target = $region3
    $region8: #{tpu_custom_call.1} parent=1 // loop_exit
      _
    %5320 = vsyncpa [#allocation3], 1
    %s5321 = scalar_lea.sflag [#allocation3], 1
    %5322 = vsyncpa %s5321, 1
    %5323 = vsyncpa [#allocation6], 1
    %s5324 = scalar_lea.sflag [#allocation6], 1
    %5325 = vsyncpa %s5324, 1
    %5326 = vsyncpa [#allocation9], 1
    %5327 = vsyncpa [#allocation12], 1
    %5328 = vsyncpa [#allocation15], 1
    %5329 = vsyncpa [#allocation4], 1
    %s5330 = scalar_lea.sflag [#allocation4], 1
    %5331 = vsyncpa %s5330, 1

</llo_original>
